<compile_context>
chip_gen: v7x
topology: tpu7x:2x2x1
jax: 0.10.0
libtpu: 0.0.40
codegen_flags: <defaults>
</compile_context>

<pallas_src>
import functools
import math

import numpy as np
import jax
import jax.numpy as jnp
from jax.experimental import pallas as pl
from jax.experimental.pallas import tpu as pltpu


# ----------------------------------------------------------------------------- helpers

def _choose_row_tile(bc, pn, d_model, d_ff):
    """Keep the whole problem in one grid step (everything resident in VMEM) unless the
    per-step working set would get large; only then tile the B*C row axis in sublane
    aligned (multiple-of-8) chunks and let the grid run 'parallel' (megacore on v7x)."""
    per_row_bytes = 4 * pn * (3 * d_model + d_ff + pn + 4 * d_model)  # rough f32 bound
    budget = 4 << 20  # conservative even for v7x's smaller (64 MiB) VMEM
    tile = bc
    while tile > 8 and tile % 16 == 0 and tile * per_row_bytes > budget:
        tile //= 2
    return tile


def _ln(x, g, b, eps=1e-5):
    """LayerNorm over the last axis. g, b broadcast-compatible (1, D)."""
    mu = jnp.mean(x, axis=-1, keepdims=True)
    xc = x - mu
    var = jnp.mean(xc * xc, axis=-1, keepdims=True)
    return xc * jax.lax.rsqrt(var + eps) * g + b


# ----------------------------------------------------------------------------- fused kernel

def _fused_forward_kernel(x_ref, w_emb_ref, pe_ref,
                          wqkv_ref, bqkv_ref, wo_ref, bo_ref,
                          g1_ref, bn1_ref, w1_ref, bf1_ref, w2_ref, bf2_ref,
                          g2_ref, bn2_ref,
                          gn_ref, bnf_ref, wh_ref, bh_ref,
                          o_ref, *, n_layers, n_heads, bc, pn):
    """Whole PatchTST trunk on a (bc*pn, patch_len) row slab, fully resident in VMEM.

    x:  (N, P)        patches, N = bc*pn rows (row = series*pn + patch)
    pe: (N, D)        positional embedding pre-tiled per series
    per-layer weights stacked on a leading layer axis
    out: (bc, pred_len)
    """
    N, P = x_ref.shape
    D = w_emb_ref.shape[1]
    H = n_heads
    E = D // H
    scale = 1.0 / math.sqrt(E)

    # --- patch value embedding (Linear(patch_len, d_model, bias=False)) + pos. emb. ---
    x = x_ref[...].astype(jnp.float32)
    h = jnp.dot(x, w_emb_ref[...].astype(jnp.float32),
                preferred_element_type=jnp.float32) + pe_ref[...]

    # --- encoder layers (post-norm transformer), Python-static loop over layers ---
    for l in range(n_layers):
        wqkv = wqkv_ref[l]                       # (D, 3D)  fused Q/K/V projection
        wo = wo_ref[l]                           # (D, D)

        qkv = jnp.dot(h, wqkv, preferred_element_type=jnp.float32) + bqkv_ref[l]

        # per-head attention; out-projection accumulated per head (no lane concat)
        attn = jnp.zeros((N, D), jnp.float32)
        for hd in range(H):
            q = qkv[:, hd * E:(hd + 1) * E].reshape(bc, pn, E)
            k = qkv[:, D + hd * E: D + (hd + 1) * E].reshape(bc, pn, E)
            v = qkv[:, 2 * D + hd * E: 2 * D + (hd + 1) * E].reshape(bc, pn, E)
            s = jax.lax.dot_general(q, k, (((2,), (2,)), ((0,), (0,))),
                                    preferred_element_type=jnp.float32) * scale  # (bc,pn,pn)
            m = jnp.max(s, axis=-1, keepdims=True)
            p = jnp.exp(s - m)
            p = p / jnp.sum(p, axis=-1, keepdims=True)          # exact softmax
            o_h = jax.lax.dot_general(p, v, (((2,), (1,)), ((0,), (0,))),
                                      preferred_element_type=jnp.float32)        # (bc,pn,E)
            attn = attn + jnp.dot(o_h.reshape(N, E), wo[hd * E:(hd + 1) * E, :],
                                  preferred_element_type=jnp.float32)
        attn = attn + bo_ref[l]

        # residual + LayerNorm1
        r = _ln(h + attn, g1_ref[l], bn1_ref[l])

        # fused FFN (1x1 conv -> ReLU -> 1x1 conv); d_ff intermediate never leaves VMEM
        y = jnp.dot(r, w1_ref[l], preferred_element_type=jnp.float32) + bf1_ref[l]
        y = jnp.maximum(y, 0.0)
        y = jnp.dot(y, w2_ref[l], preferred_element_type=jnp.float32) + bf2_ref[l]

        h = _ln(r + y, g2_ref[l], bn2_ref[l])

    # --- final encoder LayerNorm + FlattenHead as ONE lane-dense K = pn*D matmul ---
    xn = _ln(h, gn_ref[...], bnf_ref[...])                      # (N, D)
    xn3 = xn.reshape(bc, pn, D)
    # lane-dense (bc, pn*D) slab; column p*D + d holds xn[b, p, d].  The PyTorch
    # (0,1,3,2)-transpose + flatten ordering is folded into w_head at init.
    xf = jnp.concatenate([xn3[:, p, :] for p in range(pn)], axis=-1)
    out = jnp.dot(xf, wh_ref[...], preferred_element_type=jnp.float32) + bh_ref[...]
    o_ref[...] = out.astype(o_ref.dtype)


# ----------------------------------------------------------------------------- pallas wrapper

def _full_spec(shape):
    return pl.BlockSpec(shape, lambda i, _s=shape: (0,) * len(_s))


def patchtst_trunk(x_patches, pe_tiled, params, cfg, bc, pn, tile_bc):
    D, F = cfg["d_model"], cfg["d_ff"]
    P = cfg["patch_len"]
    O = cfg["pred_len"]
    Lyr = cfg["e_layers"]
    n_steps = bc // tile_bc
    n_blk = tile_bc * pn
    lp = params["layers"]

    kern = functools.partial(_fused_forward_kernel, n_layers=Lyr,
                             n_heads=cfg["n_heads"], bc=tile_bc, pn=pn)

    return pl.pallas_call(
        kern,
        out_shape=jax.ShapeDtypeStruct((bc, O), x_patches.dtype),
        grid=(n_steps,),
        in_specs=[
            pl.BlockSpec((n_blk, P), lambda i: (i, 0)),          # patches
            _full_spec((P, D)),                                  # w_emb
            pl.BlockSpec((n_blk, D), lambda i: (i, 0)),          # pos. emb (pre-tiled)
            _full_spec((Lyr, D, 3 * D)),                         # wqkv
            _full_spec((Lyr, 1, 3 * D)),                         # bqkv
            _full_spec((Lyr, D, D)),                             # wo
            _full_spec((Lyr, 1, D)),                             # bo
            _full_spec((Lyr, 1, D)),                             # ln1 gamma
            _full_spec((Lyr, 1, D)),                             # ln1 beta
            _full_spec((Lyr, D, F)),                             # ffn w1
            _full_spec((Lyr, 1, F)),                             # ffn b1
            _full_spec((Lyr, F, D)),                             # ffn w2
            _full_spec((Lyr, 1, D)),                             # ffn b2
            _full_spec((Lyr, 1, D)),                             # ln2 gamma
            _full_spec((Lyr, 1, D)),                             # ln2 beta
            _full_spec((1, D)),                                  # final norm gamma
            _full_spec((1, D)),                                  # final norm beta
            _full_spec((pn * D, O)),                             # head weight (folded)
            _full_spec((1, O)),                                  # head bias
        ],
        out_specs=pl.BlockSpec((tile_bc, O), lambda i: (i, 0)),
        compiler_params=pltpu.CompilerParams(
            dimension_semantics=("arbitrary",) if n_steps == 1 else ("parallel",)),
    )(x_patches, params["w_emb"], pe_tiled,
      lp["wqkv"], lp["bqkv"], lp["wo"], lp["bo"],
      lp["n1_g"], lp["n1_b"], lp["w1"], lp["b1"], lp["w2"], lp["b2"],
      lp["n2_g"], lp["n2_b"],
      params["norm_g"], params["norm_b"], params["w_head"], params["b_head"])


# ----------------------------------------------------------------------------- init / glue

def positional_embedding(max_len, d_model):
    position = np.arange(max_len, dtype=np.float32)[:, None]
    div_term = np.exp(np.arange(0, d_model, 2, dtype=np.float32) * -(math.log(10000.0) / d_model))
    pe = np.zeros((max_len, d_model), dtype=np.float32)
    pe[:, 0::2] = np.sin(position * div_term)
    pe[:, 1::2] = np.cos(position * div_term)
    return jnp.asarray(pe)


def _dense_init(key, fan_in, fan_out, bias=True):
    """PyTorch nn.Linear-style uniform init, deterministic given key."""
    k1, k2 = jax.random.split(key)
    bound = 1.0 / math.sqrt(fan_in)
    w = jax.random.uniform(k1, (fan_in, fan_out), jnp.float32, -bound, bound)
    b = (jax.random.uniform(k2, (fan_out,), jnp.float32, -bound, bound)
         if bias else jnp.zeros((fan_out,), jnp.float32))
    return w, b


def init_params(key, cfg):
    D, F = cfg["d_model"], cfg["d_ff"]
    P = cfg["patch_len"]
    PN = (cfg["seq_len"] - P) // cfg["stride"] + 2
    head_nf = D * PN
    Lyr = cfg["e_layers"]

    keys = jax.random.split(key, 2 + 6 * Lyr)
    ki = iter(keys)

    params = {}
    # patch value embedding: Linear(patch_len, d_model, bias=False); fixed sinusoidal PE
    w_emb, _ = _dense_init(next(ki), P, D, bias=False)
    params["w_emb"] = w_emb
    params["pe"] = positional_embedding(PN, D)

    stk = {k: [] for k in ["wqkv", "bqkv", "wo", "bo", "n1_g", "n1_b",
                           "w1", "b1", "w2", "b2", "n2_g", "n2_b"]}
    for _ in range(Lyr):
        wq, bq = _dense_init(next(ki), D, D)
        wk, bk = _dense_init(next(ki), D, D)
        wv, bv = _dense_init(next(ki), D, D)
        stk["wqkv"].append(jnp.concatenate([wq, wk, wv], axis=1))         # fused (D, 3D)
        stk["bqkv"].append(jnp.concatenate([bq, bk, bv]).reshape(1, 3 * D))
        wo, bo = _dense_init(next(ki), D, D)
        stk["wo"].append(wo)
        stk["bo"].append(bo.reshape(1, D))
        w1, b1 = _dense_init(next(ki), D, F)                               # Conv1d(D, F, 1)
        w2, b2 = _dense_init(next(ki), F, D)                               # Conv1d(F, D, 1)
        stk["w1"].append(w1)
        stk["b1"].append(b1.reshape(1, F))
        stk["w2"].append(w2)
        stk["b2"].append(b2.reshape(1, D))
        stk["n1_g"].append(jnp.ones((1, D), jnp.float32))
        stk["n1_b"].append(jnp.zeros((1, D), jnp.float32))
        stk["n2_g"].append(jnp.ones((1, D), jnp.float32))
        stk["n2_b"].append(jnp.zeros((1, D), jnp.float32))
    params["layers"] = {k: jnp.stack(v, axis=0) for k, v in stk.items()}

    params["norm_g"] = jnp.ones((1, D), jnp.float32)
    params["norm_b"] = jnp.zeros((1, D), jnp.float32)

    # Head: PyTorch permutes to (B,C,D,PN) and flattens row-major (index d*PN + p).
    # The kernel's lane-dense slab is ordered p*D + d, so fold that reordering into the
    # weight once at init -> (PN*D, pred_len).  No runtime transpose anywhere.
    w_head, b_head = _dense_init(next(ki), head_nf, cfg["pred_len"])
    params["w_head"] = (w_head.reshape(D, PN, cfg["pred_len"])
                        .transpose(1, 0, 2).reshape(PN * D, cfg["pred_len"]))
    params["b_head"] = b_head.reshape(1, cfg["pred_len"])
    return params


def patchtst_forward(x_enc, params, cfg):
    B, L, C = x_enc.shape
    P, S = cfg["patch_len"], cfg["stride"]
    D = cfg["d_model"]
    PN = (L - P) // S + 2
    BC = B * C

    # --- series (instance) normalization: plain JAX (C is lane-sparse; XLA fuses it) ---
    means = jnp.mean(x_enc, axis=1, keepdims=True)
    xc = x_enc - means
    stdev = jnp.sqrt(jnp.mean(xc * xc, axis=1, keepdims=True) + 1e-5)   # unbiased=False
    xn = xc / stdev

    # --- patching: permute, replication-pad right by stride, unfold via STATIC slices ---
    xt = jnp.transpose(xn, (0, 2, 1))                                    # (B, C, L)
    xp = jnp.concatenate([xt, jnp.repeat(xt[:, :, -1:], S, axis=-1)], axis=-1)
    patches = jnp.stack([xp[:, :, p * S: p * S + P] for p in range(PN)], axis=2)  # (B,C,PN,P)
    x = patches.reshape(BC * PN, P)                                      # 2-D slab for kernel

    tile_bc = _choose_row_tile(BC, PN, D, cfg["d_ff"])
    pe_tiled = jnp.tile(params["pe"], (BC, 1))                           # (BC*PN, D), once

    # --- the whole trunk (embed + encoder layers + norm + head) in ONE Pallas kernel ---
    dec = patchtst_trunk(x, pe_tiled, params, cfg, BC, PN, tile_bc)      # (BC, pred_len)
    dec = dec.reshape(B, C, cfg["pred_len"]).transpose(0, 2, 1)          # (B, pred_len, C)

    # --- de-normalization: plain JAX ---
    return dec * stdev + means


# ----------------------------------------------------------------------------- main

if __name__ == "__main__":
    cfg = dict(
        seq_len=32, pred_len=8, enc_in=4,
        d_model=16, n_heads=2, e_layers=2, d_ff=32,
        patch_len=8, stride=4,
        activation="relu",
    )
    # TODO(synk): dropout layers are identity here (inference-mode semantics, p effectively 0).

    key = jax.random.PRNGKey(0)
    k_data, k_param = jax.random.split(key)
    x_enc = jax.random.normal(k_data, (2, cfg["seq_len"], cfg["enc_in"]), jnp.float32)
    params = init_params(k_param, cfg)

    fwd = jax.jit(lambda x, p: patchtst_forward(x, p, cfg))
    out = jax.block_until_ready(fwd(x_enc, params))

    assert out.shape == (2, cfg["pred_len"], cfg["enc_in"]), out.shape
    assert bool(jnp.all(jnp.isfinite(out)))
    print("KERNEL_OK")
</pallas_src>

<mosaic_0001>
module attributes {stable_mosaic.version = 11 : i64} {
  func.func @_fused_forward_kernel(%arg0: i32, %arg1: memref<64x8xf32, #tpu.memory_space<vmem>>, %arg2: memref<8x16xf32, #tpu.memory_space<vmem>>, %arg3: memref<64x16xf32, #tpu.memory_space<vmem>>, %arg4: memref<2x16x48xf32, #tpu.memory_space<vmem>>, %arg5: memref<2x1x48xf32, #tpu.memory_space<vmem>>, %arg6: memref<2x16x16xf32, #tpu.memory_space<vmem>>, %arg7: memref<2x1x16xf32, #tpu.memory_space<vmem>>, %arg8: memref<2x1x16xf32, #tpu.memory_space<vmem>>, %arg9: memref<2x1x16xf32, #tpu.memory_space<vmem>>, %arg10: memref<2x16x32xf32, #tpu.memory_space<vmem>>, %arg11: memref<2x1x32xf32, #tpu.memory_space<vmem>>, %arg12: memref<2x32x16xf32, #tpu.memory_space<vmem>>, %arg13: memref<2x1x16xf32, #tpu.memory_space<vmem>>, %arg14: memref<2x1x16xf32, #tpu.memory_space<vmem>>, %arg15: memref<2x1x16xf32, #tpu.memory_space<vmem>>, %arg16: memref<1x16xf32, #tpu.memory_space<vmem>>, %arg17: memref<1x16xf32, #tpu.memory_space<vmem>>, %arg18: memref<128x8xf32, #tpu.memory_space<vmem>>, %arg19: memref<1x8xf32, #tpu.memory_space<vmem>>, %arg20: memref<8x8xf32, #tpu.memory_space<vmem>>) attributes {dimension_semantics = [#tpu.dimension_semantics<arbitrary>], iteration_bounds = array<i64: 1>, scalar_prefetch = 0 : i64, scratch_operands = 0 : i64, tpu.core_type = #tpu.core_type<tc>, window_params = [{transform_indices = @transform_0, window_bounds = array<i64: 64, 8>}, {pipeline_mode = #tpu.pipeline_mode<synchronous>, transform_indices = @transform_1, window_bounds = array<i64: 8, 16>}, {transform_indices = @transform_2, window_bounds = array<i64: 64, 16>}, {pipeline_mode = #tpu.pipeline_mode<synchronous>, transform_indices = @transform_3, window_bounds = array<i64: 2, 16, 48>}, {pipeline_mode = #tpu.pipeline_mode<synchronous>, transform_indices = @transform_4, window_bounds = array<i64: 2, 1, 48>}, {pipeline_mode = #tpu.pipeline_mode<synchronous>, transform_indices = @transform_5, window_bounds = array<i64: 2, 16, 16>}, {pipeline_mode = #tpu.pipeline_mode<synchronous>, transform_indices = @transform_6, window_bounds = array<i64: 2, 1, 16>}, {pipeline_mode = #tpu.pipeline_mode<synchronous>, transform_indices = @transform_7, window_bounds = array<i64: 2, 1, 16>}, {pipeline_mode = #tpu.pipeline_mode<synchronous>, transform_indices = @transform_8, window_bounds = array<i64: 2, 1, 16>}, {pipeline_mode = #tpu.pipeline_mode<synchronous>, transform_indices = @transform_9, window_bounds = array<i64: 2, 16, 32>}, {pipeline_mode = #tpu.pipeline_mode<synchronous>, transform_indices = @transform_10, window_bounds = array<i64: 2, 1, 32>}, {pipeline_mode = #tpu.pipeline_mode<synchronous>, transform_indices = @transform_11, window_bounds = array<i64: 2, 32, 16>}, {pipeline_mode = #tpu.pipeline_mode<synchronous>, transform_indices = @transform_12, window_bounds = array<i64: 2, 1, 16>}, {pipeline_mode = #tpu.pipeline_mode<synchronous>, transform_indices = @transform_13, window_bounds = array<i64: 2, 1, 16>}, {pipeline_mode = #tpu.pipeline_mode<synchronous>, transform_indices = @transform_14, window_bounds = array<i64: 2, 1, 16>}, {pipeline_mode = #tpu.pipeline_mode<synchronous>, transform_indices = @transform_15, window_bounds = array<i64: 1, 16>}, {pipeline_mode = #tpu.pipeline_mode<synchronous>, transform_indices = @transform_16, window_bounds = array<i64: 1, 16>}, {pipeline_mode = #tpu.pipeline_mode<synchronous>, transform_indices = @transform_17, window_bounds = array<i64: 128, 8>}, {pipeline_mode = #tpu.pipeline_mode<synchronous>, transform_indices = @transform_18, window_bounds = array<i64: 1, 8>}, {transform_indices = @transform_19, window_bounds = array<i64: 8, 8>}]} {
    %c0 = arith.constant 0 : index
    %c0_0 = arith.constant 0 : index
    %0 = vector.load %arg1[%c0, %c0_0] : memref<64x8xf32, #tpu.memory_space<vmem>>, vector<64x8xf32>
    %c0_1 = arith.constant 0 : index
    %c0_2 = arith.constant 0 : index
    %1 = vector.load %arg2[%c0_1, %c0_2] : memref<8x16xf32, #tpu.memory_space<vmem>>, vector<8x16xf32>
    %cst = arith.constant dense<0.000000e+00> : vector<64x16xf32>
    %2 = tpu.matmul %0, %1, %cst {dimension_numbers = #tpu.dot_dimension_numbers<[1], [0], [0], [1], [0, 0, 1, 1], [], []>} : vector<64x8xf32>, vector<8x16xf32>, vector<64x16xf32> -> vector<64x16xf32>
    %c0_3 = arith.constant 0 : index
    %c0_4 = arith.constant 0 : index
    %3 = vector.load %arg3[%c0_3, %c0_4] : memref<64x16xf32, #tpu.memory_space<vmem>>, vector<64x16xf32>
    %4 = arith.addf %2, %3 : vector<64x16xf32>
    %c0_5 = arith.constant 0 : index
    %c0_6 = arith.constant 0 : index
    %c0_7 = arith.constant 0 : index
    %5 = vector.load %arg4[%c0_5, %c0_6, %c0_7] : memref<2x16x48xf32, #tpu.memory_space<vmem>>, vector<1x16x48xf32>
    %6 = vector.shape_cast %5 : vector<1x16x48xf32> to vector<16x48xf32>
    %c0_8 = arith.constant 0 : index
    %c0_9 = arith.constant 0 : index
    %c0_10 = arith.constant 0 : index
    %7 = vector.load %arg6[%c0_8, %c0_9, %c0_10] : memref<2x16x16xf32, #tpu.memory_space<vmem>>, vector<1x16x16xf32>
    %8 = vector.shape_cast %7 : vector<1x16x16xf32> to vector<16x16xf32>
    %cst_11 = arith.constant dense<0.000000e+00> : vector<64x48xf32>
    %9 = tpu.matmul %4, %6, %cst_11 {dimension_numbers = #tpu.dot_dimension_numbers<[1], [0], [0], [1], [0, 0, 1, 1], [], []>} : vector<64x16xf32>, vector<16x48xf32>, vector<64x48xf32> -> vector<64x48xf32>
    %c0_12 = arith.constant 0 : index
    %c0_13 = arith.constant 0 : index
    %c0_14 = arith.constant 0 : index
    %10 = vector.load %arg5[%c0_12, %c0_13, %c0_14] : memref<2x1x48xf32, #tpu.memory_space<vmem>>, vector<1x1x48xf32>
    %11 = vector.shape_cast %10 : vector<1x1x48xf32> to vector<1x48xf32>
    %12 = vector.broadcast %11 : vector<1x48xf32> to vector<64x48xf32>
    %13 = arith.addf %9, %12 : vector<64x48xf32>
    %cst_15 = arith.constant 0.000000e+00 : f32
    %14 = vector.broadcast %cst_15 : f32 to vector<64x16xf32>
    %15 = vector.extract_strided_slice %13 {offsets = [0, 0], sizes = [64, 8], strides = [1, 1]} : vector<64x48xf32> to vector<64x8xf32>
    %16 = vector.shape_cast %15 : vector<64x8xf32> to vector<8x8x8xf32>
    %17 = vector.extract_strided_slice %13 {offsets = [0, 16], sizes = [64, 8], strides = [1, 1]} : vector<64x48xf32> to vector<64x8xf32>
    %18 = vector.shape_cast %17 : vector<64x8xf32> to vector<8x8x8xf32>
    %19 = vector.extract_strided_slice %13 {offsets = [0, 32], sizes = [64, 8], strides = [1, 1]} : vector<64x48xf32> to vector<64x8xf32>
    %20 = vector.shape_cast %19 : vector<64x8xf32> to vector<8x8x8xf32>
    %cst_16 = arith.constant dense<0.000000e+00> : vector<8x8x8xf32>
    %21 = tpu.matmul %16, %18, %cst_16 {dimension_numbers = #tpu.dot_dimension_numbers<[2], [2], [1], [1], [0, 0, 0, 1, 1, 1], [0], [0]>} : vector<8x8x8xf32>, vector<8x8x8xf32>, vector<8x8x8xf32> -> vector<8x8x8xf32>
    %cst_17 = arith.constant 0.353553385 : f32
    %22 = vector.broadcast %cst_17 : f32 to vector<8x8x8xf32>
    %23 = arith.mulf %21, %22 : vector<8x8x8xf32>
    %cst_18 = arith.constant dense<0xFF800000> : vector<8x8xf32>
    %24 = vector.multi_reduction <maximumf>, %23, %cst_18 [2] : vector<8x8x8xf32> to vector<8x8xf32>
    %25 = vector.shape_cast %24 : vector<8x8xf32> to vector<8x8x1xf32>
    %26 = vector.broadcast %25 : vector<8x8x1xf32> to vector<8x8x8xf32>
    %27 = arith.subf %23, %26 : vector<8x8x8xf32>
    %28 = math.exp %27 : vector<8x8x8xf32>
    %cst_19 = arith.constant dense<0.000000e+00> : vector<8x8xf32>
    %29 = vector.multi_reduction <add>, %28, %cst_19 [2] : vector<8x8x8xf32> to vector<8x8xf32>
    %30 = vector.shape_cast %29 : vector<8x8xf32> to vector<8x8x1xf32>
    %31 = vector.broadcast %30 : vector<8x8x1xf32> to vector<8x8x8xf32>
    %32 = arith.divf %28, %31 : vector<8x8x8xf32>
    %cst_20 = arith.constant dense<0.000000e+00> : vector<8x8x8xf32>
    %33 = tpu.matmul %32, %20, %cst_20 {dimension_numbers = #tpu.dot_dimension_numbers<[2], [1], [1], [2], [0, 0, 0, 1, 1, 2], [0], [0]>} : vector<8x8x8xf32>, vector<8x8x8xf32>, vector<8x8x8xf32> -> vector<8x8x8xf32>
    %34 = vector.shape_cast %33 : vector<8x8x8xf32> to vector<64x8xf32>
    %35 = vector.extract_strided_slice %8 {offsets = [0, 0], sizes = [8, 16], strides = [1, 1]} : vector<16x16xf32> to vector<8x16xf32>
    %cst_21 = arith.constant dense<0.000000e+00> : vector<64x16xf32>
    %36 = tpu.matmul %34, %35, %cst_21 {dimension_numbers = #tpu.dot_dimension_numbers<[1], [0], [0], [1], [0, 0, 1, 1], [], []>} : vector<64x8xf32>, vector<8x16xf32>, vector<64x16xf32> -> vector<64x16xf32>
    %37 = arith.addf %14, %36 : vector<64x16xf32>
    %38 = vector.extract_strided_slice %13 {offsets = [0, 8], sizes = [64, 8], strides = [1, 1]} : vector<64x48xf32> to vector<64x8xf32>
    %39 = vector.shape_cast %38 : vector<64x8xf32> to vector<8x8x8xf32>
    %40 = vector.extract_strided_slice %13 {offsets = [0, 24], sizes = [64, 8], strides = [1, 1]} : vector<64x48xf32> to vector<64x8xf32>
    %41 = vector.shape_cast %40 : vector<64x8xf32> to vector<8x8x8xf32>
    %42 = vector.extract_strided_slice %13 {offsets = [0, 40], sizes = [64, 8], strides = [1, 1]} : vector<64x48xf32> to vector<64x8xf32>
    %43 = vector.shape_cast %42 : vector<64x8xf32> to vector<8x8x8xf32>
    %cst_22 = arith.constant dense<0.000000e+00> : vector<8x8x8xf32>
    %44 = tpu.matmul %39, %41, %cst_22 {dimension_numbers = #tpu.dot_dimension_numbers<[2], [2], [1], [1], [0, 0, 0, 1, 1, 1], [0], [0]>} : vector<8x8x8xf32>, vector<8x8x8xf32>, vector<8x8x8xf32> -> vector<8x8x8xf32>
    %cst_23 = arith.constant 0.353553385 : f32
    %45 = vector.broadcast %cst_23 : f32 to vector<8x8x8xf32>
    %46 = arith.mulf %44, %45 : vector<8x8x8xf32>
    %cst_24 = arith.constant dense<0xFF800000> : vector<8x8xf32>
    %47 = vector.multi_reduction <maximumf>, %46, %cst_24 [2] : vector<8x8x8xf32> to vector<8x8xf32>
    %48 = vector.shape_cast %47 : vector<8x8xf32> to vector<8x8x1xf32>
    %49 = vector.broadcast %48 : vector<8x8x1xf32> to vector<8x8x8xf32>
    %50 = arith.subf %46, %49 : vector<8x8x8xf32>
    %51 = math.exp %50 : vector<8x8x8xf32>
    %cst_25 = arith.constant dense<0.000000e+00> : vector<8x8xf32>
    %52 = vector.multi_reduction <add>, %51, %cst_25 [2] : vector<8x8x8xf32> to vector<8x8xf32>
    %53 = vector.shape_cast %52 : vector<8x8xf32> to vector<8x8x1xf32>
    %54 = vector.broadcast %53 : vector<8x8x1xf32> to vector<8x8x8xf32>
    %55 = arith.divf %51, %54 : vector<8x8x8xf32>
    %cst_26 = arith.constant dense<0.000000e+00> : vector<8x8x8xf32>
    %56 = tpu.matmul %55, %43, %cst_26 {dimension_numbers = #tpu.dot_dimension_numbers<[2], [1], [1], [2], [0, 0, 0, 1, 1, 2], [0], [0]>} : vector<8x8x8xf32>, vector<8x8x8xf32>, vector<8x8x8xf32> -> vector<8x8x8xf32>
    %57 = vector.shape_cast %56 : vector<8x8x8xf32> to vector<64x8xf32>
    %58 = vector.extract_strided_slice %8 {offsets = [8, 0], sizes = [8, 16], strides = [1, 1]} : vector<16x16xf32> to vector<8x16xf32>
    %cst_27 = arith.constant dense<0.000000e+00> : vector<64x16xf32>
    %59 = tpu.matmul %57, %58, %cst_27 {dimension_numbers = #tpu.dot_dimension_numbers<[1], [0], [0], [1], [0, 0, 1, 1], [], []>} : vector<64x8xf32>, vector<8x16xf32>, vector<64x16xf32> -> vector<64x16xf32>
    %60 = arith.addf %37, %59 : vector<64x16xf32>
    %c0_28 = arith.constant 0 : index
    %c0_29 = arith.constant 0 : index
    %c0_30 = arith.constant 0 : index
    %61 = vector.load %arg7[%c0_28, %c0_29, %c0_30] : memref<2x1x16xf32, #tpu.memory_space<vmem>>, vector<1x1x16xf32>
    %62 = vector.shape_cast %61 : vector<1x1x16xf32> to vector<1x16xf32>
    %63 = vector.broadcast %62 : vector<1x16xf32> to vector<64x16xf32>
    %64 = arith.addf %60, %63 : vector<64x16xf32>
    %65 = arith.addf %4, %64 : vector<64x16xf32>
    %c0_31 = arith.constant 0 : index
    %c0_32 = arith.constant 0 : index
    %c0_33 = arith.constant 0 : index
    %66 = vector.load %arg8[%c0_31, %c0_32, %c0_33] : memref<2x1x16xf32, #tpu.memory_space<vmem>>, vector<1x1x16xf32>
    %67 = vector.shape_cast %66 : vector<1x1x16xf32> to vector<1x16xf32>
    %c0_34 = arith.constant 0 : index
    %c0_35 = arith.constant 0 : index
    %c0_36 = arith.constant 0 : index
    %68 = vector.load %arg9[%c0_34, %c0_35, %c0_36] : memref<2x1x16xf32, #tpu.memory_space<vmem>>, vector<1x1x16xf32>
    %69 = vector.shape_cast %68 : vector<1x1x16xf32> to vector<1x16xf32>
    %cst_37 = arith.constant dense<0.000000e+00> : vector<64xf32>
    %70 = vector.multi_reduction <add>, %65, %cst_37 [1] : vector<64x16xf32> to vector<64xf32>
    %71 = vector.shape_cast %70 : vector<64xf32> to vector<64x1xf32>
    %cst_38 = arith.constant 1.600000e+01 : f32
    %72 = vector.broadcast %cst_38 : f32 to vector<64x1xf32>
    %73 = arith.divf %71, %72 : vector<64x1xf32>
    %74 = vector.broadcast %73 : vector<64x1xf32> to vector<64x16xf32>
    %75 = arith.subf %65, %74 : vector<64x16xf32>
    %76 = arith.mulf %75, %75 : vector<64x16xf32>
    %cst_39 = arith.constant dense<0.000000e+00> : vector<64xf32>
    %77 = vector.multi_reduction <add>, %76, %cst_39 [1] : vector<64x16xf32> to vector<64xf32>
    %78 = vector.shape_cast %77 : vector<64xf32> to vector<64x1xf32>
    %cst_40 = arith.constant 1.600000e+01 : f32
    %79 = vector.broadcast %cst_40 : f32 to vector<64x1xf32>
    %80 = arith.divf %78, %79 : vector<64x1xf32>
    %cst_41 = arith.constant 9.99999974E-6 : f32
    %81 = vector.broadcast %cst_41 : f32 to vector<64x1xf32>
    %82 = arith.addf %80, %81 : vector<64x1xf32>
    %83 = math.rsqrt %82 : vector<64x1xf32>
    %84 = vector.broadcast %83 : vector<64x1xf32> to vector<64x16xf32>
    %85 = arith.mulf %75, %84 : vector<64x16xf32>
    %86 = vector.broadcast %67 : vector<1x16xf32> to vector<64x16xf32>
    %87 = arith.mulf %85, %86 : vector<64x16xf32>
    %88 = vector.broadcast %69 : vector<1x16xf32> to vector<64x16xf32>
    %89 = arith.addf %87, %88 : vector<64x16xf32>
    %c0_42 = arith.constant 0 : index
    %c0_43 = arith.constant 0 : index
    %c0_44 = arith.constant 0 : index
    %90 = vector.load %arg10[%c0_42, %c0_43, %c0_44] : memref<2x16x32xf32, #tpu.memory_space<vmem>>, vector<1x16x32xf32>
    %91 = vector.shape_cast %90 : vector<1x16x32xf32> to vector<16x32xf32>
    %cst_45 = arith.constant dense<0.000000e+00> : vector<64x32xf32>
    %92 = tpu.matmul %89, %91, %cst_45 {dimension_numbers = #tpu.dot_dimension_numbers<[1], [0], [0], [1], [0, 0, 1, 1], [], []>} : vector<64x16xf32>, vector<16x32xf32>, vector<64x32xf32> -> vector<64x32xf32>
    %c0_46 = arith.constant 0 : index
    %c0_47 = arith.constant 0 : index
    %c0_48 = arith.constant 0 : index
    %93 = vector.load %arg11[%c0_46, %c0_47, %c0_48] : memref<2x1x32xf32, #tpu.memory_space<vmem>>, vector<1x1x32xf32>
    %94 = vector.shape_cast %93 : vector<1x1x32xf32> to vector<1x32xf32>
    %95 = vector.broadcast %94 : vector<1x32xf32> to vector<64x32xf32>
    %96 = arith.addf %92, %95 : vector<64x32xf32>
    %cst_49 = arith.constant 0.000000e+00 : f32
    %97 = vector.broadcast %cst_49 : f32 to vector<64x32xf32>
    %98 = arith.maximumf %96, %97 : vector<64x32xf32>
    %c0_50 = arith.constant 0 : index
    %c0_51 = arith.constant 0 : index
    %c0_52 = arith.constant 0 : index
    %99 = vector.load %arg12[%c0_50, %c0_51, %c0_52] : memref<2x32x16xf32, #tpu.memory_space<vmem>>, vector<1x32x16xf32>
    %100 = vector.shape_cast %99 : vector<1x32x16xf32> to vector<32x16xf32>
    %cst_53 = arith.constant dense<0.000000e+00> : vector<64x16xf32>
    %101 = tpu.matmul %98, %100, %cst_53 {dimension_numbers = #tpu.dot_dimension_numbers<[1], [0], [0], [1], [0, 0, 1, 1], [], []>} : vector<64x32xf32>, vector<32x16xf32>, vector<64x16xf32> -> vector<64x16xf32>
    %c0_54 = arith.constant 0 : index
    %c0_55 = arith.constant 0 : index
    %c0_56 = arith.constant 0 : index
    %102 = vector.load %arg13[%c0_54, %c0_55, %c0_56] : memref<2x1x16xf32, #tpu.memory_space<vmem>>, vector<1x1x16xf32>
    %103 = vector.shape_cast %102 : vector<1x1x16xf32> to vector<1x16xf32>
    %104 = vector.broadcast %103 : vector<1x16xf32> to vector<64x16xf32>
    %105 = arith.addf %101, %104 : vector<64x16xf32>
    %106 = arith.addf %89, %105 : vector<64x16xf32>
    %c0_57 = arith.constant 0 : index
    %c0_58 = arith.constant 0 : index
    %c0_59 = arith.constant 0 : index
    %107 = vector.load %arg14[%c0_57, %c0_58, %c0_59] : memref<2x1x16xf32, #tpu.memory_space<vmem>>, vector<1x1x16xf32>
    %108 = vector.shape_cast %107 : vector<1x1x16xf32> to vector<1x16xf32>
    %c0_60 = arith.constant 0 : index
    %c0_61 = arith.constant 0 : index
    %c0_62 = arith.constant 0 : index
    %109 = vector.load %arg15[%c0_60, %c0_61, %c0_62] : memref<2x1x16xf32, #tpu.memory_space<vmem>>, vector<1x1x16xf32>
    %110 = vector.shape_cast %109 : vector<1x1x16xf32> to vector<1x16xf32>
    %cst_63 = arith.constant dense<0.000000e+00> : vector<64xf32>
    %111 = vector.multi_reduction <add>, %106, %cst_63 [1] : vector<64x16xf32> to vector<64xf32>
    %112 = vector.shape_cast %111 : vector<64xf32> to vector<64x1xf32>
    %cst_64 = arith.constant 1.600000e+01 : f32
    %113 = vector.broadcast %cst_64 : f32 to vector<64x1xf32>
    %114 = arith.divf %112, %113 : vector<64x1xf32>
    %115 = vector.broadcast %114 : vector<64x1xf32> to vector<64x16xf32>
    %116 = arith.subf %106, %115 : vector<64x16xf32>
    %117 = arith.mulf %116, %116 : vector<64x16xf32>
    %cst_65 = arith.constant dense<0.000000e+00> : vector<64xf32>
    %118 = vector.multi_reduction <add>, %117, %cst_65 [1] : vector<64x16xf32> to vector<64xf32>
    %119 = vector.shape_cast %118 : vector<64xf32> to vector<64x1xf32>
    %cst_66 = arith.constant 1.600000e+01 : f32
    %120 = vector.broadcast %cst_66 : f32 to vector<64x1xf32>
    %121 = arith.divf %119, %120 : vector<64x1xf32>
    %cst_67 = arith.constant 9.99999974E-6 : f32
    %122 = vector.broadcast %cst_67 : f32 to vector<64x1xf32>
    %123 = arith.addf %121, %122 : vector<64x1xf32>
    %124 = math.rsqrt %123 : vector<64x1xf32>
    %125 = vector.broadcast %124 : vector<64x1xf32> to vector<64x16xf32>
    %126 = arith.mulf %116, %125 : vector<64x16xf32>
    %127 = vector.broadcast %108 : vector<1x16xf32> to vector<64x16xf32>
    %128 = arith.mulf %126, %127 : vector<64x16xf32>
    %129 = vector.broadcast %110 : vector<1x16xf32> to vector<64x16xf32>
    %130 = arith.addf %128, %129 : vector<64x16xf32>
    %c1 = arith.constant 1 : index
    %c0_68 = arith.constant 0 : index
    %c0_69 = arith.constant 0 : index
    %131 = vector.load %arg4[%c1, %c0_68, %c0_69] : memref<2x16x48xf32, #tpu.memory_space<vmem>>, vector<1x16x48xf32>
    %132 = vector.shape_cast %131 : vector<1x16x48xf32> to vector<16x48xf32>
    %c1_70 = arith.constant 1 : index
    %c0_71 = arith.constant 0 : index
    %c0_72 = arith.constant 0 : index
    %133 = vector.load %arg6[%c1_70, %c0_71, %c0_72] : memref<2x16x16xf32, #tpu.memory_space<vmem>>, vector<1x16x16xf32>
    %134 = vector.shape_cast %133 : vector<1x16x16xf32> to vector<16x16xf32>
    %cst_73 = arith.constant dense<0.000000e+00> : vector<64x48xf32>
    %135 = tpu.matmul %130, %132, %cst_73 {dimension_numbers = #tpu.dot_dimension_numbers<[1], [0], [0], [1], [0, 0, 1, 1], [], []>} : vector<64x16xf32>, vector<16x48xf32>, vector<64x48xf32> -> vector<64x48xf32>
    %c1_74 = arith.constant 1 : index
    %c0_75 = arith.constant 0 : index
    %c0_76 = arith.constant 0 : index
    %136 = vector.load %arg5[%c1_74, %c0_75, %c0_76] : memref<2x1x48xf32, #tpu.memory_space<vmem>>, vector<1x1x48xf32>
    %137 = vector.shape_cast %136 : vector<1x1x48xf32> to vector<1x48xf32>
    %138 = vector.broadcast %137 : vector<1x48xf32> to vector<64x48xf32>
    %139 = arith.addf %135, %138 : vector<64x48xf32>
    %cst_77 = arith.constant 0.000000e+00 : f32
    %140 = vector.broadcast %cst_77 : f32 to vector<64x16xf32>
    %141 = vector.extract_strided_slice %139 {offsets = [0, 0], sizes = [64, 8], strides = [1, 1]} : vector<64x48xf32> to vector<64x8xf32>
    %142 = vector.shape_cast %141 : vector<64x8xf32> to vector<8x8x8xf32>
    %143 = vector.extract_strided_slice %139 {offsets = [0, 16], sizes = [64, 8], strides = [1, 1]} : vector<64x48xf32> to vector<64x8xf32>
    %144 = vector.shape_cast %143 : vector<64x8xf32> to vector<8x8x8xf32>
    %145 = vector.extract_strided_slice %139 {offsets = [0, 32], sizes = [64, 8], strides = [1, 1]} : vector<64x48xf32> to vector<64x8xf32>
    %146 = vector.shape_cast %145 : vector<64x8xf32> to vector<8x8x8xf32>
    %cst_78 = arith.constant dense<0.000000e+00> : vector<8x8x8xf32>
    %147 = tpu.matmul %142, %144, %cst_78 {dimension_numbers = #tpu.dot_dimension_numbers<[2], [2], [1], [1], [0, 0, 0, 1, 1, 1], [0], [0]>} : vector<8x8x8xf32>, vector<8x8x8xf32>, vector<8x8x8xf32> -> vector<8x8x8xf32>
    %cst_79 = arith.constant 0.353553385 : f32
    %148 = vector.broadcast %cst_79 : f32 to vector<8x8x8xf32>
    %149 = arith.mulf %147, %148 : vector<8x8x8xf32>
    %cst_80 = arith.constant dense<0xFF800000> : vector<8x8xf32>
    %150 = vector.multi_reduction <maximumf>, %149, %cst_80 [2] : vector<8x8x8xf32> to vector<8x8xf32>
    %151 = vector.shape_cast %150 : vector<8x8xf32> to vector<8x8x1xf32>
    %152 = vector.broadcast %151 : vector<8x8x1xf32> to vector<8x8x8xf32>
    %153 = arith.subf %149, %152 : vector<8x8x8xf32>
    %154 = math.exp %153 : vector<8x8x8xf32>
    %cst_81 = arith.constant dense<0.000000e+00> : vector<8x8xf32>
    %155 = vector.multi_reduction <add>, %154, %cst_81 [2] : vector<8x8x8xf32> to vector<8x8xf32>
    %156 = vector.shape_cast %155 : vector<8x8xf32> to vector<8x8x1xf32>
    %157 = vector.broadcast %156 : vector<8x8x1xf32> to vector<8x8x8xf32>
    %158 = arith.divf %154, %157 : vector<8x8x8xf32>
    %cst_82 = arith.constant dense<0.000000e+00> : vector<8x8x8xf32>
    %159 = tpu.matmul %158, %146, %cst_82 {dimension_numbers = #tpu.dot_dimension_numbers<[2], [1], [1], [2], [0, 0, 0, 1, 1, 2], [0], [0]>} : vector<8x8x8xf32>, vector<8x8x8xf32>, vector<8x8x8xf32> -> vector<8x8x8xf32>
    %160 = vector.shape_cast %159 : vector<8x8x8xf32> to vector<64x8xf32>
    %161 = vector.extract_strided_slice %134 {offsets = [0, 0], sizes = [8, 16], strides = [1, 1]} : vector<16x16xf32> to vector<8x16xf32>
    %cst_83 = arith.constant dense<0.000000e+00> : vector<64x16xf32>
    %162 = tpu.matmul %160, %161, %cst_83 {dimension_numbers = #tpu.dot_dimension_numbers<[1], [0], [0], [1], [0, 0, 1, 1], [], []>} : vector<64x8xf32>, vector<8x16xf32>, vector<64x16xf32> -> vector<64x16xf32>
    %163 = arith.addf %140, %162 : vector<64x16xf32>
    %164 = vector.extract_strided_slice %139 {offsets = [0, 8], sizes = [64, 8], strides = [1, 1]} : vector<64x48xf32> to vector<64x8xf32>
    %165 = vector.shape_cast %164 : vector<64x8xf32> to vector<8x8x8xf32>
    %166 = vector.extract_strided_slice %139 {offsets = [0, 24], sizes = [64, 8], strides = [1, 1]} : vector<64x48xf32> to vector<64x8xf32>
    %167 = vector.shape_cast %166 : vector<64x8xf32> to vector<8x8x8xf32>
    %168 = vector.extract_strided_slice %139 {offsets = [0, 40], sizes = [64, 8], strides = [1, 1]} : vector<64x48xf32> to vector<64x8xf32>
    %169 = vector.shape_cast %168 : vector<64x8xf32> to vector<8x8x8xf32>
    %cst_84 = arith.constant dense<0.000000e+00> : vector<8x8x8xf32>
    %170 = tpu.matmul %165, %167, %cst_84 {dimension_numbers = #tpu.dot_dimension_numbers<[2], [2], [1], [1], [0, 0, 0, 1, 1, 1], [0], [0]>} : vector<8x8x8xf32>, vector<8x8x8xf32>, vector<8x8x8xf32> -> vector<8x8x8xf32>
    %cst_85 = arith.constant 0.353553385 : f32
    %171 = vector.broadcast %cst_85 : f32 to vector<8x8x8xf32>
    %172 = arith.mulf %170, %171 : vector<8x8x8xf32>
    %cst_86 = arith.constant dense<0xFF800000> : vector<8x8xf32>
    %173 = vector.multi_reduction <maximumf>, %172, %cst_86 [2] : vector<8x8x8xf32> to vector<8x8xf32>
    %174 = vector.shape_cast %173 : vector<8x8xf32> to vector<8x8x1xf32>
    %175 = vector.broadcast %174 : vector<8x8x1xf32> to vector<8x8x8xf32>
    %176 = arith.subf %172, %175 : vector<8x8x8xf32>
    %177 = math.exp %176 : vector<8x8x8xf32>
    %cst_87 = arith.constant dense<0.000000e+00> : vector<8x8xf32>
    %178 = vector.multi_reduction <add>, %177, %cst_87 [2] : vector<8x8x8xf32> to vector<8x8xf32>
    %179 = vector.shape_cast %178 : vector<8x8xf32> to vector<8x8x1xf32>
    %180 = vector.broadcast %179 : vector<8x8x1xf32> to vector<8x8x8xf32>
    %181 = arith.divf %177, %180 : vector<8x8x8xf32>
    %cst_88 = arith.constant dense<0.000000e+00> : vector<8x8x8xf32>
    %182 = tpu.matmul %181, %169, %cst_88 {dimension_numbers = #tpu.dot_dimension_numbers<[2], [1], [1], [2], [0, 0, 0, 1, 1, 2], [0], [0]>} : vector<8x8x8xf32>, vector<8x8x8xf32>, vector<8x8x8xf32> -> vector<8x8x8xf32>
    %183 = vector.shape_cast %182 : vector<8x8x8xf32> to vector<64x8xf32>
    %184 = vector.extract_strided_slice %134 {offsets = [8, 0], sizes = [8, 16], strides = [1, 1]} : vector<16x16xf32> to vector<8x16xf32>
    %cst_89 = arith.constant dense<0.000000e+00> : vector<64x16xf32>
    %185 = tpu.matmul %183, %184, %cst_89 {dimension_numbers = #tpu.dot_dimension_numbers<[1], [0], [0], [1], [0, 0, 1, 1], [], []>} : vector<64x8xf32>, vector<8x16xf32>, vector<64x16xf32> -> vector<64x16xf32>
    %186 = arith.addf %163, %185 : vector<64x16xf32>
    %c1_90 = arith.constant 1 : index
    %c0_91 = arith.constant 0 : index
    %c0_92 = arith.constant 0 : index
    %187 = vector.load %arg7[%c1_90, %c0_91, %c0_92] : memref<2x1x16xf32, #tpu.memory_space<vmem>>, vector<1x1x16xf32>
    %188 = vector.shape_cast %187 : vector<1x1x16xf32> to vector<1x16xf32>
    %189 = vector.broadcast %188 : vector<1x16xf32> to vector<64x16xf32>
    %190 = arith.addf %186, %189 : vector<64x16xf32>
    %191 = arith.addf %130, %190 : vector<64x16xf32>
    %c1_93 = arith.constant 1 : index
    %c0_94 = arith.constant 0 : index
    %c0_95 = arith.constant 0 : index
    %192 = vector.load %arg8[%c1_93, %c0_94, %c0_95] : memref<2x1x16xf32, #tpu.memory_space<vmem>>, vector<1x1x16xf32>
    %193 = vector.shape_cast %192 : vector<1x1x16xf32> to vector<1x16xf32>
    %c1_96 = arith.constant 1 : index
    %c0_97 = arith.constant 0 : index
    %c0_98 = arith.constant 0 : index
    %194 = vector.load %arg9[%c1_96, %c0_97, %c0_98] : memref<2x1x16xf32, #tpu.memory_space<vmem>>, vector<1x1x16xf32>
    %195 = vector.shape_cast %194 : vector<1x1x16xf32> to vector<1x16xf32>
    %cst_99 = arith.constant dense<0.000000e+00> : vector<64xf32>
    %196 = vector.multi_reduction <add>, %191, %cst_99 [1] : vector<64x16xf32> to vector<64xf32>
    %197 = vector.shape_cast %196 : vector<64xf32> to vector<64x1xf32>
    %cst_100 = arith.constant 1.600000e+01 : f32
    %198 = vector.broadcast %cst_100 : f32 to vector<64x1xf32>
    %199 = arith.divf %197, %198 : vector<64x1xf32>
    %200 = vector.broadcast %199 : vector<64x1xf32> to vector<64x16xf32>
    %201 = arith.subf %191, %200 : vector<64x16xf32>
    %202 = arith.mulf %201, %201 : vector<64x16xf32>
    %cst_101 = arith.constant dense<0.000000e+00> : vector<64xf32>
    %203 = vector.multi_reduction <add>, %202, %cst_101 [1] : vector<64x16xf32> to vector<64xf32>
    %204 = vector.shape_cast %203 : vector<64xf32> to vector<64x1xf32>
    %cst_102 = arith.constant 1.600000e+01 : f32
    %205 = vector.broadcast %cst_102 : f32 to vector<64x1xf32>
    %206 = arith.divf %204, %205 : vector<64x1xf32>
    %cst_103 = arith.constant 9.99999974E-6 : f32
    %207 = vector.broadcast %cst_103 : f32 to vector<64x1xf32>
    %208 = arith.addf %206, %207 : vector<64x1xf32>
    %209 = math.rsqrt %208 : vector<64x1xf32>
    %210 = vector.broadcast %209 : vector<64x1xf32> to vector<64x16xf32>
    %211 = arith.mulf %201, %210 : vector<64x16xf32>
    %212 = vector.broadcast %193 : vector<1x16xf32> to vector<64x16xf32>
    %213 = arith.mulf %211, %212 : vector<64x16xf32>
    %214 = vector.broadcast %195 : vector<1x16xf32> to vector<64x16xf32>
    %215 = arith.addf %213, %214 : vector<64x16xf32>
    %c1_104 = arith.constant 1 : index
    %c0_105 = arith.constant 0 : index
    %c0_106 = arith.constant 0 : index
    %216 = vector.load %arg10[%c1_104, %c0_105, %c0_106] : memref<2x16x32xf32, #tpu.memory_space<vmem>>, vector<1x16x32xf32>
    %217 = vector.shape_cast %216 : vector<1x16x32xf32> to vector<16x32xf32>
    %cst_107 = arith.constant dense<0.000000e+00> : vector<64x32xf32>
    %218 = tpu.matmul %215, %217, %cst_107 {dimension_numbers = #tpu.dot_dimension_numbers<[1], [0], [0], [1], [0, 0, 1, 1], [], []>} : vector<64x16xf32>, vector<16x32xf32>, vector<64x32xf32> -> vector<64x32xf32>
    %c1_108 = arith.constant 1 : index
    %c0_109 = arith.constant 0 : index
    %c0_110 = arith.constant 0 : index
    %219 = vector.load %arg11[%c1_108, %c0_109, %c0_110] : memref<2x1x32xf32, #tpu.memory_space<vmem>>, vector<1x1x32xf32>
    %220 = vector.shape_cast %219 : vector<1x1x32xf32> to vector<1x32xf32>
    %221 = vector.broadcast %220 : vector<1x32xf32> to vector<64x32xf32>
    %222 = arith.addf %218, %221 : vector<64x32xf32>
    %cst_111 = arith.constant 0.000000e+00 : f32
    %223 = vector.broadcast %cst_111 : f32 to vector<64x32xf32>
    %224 = arith.maximumf %222, %223 : vector<64x32xf32>
    %c1_112 = arith.constant 1 : index
    %c0_113 = arith.constant 0 : index
    %c0_114 = arith.constant 0 : index
    %225 = vector.load %arg12[%c1_112, %c0_113, %c0_114] : memref<2x32x16xf32, #tpu.memory_space<vmem>>, vector<1x32x16xf32>
    %226 = vector.shape_cast %225 : vector<1x32x16xf32> to vector<32x16xf32>
    %cst_115 = arith.constant dense<0.000000e+00> : vector<64x16xf32>
    %227 = tpu.matmul %224, %226, %cst_115 {dimension_numbers = #tpu.dot_dimension_numbers<[1], [0], [0], [1], [0, 0, 1, 1], [], []>} : vector<64x32xf32>, vector<32x16xf32>, vector<64x16xf32> -> vector<64x16xf32>
    %c1_116 = arith.constant 1 : index
    %c0_117 = arith.constant 0 : index
    %c0_118 = arith.constant 0 : index
    %228 = vector.load %arg13[%c1_116, %c0_117, %c0_118] : memref<2x1x16xf32, #tpu.memory_space<vmem>>, vector<1x1x16xf32>
    %229 = vector.shape_cast %228 : vector<1x1x16xf32> to vector<1x16xf32>
    %230 = vector.broadcast %229 : vector<1x16xf32> to vector<64x16xf32>
    %231 = arith.addf %227, %230 : vector<64x16xf32>
    %232 = arith.addf %215, %231 : vector<64x16xf32>
    %c1_119 = arith.constant 1 : index
    %c0_120 = arith.constant 0 : index
    %c0_121 = arith.constant 0 : index
    %233 = vector.load %arg14[%c1_119, %c0_120, %c0_121] : memref<2x1x16xf32, #tpu.memory_space<vmem>>, vector<1x1x16xf32>
    %234 = vector.shape_cast %233 : vector<1x1x16xf32> to vector<1x16xf32>
    %c1_122 = arith.constant 1 : index
    %c0_123 = arith.constant 0 : index
    %c0_124 = arith.constant 0 : index
    %235 = vector.load %arg15[%c1_122, %c0_123, %c0_124] : memref<2x1x16xf32, #tpu.memory_space<vmem>>, vector<1x1x16xf32>
    %236 = vector.shape_cast %235 : vector<1x1x16xf32> to vector<1x16xf32>
    %cst_125 = arith.constant dense<0.000000e+00> : vector<64xf32>
    %237 = vector.multi_reduction <add>, %232, %cst_125 [1] : vector<64x16xf32> to vector<64xf32>
    %238 = vector.shape_cast %237 : vector<64xf32> to vector<64x1xf32>
    %cst_126 = arith.constant 1.600000e+01 : f32
    %239 = vector.broadcast %cst_126 : f32 to vector<64x1xf32>
    %240 = arith.divf %238, %239 : vector<64x1xf32>
    %241 = vector.broadcast %240 : vector<64x1xf32> to vector<64x16xf32>
    %242 = arith.subf %232, %241 : vector<64x16xf32>
    %243 = arith.mulf %242, %242 : vector<64x16xf32>
    %cst_127 = arith.constant dense<0.000000e+00> : vector<64xf32>
    %244 = vector.multi_reduction <add>, %243, %cst_127 [1] : vector<64x16xf32> to vector<64xf32>
    %245 = vector.shape_cast %244 : vector<64xf32> to vector<64x1xf32>
    %cst_128 = arith.constant 1.600000e+01 : f32
    %246 = vector.broadcast %cst_128 : f32 to vector<64x1xf32>
    %247 = arith.divf %245, %246 : vector<64x1xf32>
    %cst_129 = arith.constant 9.99999974E-6 : f32
    %248 = vector.broadcast %cst_129 : f32 to vector<64x1xf32>
    %249 = arith.addf %247, %248 : vector<64x1xf32>
    %250 = math.rsqrt %249 : vector<64x1xf32>
    %251 = vector.broadcast %250 : vector<64x1xf32> to vector<64x16xf32>
    %252 = arith.mulf %242, %251 : vector<64x16xf32>
    %253 = vector.broadcast %234 : vector<1x16xf32> to vector<64x16xf32>
    %254 = arith.mulf %252, %253 : vector<64x16xf32>
    %255 = vector.broadcast %236 : vector<1x16xf32> to vector<64x16xf32>
    %256 = arith.addf %254, %255 : vector<64x16xf32>
    %c0_130 = arith.constant 0 : index
    %c0_131 = arith.constant 0 : index
    %257 = vector.load %arg16[%c0_130, %c0_131] : memref<1x16xf32, #tpu.memory_space<vmem>>, vector<1x16xf32>
    %c0_132 = arith.constant 0 : index
    %c0_133 = arith.constant 0 : index
    %258 = vector.load %arg17[%c0_132, %c0_133] : memref<1x16xf32, #tpu.memory_space<vmem>>, vector<1x16xf32>
    %cst_134 = arith.constant dense<0.000000e+00> : vector<64xf32>
    %259 = vector.multi_reduction <add>, %256, %cst_134 [1] : vector<64x16xf32> to vector<64xf32>
    %260 = vector.shape_cast %259 : vector<64xf32> to vector<64x1xf32>
    %cst_135 = arith.constant 1.600000e+01 : f32
    %261 = vector.broadcast %cst_135 : f32 to vector<64x1xf32>
    %262 = arith.divf %260, %261 : vector<64x1xf32>
    %263 = vector.broadcast %262 : vector<64x1xf32> to vector<64x16xf32>
    %264 = arith.subf %256, %263 : vector<64x16xf32>
    %265 = arith.mulf %264, %264 : vector<64x16xf32>
    %cst_136 = arith.constant dense<0.000000e+00> : vector<64xf32>
    %266 = vector.multi_reduction <add>, %265, %cst_136 [1] : vector<64x16xf32> to vector<64xf32>
    %267 = vector.shape_cast %266 : vector<64xf32> to vector<64x1xf32>
    %cst_137 = arith.constant 1.600000e+01 : f32
    %268 = vector.broadcast %cst_137 : f32 to vector<64x1xf32>
    %269 = arith.divf %267, %268 : vector<64x1xf32>
    %cst_138 = arith.constant 9.99999974E-6 : f32
    %270 = vector.broadcast %cst_138 : f32 to vector<64x1xf32>
    %271 = arith.addf %269, %270 : vector<64x1xf32>
    %272 = math.rsqrt %271 : vector<64x1xf32>
    %273 = vector.broadcast %272 : vector<64x1xf32> to vector<64x16xf32>
    %274 = arith.mulf %264, %273 : vector<64x16xf32>
    %275 = vector.broadcast %257 : vector<1x16xf32> to vector<64x16xf32>
    %276 = arith.mulf %274, %275 : vector<64x16xf32>
    %277 = vector.broadcast %258 : vector<1x16xf32> to vector<64x16xf32>
    %278 = arith.addf %276, %277 : vector<64x16xf32>
    %279 = vector.shape_cast %278 : vector<64x16xf32> to vector<8x8x16xf32>
    %280 = vector.extract_strided_slice %279 {offsets = [0, 0, 0], sizes = [8, 1, 16], strides = [1, 1, 1]} : vector<8x8x16xf32> to vector<8x1x16xf32>
    %281 = vector.shape_cast %280 : vector<8x1x16xf32> to vector<8x16xf32>
    %282 = vector.extract_strided_slice %279 {offsets = [0, 1, 0], sizes = [8, 1, 16], strides = [1, 1, 1]} : vector<8x8x16xf32> to vector<8x1x16xf32>
    %283 = vector.shape_cast %282 : vector<8x1x16xf32> to vector<8x16xf32>
    %284 = vector.extract_strided_slice %279 {offsets = [0, 2, 0], sizes = [8, 1, 16], strides = [1, 1, 1]} : vector<8x8x16xf32> to vector<8x1x16xf32>
    %285 = vector.shape_cast %284 : vector<8x1x16xf32> to vector<8x16xf32>
    %286 = vector.extract_strided_slice %279 {offsets = [0, 3, 0], sizes = [8, 1, 16], strides = [1, 1, 1]} : vector<8x8x16xf32> to vector<8x1x16xf32>
    %287 = vector.shape_cast %286 : vector<8x1x16xf32> to vector<8x16xf32>
    %288 = vector.extract_strided_slice %279 {offsets = [0, 4, 0], sizes = [8, 1, 16], strides = [1, 1, 1]} : vector<8x8x16xf32> to vector<8x1x16xf32>
    %289 = vector.shape_cast %288 : vector<8x1x16xf32> to vector<8x16xf32>
    %290 = vector.extract_strided_slice %279 {offsets = [0, 5, 0], sizes = [8, 1, 16], strides = [1, 1, 1]} : vector<8x8x16xf32> to vector<8x1x16xf32>
    %291 = vector.shape_cast %290 : vector<8x1x16xf32> to vector<8x16xf32>
    %292 = vector.extract_strided_slice %279 {offsets = [0, 6, 0], sizes = [8, 1, 16], strides = [1, 1, 1]} : vector<8x8x16xf32> to vector<8x1x16xf32>
    %293 = vector.shape_cast %292 : vector<8x1x16xf32> to vector<8x16xf32>
    %294 = vector.extract_strided_slice %279 {offsets = [0, 7, 0], sizes = [8, 1, 16], strides = [1, 1, 1]} : vector<8x8x16xf32> to vector<8x1x16xf32>
    %295 = vector.shape_cast %294 : vector<8x1x16xf32> to vector<8x16xf32>
    %296 = tpu.concatenate %281, %283, %285, %287, %289, %291, %293, %295 in 1 : vector<8x16xf32>, vector<8x16xf32>, vector<8x16xf32>, vector<8x16xf32>, vector<8x16xf32>, vector<8x16xf32>, vector<8x16xf32>, vector<8x16xf32> -> vector<8x128xf32>
    %c0_139 = arith.constant 0 : index
    %c0_140 = arith.constant 0 : index
    %297 = vector.load %arg18[%c0_139, %c0_140] : memref<128x8xf32, #tpu.memory_space<vmem>>, vector<128x8xf32>
    %cst_141 = arith.constant dense<0.000000e+00> : vector<8x8xf32>
    %298 = tpu.matmul %296, %297, %cst_141 {dimension_numbers = #tpu.dot_dimension_numbers<[1], [0], [0], [1], [0, 0, 1, 1], [], []>} : vector<8x128xf32>, vector<128x8xf32>, vector<8x8xf32> -> vector<8x8xf32>
    %c0_142 = arith.constant 0 : index
    %c0_143 = arith.constant 0 : index
    %299 = vector.load %arg19[%c0_142, %c0_143] : memref<1x8xf32, #tpu.memory_space<vmem>>, vector<1x8xf32>
    %300 = vector.broadcast %299 : vector<1x8xf32> to vector<8x8xf32>
    %301 = arith.addf %298, %300 : vector<8x8xf32>
    %c0_144 = arith.constant 0 : index
    %c0_145 = arith.constant 0 : index
    %302 = vector.load %arg20[%c0_144, %c0_145] : memref<8x8xf32, #tpu.memory_space<vmem>>, vector<8x8xf32>
    tpu.vector_store %arg20[%c0_144, %c0_145], %301 {strides = array<i32>} : memref<8x8xf32, #tpu.memory_space<vmem>>, vector<8x8xf32>,
    return
  }
  func.func @transform_0(%arg0: i32) -> (i32, i32) {
    %c0_i32 = arith.constant 0 : i32
    %c0_i32_0 = arith.constant 0 : i32
    return %arg0, %c0_i32 : i32, i32
  }
  func.func @transform_1(%arg0: i32) -> (i32, i32) {
    %c0_i32 = arith.constant 0 : i32
    %c0_i32_0 = arith.constant 0 : i32
    %c0_i32_1 = arith.constant 0 : i32
    return %c0_i32, %c0_i32_0 : i32, i32
  }
  func.func @transform_2(%arg0: i32) -> (i32, i32) {
    %c0_i32 = arith.constant 0 : i32
    %c0_i32_0 = arith.constant 0 : i32
    return %arg0, %c0_i32 : i32, i32
  }
  func.func @transform_3(%arg0: i32) -> (i32, i32, i32) {
    %c0_i32 = arith.constant 0 : i32
    %c0_i32_0 = arith.constant 0 : i32
    %c0_i32_1 = arith.constant 0 : i32
    %c0_i32_2 = arith.constant 0 : i32
    return %c0_i32, %c0_i32_0, %c0_i32_1 : i32, i32, i32
  }
  func.func @transform_4(%arg0: i32) -> (i32, i32, i32) {
    %c0_i32 = arith.constant 0 : i32
    %c0_i32_0 = arith.constant 0 : i32
    %c0_i32_1 = arith.constant 0 : i32
    %c0_i32_2 = arith.constant 0 : i32
    return %c0_i32, %c0_i32_0, %c0_i32_1 : i32, i32, i32
  }
  func.func @transform_5(%arg0: i32) -> (i32, i32, i32) {
    %c0_i32 = arith.constant 0 : i32
    %c0_i32_0 = arith.constant 0 : i32
    %c0_i32_1 = arith.constant 0 : i32
    %c0_i32_2 = arith.constant 0 : i32
    return %c0_i32, %c0_i32_0, %c0_i32_1 : i32, i32, i32
  }
  func.func @transform_6(%arg0: i32) -> (i32, i32, i32) {
    %c0_i32 = arith.constant 0 : i32
    %c0_i32_0 = arith.constant 0 : i32
    %c0_i32_1 = arith.constant 0 : i32
    %c0_i32_2 = arith.constant 0 : i32
    return %c0_i32, %c0_i32_0, %c0_i32_1 : i32, i32, i32
  }
  func.func @transform_7(%arg0: i32) -> (i32, i32, i32) {
    %c0_i32 = arith.constant 0 : i32
    %c0_i32_0 = arith.constant 0 : i32
    %c0_i32_1 = arith.constant 0 : i32
    %c0_i32_2 = arith.constant 0 : i32
    return %c0_i32, %c0_i32_0, %c0_i32_1 : i32, i32, i32
  }
  func.func @transform_8(%arg0: i32) -> (i32, i32, i32) {
    %c0_i32 = arith.constant 0 : i32
    %c0_i32_0 = arith.constant 0 : i32
    %c0_i32_1 = arith.constant 0 : i32
    %c0_i32_2 = arith.constant 0 : i32
    return %c0_i32, %c0_i32_0, %c0_i32_1 : i32, i32, i32
  }
  func.func @transform_9(%arg0: i32) -> (i32, i32, i32) {
    %c0_i32 = arith.constant 0 : i32
    %c0_i32_0 = arith.constant 0 : i32
    %c0_i32_1 = arith.constant 0 : i32
    %c0_i32_2 = arith.constant 0 : i32
    return %c0_i32, %c0_i32_0, %c0_i32_1 : i32, i32, i32
  }
  func.func @transform_10(%arg0: i32) -> (i32, i32, i32) {
    %c0_i32 = arith.constant 0 : i32
    %c0_i32_0 = arith.constant 0 : i32
    %c0_i32_1 = arith.constant 0 : i32
    %c0_i32_2 = arith.constant 0 : i32
    return %c0_i32, %c0_i32_0, %c0_i32_1 : i32, i32, i32
  }
  func.func @transform_11(%arg0: i32) -> (i32, i32, i32) {
    %c0_i32 = arith.constant 0 : i32
    %c0_i32_0 = arith.constant 0 : i32
    %c0_i32_1 = arith.constant 0 : i32
    %c0_i32_2 = arith.constant 0 : i32
    return %c0_i32, %c0_i32_0, %c0_i32_1 : i32, i32, i32
  }
  func.func @transform_12(%arg0: i32) -> (i32, i32, i32) {
    %c0_i32 = arith.constant 0 : i32
    %c0_i32_0 = arith.constant 0 : i32
    %c0_i32_1 = arith.constant 0 : i32
    %c0_i32_2 = arith.constant 0 : i32
    return %c0_i32, %c0_i32_0, %c0_i32_1 : i32, i32, i32
  }
  func.func @transform_13(%arg0: i32) -> (i32, i32, i32) {
    %c0_i32 = arith.constant 0 : i32
    %c0_i32_0 = arith.constant 0 : i32
    %c0_i32_1 = arith.constant 0 : i32
    %c0_i32_2 = arith.constant 0 : i32
    return %c0_i32, %c0_i32_0, %c0_i32_1 : i32, i32, i32
  }
  func.func @transform_14(%arg0: i32) -> (i32, i32, i32) {
    %c0_i32 = arith.constant 0 : i32
    %c0_i32_0 = arith.constant 0 : i32
    %c0_i32_1 = arith.constant 0 : i32
    %c0_i32_2 = arith.constant 0 : i32
    return %c0_i32, %c0_i32_0, %c0_i32_1 : i32, i32, i32
  }
  func.func @transform_15(%arg0: i32) -> (i32, i32) {
    %c0_i32 = arith.constant 0 : i32
    %c0_i32_0 = arith.constant 0 : i32
    %c0_i32_1 = arith.constant 0 : i32
    return %c0_i32, %c0_i32_0 : i32, i32
  }
  func.func @transform_16(%arg0: i32) -> (i32, i32) {
    %c0_i32 = arith.constant 0 : i32
    %c0_i32_0 = arith.constant 0 : i32
    %c0_i32_1 = arith.constant 0 : i32
    return %c0_i32, %c0_i32_0 : i32, i32
  }
  func.func @transform_17(%arg0: i32) -> (i32, i32) {
    %c0_i32 = arith.constant 0 : i32
    %c0_i32_0 = arith.constant 0 : i32
    %c0_i32_1 = arith.constant 0 : i32
    return %c0_i32, %c0_i32_0 : i32, i32
  }
  func.func @transform_18(%arg0: i32) -> (i32, i32) {
    %c0_i32 = arith.constant 0 : i32
    %c0_i32_0 = arith.constant 0 : i32
    %c0_i32_1 = arith.constant 0 : i32
    return %c0_i32, %c0_i32_0 : i32, i32
  }
  func.func @transform_19(%arg0: i32) -> (i32, i32) {
    %c0_i32 = arith.constant 0 : i32
    %c0_i32_0 = arith.constant 0 : i32
    return %arg0, %c0_i32 : i32, i32
  }
}

</mosaic_0001>

<llo_original>
// kernel: _lambda_.1
$region0: #{_lambda_.1}
  #allocation0 [shape = 'u32[]', space=smem, size = 0x4, offset = 0x4, fixed_abs, tag = 'smem constant byte address 0x4 - core index']
  #allocation1 [shape = 'u32[144,128]{1,0:T(1,128)}', space=vmem, size = 0x12000, scoped, tag = 'internal scratch']
  %s0 = inlined_call_operand.vmem [shape: f32[64,8], index: 0, kind: input, shape index: {}]
  %s1 = inlined_call_operand.vmem [shape: f32[8,16], index: 1, kind: input, shape index: {}]
  %s2 = inlined_call_operand.vmem [shape: f32[64,16], index: 2, kind: input, shape index: {}]
  %s3 = inlined_call_operand.vmem [shape: f32[2,16,48], index: 3, kind: input, shape index: {}]
  %s4 = inlined_call_operand.vmem [shape: f32[2,1,48], index: 4, kind: input, shape index: {}]
  %s5 = inlined_call_operand.vmem [shape: f32[2,16,16], index: 5, kind: input, shape index: {}]
  %s6 = inlined_call_operand.vmem [shape: f32[2,1,16], index: 6, kind: input, shape index: {}]
  %s7 = inlined_call_operand.vmem [shape: f32[2,1,16], index: 7, kind: input, shape index: {}]
  %s8 = inlined_call_operand.vmem [shape: f32[2,1,16], index: 8, kind: input, shape index: {}]
  %s9 = inlined_call_operand.vmem [shape: f32[2,16,32], index: 9, kind: input, shape index: {}]
  %s10 = inlined_call_operand.vmem [shape: f32[2,1,32], index: 10, kind: input, shape index: {}]
  %s11 = inlined_call_operand.vmem [shape: f32[2,32,16], index: 11, kind: input, shape index: {}]
  %s12 = inlined_call_operand.vmem [shape: f32[2,1,16], index: 12, kind: input, shape index: {}]
  %s13 = inlined_call_operand.vmem [shape: f32[2,1,16], index: 13, kind: input, shape index: {}]
  %s14 = inlined_call_operand.vmem [shape: f32[2,1,16], index: 14, kind: input, shape index: {}]
  %s15 = inlined_call_operand.vmem [shape: f32[1,16], index: 15, kind: input, shape index: {}]
  %s16 = inlined_call_operand.vmem [shape: f32[1,16], index: 16, kind: input, shape index: {}]
  %s17 = inlined_call_operand.vmem [shape: f32[128,8], index: 17, kind: input, shape index: {}]
  %s18 = inlined_call_operand.vmem [shape: f32[1,8], index: 18, kind: input, shape index: {}]
  %s19 = inlined_call_operand.vmem [shape: f32[8,8], index: 19, kind: output, shape index: {}]
  %s20 = sld [smem:[#allocation0]]
  $region86: #{_lambda_.1} parent=0
    _
  %s22 = ssub.s32 1, %s20
  %s23 = scalar_select 0, %s22, %s20
  // Predicated region
  $region2: #{_lambda_.1} parent=0 // pred_check
    _
  $region3: #{_lambda_.1} parent=0 // pred_check_branch
    %25 = sbr.rel (0) target = $region5
  $region4: #{_lambda_.1} parent=0 // pred_region
    _
  $region5: #{_lambda_.1} parent=0 // pred_fallthru
    _
  // Predicated region
  $region6: #{_lambda_.1} parent=0 // pred_check
    _
  $region7: #{_lambda_.1} parent=0 // pred_check_branch
    %27 = sbr.rel (0) target = $region9
  $region8: #{_lambda_.1} parent=0 // pred_region
    _
  $region9: #{_lambda_.1} parent=0 // pred_fallthru
    _
  // Predicated region
  $region10: #{_lambda_.1} parent=0 // pred_check
    _
  $region11: #{_lambda_.1} parent=0 // pred_check_branch
    %29 = sbr.rel (0) target = $region13
  $region12: #{_lambda_.1} parent=0 // pred_region
    _
  $region13: #{_lambda_.1} parent=0 // pred_fallthru
    _
  // Predicated region
  $region14: #{_lambda_.1} parent=0 // pred_check
    _
  $region15: #{_lambda_.1} parent=0 // pred_check_branch
    %31 = sbr.rel (0) target = $region17
  $region16: #{_lambda_.1} parent=0 // pred_region
    _
  $region17: #{_lambda_.1} parent=0 // pred_fallthru
    _
  // Predicated region
  $region18: #{_lambda_.1} parent=0 // pred_check
    _
  $region19: #{_lambda_.1} parent=0 // pred_check_branch
    %33 = sbr.rel (0) target = $region21
  $region20: #{_lambda_.1} parent=0 // pred_region
    _
  $region21: #{_lambda_.1} parent=0 // pred_fallthru
    _
  // Predicated region
  $region22: #{_lambda_.1} parent=0 // pred_check
    _
  $region23: #{_lambda_.1} parent=0 // pred_check_branch
    %35 = sbr.rel (0) target = $region25
  $region24: #{_lambda_.1} parent=0 // pred_region
    _
  $region25: #{_lambda_.1} parent=0 // pred_fallthru
    _
  // Predicated region
  $region26: #{_lambda_.1} parent=0 // pred_check
    _
  $region27: #{_lambda_.1} parent=0 // pred_check_branch
    %37 = sbr.rel (0) target = $region29
  $region28: #{_lambda_.1} parent=0 // pred_region
    _
  $region29: #{_lambda_.1} parent=0 // pred_fallthru
    _
  // Predicated region
  $region30: #{_lambda_.1} parent=0 // pred_check
    _
  $region31: #{_lambda_.1} parent=0 // pred_check_branch
    %39 = sbr.rel (0) target = $region33
  $region32: #{_lambda_.1} parent=0 // pred_region
    _
  $region33: #{_lambda_.1} parent=0 // pred_fallthru
    _
  // Predicated region
  $region34: #{_lambda_.1} parent=0 // pred_check
    _
  $region35: #{_lambda_.1} parent=0 // pred_check_branch
    %41 = sbr.rel (0) target = $region37
  $region36: #{_lambda_.1} parent=0 // pred_region
    _
  $region37: #{_lambda_.1} parent=0 // pred_fallthru
    _
  // Predicated region
  $region38: #{_lambda_.1} parent=0 // pred_check
    _
  $region39: #{_lambda_.1} parent=0 // pred_check_branch
    %43 = sbr.rel (0) target = $region41
  $region40: #{_lambda_.1} parent=0 // pred_region
    _
  $region41: #{_lambda_.1} parent=0 // pred_fallthru
    _
  // Predicated region
  $region42: #{_lambda_.1} parent=0 // pred_check
    _
  $region43: #{_lambda_.1} parent=0 // pred_check_branch
    %45 = sbr.rel (0) target = $region45
  $region44: #{_lambda_.1} parent=0 // pred_region
    _
  $region45: #{_lambda_.1} parent=0 // pred_fallthru
    _
  // Predicated region
  $region46: #{_lambda_.1} parent=0 // pred_check
    _
  $region47: #{_lambda_.1} parent=0 // pred_check_branch
    %47 = sbr.rel (0) target = $region49
  $region48: #{_lambda_.1} parent=0 // pred_region
    _
  $region49: #{_lambda_.1} parent=0 // pred_fallthru
    _
  // Predicated region
  $region50: #{_lambda_.1} parent=0 // pred_check
    _
  $region51: #{_lambda_.1} parent=0 // pred_check_branch
    %49 = sbr.rel (0) target = $region53
  $region52: #{_lambda_.1} parent=0 // pred_region
    _
  $region53: #{_lambda_.1} parent=0 // pred_fallthru
    _
  // Predicated region
  $region54: #{_lambda_.1} parent=0 // pred_check
    _
  $region55: #{_lambda_.1} parent=0 // pred_check_branch
    %51 = sbr.rel (0) target = $region57
  $region56: #{_lambda_.1} parent=0 // pred_region
    _
  $region57: #{_lambda_.1} parent=0 // pred_fallthru
    _
  // Predicated region
  $region58: #{_lambda_.1} parent=0 // pred_check
    _
  $region59: #{_lambda_.1} parent=0 // pred_check_branch
    %53 = sbr.rel (0) target = $region61
  $region60: #{_lambda_.1} parent=0 // pred_region
    _
  $region61: #{_lambda_.1} parent=0 // pred_fallthru
    _
  // Predicated region
  $region62: #{_lambda_.1} parent=0 // pred_check
    _
  $region63: #{_lambda_.1} parent=0 // pred_check_branch
    %55 = sbr.rel (0) target = $region65
  $region64: #{_lambda_.1} parent=0 // pred_region
    _
  $region65: #{_lambda_.1} parent=0 // pred_fallthru
    _
  // Predicated region
  $region66: #{_lambda_.1} parent=0 // pred_check
    _
  $region67: #{_lambda_.1} parent=0 // pred_check_branch
    %57 = sbr.rel (0) target = $region69
  $region68: #{_lambda_.1} parent=0 // pred_region
    _
  $region69: #{_lambda_.1} parent=0 // pred_fallthru
    _
  // Predicated region
  $region70: #{_lambda_.1} parent=0 // pred_check
    _
  $region71: #{_lambda_.1} parent=0 // pred_check_branch
    %59 = sbr.rel (0) target = $region73
  $region72: #{_lambda_.1} parent=0 // pred_region
    _
  $region73: #{_lambda_.1} parent=0 // pred_fallthru
    _
  // Predicated region
  $region74: #{_lambda_.1} parent=0 // pred_check
    _
  $region75: #{_lambda_.1} parent=0 // pred_check_branch
    %61 = sbr.rel (0) target = $region77
  $region76: #{_lambda_.1} parent=0 // pred_region
    _
  $region77: #{_lambda_.1} parent=0 // pred_fallthru
    _
  %v62 = vld [vmem:[%s0] sm:$0xff]
  %v63 = vld [vmem:[%s0 + $0x8] sm:$0xff]
  %v64 = vld [vmem:[%s0 + $0x10] sm:$0xff]
  %v65 = vld [vmem:[%s0 + $0x18] sm:$0xff]
  %v66 = vld [vmem:[%s0 + $0x20] sm:$0xff]
  %v67 = vld [vmem:[%s0 + $0x28] sm:$0xff]
  %v68 = vld [vmem:[%s0 + $0x30] sm:$0xff]
  %v69 = vld [vmem:[%s0 + $0x38] sm:$0xff]
  %v70 = vld [vmem:[%s1] sm:$0xff]
  %v71 = vld [vmem:[%s2] sm:$0xff]
  %v72 = vld [vmem:[%s2 + $0x8] sm:$0xff]
  %v73 = vld [vmem:[%s2 + $0x10] sm:$0xff]
  %v74 = vld [vmem:[%s2 + $0x18] sm:$0xff]
  %v75 = vld [vmem:[%s2 + $0x20] sm:$0xff]
  %v76 = vld [vmem:[%s2 + $0x28] sm:$0xff]
  %v77 = vld [vmem:[%s2 + $0x30] sm:$0xff]
  %v78 = vld [vmem:[%s2 + $0x38] sm:$0xff]
  %vm79 = vcmask 64512
  %v81 = vsel %vm79, %v62, 0
  %v84 = vsel %vm79, %v63, 0
  %v87 = vsel %vm79, %v64, 0
  %v90 = vsel %vm79, %v65, 0
  %v93 = vsel %vm79, %v66, 0
  %v96 = vsel %vm79, %v67, 0
  %v99 = vsel %vm79, %v68, 0
  %v102 = vsel %vm79, %v69, 0
  %104 = vmatprep.subr.mxu0 0.0
  %105 = vmatpush1.msra.mxu0 %v70
  %106 = vmatprep.subr.mxu0 0.0
  %107 = vmatpush1.msra.mxu0 0.0
  %108 = vmatprep.subr.mxu0 0.0
  %109 = vmatpush1.msra.mxu0 0.0
  %110 = vmatprep.subr.mxu0 0.0
  %111 = vmatpush1.msra.mxu0 0.0
  %112 = vmatprep.subr.mxu0 0.0
  %113 = vmatpush1.msra.mxu0 0.0
  %114 = vmatprep.subr.mxu0 0.0
  %115 = vmatpush1.msra.mxu0 0.0
  %116 = vmatprep.subr.mxu0 0.0
  %117 = vmatpush1.msra.mxu0 0.0
  %118 = vmatprep.subr.mxu0 0.0
  %119 = vmatpush1.msra.mxu0 0.0
  %120 = vmatprep.subr.mxu0 0.0
  %121 = vmatpush1.msra.mxu0 0.0
  %122 = vmatprep.subr.mxu0 0.0
  %123 = vmatpush1.msra.mxu0 0.0
  %124 = vmatprep.subr.mxu0 0.0
  %125 = vmatpush1.msra.mxu0 0.0
  %126 = vmatprep.subr.mxu0 0.0
  %127 = vmatpush1.msra.mxu0 0.0
  %128 = vmatprep.subr.mxu0 0.0
  %129 = vmatpush1.msra.mxu0 0.0
  %130 = vmatprep.subr.mxu0 0.0
  %131 = vmatpush1.msra.mxu0 0.0
  %132 = vmatprep.subr.mxu0 0.0
  %133 = vmatpush1.msra.mxu0 0.0
  %134 = vmatprep.subr.mxu0 0.0
  %135 = vmatpush1.msra.mxu0 0.0
  %136 = vmatprep.subr.mxu0 0.0
  %137 = vmatpush1.msra.mxu0 0.0
  %138 = vmatprep.subr.mxu0 0.0
  %139 = vmatpush1.msra.mxu0 0.0
  %140 = vmatprep.subr.mxu0 0.0
  %141 = vmatpush1.msra.mxu0 0.0
  %142 = vmatprep.subr.mxu0 0.0
  %143 = vmatpush1.msra.mxu0 0.0
  %144 = vmatprep.subr.mxu0 0.0
  %145 = vmatpush1.msra.mxu0 0.0
  %146 = vmatprep.subr.mxu0 0.0
  %147 = vmatpush1.msra.mxu0 0.0
  %148 = vmatprep.subr.mxu0 0.0
  %149 = vmatpush1.msra.mxu0 0.0
  %150 = vmatprep.subr.mxu0 0.0
  %151 = vmatpush1.msra.mxu0 0.0
  %152 = vmatprep.subr.mxu0 0.0
  %153 = vmatpush1.msra.mxu0 0.0
  %154 = vmatprep.subr.mxu0 0.0
  %155 = vmatpush1.msra.mxu0 0.0
  %156 = vmatprep.subr.mxu0 0.0
  %157 = vmatpush1.msra.mxu0 0.0
  %158 = vmatprep.subr.mxu0 0.0
  %159 = vmatpush1.msra.mxu0 0.0
  %160 = vmatprep.subr.mxu0 0.0
  %161 = vmatpush1.msra.mxu0 0.0
  %162 = vmatprep.subr.mxu0 0.0
  %163 = vmatpush1.msra.mxu0 0.0
  %164 = vmatprep.subr.mxu0 0.0
  %165 = vmatpush1.msra.mxu0 0.0
  %166 = vmatprep.subr.mxu0 0.0
  %167 = vmatpush1.msra.mxu0 0.0
  %168 = vmatprep.mubr.f32.mxu0 0.0
  %169 = vmatmul.mubr.f32.gmra.mrb[0].mxu0 %v81
  %v170 = vpop.f32.mrb[0].mxu0
  %v171 = vadd.f32 %v71, %v170
  %v172 = vpop.f32.mrb[0].mxu0
  %173 = vmatprep.mubr.f32.mxu0 0.0
  %174 = vmatmul.mubr.f32.gmra.mrb[0].mxu0 %v84
  %v175 = vpop.f32.mrb[0].mxu0
  %v176 = vadd.f32 %v72, %v175
  %v177 = vpop.f32.mrb[0].mxu0
  %178 = vmatprep.mubr.f32.mxu0 0.0
  %179 = vmatmul.mubr.f32.gmra.mrb[0].mxu0 %v87
  %v180 = vpop.f32.mrb[0].mxu0
  %v181 = vadd.f32 %v73, %v180
  %v182 = vpop.f32.mrb[0].mxu0
  %183 = vmatprep.mubr.f32.mxu0 0.0
  %184 = vmatmul.mubr.f32.gmra.mrb[0].mxu0 %v90
  %v185 = vpop.f32.mrb[0].mxu0
  %v186 = vadd.f32 %v74, %v185
  %v187 = vpop.f32.mrb[0].mxu0
  %188 = vmatprep.mubr.f32.mxu0 0.0
  %189 = vmatmul.mubr.f32.gmra.mrb[0].mxu0 %v93
  %v190 = vpop.f32.mrb[0].mxu0
  %v191 = vadd.f32 %v75, %v190
  %v192 = vpop.f32.mrb[0].mxu0
  %193 = vmatprep.mubr.f32.mxu0 0.0
  %194 = vmatmul.mubr.f32.gmra.mrb[0].mxu0 %v96
  %v195 = vpop.f32.mrb[0].mxu0
  %v196 = vadd.f32 %v76, %v195
  %v197 = vpop.f32.mrb[0].mxu0
  %198 = vmatprep.mubr.f32.mxu0 0.0
  %199 = vmatmul.mubr.f32.gmra.mrb[0].mxu0 %v99
  %v200 = vpop.f32.mrb[0].mxu0
  %v201 = vadd.f32 %v77, %v200
  %v202 = vpop.f32.mrb[0].mxu0
  %203 = vmatprep.mubr.f32.mxu0 0.0
  %204 = vmatmul.mubr.f32.gmra.mrb[0].mxu0 %v102
  %v205 = vpop.f32.mrb[0].mxu0
  %v206 = vadd.f32 %v78, %v205
  %v207 = vpop.f32.mrb[0].mxu0
  %208 = vdwg.mxu0
  %v209 = vld [vmem:[%s3] sm:$0xff]
  %v210 = vld [vmem:[%s3 + $0x8] sm:$0xff]
  %v211 = vld [vmem:[%s5] sm:$0xff]
  %v212 = vld [vmem:[%s5 + $0x8] sm:$0xff]
  %v213 = vld [vmem:[%s4] sm:$0x1]
  %v215 = vlaneseq
  %v216 = vshrl.u32 %v215, 7
  %v217 = vsub.s32 0, %v216
  %v218 = vrot.slane %v213, %v217
  %vm220 = vcmask 130048
  %v222 = vsel %vm220, %v171, 0
  %v225 = vsel %vm220, %v176, 0
  %v228 = vsel %vm220, %v181, 0
  %v231 = vsel %vm220, %v186, 0
  %v234 = vsel %vm220, %v191, 0
  %v237 = vsel %vm220, %v196, 0
  %v240 = vsel %vm220, %v201, 0
  %v243 = vsel %vm220, %v206, 0
  %245 = vmatprep.subr.mxu0 0.0
  %246 = vmatpush1.msra.mxu0 %v209
  %247 = vmatprep.subr.mxu0 0.0
  %248 = vmatpush1.msra.mxu0 %v210
  %249 = vmatprep.subr.mxu0 0.0
  %250 = vmatpush1.msra.mxu0 0.0
  %251 = vmatprep.subr.mxu0 0.0
  %252 = vmatpush1.msra.mxu0 0.0
  %253 = vmatprep.subr.mxu0 0.0
  %254 = vmatpush1.msra.mxu0 0.0
  %255 = vmatprep.subr.mxu0 0.0
  %256 = vmatpush1.msra.mxu0 0.0
  %257 = vmatprep.subr.mxu0 0.0
  %258 = vmatpush1.msra.mxu0 0.0
  %259 = vmatprep.subr.mxu0 0.0
  %260 = vmatpush1.msra.mxu0 0.0
  %261 = vmatprep.subr.mxu0 0.0
  %262 = vmatpush1.msra.mxu0 0.0
  %263 = vmatprep.subr.mxu0 0.0
  %264 = vmatpush1.msra.mxu0 0.0
  %265 = vmatprep.subr.mxu0 0.0
  %266 = vmatpush1.msra.mxu0 0.0
  %267 = vmatprep.subr.mxu0 0.0
  %268 = vmatpush1.msra.mxu0 0.0
  %269 = vmatprep.subr.mxu0 0.0
  %270 = vmatpush1.msra.mxu0 0.0
  %271 = vmatprep.subr.mxu0 0.0
  %272 = vmatpush1.msra.mxu0 0.0
  %273 = vmatprep.subr.mxu0 0.0
  %274 = vmatpush1.msra.mxu0 0.0
  %275 = vmatprep.subr.mxu0 0.0
  %276 = vmatpush1.msra.mxu0 0.0
  %277 = vmatprep.subr.mxu0 0.0
  %278 = vmatpush1.msra.mxu0 0.0
  %279 = vmatprep.subr.mxu0 0.0
  %280 = vmatpush1.msra.mxu0 0.0
  %281 = vmatprep.subr.mxu0 0.0
  %282 = vmatpush1.msra.mxu0 0.0
  %283 = vmatprep.subr.mxu0 0.0
  %284 = vmatpush1.msra.mxu0 0.0
  %285 = vmatprep.subr.mxu0 0.0
  %286 = vmatpush1.msra.mxu0 0.0
  %287 = vmatprep.subr.mxu0 0.0
  %288 = vmatpush1.msra.mxu0 0.0
  %289 = vmatprep.subr.mxu0 0.0
  %290 = vmatpush1.msra.mxu0 0.0
  %291 = vmatprep.subr.mxu0 0.0
  %292 = vmatpush1.msra.mxu0 0.0
  %293 = vmatprep.subr.mxu0 0.0
  %294 = vmatpush1.msra.mxu0 0.0
  %295 = vmatprep.subr.mxu0 0.0
  %296 = vmatpush1.msra.mxu0 0.0
  %297 = vmatprep.subr.mxu0 0.0
  %298 = vmatpush1.msra.mxu0 0.0
  %299 = vmatprep.subr.mxu0 0.0
  %300 = vmatpush1.msra.mxu0 0.0
  %301 = vmatprep.subr.mxu0 0.0
  %302 = vmatpush1.msra.mxu0 0.0
  %303 = vmatprep.subr.mxu0 0.0
  %304 = vmatpush1.msra.mxu0 0.0
  %305 = vmatprep.subr.mxu0 0.0
  %306 = vmatpush1.msra.mxu0 0.0
  %307 = vmatprep.subr.mxu0 0.0
  %308 = vmatpush1.msra.mxu0 0.0
  %309 = vmatprep.mubr.f32.mxu0 0.0
  %310 = vmatmul.mubr.f32.gmra.mrb[0].mxu0 %v222
  %v311 = vpop.f32.mrb[0].mxu0
  %v312 = vadd.f32 %v218, %v311
  %v313 = vpop.f32.mrb[0].mxu0
  %314 = vmatprep.mubr.f32.mxu0 0.0
  %315 = vmatmul.mubr.f32.gmra.mrb[0].mxu0 %v225
  %v316 = vpop.f32.mrb[0].mxu0
  %v317 = vadd.f32 %v218, %v316
  %v318 = vpop.f32.mrb[0].mxu0
  %319 = vmatprep.mubr.f32.mxu0 0.0
  %320 = vmatmul.mubr.f32.gmra.mrb[0].mxu0 %v228
  %v321 = vpop.f32.mrb[0].mxu0
  %v322 = vadd.f32 %v218, %v321
  %v323 = vpop.f32.mrb[0].mxu0
  %324 = vmatprep.mubr.f32.mxu0 0.0
  %325 = vmatmul.mubr.f32.gmra.mrb[0].mxu0 %v231
  %v326 = vpop.f32.mrb[0].mxu0
  %v327 = vadd.f32 %v218, %v326
  %v328 = vpop.f32.mrb[0].mxu0
  %329 = vmatprep.mubr.f32.mxu0 0.0
  %330 = vmatmul.mubr.f32.gmra.mrb[0].mxu0 %v234
  %v331 = vpop.f32.mrb[0].mxu0
  %v332 = vadd.f32 %v218, %v331
  %v333 = vpop.f32.mrb[0].mxu0
  %334 = vmatprep.mubr.f32.mxu0 0.0
  %335 = vmatmul.mubr.f32.gmra.mrb[0].mxu0 %v237
  %v336 = vpop.f32.mrb[0].mxu0
  %v337 = vadd.f32 %v218, %v336
  %v338 = vpop.f32.mrb[0].mxu0
  %339 = vmatprep.mubr.f32.mxu0 0.0
  %340 = vmatmul.mubr.f32.gmra.mrb[0].mxu0 %v240
  %v341 = vpop.f32.mrb[0].mxu0
  %v342 = vadd.f32 %v218, %v341
  %v343 = vpop.f32.mrb[0].mxu0
  %344 = vmatprep.mubr.f32.mxu0 0.0
  %345 = vmatmul.mubr.f32.gmra.mrb[0].mxu0 %v243
  %v346 = vpop.f32.mrb[0].mxu0
  %v347 = vadd.f32 %v218, %v346
  %v348 = vpop.f32.mrb[0].mxu0
  %349 = vdwg.mxu0
  %351 = vrot.lane.b32.xlu0 %v312, 112
  %v352 = vpop.permute.xlu0 %351
  %v353 = vsel %vm79, %v312, 0
  %v355 = vsel %vm79, %v352, 0
  %357 = vmatprep.subr.mxu0 0.0
  %358 = vmatpush1.xpose.msra.mxu0 %v355
  %359 = vmatprep.subr.mxu0 0.0
  %360 = vmatpush1.xpose.msra.mxu0 0.0
  %361 = vmatprep.subr.mxu0 0.0
  %362 = vmatpush1.xpose.msra.mxu0 0.0
  %363 = vmatprep.subr.mxu0 0.0
  %364 = vmatpush1.xpose.msra.mxu0 0.0
  %365 = vmatprep.subr.mxu0 0.0
  %366 = vmatpush1.xpose.msra.mxu0 0.0
  %367 = vmatprep.subr.mxu0 0.0
  %368 = vmatpush1.xpose.msra.mxu0 0.0
  %369 = vmatprep.subr.mxu0 0.0
  %370 = vmatpush1.xpose.msra.mxu0 0.0
  %371 = vmatprep.subr.mxu0 0.0
  %372 = vmatpush1.xpose.msra.mxu0 0.0
  %373 = vmatprep.subr.mxu0 0.0
  %374 = vmatpush1.xpose.msra.mxu0 0.0
  %375 = vmatprep.subr.mxu0 0.0
  %376 = vmatpush1.xpose.msra.mxu0 0.0
  %377 = vmatprep.subr.mxu0 0.0
  %378 = vmatpush1.xpose.msra.mxu0 0.0
  %379 = vmatprep.subr.mxu0 0.0
  %380 = vmatpush1.xpose.msra.mxu0 0.0
  %381 = vmatprep.subr.mxu0 0.0
  %382 = vmatpush1.xpose.msra.mxu0 0.0
  %383 = vmatprep.subr.mxu0 0.0
  %384 = vmatpush1.xpose.msra.mxu0 0.0
  %385 = vmatprep.subr.mxu0 0.0
  %386 = vmatpush1.xpose.msra.mxu0 0.0
  %387 = vmatprep.subr.mxu0 0.0
  %388 = vmatpush1.xpose.msra.mxu0 0.0
  %389 = vmatprep.subr.mxu0 0.0
  %390 = vmatpush1.xpose.msra.mxu0 0.0
  %391 = vmatprep.subr.mxu0 0.0
  %392 = vmatpush1.xpose.msra.mxu0 0.0
  %393 = vmatprep.subr.mxu0 0.0
  %394 = vmatpush1.xpose.msra.mxu0 0.0
  %395 = vmatprep.subr.mxu0 0.0
  %396 = vmatpush1.xpose.msra.mxu0 0.0
  %397 = vmatprep.subr.mxu0 0.0
  %398 = vmatpush1.xpose.msra.mxu0 0.0
  %399 = vmatprep.subr.mxu0 0.0
  %400 = vmatpush1.xpose.msra.mxu0 0.0
  %401 = vmatprep.subr.mxu0 0.0
  %402 = vmatpush1.xpose.msra.mxu0 0.0
  %403 = vmatprep.subr.mxu0 0.0
  %404 = vmatpush1.xpose.msra.mxu0 0.0
  %405 = vmatprep.subr.mxu0 0.0
  %406 = vmatpush1.xpose.msra.mxu0 0.0
  %407 = vmatprep.subr.mxu0 0.0
  %408 = vmatpush1.xpose.msra.mxu0 0.0
  %409 = vmatprep.subr.mxu0 0.0
  %410 = vmatpush1.xpose.msra.mxu0 0.0
  %411 = vmatprep.subr.mxu0 0.0
  %412 = vmatpush1.xpose.msra.mxu0 0.0
  %413 = vmatprep.subr.mxu0 0.0
  %414 = vmatpush1.xpose.msra.mxu0 0.0
  %415 = vmatprep.subr.mxu0 0.0
  %416 = vmatpush1.xpose.msra.mxu0 0.0
  %417 = vmatprep.subr.mxu0 0.0
  %418 = vmatpush1.xpose.msra.mxu0 0.0
  %419 = vmatprep.subr.mxu0 0.0
  %420 = vmatpush1.xpose.msra.mxu0 0.0
  %421 = vmatprep.mubr.f32.mxu0 0.0
  %422 = vmatmul.mubr.f32.gmra.mrb[0].mxu0 %v353
  %v423 = vpop.f32.mrb[0].mxu0
  %v424 = vadd.f32 0.0, %v423
  %v425 = vpop.f32.mrb[0].mxu0
  %426 = vdwg.mxu0
  %428 = vrot.lane.b32.xlu0 %v317, 112
  %v429 = vpop.permute.xlu0 %428
  %v430 = vsel %vm79, %v317, 0
  %v432 = vsel %vm79, %v429, 0
  %434 = vmatprep.subr.mxu0 0.0
  %435 = vmatpush1.xpose.msra.mxu0 %v432
  %436 = vmatprep.subr.mxu0 0.0
  %437 = vmatpush1.xpose.msra.mxu0 0.0
  %438 = vmatprep.subr.mxu0 0.0
  %439 = vmatpush1.xpose.msra.mxu0 0.0
  %440 = vmatprep.subr.mxu0 0.0
  %441 = vmatpush1.xpose.msra.mxu0 0.0
  %442 = vmatprep.subr.mxu0 0.0
  %443 = vmatpush1.xpose.msra.mxu0 0.0
  %444 = vmatprep.subr.mxu0 0.0
  %445 = vmatpush1.xpose.msra.mxu0 0.0
  %446 = vmatprep.subr.mxu0 0.0
  %447 = vmatpush1.xpose.msra.mxu0 0.0
  %448 = vmatprep.subr.mxu0 0.0
  %449 = vmatpush1.xpose.msra.mxu0 0.0
  %450 = vmatprep.subr.mxu0 0.0
  %451 = vmatpush1.xpose.msra.mxu0 0.0
  %452 = vmatprep.subr.mxu0 0.0
  %453 = vmatpush1.xpose.msra.mxu0 0.0
  %454 = vmatprep.subr.mxu0 0.0
  %455 = vmatpush1.xpose.msra.mxu0 0.0
  %456 = vmatprep.subr.mxu0 0.0
  %457 = vmatpush1.xpose.msra.mxu0 0.0
  %458 = vmatprep.subr.mxu0 0.0
  %459 = vmatpush1.xpose.msra.mxu0 0.0
  %460 = vmatprep.subr.mxu0 0.0
  %461 = vmatpush1.xpose.msra.mxu0 0.0
  %462 = vmatprep.subr.mxu0 0.0
  %463 = vmatpush1.xpose.msra.mxu0 0.0
  %464 = vmatprep.subr.mxu0 0.0
  %465 = vmatpush1.xpose.msra.mxu0 0.0
  %466 = vmatprep.subr.mxu0 0.0
  %467 = vmatpush1.xpose.msra.mxu0 0.0
  %468 = vmatprep.subr.mxu0 0.0
  %469 = vmatpush1.xpose.msra.mxu0 0.0
  %470 = vmatprep.subr.mxu0 0.0
  %471 = vmatpush1.xpose.msra.mxu0 0.0
  %472 = vmatprep.subr.mxu0 0.0
  %473 = vmatpush1.xpose.msra.mxu0 0.0
  %474 = vmatprep.subr.mxu0 0.0
  %475 = vmatpush1.xpose.msra.mxu0 0.0
  %476 = vmatprep.subr.mxu0 0.0
  %477 = vmatpush1.xpose.msra.mxu0 0.0
  %478 = vmatprep.subr.mxu0 0.0
  %479 = vmatpush1.xpose.msra.mxu0 0.0
  %480 = vmatprep.subr.mxu0 0.0
  %481 = vmatpush1.xpose.msra.mxu0 0.0
  %482 = vmatprep.subr.mxu0 0.0
  %483 = vmatpush1.xpose.msra.mxu0 0.0
  %484 = vmatprep.subr.mxu0 0.0
  %485 = vmatpush1.xpose.msra.mxu0 0.0
  %486 = vmatprep.subr.mxu0 0.0
  %487 = vmatpush1.xpose.msra.mxu0 0.0
  %488 = vmatprep.subr.mxu0 0.0
  %489 = vmatpush1.xpose.msra.mxu0 0.0
  %490 = vmatprep.subr.mxu0 0.0
  %491 = vmatpush1.xpose.msra.mxu0 0.0
  %492 = vmatprep.subr.mxu0 0.0
  %493 = vmatpush1.xpose.msra.mxu0 0.0
  %494 = vmatprep.subr.mxu0 0.0
  %495 = vmatpush1.xpose.msra.mxu0 0.0
  %496 = vmatprep.subr.mxu0 0.0
  %497 = vmatpush1.xpose.msra.mxu0 0.0
  %498 = vmatprep.mubr.f32.mxu0 0.0
  %499 = vmatmul.mubr.f32.gmra.mrb[0].mxu0 %v430
  %v500 = vpop.f32.mrb[0].mxu0
  %v501 = vadd.f32 0.0, %v500
  %v502 = vpop.f32.mrb[0].mxu0
  %503 = vdwg.mxu0
  %505 = vrot.lane.b32.xlu0 %v322, 112
  %v506 = vpop.permute.xlu0 %505
  %v507 = vsel %vm79, %v322, 0
  %v509 = vsel %vm79, %v506, 0
  %511 = vmatprep.subr.mxu0 0.0
  %512 = vmatpush1.xpose.msra.mxu0 %v509
  %513 = vmatprep.subr.mxu0 0.0
  %514 = vmatpush1.xpose.msra.mxu0 0.0
  %515 = vmatprep.subr.mxu0 0.0
  %516 = vmatpush1.xpose.msra.mxu0 0.0
  %517 = vmatprep.subr.mxu0 0.0
  %518 = vmatpush1.xpose.msra.mxu0 0.0
  %519 = vmatprep.subr.mxu0 0.0
  %520 = vmatpush1.xpose.msra.mxu0 0.0
  %521 = vmatprep.subr.mxu0 0.0
  %522 = vmatpush1.xpose.msra.mxu0 0.0
  %523 = vmatprep.subr.mxu0 0.0
  %524 = vmatpush1.xpose.msra.mxu0 0.0
  %525 = vmatprep.subr.mxu0 0.0
  %526 = vmatpush1.xpose.msra.mxu0 0.0
  %527 = vmatprep.subr.mxu0 0.0
  %528 = vmatpush1.xpose.msra.mxu0 0.0
  %529 = vmatprep.subr.mxu0 0.0
  %530 = vmatpush1.xpose.msra.mxu0 0.0
  %531 = vmatprep.subr.mxu0 0.0
  %532 = vmatpush1.xpose.msra.mxu0 0.0
  %533 = vmatprep.subr.mxu0 0.0
  %534 = vmatpush1.xpose.msra.mxu0 0.0
  %535 = vmatprep.subr.mxu0 0.0
  %536 = vmatpush1.xpose.msra.mxu0 0.0
  %537 = vmatprep.subr.mxu0 0.0
  %538 = vmatpush1.xpose.msra.mxu0 0.0
  %539 = vmatprep.subr.mxu0 0.0
  %540 = vmatpush1.xpose.msra.mxu0 0.0
  %541 = vmatprep.subr.mxu0 0.0
  %542 = vmatpush1.xpose.msra.mxu0 0.0
  %543 = vmatprep.subr.mxu0 0.0
  %544 = vmatpush1.xpose.msra.mxu0 0.0
  %545 = vmatprep.subr.mxu0 0.0
  %546 = vmatpush1.xpose.msra.mxu0 0.0
  %547 = vmatprep.subr.mxu0 0.0
  %548 = vmatpush1.xpose.msra.mxu0 0.0
  %549 = vmatprep.subr.mxu0 0.0
  %550 = vmatpush1.xpose.msra.mxu0 0.0
  %551 = vmatprep.subr.mxu0 0.0
  %552 = vmatpush1.xpose.msra.mxu0 0.0
  %553 = vmatprep.subr.mxu0 0.0
  %554 = vmatpush1.xpose.msra.mxu0 0.0
  %555 = vmatprep.subr.mxu0 0.0
  %556 = vmatpush1.xpose.msra.mxu0 0.0
  %557 = vmatprep.subr.mxu0 0.0
  %558 = vmatpush1.xpose.msra.mxu0 0.0
  %559 = vmatprep.subr.mxu0 0.0
  %560 = vmatpush1.xpose.msra.mxu0 0.0
  %561 = vmatprep.subr.mxu0 0.0
  %562 = vmatpush1.xpose.msra.mxu0 0.0
  %563 = vmatprep.subr.mxu0 0.0
  %564 = vmatpush1.xpose.msra.mxu0 0.0
  %565 = vmatprep.subr.mxu0 0.0
  %566 = vmatpush1.xpose.msra.mxu0 0.0
  %567 = vmatprep.subr.mxu0 0.0
  %568 = vmatpush1.xpose.msra.mxu0 0.0
  %569 = vmatprep.subr.mxu0 0.0
  %570 = vmatpush1.xpose.msra.mxu0 0.0
  %571 = vmatprep.subr.mxu0 0.0
  %572 = vmatpush1.xpose.msra.mxu0 0.0
  %573 = vmatprep.subr.mxu0 0.0
  %574 = vmatpush1.xpose.msra.mxu0 0.0
  %575 = vmatprep.mubr.f32.mxu0 0.0
  %576 = vmatmul.mubr.f32.gmra.mrb[0].mxu0 %v507
  %v577 = vpop.f32.mrb[0].mxu0
  %v578 = vadd.f32 0.0, %v577
  %v579 = vpop.f32.mrb[0].mxu0
  %580 = vdwg.mxu0
  %582 = vrot.lane.b32.xlu0 %v327, 112
  %v583 = vpop.permute.xlu0 %582
  %v584 = vsel %vm79, %v327, 0
  %v586 = vsel %vm79, %v583, 0
  %588 = vmatprep.subr.mxu0 0.0
  %589 = vmatpush1.xpose.msra.mxu0 %v586
  %590 = vmatprep.subr.mxu0 0.0
  %591 = vmatpush1.xpose.msra.mxu0 0.0
  %592 = vmatprep.subr.mxu0 0.0
  %593 = vmatpush1.xpose.msra.mxu0 0.0
  %594 = vmatprep.subr.mxu0 0.0
  %595 = vmatpush1.xpose.msra.mxu0 0.0
  %596 = vmatprep.subr.mxu0 0.0
  %597 = vmatpush1.xpose.msra.mxu0 0.0
  %598 = vmatprep.subr.mxu0 0.0
  %599 = vmatpush1.xpose.msra.mxu0 0.0
  %600 = vmatprep.subr.mxu0 0.0
  %601 = vmatpush1.xpose.msra.mxu0 0.0
  %602 = vmatprep.subr.mxu0 0.0
  %603 = vmatpush1.xpose.msra.mxu0 0.0
  %604 = vmatprep.subr.mxu0 0.0
  %605 = vmatpush1.xpose.msra.mxu0 0.0
  %606 = vmatprep.subr.mxu0 0.0
  %607 = vmatpush1.xpose.msra.mxu0 0.0
  %608 = vmatprep.subr.mxu0 0.0
  %609 = vmatpush1.xpose.msra.mxu0 0.0
  %610 = vmatprep.subr.mxu0 0.0
  %611 = vmatpush1.xpose.msra.mxu0 0.0
  %612 = vmatprep.subr.mxu0 0.0
  %613 = vmatpush1.xpose.msra.mxu0 0.0
  %614 = vmatprep.subr.mxu0 0.0
  %615 = vmatpush1.xpose.msra.mxu0 0.0
  %616 = vmatprep.subr.mxu0 0.0
  %617 = vmatpush1.xpose.msra.mxu0 0.0
  %618 = vmatprep.subr.mxu0 0.0
  %619 = vmatpush1.xpose.msra.mxu0 0.0
  %620 = vmatprep.subr.mxu0 0.0
  %621 = vmatpush1.xpose.msra.mxu0 0.0
  %622 = vmatprep.subr.mxu0 0.0
  %623 = vmatpush1.xpose.msra.mxu0 0.0
  %624 = vmatprep.subr.mxu0 0.0
  %625 = vmatpush1.xpose.msra.mxu0 0.0
  %626 = vmatprep.subr.mxu0 0.0
  %627 = vmatpush1.xpose.msra.mxu0 0.0
  %628 = vmatprep.subr.mxu0 0.0
  %629 = vmatpush1.xpose.msra.mxu0 0.0
  %630 = vmatprep.subr.mxu0 0.0
  %631 = vmatpush1.xpose.msra.mxu0 0.0
  %632 = vmatprep.subr.mxu0 0.0
  %633 = vmatpush1.xpose.msra.mxu0 0.0
  %634 = vmatprep.subr.mxu0 0.0
  %635 = vmatpush1.xpose.msra.mxu0 0.0
  %636 = vmatprep.subr.mxu0 0.0
  %637 = vmatpush1.xpose.msra.mxu0 0.0
  %638 = vmatprep.subr.mxu0 0.0
  %639 = vmatpush1.xpose.msra.mxu0 0.0
  %640 = vmatprep.subr.mxu0 0.0
  %641 = vmatpush1.xpose.msra.mxu0 0.0
  %642 = vmatprep.subr.mxu0 0.0
  %643 = vmatpush1.xpose.msra.mxu0 0.0
  %644 = vmatprep.subr.mxu0 0.0
  %645 = vmatpush1.xpose.msra.mxu0 0.0
  %646 = vmatprep.subr.mxu0 0.0
  %647 = vmatpush1.xpose.msra.mxu0 0.0
  %648 = vmatprep.subr.mxu0 0.0
  %649 = vmatpush1.xpose.msra.mxu0 0.0
  %650 = vmatprep.subr.mxu0 0.0
  %651 = vmatpush1.xpose.msra.mxu0 0.0
  %652 = vmatprep.mubr.f32.mxu0 0.0
  %653 = vmatmul.mubr.f32.gmra.mrb[0].mxu0 %v584
  %v654 = vpop.f32.mrb[0].mxu0
  %v655 = vadd.f32 0.0, %v654
  %v656 = vpop.f32.mrb[0].mxu0
  %657 = vdwg.mxu0
  %659 = vrot.lane.b32.xlu0 %v332, 112
  %v660 = vpop.permute.xlu0 %659
  %v661 = vsel %vm79, %v332, 0
  %v663 = vsel %vm79, %v660, 0
  %665 = vmatprep.subr.mxu0 0.0
  %666 = vmatpush1.xpose.msra.mxu0 %v663
  %667 = vmatprep.subr.mxu0 0.0
  %668 = vmatpush1.xpose.msra.mxu0 0.0
  %669 = vmatprep.subr.mxu0 0.0
  %670 = vmatpush1.xpose.msra.mxu0 0.0
  %671 = vmatprep.subr.mxu0 0.0
  %672 = vmatpush1.xpose.msra.mxu0 0.0
  %673 = vmatprep.subr.mxu0 0.0
  %674 = vmatpush1.xpose.msra.mxu0 0.0
  %675 = vmatprep.subr.mxu0 0.0
  %676 = vmatpush1.xpose.msra.mxu0 0.0
  %677 = vmatprep.subr.mxu0 0.0
  %678 = vmatpush1.xpose.msra.mxu0 0.0
  %679 = vmatprep.subr.mxu0 0.0
  %680 = vmatpush1.xpose.msra.mxu0 0.0
  %681 = vmatprep.subr.mxu0 0.0
  %682 = vmatpush1.xpose.msra.mxu0 0.0
  %683 = vmatprep.subr.mxu0 0.0
  %684 = vmatpush1.xpose.msra.mxu0 0.0
  %685 = vmatprep.subr.mxu0 0.0
  %686 = vmatpush1.xpose.msra.mxu0 0.0
  %687 = vmatprep.subr.mxu0 0.0
  %688 = vmatpush1.xpose.msra.mxu0 0.0
  %689 = vmatprep.subr.mxu0 0.0
  %690 = vmatpush1.xpose.msra.mxu0 0.0
  %691 = vmatprep.subr.mxu0 0.0
  %692 = vmatpush1.xpose.msra.mxu0 0.0
  %693 = vmatprep.subr.mxu0 0.0
  %694 = vmatpush1.xpose.msra.mxu0 0.0
  %695 = vmatprep.subr.mxu0 0.0
  %696 = vmatpush1.xpose.msra.mxu0 0.0
  %697 = vmatprep.subr.mxu0 0.0
  %698 = vmatpush1.xpose.msra.mxu0 0.0
  %699 = vmatprep.subr.mxu0 0.0
  %700 = vmatpush1.xpose.msra.mxu0 0.0
  %701 = vmatprep.subr.mxu0 0.0
  %702 = vmatpush1.xpose.msra.mxu0 0.0
  %703 = vmatprep.subr.mxu0 0.0
  %704 = vmatpush1.xpose.msra.mxu0 0.0
  %705 = vmatprep.subr.mxu0 0.0
  %706 = vmatpush1.xpose.msra.mxu0 0.0
  %707 = vmatprep.subr.mxu0 0.0
  %708 = vmatpush1.xpose.msra.mxu0 0.0
  %709 = vmatprep.subr.mxu0 0.0
  %710 = vmatpush1.xpose.msra.mxu0 0.0
  %711 = vmatprep.subr.mxu0 0.0
  %712 = vmatpush1.xpose.msra.mxu0 0.0
  %713 = vmatprep.subr.mxu0 0.0
  %714 = vmatpush1.xpose.msra.mxu0 0.0
  %715 = vmatprep.subr.mxu0 0.0
  %716 = vmatpush1.xpose.msra.mxu0 0.0
  %717 = vmatprep.subr.mxu0 0.0
  %718 = vmatpush1.xpose.msra.mxu0 0.0
  %719 = vmatprep.subr.mxu0 0.0
  %720 = vmatpush1.xpose.msra.mxu0 0.0
  %721 = vmatprep.subr.mxu0 0.0
  %722 = vmatpush1.xpose.msra.mxu0 0.0
  %723 = vmatprep.subr.mxu0 0.0
  %724 = vmatpush1.xpose.msra.mxu0 0.0
  %725 = vmatprep.subr.mxu0 0.0
  %726 = vmatpush1.xpose.msra.mxu0 0.0
  %727 = vmatprep.subr.mxu0 0.0
  %728 = vmatpush1.xpose.msra.mxu0 0.0
  %729 = vmatprep.mubr.f32.mxu0 0.0
  %730 = vmatmul.mubr.f32.gmra.mrb[0].mxu0 %v661
  %v731 = vpop.f32.mrb[0].mxu0
  %v732 = vadd.f32 0.0, %v731
  %v733 = vpop.f32.mrb[0].mxu0
  %734 = vdwg.mxu0
  %736 = vrot.lane.b32.xlu0 %v337, 112
  %v737 = vpop.permute.xlu0 %736
  %v738 = vsel %vm79, %v337, 0
  %v740 = vsel %vm79, %v737, 0
  %742 = vmatprep.subr.mxu0 0.0
  %743 = vmatpush1.xpose.msra.mxu0 %v740
  %744 = vmatprep.subr.mxu0 0.0
  %745 = vmatpush1.xpose.msra.mxu0 0.0
  %746 = vmatprep.subr.mxu0 0.0
  %747 = vmatpush1.xpose.msra.mxu0 0.0
  %748 = vmatprep.subr.mxu0 0.0
  %749 = vmatpush1.xpose.msra.mxu0 0.0
  %750 = vmatprep.subr.mxu0 0.0
  %751 = vmatpush1.xpose.msra.mxu0 0.0
  %752 = vmatprep.subr.mxu0 0.0
  %753 = vmatpush1.xpose.msra.mxu0 0.0
  %754 = vmatprep.subr.mxu0 0.0
  %755 = vmatpush1.xpose.msra.mxu0 0.0
  %756 = vmatprep.subr.mxu0 0.0
  %757 = vmatpush1.xpose.msra.mxu0 0.0
  %758 = vmatprep.subr.mxu0 0.0
  %759 = vmatpush1.xpose.msra.mxu0 0.0
  %760 = vmatprep.subr.mxu0 0.0
  %761 = vmatpush1.xpose.msra.mxu0 0.0
  %762 = vmatprep.subr.mxu0 0.0
  %763 = vmatpush1.xpose.msra.mxu0 0.0
  %764 = vmatprep.subr.mxu0 0.0
  %765 = vmatpush1.xpose.msra.mxu0 0.0
  %766 = vmatprep.subr.mxu0 0.0
  %767 = vmatpush1.xpose.msra.mxu0 0.0
  %768 = vmatprep.subr.mxu0 0.0
  %769 = vmatpush1.xpose.msra.mxu0 0.0
  %770 = vmatprep.subr.mxu0 0.0
  %771 = vmatpush1.xpose.msra.mxu0 0.0
  %772 = vmatprep.subr.mxu0 0.0
  %773 = vmatpush1.xpose.msra.mxu0 0.0
  %774 = vmatprep.subr.mxu0 0.0
  %775 = vmatpush1.xpose.msra.mxu0 0.0
  %776 = vmatprep.subr.mxu0 0.0
  %777 = vmatpush1.xpose.msra.mxu0 0.0
  %778 = vmatprep.subr.mxu0 0.0
  %779 = vmatpush1.xpose.msra.mxu0 0.0
  %780 = vmatprep.subr.mxu0 0.0
  %781 = vmatpush1.xpose.msra.mxu0 0.0
  %782 = vmatprep.subr.mxu0 0.0
  %783 = vmatpush1.xpose.msra.mxu0 0.0
  %784 = vmatprep.subr.mxu0 0.0
  %785 = vmatpush1.xpose.msra.mxu0 0.0
  %786 = vmatprep.subr.mxu0 0.0
  %787 = vmatpush1.xpose.msra.mxu0 0.0
  %788 = vmatprep.subr.mxu0 0.0
  %789 = vmatpush1.xpose.msra.mxu0 0.0
  %790 = vmatprep.subr.mxu0 0.0
  %791 = vmatpush1.xpose.msra.mxu0 0.0
  %792 = vmatprep.subr.mxu0 0.0
  %793 = vmatpush1.xpose.msra.mxu0 0.0
  %794 = vmatprep.subr.mxu0 0.0
  %795 = vmatpush1.xpose.msra.mxu0 0.0
  %796 = vmatprep.subr.mxu0 0.0
  %797 = vmatpush1.xpose.msra.mxu0 0.0
  %798 = vmatprep.subr.mxu0 0.0
  %799 = vmatpush1.xpose.msra.mxu0 0.0
  %800 = vmatprep.subr.mxu0 0.0
  %801 = vmatpush1.xpose.msra.mxu0 0.0
  %802 = vmatprep.subr.mxu0 0.0
  %803 = vmatpush1.xpose.msra.mxu0 0.0
  %804 = vmatprep.subr.mxu0 0.0
  %805 = vmatpush1.xpose.msra.mxu0 0.0
  %806 = vmatprep.mubr.f32.mxu0 0.0
  %807 = vmatmul.mubr.f32.gmra.mrb[0].mxu0 %v738
  %v808 = vpop.f32.mrb[0].mxu0
  %v809 = vadd.f32 0.0, %v808
  %v810 = vpop.f32.mrb[0].mxu0
  %811 = vdwg.mxu0
  %813 = vrot.lane.b32.xlu0 %v342, 112
  %v814 = vpop.permute.xlu0 %813
  %v815 = vsel %vm79, %v342, 0
  %v817 = vsel %vm79, %v814, 0
  %819 = vmatprep.subr.mxu0 0.0
  %820 = vmatpush1.xpose.msra.mxu0 %v817
  %821 = vmatprep.subr.mxu0 0.0
  %822 = vmatpush1.xpose.msra.mxu0 0.0
  %823 = vmatprep.subr.mxu0 0.0
  %824 = vmatpush1.xpose.msra.mxu0 0.0
  %825 = vmatprep.subr.mxu0 0.0
  %826 = vmatpush1.xpose.msra.mxu0 0.0
  %827 = vmatprep.subr.mxu0 0.0
  %828 = vmatpush1.xpose.msra.mxu0 0.0
  %829 = vmatprep.subr.mxu0 0.0
  %830 = vmatpush1.xpose.msra.mxu0 0.0
  %831 = vmatprep.subr.mxu0 0.0
  %832 = vmatpush1.xpose.msra.mxu0 0.0
  %833 = vmatprep.subr.mxu0 0.0
  %834 = vmatpush1.xpose.msra.mxu0 0.0
  %835 = vmatprep.subr.mxu0 0.0
  %836 = vmatpush1.xpose.msra.mxu0 0.0
  %837 = vmatprep.subr.mxu0 0.0
  %838 = vmatpush1.xpose.msra.mxu0 0.0
  %839 = vmatprep.subr.mxu0 0.0
  %840 = vmatpush1.xpose.msra.mxu0 0.0
  %841 = vmatprep.subr.mxu0 0.0
  %842 = vmatpush1.xpose.msra.mxu0 0.0
  %843 = vmatprep.subr.mxu0 0.0
  %844 = vmatpush1.xpose.msra.mxu0 0.0
  %845 = vmatprep.subr.mxu0 0.0
  %846 = vmatpush1.xpose.msra.mxu0 0.0
  %847 = vmatprep.subr.mxu0 0.0
  %848 = vmatpush1.xpose.msra.mxu0 0.0
  %849 = vmatprep.subr.mxu0 0.0
  %850 = vmatpush1.xpose.msra.mxu0 0.0
  %851 = vmatprep.subr.mxu0 0.0
  %852 = vmatpush1.xpose.msra.mxu0 0.0
  %853 = vmatprep.subr.mxu0 0.0
  %854 = vmatpush1.xpose.msra.mxu0 0.0
  %855 = vmatprep.subr.mxu0 0.0
  %856 = vmatpush1.xpose.msra.mxu0 0.0
  %857 = vmatprep.subr.mxu0 0.0
  %858 = vmatpush1.xpose.msra.mxu0 0.0
  %859 = vmatprep.subr.mxu0 0.0
  %860 = vmatpush1.xpose.msra.mxu0 0.0
  %861 = vmatprep.subr.mxu0 0.0
  %862 = vmatpush1.xpose.msra.mxu0 0.0
  %863 = vmatprep.subr.mxu0 0.0
  %864 = vmatpush1.xpose.msra.mxu0 0.0
  %865 = vmatprep.subr.mxu0 0.0
  %866 = vmatpush1.xpose.msra.mxu0 0.0
  %867 = vmatprep.subr.mxu0 0.0
  %868 = vmatpush1.xpose.msra.mxu0 0.0
  %869 = vmatprep.subr.mxu0 0.0
  %870 = vmatpush1.xpose.msra.mxu0 0.0
  %871 = vmatprep.subr.mxu0 0.0
  %872 = vmatpush1.xpose.msra.mxu0 0.0
  %873 = vmatprep.subr.mxu0 0.0
  %874 = vmatpush1.xpose.msra.mxu0 0.0
  %875 = vmatprep.subr.mxu0 0.0
  %876 = vmatpush1.xpose.msra.mxu0 0.0
  %877 = vmatprep.subr.mxu0 0.0
  %878 = vmatpush1.xpose.msra.mxu0 0.0
  %879 = vmatprep.subr.mxu0 0.0
  %880 = vmatpush1.xpose.msra.mxu0 0.0
  %881 = vmatprep.subr.mxu0 0.0
  %882 = vmatpush1.xpose.msra.mxu0 0.0
  %883 = vmatprep.mubr.f32.mxu0 0.0
  %884 = vmatmul.mubr.f32.gmra.mrb[0].mxu0 %v815
  %v885 = vpop.f32.mrb[0].mxu0
  %v886 = vadd.f32 0.0, %v885
  %v887 = vpop.f32.mrb[0].mxu0
  %888 = vdwg.mxu0
  %890 = vrot.lane.b32.xlu0 %v347, 112
  %v891 = vpop.permute.xlu0 %890
  %v892 = vsel %vm79, %v347, 0
  %v894 = vsel %vm79, %v891, 0
  %896 = vmatprep.subr.mxu0 0.0
  %897 = vmatpush1.xpose.msra.mxu0 %v894
  %898 = vmatprep.subr.mxu0 0.0
  %899 = vmatpush1.xpose.msra.mxu0 0.0
  %900 = vmatprep.subr.mxu0 0.0
  %901 = vmatpush1.xpose.msra.mxu0 0.0
  %902 = vmatprep.subr.mxu0 0.0
  %903 = vmatpush1.xpose.msra.mxu0 0.0
  %904 = vmatprep.subr.mxu0 0.0
  %905 = vmatpush1.xpose.msra.mxu0 0.0
  %906 = vmatprep.subr.mxu0 0.0
  %907 = vmatpush1.xpose.msra.mxu0 0.0
  %908 = vmatprep.subr.mxu0 0.0
  %909 = vmatpush1.xpose.msra.mxu0 0.0
  %910 = vmatprep.subr.mxu0 0.0
  %911 = vmatpush1.xpose.msra.mxu0 0.0
  %912 = vmatprep.subr.mxu0 0.0
  %913 = vmatpush1.xpose.msra.mxu0 0.0
  %914 = vmatprep.subr.mxu0 0.0
  %915 = vmatpush1.xpose.msra.mxu0 0.0
  %916 = vmatprep.subr.mxu0 0.0
  %917 = vmatpush1.xpose.msra.mxu0 0.0
  %918 = vmatprep.subr.mxu0 0.0
  %919 = vmatpush1.xpose.msra.mxu0 0.0
  %920 = vmatprep.subr.mxu0 0.0
  %921 = vmatpush1.xpose.msra.mxu0 0.0
  %922 = vmatprep.subr.mxu0 0.0
  %923 = vmatpush1.xpose.msra.mxu0 0.0
  %924 = vmatprep.subr.mxu0 0.0
  %925 = vmatpush1.xpose.msra.mxu0 0.0
  %926 = vmatprep.subr.mxu0 0.0
  %927 = vmatpush1.xpose.msra.mxu0 0.0
  %928 = vmatprep.subr.mxu0 0.0
  %929 = vmatpush1.xpose.msra.mxu0 0.0
  %930 = vmatprep.subr.mxu0 0.0
  %931 = vmatpush1.xpose.msra.mxu0 0.0
  %932 = vmatprep.subr.mxu0 0.0
  %933 = vmatpush1.xpose.msra.mxu0 0.0
  %934 = vmatprep.subr.mxu0 0.0
  %935 = vmatpush1.xpose.msra.mxu0 0.0
  %936 = vmatprep.subr.mxu0 0.0
  %937 = vmatpush1.xpose.msra.mxu0 0.0
  %938 = vmatprep.subr.mxu0 0.0
  %939 = vmatpush1.xpose.msra.mxu0 0.0
  %940 = vmatprep.subr.mxu0 0.0
  %941 = vmatpush1.xpose.msra.mxu0 0.0
  %942 = vmatprep.subr.mxu0 0.0
  %943 = vmatpush1.xpose.msra.mxu0 0.0
  %944 = vmatprep.subr.mxu0 0.0
  %945 = vmatpush1.xpose.msra.mxu0 0.0
  %946 = vmatprep.subr.mxu0 0.0
  %947 = vmatpush1.xpose.msra.mxu0 0.0
  %948 = vmatprep.subr.mxu0 0.0
  %949 = vmatpush1.xpose.msra.mxu0 0.0
  %950 = vmatprep.subr.mxu0 0.0
  %951 = vmatpush1.xpose.msra.mxu0 0.0
  %952 = vmatprep.subr.mxu0 0.0
  %953 = vmatpush1.xpose.msra.mxu0 0.0
  %954 = vmatprep.subr.mxu0 0.0
  %955 = vmatpush1.xpose.msra.mxu0 0.0
  %956 = vmatprep.subr.mxu0 0.0
  %957 = vmatpush1.xpose.msra.mxu0 0.0
  %958 = vmatprep.subr.mxu0 0.0
  %959 = vmatpush1.xpose.msra.mxu0 0.0
  %960 = vmatprep.mubr.f32.mxu0 0.0
  %961 = vmatmul.mubr.f32.gmra.mrb[0].mxu0 %v892
  %v962 = vpop.f32.mrb[0].mxu0
  %v963 = vadd.f32 0.0, %v962
  %v964 = vpop.f32.mrb[0].mxu0
  %965 = vdwg.mxu0
  %v966 = vmul.f32 %v424, 0.35355338
  %v967 = vmul.f32 %v501, 0.35355338
  %v968 = vmul.f32 %v578, 0.35355338
  %v969 = vmul.f32 %v655, 0.35355338
  %v970 = vmul.f32 %v732, 0.35355338
  %v971 = vmul.f32 %v809, 0.35355338
  %v972 = vmul.f32 %v886, 0.35355338
  %v973 = vmul.f32 %v963, 0.35355338
  %v974 = vsel %vm79, %v966, -inf
  %975 = vmax.xlane.f32.xlu0 %v974
  %v976 = vpop.xlane.xlu0 %975
  %v977 = vsel %vm79, %v967, -inf
  %978 = vmax.xlane.f32.xlu0 %v977
  %v979 = vpop.xlane.xlu0 %978
  %v980 = vsel %vm79, %v968, -inf
  %981 = vmax.xlane.f32.xlu0 %v980
  %v982 = vpop.xlane.xlu0 %981
  %v983 = vsel %vm79, %v969, -inf
  %984 = vmax.xlane.f32.xlu0 %v983
  %v985 = vpop.xlane.xlu0 %984
  %v986 = vsel %vm79, %v970, -inf
  %987 = vmax.xlane.f32.xlu0 %v986
  %v988 = vpop.xlane.xlu0 %987
  %v989 = vsel %vm79, %v971, -inf
  %990 = vmax.xlane.f32.xlu0 %v989
  %v991 = vpop.xlane.xlu0 %990
  %v992 = vsel %vm79, %v972, -inf
  %993 = vmax.xlane.f32.xlu0 %v992
  %v994 = vpop.xlane.xlu0 %993
  %v995 = vsel %vm79, %v973, -inf
  %996 = vmax.xlane.f32.xlu0 %v995
  %v997 = vpop.xlane.xlu0 %996
  %v998 = vsub.f32 %v966, %v976
  %v999 = vsub.f32 %v967, %v979
  %v1000 = vsub.f32 %v968, %v982
  %v1001 = vsub.f32 %v969, %v985
  %v1002 = vsub.f32 %v970, %v988
  %v1003 = vsub.f32 %v971, %v991
  %v1004 = vsub.f32 %v972, %v994
  %v1005 = vsub.f32 %v973, %v997
  %v1006 = vmul.f32 %v998, 1.442695
  %v1007 = vpow.pop %v1006
  %v1008 = vmul.f32 %v999, 1.442695
  %v1009 = vpow.pop %v1008
  %v1010 = vmul.f32 %v1000, 1.442695
  %v1011 = vpow.pop %v1010
  %v1012 = vmul.f32 %v1001, 1.442695
  %v1013 = vpow.pop %v1012
  %v1014 = vmul.f32 %v1002, 1.442695
  %v1015 = vpow.pop %v1014
  %v1016 = vmul.f32 %v1003, 1.442695
  %v1017 = vpow.pop %v1016
  %v1018 = vmul.f32 %v1004, 1.442695
  %v1019 = vpow.pop %v1018
  %v1020 = vmul.f32 %v1005, 1.442695
  %v1021 = vpow.pop %v1020
  %v1022 = vsel %vm79, %v1007, 0.0
  %1023 = vadd.xlane.f32.xlu0 %v1022
  %v1024 = vpop.xlane.xlu0 %1023
  %v1025 = vsel %vm79, %v1009, 0.0
  %1026 = vadd.xlane.f32.xlu0 %v1025
  %v1027 = vpop.xlane.xlu0 %1026
  %v1028 = vsel %vm79, %v1011, 0.0
  %1029 = vadd.xlane.f32.xlu0 %v1028
  %v1030 = vpop.xlane.xlu0 %1029
  %v1031 = vsel %vm79, %v1013, 0.0
  %1032 = vadd.xlane.f32.xlu0 %v1031
  %v1033 = vpop.xlane.xlu0 %1032
  %v1034 = vsel %vm79, %v1015, 0.0
  %1035 = vadd.xlane.f32.xlu0 %v1034
  %v1036 = vpop.xlane.xlu0 %1035
  %v1037 = vsel %vm79, %v1017, 0.0
  %1038 = vadd.xlane.f32.xlu0 %v1037
  %v1039 = vpop.xlane.xlu0 %1038
  %v1040 = vsel %vm79, %v1019, 0.0
  %1041 = vadd.xlane.f32.xlu0 %v1040
  %v1042 = vpop.xlane.xlu0 %1041
  %v1043 = vsel %vm79, %v1021, 0.0
  %1044 = vadd.xlane.f32.xlu0 %v1043
  %v1045 = vpop.xlane.xlu0 %1044
  %v1046 = vrcp.pop %v1024
  %v1047 = vmul.f32 %v1007, %v1046
  %v1048 = vrcp.pop %v1027
  %v1049 = vmul.f32 %v1009, %v1048
  %v1050 = vrcp.pop %v1030
  %v1051 = vmul.f32 %v1011, %v1050
  %v1052 = vrcp.pop %v1033
  %v1053 = vmul.f32 %v1013, %v1052
  %v1054 = vrcp.pop %v1036
  %v1055 = vmul.f32 %v1015, %v1054
  %v1056 = vrcp.pop %v1039
  %v1057 = vmul.f32 %v1017, %v1056
  %v1058 = vrcp.pop %v1042
  %v1059 = vmul.f32 %v1019, %v1058
  %v1060 = vrcp.pop %v1045
  %v1061 = vmul.f32 %v1021, %v1060
  %1062 = vrot.lane.b32.xlu0 %v312, 96
  %v1063 = vpop.permute.xlu0 %1062
  %v1066 = vsel %vm79, %v1047, 0
  %1068 = vmatprep.subr.mxu0 0.0
  %1069 = vmatpush1.msra.mxu0 %v1063
  %1070 = vmatprep.subr.mxu0 0.0
  %1071 = vmatpush1.msra.mxu0 0.0
  %1072 = vmatprep.subr.mxu0 0.0
  %1073 = vmatpush1.msra.mxu0 0.0
  %1074 = vmatprep.subr.mxu0 0.0
  %1075 = vmatpush1.msra.mxu0 0.0
  %1076 = vmatprep.subr.mxu0 0.0
  %1077 = vmatpush1.msra.mxu0 0.0
  %1078 = vmatprep.subr.mxu0 0.0
  %1079 = vmatpush1.msra.mxu0 0.0
  %1080 = vmatprep.subr.mxu0 0.0
  %1081 = vmatpush1.msra.mxu0 0.0
  %1082 = vmatprep.subr.mxu0 0.0
  %1083 = vmatpush1.msra.mxu0 0.0
  %1084 = vmatprep.subr.mxu0 0.0
  %1085 = vmatpush1.msra.mxu0 0.0
  %1086 = vmatprep.subr.mxu0 0.0
  %1087 = vmatpush1.msra.mxu0 0.0
  %1088 = vmatprep.subr.mxu0 0.0
  %1089 = vmatpush1.msra.mxu0 0.0
  %1090 = vmatprep.subr.mxu0 0.0
  %1091 = vmatpush1.msra.mxu0 0.0
  %1092 = vmatprep.subr.mxu0 0.0
  %1093 = vmatpush1.msra.mxu0 0.0
  %1094 = vmatprep.subr.mxu0 0.0
  %1095 = vmatpush1.msra.mxu0 0.0
  %1096 = vmatprep.subr.mxu0 0.0
  %1097 = vmatpush1.msra.mxu0 0.0
  %1098 = vmatprep.subr.mxu0 0.0
  %1099 = vmatpush1.msra.mxu0 0.0
  %1100 = vmatprep.subr.mxu0 0.0
  %1101 = vmatpush1.msra.mxu0 0.0
  %1102 = vmatprep.subr.mxu0 0.0
  %1103 = vmatpush1.msra.mxu0 0.0
  %1104 = vmatprep.subr.mxu0 0.0
  %1105 = vmatpush1.msra.mxu0 0.0
  %1106 = vmatprep.subr.mxu0 0.0
  %1107 = vmatpush1.msra.mxu0 0.0
  %1108 = vmatprep.subr.mxu0 0.0
  %1109 = vmatpush1.msra.mxu0 0.0
  %1110 = vmatprep.subr.mxu0 0.0
  %1111 = vmatpush1.msra.mxu0 0.0
  %1112 = vmatprep.subr.mxu0 0.0
  %1113 = vmatpush1.msra.mxu0 0.0
  %1114 = vmatprep.subr.mxu0 0.0
  %1115 = vmatpush1.msra.mxu0 0.0
  %1116 = vmatprep.subr.mxu0 0.0
  %1117 = vmatpush1.msra.mxu0 0.0
  %1118 = vmatprep.subr.mxu0 0.0
  %1119 = vmatpush1.msra.mxu0 0.0
  %1120 = vmatprep.subr.mxu0 0.0
  %1121 = vmatpush1.msra.mxu0 0.0
  %1122 = vmatprep.subr.mxu0 0.0
  %1123 = vmatpush1.msra.mxu0 0.0
  %1124 = vmatprep.subr.mxu0 0.0
  %1125 = vmatpush1.msra.mxu0 0.0
  %1126 = vmatprep.subr.mxu0 0.0
  %1127 = vmatpush1.msra.mxu0 0.0
  %1128 = vmatprep.subr.mxu0 0.0
  %1129 = vmatpush1.msra.mxu0 0.0
  %1130 = vmatprep.subr.mxu0 0.0
  %1131 = vmatpush1.msra.mxu0 0.0
  %1132 = vmatprep.mubr.f32.mxu0 0.0
  %1133 = vmatmul.mubr.f32.gmra.mrb[0].mxu0 %v1066
  %v1134 = vpop.f32.mrb[0].mxu0
  %v1135 = vadd.f32 0.0, %v1134
  %v1136 = vpop.f32.mrb[0].mxu0
  %1137 = vdwg.mxu0
  %1138 = vrot.lane.b32.xlu0 %v317, 96
  %v1139 = vpop.permute.xlu0 %1138
  %v1142 = vsel %vm79, %v1049, 0
  %1144 = vmatprep.subr.mxu0 0.0
  %1145 = vmatpush1.msra.mxu0 %v1139
  %1146 = vmatprep.subr.mxu0 0.0
  %1147 = vmatpush1.msra.mxu0 0.0
  %1148 = vmatprep.subr.mxu0 0.0
  %1149 = vmatpush1.msra.mxu0 0.0
  %1150 = vmatprep.subr.mxu0 0.0
  %1151 = vmatpush1.msra.mxu0 0.0
  %1152 = vmatprep.subr.mxu0 0.0
  %1153 = vmatpush1.msra.mxu0 0.0
  %1154 = vmatprep.subr.mxu0 0.0
  %1155 = vmatpush1.msra.mxu0 0.0
  %1156 = vmatprep.subr.mxu0 0.0
  %1157 = vmatpush1.msra.mxu0 0.0
  %1158 = vmatprep.subr.mxu0 0.0
  %1159 = vmatpush1.msra.mxu0 0.0
  %1160 = vmatprep.subr.mxu0 0.0
  %1161 = vmatpush1.msra.mxu0 0.0
  %1162 = vmatprep.subr.mxu0 0.0
  %1163 = vmatpush1.msra.mxu0 0.0
  %1164 = vmatprep.subr.mxu0 0.0
  %1165 = vmatpush1.msra.mxu0 0.0
  %1166 = vmatprep.subr.mxu0 0.0
  %1167 = vmatpush1.msra.mxu0 0.0
  %1168 = vmatprep.subr.mxu0 0.0
  %1169 = vmatpush1.msra.mxu0 0.0
  %1170 = vmatprep.subr.mxu0 0.0
  %1171 = vmatpush1.msra.mxu0 0.0
  %1172 = vmatprep.subr.mxu0 0.0
  %1173 = vmatpush1.msra.mxu0 0.0
  %1174 = vmatprep.subr.mxu0 0.0
  %1175 = vmatpush1.msra.mxu0 0.0
  %1176 = vmatprep.subr.mxu0 0.0
  %1177 = vmatpush1.msra.mxu0 0.0
  %1178 = vmatprep.subr.mxu0 0.0
  %1179 = vmatpush1.msra.mxu0 0.0
  %1180 = vmatprep.subr.mxu0 0.0
  %1181 = vmatpush1.msra.mxu0 0.0
  %1182 = vmatprep.subr.mxu0 0.0
  %1183 = vmatpush1.msra.mxu0 0.0
  %1184 = vmatprep.subr.mxu0 0.0
  %1185 = vmatpush1.msra.mxu0 0.0
  %1186 = vmatprep.subr.mxu0 0.0
  %1187 = vmatpush1.msra.mxu0 0.0
  %1188 = vmatprep.subr.mxu0 0.0
  %1189 = vmatpush1.msra.mxu0 0.0
  %1190 = vmatprep.subr.mxu0 0.0
  %1191 = vmatpush1.msra.mxu0 0.0
  %1192 = vmatprep.subr.mxu0 0.0
  %1193 = vmatpush1.msra.mxu0 0.0
  %1194 = vmatprep.subr.mxu0 0.0
  %1195 = vmatpush1.msra.mxu0 0.0
  %1196 = vmatprep.subr.mxu0 0.0
  %1197 = vmatpush1.msra.mxu0 0.0
  %1198 = vmatprep.subr.mxu0 0.0
  %1199 = vmatpush1.msra.mxu0 0.0
  %1200 = vmatprep.subr.mxu0 0.0
  %1201 = vmatpush1.msra.mxu0 0.0
  %1202 = vmatprep.subr.mxu0 0.0
  %1203 = vmatpush1.msra.mxu0 0.0
  %1204 = vmatprep.subr.mxu0 0.0
  %1205 = vmatpush1.msra.mxu0 0.0
  %1206 = vmatprep.subr.mxu0 0.0
  %1207 = vmatpush1.msra.mxu0 0.0
  %1208 = vmatprep.mubr.f32.mxu0 0.0
  %1209 = vmatmul.mubr.f32.gmra.mrb[0].mxu0 %v1142
  %v1210 = vpop.f32.mrb[0].mxu0
  %v1211 = vadd.f32 0.0, %v1210
  %v1212 = vpop.f32.mrb[0].mxu0
  %1213 = vdwg.mxu0
  %1214 = vrot.lane.b32.xlu0 %v322, 96
  %v1215 = vpop.permute.xlu0 %1214
  %v1218 = vsel %vm79, %v1051, 0
  %1220 = vmatprep.subr.mxu0 0.0
  %1221 = vmatpush1.msra.mxu0 %v1215
  %1222 = vmatprep.subr.mxu0 0.0
  %1223 = vmatpush1.msra.mxu0 0.0
  %1224 = vmatprep.subr.mxu0 0.0
  %1225 = vmatpush1.msra.mxu0 0.0
  %1226 = vmatprep.subr.mxu0 0.0
  %1227 = vmatpush1.msra.mxu0 0.0
  %1228 = vmatprep.subr.mxu0 0.0
  %1229 = vmatpush1.msra.mxu0 0.0
  %1230 = vmatprep.subr.mxu0 0.0
  %1231 = vmatpush1.msra.mxu0 0.0
  %1232 = vmatprep.subr.mxu0 0.0
  %1233 = vmatpush1.msra.mxu0 0.0
  %1234 = vmatprep.subr.mxu0 0.0
  %1235 = vmatpush1.msra.mxu0 0.0
  %1236 = vmatprep.subr.mxu0 0.0
  %1237 = vmatpush1.msra.mxu0 0.0
  %1238 = vmatprep.subr.mxu0 0.0
  %1239 = vmatpush1.msra.mxu0 0.0
  %1240 = vmatprep.subr.mxu0 0.0
  %1241 = vmatpush1.msra.mxu0 0.0
  %1242 = vmatprep.subr.mxu0 0.0
  %1243 = vmatpush1.msra.mxu0 0.0
  %1244 = vmatprep.subr.mxu0 0.0
  %1245 = vmatpush1.msra.mxu0 0.0
  %1246 = vmatprep.subr.mxu0 0.0
  %1247 = vmatpush1.msra.mxu0 0.0
  %1248 = vmatprep.subr.mxu0 0.0
  %1249 = vmatpush1.msra.mxu0 0.0
  %1250 = vmatprep.subr.mxu0 0.0
  %1251 = vmatpush1.msra.mxu0 0.0
  %1252 = vmatprep.subr.mxu0 0.0
  %1253 = vmatpush1.msra.mxu0 0.0
  %1254 = vmatprep.subr.mxu0 0.0
  %1255 = vmatpush1.msra.mxu0 0.0
  %1256 = vmatprep.subr.mxu0 0.0
  %1257 = vmatpush1.msra.mxu0 0.0
  %1258 = vmatprep.subr.mxu0 0.0
  %1259 = vmatpush1.msra.mxu0 0.0
  %1260 = vmatprep.subr.mxu0 0.0
  %1261 = vmatpush1.msra.mxu0 0.0
  %1262 = vmatprep.subr.mxu0 0.0
  %1263 = vmatpush1.msra.mxu0 0.0
  %1264 = vmatprep.subr.mxu0 0.0
  %1265 = vmatpush1.msra.mxu0 0.0
  %1266 = vmatprep.subr.mxu0 0.0
  %1267 = vmatpush1.msra.mxu0 0.0
  %1268 = vmatprep.subr.mxu0 0.0
  %1269 = vmatpush1.msra.mxu0 0.0
  %1270 = vmatprep.subr.mxu0 0.0
  %1271 = vmatpush1.msra.mxu0 0.0
  %1272 = vmatprep.subr.mxu0 0.0
  %1273 = vmatpush1.msra.mxu0 0.0
  %1274 = vmatprep.subr.mxu0 0.0
  %1275 = vmatpush1.msra.mxu0 0.0
  %1276 = vmatprep.subr.mxu0 0.0
  %1277 = vmatpush1.msra.mxu0 0.0
  %1278 = vmatprep.subr.mxu0 0.0
  %1279 = vmatpush1.msra.mxu0 0.0
  %1280 = vmatprep.subr.mxu0 0.0
  %1281 = vmatpush1.msra.mxu0 0.0
  %1282 = vmatprep.subr.mxu0 0.0
  %1283 = vmatpush1.msra.mxu0 0.0
  %1284 = vmatprep.mubr.f32.mxu0 0.0
  %1285 = vmatmul.mubr.f32.gmra.mrb[0].mxu0 %v1218
  %v1286 = vpop.f32.mrb[0].mxu0
  %v1287 = vadd.f32 0.0, %v1286
  %v1288 = vpop.f32.mrb[0].mxu0
  %1289 = vdwg.mxu0
  %1290 = vrot.lane.b32.xlu0 %v327, 96
  %v1291 = vpop.permute.xlu0 %1290
  %v1294 = vsel %vm79, %v1053, 0
  %1296 = vmatprep.subr.mxu0 0.0
  %1297 = vmatpush1.msra.mxu0 %v1291
  %1298 = vmatprep.subr.mxu0 0.0
  %1299 = vmatpush1.msra.mxu0 0.0
  %1300 = vmatprep.subr.mxu0 0.0
  %1301 = vmatpush1.msra.mxu0 0.0
  %1302 = vmatprep.subr.mxu0 0.0
  %1303 = vmatpush1.msra.mxu0 0.0
  %1304 = vmatprep.subr.mxu0 0.0
  %1305 = vmatpush1.msra.mxu0 0.0
  %1306 = vmatprep.subr.mxu0 0.0
  %1307 = vmatpush1.msra.mxu0 0.0
  %1308 = vmatprep.subr.mxu0 0.0
  %1309 = vmatpush1.msra.mxu0 0.0
  %1310 = vmatprep.subr.mxu0 0.0
  %1311 = vmatpush1.msra.mxu0 0.0
  %1312 = vmatprep.subr.mxu0 0.0
  %1313 = vmatpush1.msra.mxu0 0.0
  %1314 = vmatprep.subr.mxu0 0.0
  %1315 = vmatpush1.msra.mxu0 0.0
  %1316 = vmatprep.subr.mxu0 0.0
  %1317 = vmatpush1.msra.mxu0 0.0
  %1318 = vmatprep.subr.mxu0 0.0
  %1319 = vmatpush1.msra.mxu0 0.0
  %1320 = vmatprep.subr.mxu0 0.0
  %1321 = vmatpush1.msra.mxu0 0.0
  %1322 = vmatprep.subr.mxu0 0.0
  %1323 = vmatpush1.msra.mxu0 0.0
  %1324 = vmatprep.subr.mxu0 0.0
  %1325 = vmatpush1.msra.mxu0 0.0
  %1326 = vmatprep.subr.mxu0 0.0
  %1327 = vmatpush1.msra.mxu0 0.0
  %1328 = vmatprep.subr.mxu0 0.0
  %1329 = vmatpush1.msra.mxu0 0.0
  %1330 = vmatprep.subr.mxu0 0.0
  %1331 = vmatpush1.msra.mxu0 0.0
  %1332 = vmatprep.subr.mxu0 0.0
  %1333 = vmatpush1.msra.mxu0 0.0
  %1334 = vmatprep.subr.mxu0 0.0
  %1335 = vmatpush1.msra.mxu0 0.0
  %1336 = vmatprep.subr.mxu0 0.0
  %1337 = vmatpush1.msra.mxu0 0.0
  %1338 = vmatprep.subr.mxu0 0.0
  %1339 = vmatpush1.msra.mxu0 0.0
  %1340 = vmatprep.subr.mxu0 0.0
  %1341 = vmatpush1.msra.mxu0 0.0
  %1342 = vmatprep.subr.mxu0 0.0
  %1343 = vmatpush1.msra.mxu0 0.0
  %1344 = vmatprep.subr.mxu0 0.0
  %1345 = vmatpush1.msra.mxu0 0.0
  %1346 = vmatprep.subr.mxu0 0.0
  %1347 = vmatpush1.msra.mxu0 0.0
  %1348 = vmatprep.subr.mxu0 0.0
  %1349 = vmatpush1.msra.mxu0 0.0
  %1350 = vmatprep.subr.mxu0 0.0
  %1351 = vmatpush1.msra.mxu0 0.0
  %1352 = vmatprep.subr.mxu0 0.0
  %1353 = vmatpush1.msra.mxu0 0.0
  %1354 = vmatprep.subr.mxu0 0.0
  %1355 = vmatpush1.msra.mxu0 0.0
  %1356 = vmatprep.subr.mxu0 0.0
  %1357 = vmatpush1.msra.mxu0 0.0
  %1358 = vmatprep.subr.mxu0 0.0
  %1359 = vmatpush1.msra.mxu0 0.0
  %1360 = vmatprep.mubr.f32.mxu0 0.0
  %1361 = vmatmul.mubr.f32.gmra.mrb[0].mxu0 %v1294
  %v1362 = vpop.f32.mrb[0].mxu0
  %v1363 = vadd.f32 0.0, %v1362
  %v1364 = vpop.f32.mrb[0].mxu0
  %1365 = vdwg.mxu0
  %1366 = vrot.lane.b32.xlu0 %v332, 96
  %v1367 = vpop.permute.xlu0 %1366
  %v1370 = vsel %vm79, %v1055, 0
  %1372 = vmatprep.subr.mxu0 0.0
  %1373 = vmatpush1.msra.mxu0 %v1367
  %1374 = vmatprep.subr.mxu0 0.0
  %1375 = vmatpush1.msra.mxu0 0.0
  %1376 = vmatprep.subr.mxu0 0.0
  %1377 = vmatpush1.msra.mxu0 0.0
  %1378 = vmatprep.subr.mxu0 0.0
  %1379 = vmatpush1.msra.mxu0 0.0
  %1380 = vmatprep.subr.mxu0 0.0
  %1381 = vmatpush1.msra.mxu0 0.0
  %1382 = vmatprep.subr.mxu0 0.0
  %1383 = vmatpush1.msra.mxu0 0.0
  %1384 = vmatprep.subr.mxu0 0.0
  %1385 = vmatpush1.msra.mxu0 0.0
  %1386 = vmatprep.subr.mxu0 0.0
  %1387 = vmatpush1.msra.mxu0 0.0
  %1388 = vmatprep.subr.mxu0 0.0
  %1389 = vmatpush1.msra.mxu0 0.0
  %1390 = vmatprep.subr.mxu0 0.0
  %1391 = vmatpush1.msra.mxu0 0.0
  %1392 = vmatprep.subr.mxu0 0.0
  %1393 = vmatpush1.msra.mxu0 0.0
  %1394 = vmatprep.subr.mxu0 0.0
  %1395 = vmatpush1.msra.mxu0 0.0
  %1396 = vmatprep.subr.mxu0 0.0
  %1397 = vmatpush1.msra.mxu0 0.0
  %1398 = vmatprep.subr.mxu0 0.0
  %1399 = vmatpush1.msra.mxu0 0.0
  %1400 = vmatprep.subr.mxu0 0.0
  %1401 = vmatpush1.msra.mxu0 0.0
  %1402 = vmatprep.subr.mxu0 0.0
  %1403 = vmatpush1.msra.mxu0 0.0
  %1404 = vmatprep.subr.mxu0 0.0
  %1405 = vmatpush1.msra.mxu0 0.0
  %1406 = vmatprep.subr.mxu0 0.0
  %1407 = vmatpush1.msra.mxu0 0.0
  %1408 = vmatprep.subr.mxu0 0.0
  %1409 = vmatpush1.msra.mxu0 0.0
  %1410 = vmatprep.subr.mxu0 0.0
  %1411 = vmatpush1.msra.mxu0 0.0
  %1412 = vmatprep.subr.mxu0 0.0
  %1413 = vmatpush1.msra.mxu0 0.0
  %1414 = vmatprep.subr.mxu0 0.0
  %1415 = vmatpush1.msra.mxu0 0.0
  %1416 = vmatprep.subr.mxu0 0.0
  %1417 = vmatpush1.msra.mxu0 0.0
  %1418 = vmatprep.subr.mxu0 0.0
  %1419 = vmatpush1.msra.mxu0 0.0
  %1420 = vmatprep.subr.mxu0 0.0
  %1421 = vmatpush1.msra.mxu0 0.0
  %1422 = vmatprep.subr.mxu0 0.0
  %1423 = vmatpush1.msra.mxu0 0.0
  %1424 = vmatprep.subr.mxu0 0.0
  %1425 = vmatpush1.msra.mxu0 0.0
  %1426 = vmatprep.subr.mxu0 0.0
  %1427 = vmatpush1.msra.mxu0 0.0
  %1428 = vmatprep.subr.mxu0 0.0
  %1429 = vmatpush1.msra.mxu0 0.0
  %1430 = vmatprep.subr.mxu0 0.0
  %1431 = vmatpush1.msra.mxu0 0.0
  %1432 = vmatprep.subr.mxu0 0.0
  %1433 = vmatpush1.msra.mxu0 0.0
  %1434 = vmatprep.subr.mxu0 0.0
  %1435 = vmatpush1.msra.mxu0 0.0
  %1436 = vmatprep.mubr.f32.mxu0 0.0
  %1437 = vmatmul.mubr.f32.gmra.mrb[0].mxu0 %v1370
  %v1438 = vpop.f32.mrb[0].mxu0
  %v1439 = vadd.f32 0.0, %v1438
  %v1440 = vpop.f32.mrb[0].mxu0
  %1441 = vdwg.mxu0
  %1442 = vrot.lane.b32.xlu0 %v337, 96
  %v1443 = vpop.permute.xlu0 %1442
  %v1446 = vsel %vm79, %v1057, 0
  %1448 = vmatprep.subr.mxu0 0.0
  %1449 = vmatpush1.msra.mxu0 %v1443
  %1450 = vmatprep.subr.mxu0 0.0
  %1451 = vmatpush1.msra.mxu0 0.0
  %1452 = vmatprep.subr.mxu0 0.0
  %1453 = vmatpush1.msra.mxu0 0.0
  %1454 = vmatprep.subr.mxu0 0.0
  %1455 = vmatpush1.msra.mxu0 0.0
  %1456 = vmatprep.subr.mxu0 0.0
  %1457 = vmatpush1.msra.mxu0 0.0
  %1458 = vmatprep.subr.mxu0 0.0
  %1459 = vmatpush1.msra.mxu0 0.0
  %1460 = vmatprep.subr.mxu0 0.0
  %1461 = vmatpush1.msra.mxu0 0.0
  %1462 = vmatprep.subr.mxu0 0.0
  %1463 = vmatpush1.msra.mxu0 0.0
  %1464 = vmatprep.subr.mxu0 0.0
  %1465 = vmatpush1.msra.mxu0 0.0
  %1466 = vmatprep.subr.mxu0 0.0
  %1467 = vmatpush1.msra.mxu0 0.0
  %1468 = vmatprep.subr.mxu0 0.0
  %1469 = vmatpush1.msra.mxu0 0.0
  %1470 = vmatprep.subr.mxu0 0.0
  %1471 = vmatpush1.msra.mxu0 0.0
  %1472 = vmatprep.subr.mxu0 0.0
  %1473 = vmatpush1.msra.mxu0 0.0
  %1474 = vmatprep.subr.mxu0 0.0
  %1475 = vmatpush1.msra.mxu0 0.0
  %1476 = vmatprep.subr.mxu0 0.0
  %1477 = vmatpush1.msra.mxu0 0.0
  %1478 = vmatprep.subr.mxu0 0.0
  %1479 = vmatpush1.msra.mxu0 0.0
  %1480 = vmatprep.subr.mxu0 0.0
  %1481 = vmatpush1.msra.mxu0 0.0
  %1482 = vmatprep.subr.mxu0 0.0
  %1483 = vmatpush1.msra.mxu0 0.0
  %1484 = vmatprep.subr.mxu0 0.0
  %1485 = vmatpush1.msra.mxu0 0.0
  %1486 = vmatprep.subr.mxu0 0.0
  %1487 = vmatpush1.msra.mxu0 0.0
  %1488 = vmatprep.subr.mxu0 0.0
  %1489 = vmatpush1.msra.mxu0 0.0
  %1490 = vmatprep.subr.mxu0 0.0
  %1491 = vmatpush1.msra.mxu0 0.0
  %1492 = vmatprep.subr.mxu0 0.0
  %1493 = vmatpush1.msra.mxu0 0.0
  %1494 = vmatprep.subr.mxu0 0.0
  %1495 = vmatpush1.msra.mxu0 0.0
  %1496 = vmatprep.subr.mxu0 0.0
  %1497 = vmatpush1.msra.mxu0 0.0
  %1498 = vmatprep.subr.mxu0 0.0
  %1499 = vmatpush1.msra.mxu0 0.0
  %1500 = vmatprep.subr.mxu0 0.0
  %1501 = vmatpush1.msra.mxu0 0.0
  %1502 = vmatprep.subr.mxu0 0.0
  %1503 = vmatpush1.msra.mxu0 0.0
  %1504 = vmatprep.subr.mxu0 0.0
  %1505 = vmatpush1.msra.mxu0 0.0
  %1506 = vmatprep.subr.mxu0 0.0
  %1507 = vmatpush1.msra.mxu0 0.0
  %1508 = vmatprep.subr.mxu0 0.0
  %1509 = vmatpush1.msra.mxu0 0.0
  %1510 = vmatprep.subr.mxu0 0.0
  %1511 = vmatpush1.msra.mxu0 0.0
  %1512 = vmatprep.mubr.f32.mxu0 0.0
  %1513 = vmatmul.mubr.f32.gmra.mrb[0].mxu0 %v1446
  %v1514 = vpop.f32.mrb[0].mxu0
  %v1515 = vadd.f32 0.0, %v1514
  %v1516 = vpop.f32.mrb[0].mxu0
  %1517 = vdwg.mxu0
  %1518 = vrot.lane.b32.xlu0 %v342, 96
  %v1519 = vpop.permute.xlu0 %1518
  %v1522 = vsel %vm79, %v1059, 0
  %1524 = vmatprep.subr.mxu0 0.0
  %1525 = vmatpush1.msra.mxu0 %v1519
  %1526 = vmatprep.subr.mxu0 0.0
  %1527 = vmatpush1.msra.mxu0 0.0
  %1528 = vmatprep.subr.mxu0 0.0
  %1529 = vmatpush1.msra.mxu0 0.0
  %1530 = vmatprep.subr.mxu0 0.0
  %1531 = vmatpush1.msra.mxu0 0.0
  %1532 = vmatprep.subr.mxu0 0.0
  %1533 = vmatpush1.msra.mxu0 0.0
  %1534 = vmatprep.subr.mxu0 0.0
  %1535 = vmatpush1.msra.mxu0 0.0
  %1536 = vmatprep.subr.mxu0 0.0
  %1537 = vmatpush1.msra.mxu0 0.0
  %1538 = vmatprep.subr.mxu0 0.0
  %1539 = vmatpush1.msra.mxu0 0.0
  %1540 = vmatprep.subr.mxu0 0.0
  %1541 = vmatpush1.msra.mxu0 0.0
  %1542 = vmatprep.subr.mxu0 0.0
  %1543 = vmatpush1.msra.mxu0 0.0
  %1544 = vmatprep.subr.mxu0 0.0
  %1545 = vmatpush1.msra.mxu0 0.0
  %1546 = vmatprep.subr.mxu0 0.0
  %1547 = vmatpush1.msra.mxu0 0.0
  %1548 = vmatprep.subr.mxu0 0.0
  %1549 = vmatpush1.msra.mxu0 0.0
  %1550 = vmatprep.subr.mxu0 0.0
  %1551 = vmatpush1.msra.mxu0 0.0
  %1552 = vmatprep.subr.mxu0 0.0
  %1553 = vmatpush1.msra.mxu0 0.0
  %1554 = vmatprep.subr.mxu0 0.0
  %1555 = vmatpush1.msra.mxu0 0.0
  %1556 = vmatprep.subr.mxu0 0.0
  %1557 = vmatpush1.msra.mxu0 0.0
  %1558 = vmatprep.subr.mxu0 0.0
  %1559 = vmatpush1.msra.mxu0 0.0
  %1560 = vmatprep.subr.mxu0 0.0
  %1561 = vmatpush1.msra.mxu0 0.0
  %1562 = vmatprep.subr.mxu0 0.0
  %1563 = vmatpush1.msra.mxu0 0.0
  %1564 = vmatprep.subr.mxu0 0.0
  %1565 = vmatpush1.msra.mxu0 0.0
  %1566 = vmatprep.subr.mxu0 0.0
  %1567 = vmatpush1.msra.mxu0 0.0
  %1568 = vmatprep.subr.mxu0 0.0
  %1569 = vmatpush1.msra.mxu0 0.0
  %1570 = vmatprep.subr.mxu0 0.0
  %1571 = vmatpush1.msra.mxu0 0.0
  %1572 = vmatprep.subr.mxu0 0.0
  %1573 = vmatpush1.msra.mxu0 0.0
  %1574 = vmatprep.subr.mxu0 0.0
  %1575 = vmatpush1.msra.mxu0 0.0
  %1576 = vmatprep.subr.mxu0 0.0
  %1577 = vmatpush1.msra.mxu0 0.0
  %1578 = vmatprep.subr.mxu0 0.0
  %1579 = vmatpush1.msra.mxu0 0.0
  %1580 = vmatprep.subr.mxu0 0.0
  %1581 = vmatpush1.msra.mxu0 0.0
  %1582 = vmatprep.subr.mxu0 0.0
  %1583 = vmatpush1.msra.mxu0 0.0
  %1584 = vmatprep.subr.mxu0 0.0
  %1585 = vmatpush1.msra.mxu0 0.0
  %1586 = vmatprep.subr.mxu0 0.0
  %1587 = vmatpush1.msra.mxu0 0.0
  %1588 = vmatprep.mubr.f32.mxu0 0.0
  %1589 = vmatmul.mubr.f32.gmra.mrb[0].mxu0 %v1522
  %v1590 = vpop.f32.mrb[0].mxu0
  %v1591 = vadd.f32 0.0, %v1590
  %v1592 = vpop.f32.mrb[0].mxu0
  %1593 = vdwg.mxu0
  %1594 = vrot.lane.b32.xlu0 %v347, 96
  %v1595 = vpop.permute.xlu0 %1594
  %v1598 = vsel %vm79, %v1061, 0
  %1600 = vmatprep.subr.mxu0 0.0
  %1601 = vmatpush1.msra.mxu0 %v1595
  %1602 = vmatprep.subr.mxu0 0.0
  %1603 = vmatpush1.msra.mxu0 0.0
  %1604 = vmatprep.subr.mxu0 0.0
  %1605 = vmatpush1.msra.mxu0 0.0
  %1606 = vmatprep.subr.mxu0 0.0
  %1607 = vmatpush1.msra.mxu0 0.0
  %1608 = vmatprep.subr.mxu0 0.0
  %1609 = vmatpush1.msra.mxu0 0.0
  %1610 = vmatprep.subr.mxu0 0.0
  %1611 = vmatpush1.msra.mxu0 0.0
  %1612 = vmatprep.subr.mxu0 0.0
  %1613 = vmatpush1.msra.mxu0 0.0
  %1614 = vmatprep.subr.mxu0 0.0
  %1615 = vmatpush1.msra.mxu0 0.0
  %1616 = vmatprep.subr.mxu0 0.0
  %1617 = vmatpush1.msra.mxu0 0.0
  %1618 = vmatprep.subr.mxu0 0.0
  %1619 = vmatpush1.msra.mxu0 0.0
  %1620 = vmatprep.subr.mxu0 0.0
  %1621 = vmatpush1.msra.mxu0 0.0
  %1622 = vmatprep.subr.mxu0 0.0
  %1623 = vmatpush1.msra.mxu0 0.0
  %1624 = vmatprep.subr.mxu0 0.0
  %1625 = vmatpush1.msra.mxu0 0.0
  %1626 = vmatprep.subr.mxu0 0.0
  %1627 = vmatpush1.msra.mxu0 0.0
  %1628 = vmatprep.subr.mxu0 0.0
  %1629 = vmatpush1.msra.mxu0 0.0
  %1630 = vmatprep.subr.mxu0 0.0
  %1631 = vmatpush1.msra.mxu0 0.0
  %1632 = vmatprep.subr.mxu0 0.0
  %1633 = vmatpush1.msra.mxu0 0.0
  %1634 = vmatprep.subr.mxu0 0.0
  %1635 = vmatpush1.msra.mxu0 0.0
  %1636 = vmatprep.subr.mxu0 0.0
  %1637 = vmatpush1.msra.mxu0 0.0
  %1638 = vmatprep.subr.mxu0 0.0
  %1639 = vmatpush1.msra.mxu0 0.0
  %1640 = vmatprep.subr.mxu0 0.0
  %1641 = vmatpush1.msra.mxu0 0.0
  %1642 = vmatprep.subr.mxu0 0.0
  %1643 = vmatpush1.msra.mxu0 0.0
  %1644 = vmatprep.subr.mxu0 0.0
  %1645 = vmatpush1.msra.mxu0 0.0
  %1646 = vmatprep.subr.mxu0 0.0
  %1647 = vmatpush1.msra.mxu0 0.0
  %1648 = vmatprep.subr.mxu0 0.0
  %1649 = vmatpush1.msra.mxu0 0.0
  %1650 = vmatprep.subr.mxu0 0.0
  %1651 = vmatpush1.msra.mxu0 0.0
  %1652 = vmatprep.subr.mxu0 0.0
  %1653 = vmatpush1.msra.mxu0 0.0
  %1654 = vmatprep.subr.mxu0 0.0
  %1655 = vmatpush1.msra.mxu0 0.0
  %1656 = vmatprep.subr.mxu0 0.0
  %1657 = vmatpush1.msra.mxu0 0.0
  %1658 = vmatprep.subr.mxu0 0.0
  %1659 = vmatpush1.msra.mxu0 0.0
  %1660 = vmatprep.subr.mxu0 0.0
  %1661 = vmatpush1.msra.mxu0 0.0
  %1662 = vmatprep.subr.mxu0 0.0
  %1663 = vmatpush1.msra.mxu0 0.0
  %1664 = vmatprep.mubr.f32.mxu0 0.0
  %1665 = vmatmul.mubr.f32.gmra.mrb[0].mxu0 %v1598
  %v1666 = vpop.f32.mrb[0].mxu0
  %v1667 = vadd.f32 0.0, %v1666
  %v1668 = vpop.f32.mrb[0].mxu0
  %1669 = vdwg.mxu0
  %1670 = vrot.lane.b32.xlu0 %v312, 120
  %v1671 = vpop.permute.xlu0 %1670
  %1672 = vrot.lane.b32.xlu0 %v312, 104
  %v1673 = vpop.permute.xlu0 %1672
  %v1674 = vsel %vm79, %v1671, 0
  %v1676 = vsel %vm79, %v1673, 0
  %1678 = vmatprep.subr.mxu0 0.0
  %1679 = vmatpush1.xpose.msra.mxu0 %v1676
  %1680 = vmatprep.subr.mxu0 0.0
  %1681 = vmatpush1.xpose.msra.mxu0 0.0
  %1682 = vmatprep.subr.mxu0 0.0
  %1683 = vmatpush1.xpose.msra.mxu0 0.0
  %1684 = vmatprep.subr.mxu0 0.0
  %1685 = vmatpush1.xpose.msra.mxu0 0.0
  %1686 = vmatprep.subr.mxu0 0.0
  %1687 = vmatpush1.xpose.msra.mxu0 0.0
  %1688 = vmatprep.subr.mxu0 0.0
  %1689 = vmatpush1.xpose.msra.mxu0 0.0
  %1690 = vmatprep.subr.mxu0 0.0
  %1691 = vmatpush1.xpose.msra.mxu0 0.0
  %1692 = vmatprep.subr.mxu0 0.0
  %1693 = vmatpush1.xpose.msra.mxu0 0.0
  %1694 = vmatprep.subr.mxu0 0.0
  %1695 = vmatpush1.xpose.msra.mxu0 0.0
  %1696 = vmatprep.subr.mxu0 0.0
  %1697 = vmatpush1.xpose.msra.mxu0 0.0
  %1698 = vmatprep.subr.mxu0 0.0
  %1699 = vmatpush1.xpose.msra.mxu0 0.0
  %1700 = vmatprep.subr.mxu0 0.0
  %1701 = vmatpush1.xpose.msra.mxu0 0.0
  %1702 = vmatprep.subr.mxu0 0.0
  %1703 = vmatpush1.xpose.msra.mxu0 0.0
  %1704 = vmatprep.subr.mxu0 0.0
  %1705 = vmatpush1.xpose.msra.mxu0 0.0
  %1706 = vmatprep.subr.mxu0 0.0
  %1707 = vmatpush1.xpose.msra.mxu0 0.0
  %1708 = vmatprep.subr.mxu0 0.0
  %1709 = vmatpush1.xpose.msra.mxu0 0.0
  %1710 = vmatprep.subr.mxu0 0.0
  %1711 = vmatpush1.xpose.msra.mxu0 0.0
  %1712 = vmatprep.subr.mxu0 0.0
  %1713 = vmatpush1.xpose.msra.mxu0 0.0
  %1714 = vmatprep.subr.mxu0 0.0
  %1715 = vmatpush1.xpose.msra.mxu0 0.0
  %1716 = vmatprep.subr.mxu0 0.0
  %1717 = vmatpush1.xpose.msra.mxu0 0.0
  %1718 = vmatprep.subr.mxu0 0.0
  %1719 = vmatpush1.xpose.msra.mxu0 0.0
  %1720 = vmatprep.subr.mxu0 0.0
  %1721 = vmatpush1.xpose.msra.mxu0 0.0
  %1722 = vmatprep.subr.mxu0 0.0
  %1723 = vmatpush1.xpose.msra.mxu0 0.0
  %1724 = vmatprep.subr.mxu0 0.0
  %1725 = vmatpush1.xpose.msra.mxu0 0.0
  %1726 = vmatprep.subr.mxu0 0.0
  %1727 = vmatpush1.xpose.msra.mxu0 0.0
  %1728 = vmatprep.subr.mxu0 0.0
  %1729 = vmatpush1.xpose.msra.mxu0 0.0
  %1730 = vmatprep.subr.mxu0 0.0
  %1731 = vmatpush1.xpose.msra.mxu0 0.0
  %1732 = vmatprep.subr.mxu0 0.0
  %1733 = vmatpush1.xpose.msra.mxu0 0.0
  %1734 = vmatprep.subr.mxu0 0.0
  %1735 = vmatpush1.xpose.msra.mxu0 0.0
  %1736 = vmatprep.subr.mxu0 0.0
  %1737 = vmatpush1.xpose.msra.mxu0 0.0
  %1738 = vmatprep.subr.mxu0 0.0
  %1739 = vmatpush1.xpose.msra.mxu0 0.0
  %1740 = vmatprep.subr.mxu0 0.0
  %1741 = vmatpush1.xpose.msra.mxu0 0.0
  %1742 = vmatprep.mubr.f32.mxu0 0.0
  %1743 = vmatmul.mubr.f32.gmra.mrb[0].mxu0 %v1674
  %v1744 = vpop.f32.mrb[0].mxu0
  %v1745 = vadd.f32 0.0, %v1744
  %v1746 = vpop.f32.mrb[0].mxu0
  %1747 = vdwg.mxu0
  %1748 = vrot.lane.b32.xlu0 %v317, 120
  %v1749 = vpop.permute.xlu0 %1748
  %1750 = vrot.lane.b32.xlu0 %v317, 104
  %v1751 = vpop.permute.xlu0 %1750
  %v1752 = vsel %vm79, %v1749, 0
  %v1754 = vsel %vm79, %v1751, 0
  %1756 = vmatprep.subr.mxu0 0.0
  %1757 = vmatpush1.xpose.msra.mxu0 %v1754
  %1758 = vmatprep.subr.mxu0 0.0
  %1759 = vmatpush1.xpose.msra.mxu0 0.0
  %1760 = vmatprep.subr.mxu0 0.0
  %1761 = vmatpush1.xpose.msra.mxu0 0.0
  %1762 = vmatprep.subr.mxu0 0.0
  %1763 = vmatpush1.xpose.msra.mxu0 0.0
  %1764 = vmatprep.subr.mxu0 0.0
  %1765 = vmatpush1.xpose.msra.mxu0 0.0
  %1766 = vmatprep.subr.mxu0 0.0
  %1767 = vmatpush1.xpose.msra.mxu0 0.0
  %1768 = vmatprep.subr.mxu0 0.0
  %1769 = vmatpush1.xpose.msra.mxu0 0.0
  %1770 = vmatprep.subr.mxu0 0.0
  %1771 = vmatpush1.xpose.msra.mxu0 0.0
  %1772 = vmatprep.subr.mxu0 0.0
  %1773 = vmatpush1.xpose.msra.mxu0 0.0
  %1774 = vmatprep.subr.mxu0 0.0
  %1775 = vmatpush1.xpose.msra.mxu0 0.0
  %1776 = vmatprep.subr.mxu0 0.0
  %1777 = vmatpush1.xpose.msra.mxu0 0.0
  %1778 = vmatprep.subr.mxu0 0.0
  %1779 = vmatpush1.xpose.msra.mxu0 0.0
  %1780 = vmatprep.subr.mxu0 0.0
  %1781 = vmatpush1.xpose.msra.mxu0 0.0
  %1782 = vmatprep.subr.mxu0 0.0
  %1783 = vmatpush1.xpose.msra.mxu0 0.0
  %1784 = vmatprep.subr.mxu0 0.0
  %1785 = vmatpush1.xpose.msra.mxu0 0.0
  %1786 = vmatprep.subr.mxu0 0.0
  %1787 = vmatpush1.xpose.msra.mxu0 0.0
  %1788 = vmatprep.subr.mxu0 0.0
  %1789 = vmatpush1.xpose.msra.mxu0 0.0
  %1790 = vmatprep.subr.mxu0 0.0
  %1791 = vmatpush1.xpose.msra.mxu0 0.0
  %1792 = vmatprep.subr.mxu0 0.0
  %1793 = vmatpush1.xpose.msra.mxu0 0.0
  %1794 = vmatprep.subr.mxu0 0.0
  %1795 = vmatpush1.xpose.msra.mxu0 0.0
  %1796 = vmatprep.subr.mxu0 0.0
  %1797 = vmatpush1.xpose.msra.mxu0 0.0
  %1798 = vmatprep.subr.mxu0 0.0
  %1799 = vmatpush1.xpose.msra.mxu0 0.0
  %1800 = vmatprep.subr.mxu0 0.0
  %1801 = vmatpush1.xpose.msra.mxu0 0.0
  %1802 = vmatprep.subr.mxu0 0.0
  %1803 = vmatpush1.xpose.msra.mxu0 0.0
  %1804 = vmatprep.subr.mxu0 0.0
  %1805 = vmatpush1.xpose.msra.mxu0 0.0
  %1806 = vmatprep.subr.mxu0 0.0
  %1807 = vmatpush1.xpose.msra.mxu0 0.0
  %1808 = vmatprep.subr.mxu0 0.0
  %1809 = vmatpush1.xpose.msra.mxu0 0.0
  %1810 = vmatprep.subr.mxu0 0.0
  %1811 = vmatpush1.xpose.msra.mxu0 0.0
  %1812 = vmatprep.subr.mxu0 0.0
  %1813 = vmatpush1.xpose.msra.mxu0 0.0
  %1814 = vmatprep.subr.mxu0 0.0
  %1815 = vmatpush1.xpose.msra.mxu0 0.0
  %1816 = vmatprep.subr.mxu0 0.0
  %1817 = vmatpush1.xpose.msra.mxu0 0.0
  %1818 = vmatprep.subr.mxu0 0.0
  %1819 = vmatpush1.xpose.msra.mxu0 0.0
  %1820 = vmatprep.mubr.f32.mxu0 0.0
  %1821 = vmatmul.mubr.f32.gmra.mrb[0].mxu0 %v1752
  %v1822 = vpop.f32.mrb[0].mxu0
  %v1823 = vadd.f32 0.0, %v1822
  %v1824 = vpop.f32.mrb[0].mxu0
  %1825 = vdwg.mxu0
  %1826 = vrot.lane.b32.xlu0 %v322, 120
  %v1827 = vpop.permute.xlu0 %1826
  %1828 = vrot.lane.b32.xlu0 %v322, 104
  %v1829 = vpop.permute.xlu0 %1828
  %v1830 = vsel %vm79, %v1827, 0
  %v1832 = vsel %vm79, %v1829, 0
  %1834 = vmatprep.subr.mxu0 0.0
  %1835 = vmatpush1.xpose.msra.mxu0 %v1832
  %1836 = vmatprep.subr.mxu0 0.0
  %1837 = vmatpush1.xpose.msra.mxu0 0.0
  %1838 = vmatprep.subr.mxu0 0.0
  %1839 = vmatpush1.xpose.msra.mxu0 0.0
  %1840 = vmatprep.subr.mxu0 0.0
  %1841 = vmatpush1.xpose.msra.mxu0 0.0
  %1842 = vmatprep.subr.mxu0 0.0
  %1843 = vmatpush1.xpose.msra.mxu0 0.0
  %1844 = vmatprep.subr.mxu0 0.0
  %1845 = vmatpush1.xpose.msra.mxu0 0.0
  %1846 = vmatprep.subr.mxu0 0.0
  %1847 = vmatpush1.xpose.msra.mxu0 0.0
  %1848 = vmatprep.subr.mxu0 0.0
  %1849 = vmatpush1.xpose.msra.mxu0 0.0
  %1850 = vmatprep.subr.mxu0 0.0
  %1851 = vmatpush1.xpose.msra.mxu0 0.0
  %1852 = vmatprep.subr.mxu0 0.0
  %1853 = vmatpush1.xpose.msra.mxu0 0.0
  %1854 = vmatprep.subr.mxu0 0.0
  %1855 = vmatpush1.xpose.msra.mxu0 0.0
  %1856 = vmatprep.subr.mxu0 0.0
  %1857 = vmatpush1.xpose.msra.mxu0 0.0
  %1858 = vmatprep.subr.mxu0 0.0
  %1859 = vmatpush1.xpose.msra.mxu0 0.0
  %1860 = vmatprep.subr.mxu0 0.0
  %1861 = vmatpush1.xpose.msra.mxu0 0.0
  %1862 = vmatprep.subr.mxu0 0.0
  %1863 = vmatpush1.xpose.msra.mxu0 0.0
  %1864 = vmatprep.subr.mxu0 0.0
  %1865 = vmatpush1.xpose.msra.mxu0 0.0
  %1866 = vmatprep.subr.mxu0 0.0
  %1867 = vmatpush1.xpose.msra.mxu0 0.0
  %1868 = vmatprep.subr.mxu0 0.0
  %1869 = vmatpush1.xpose.msra.mxu0 0.0
  %1870 = vmatprep.subr.mxu0 0.0
  %1871 = vmatpush1.xpose.msra.mxu0 0.0
  %1872 = vmatprep.subr.mxu0 0.0
  %1873 = vmatpush1.xpose.msra.mxu0 0.0
  %1874 = vmatprep.subr.mxu0 0.0
  %1875 = vmatpush1.xpose.msra.mxu0 0.0
  %1876 = vmatprep.subr.mxu0 0.0
  %1877 = vmatpush1.xpose.msra.mxu0 0.0
  %1878 = vmatprep.subr.mxu0 0.0
  %1879 = vmatpush1.xpose.msra.mxu0 0.0
  %1880 = vmatprep.subr.mxu0 0.0
  %1881 = vmatpush1.xpose.msra.mxu0 0.0
  %1882 = vmatprep.subr.mxu0 0.0
  %1883 = vmatpush1.xpose.msra.mxu0 0.0
  %1884 = vmatprep.subr.mxu0 0.0
  %1885 = vmatpush1.xpose.msra.mxu0 0.0
  %1886 = vmatprep.subr.mxu0 0.0
  %1887 = vmatpush1.xpose.msra.mxu0 0.0
  %1888 = vmatprep.subr.mxu0 0.0
  %1889 = vmatpush1.xpose.msra.mxu0 0.0
  %1890 = vmatprep.subr.mxu0 0.0
  %1891 = vmatpush1.xpose.msra.mxu0 0.0
  %1892 = vmatprep.subr.mxu0 0.0
  %1893 = vmatpush1.xpose.msra.mxu0 0.0
  %1894 = vmatprep.subr.mxu0 0.0
  %1895 = vmatpush1.xpose.msra.mxu0 0.0
  %1896 = vmatprep.subr.mxu0 0.0
  %1897 = vmatpush1.xpose.msra.mxu0 0.0
  %1898 = vmatprep.mubr.f32.mxu0 0.0
  %1899 = vmatmul.mubr.f32.gmra.mrb[0].mxu0 %v1830
  %v1900 = vpop.f32.mrb[0].mxu0
  %v1901 = vadd.f32 0.0, %v1900
  %v1902 = vpop.f32.mrb[0].mxu0
  %1903 = vdwg.mxu0
  %1904 = vrot.lane.b32.xlu0 %v327, 120
  %v1905 = vpop.permute.xlu0 %1904
  %1906 = vrot.lane.b32.xlu0 %v327, 104
  %v1907 = vpop.permute.xlu0 %1906
  %v1908 = vsel %vm79, %v1905, 0
  %v1910 = vsel %vm79, %v1907, 0
  %1912 = vmatprep.subr.mxu0 0.0
  %1913 = vmatpush1.xpose.msra.mxu0 %v1910
  %1914 = vmatprep.subr.mxu0 0.0
  %1915 = vmatpush1.xpose.msra.mxu0 0.0
  %1916 = vmatprep.subr.mxu0 0.0
  %1917 = vmatpush1.xpose.msra.mxu0 0.0
  %1918 = vmatprep.subr.mxu0 0.0
  %1919 = vmatpush1.xpose.msra.mxu0 0.0
  %1920 = vmatprep.subr.mxu0 0.0
  %1921 = vmatpush1.xpose.msra.mxu0 0.0
  %1922 = vmatprep.subr.mxu0 0.0
  %1923 = vmatpush1.xpose.msra.mxu0 0.0
  %1924 = vmatprep.subr.mxu0 0.0
  %1925 = vmatpush1.xpose.msra.mxu0 0.0
  %1926 = vmatprep.subr.mxu0 0.0
  %1927 = vmatpush1.xpose.msra.mxu0 0.0
  %1928 = vmatprep.subr.mxu0 0.0
  %1929 = vmatpush1.xpose.msra.mxu0 0.0
  %1930 = vmatprep.subr.mxu0 0.0
  %1931 = vmatpush1.xpose.msra.mxu0 0.0
  %1932 = vmatprep.subr.mxu0 0.0
  %1933 = vmatpush1.xpose.msra.mxu0 0.0
  %1934 = vmatprep.subr.mxu0 0.0
  %1935 = vmatpush1.xpose.msra.mxu0 0.0
  %1936 = vmatprep.subr.mxu0 0.0
  %1937 = vmatpush1.xpose.msra.mxu0 0.0
  %1938 = vmatprep.subr.mxu0 0.0
  %1939 = vmatpush1.xpose.msra.mxu0 0.0
  %1940 = vmatprep.subr.mxu0 0.0
  %1941 = vmatpush1.xpose.msra.mxu0 0.0
  %1942 = vmatprep.subr.mxu0 0.0
  %1943 = vmatpush1.xpose.msra.mxu0 0.0
  %1944 = vmatprep.subr.mxu0 0.0
  %1945 = vmatpush1.xpose.msra.mxu0 0.0
  %1946 = vmatprep.subr.mxu0 0.0
  %1947 = vmatpush1.xpose.msra.mxu0 0.0
  %1948 = vmatprep.subr.mxu0 0.0
  %1949 = vmatpush1.xpose.msra.mxu0 0.0
  %1950 = vmatprep.subr.mxu0 0.0
  %1951 = vmatpush1.xpose.msra.mxu0 0.0
  %1952 = vmatprep.subr.mxu0 0.0
  %1953 = vmatpush1.xpose.msra.mxu0 0.0
  %1954 = vmatprep.subr.mxu0 0.0
  %1955 = vmatpush1.xpose.msra.mxu0 0.0
  %1956 = vmatprep.subr.mxu0 0.0
  %1957 = vmatpush1.xpose.msra.mxu0 0.0
  %1958 = vmatprep.subr.mxu0 0.0
  %1959 = vmatpush1.xpose.msra.mxu0 0.0
  %1960 = vmatprep.subr.mxu0 0.0
  %1961 = vmatpush1.xpose.msra.mxu0 0.0
  %1962 = vmatprep.subr.mxu0 0.0
  %1963 = vmatpush1.xpose.msra.mxu0 0.0
  %1964 = vmatprep.subr.mxu0 0.0
  %1965 = vmatpush1.xpose.msra.mxu0 0.0
  %1966 = vmatprep.subr.mxu0 0.0
  %1967 = vmatpush1.xpose.msra.mxu0 0.0
  %1968 = vmatprep.subr.mxu0 0.0
  %1969 = vmatpush1.xpose.msra.mxu0 0.0
  %1970 = vmatprep.subr.mxu0 0.0
  %1971 = vmatpush1.xpose.msra.mxu0 0.0
  %1972 = vmatprep.subr.mxu0 0.0
  %1973 = vmatpush1.xpose.msra.mxu0 0.0
  %1974 = vmatprep.subr.mxu0 0.0
  %1975 = vmatpush1.xpose.msra.mxu0 0.0
  %1976 = vmatprep.mubr.f32.mxu0 0.0
  %1977 = vmatmul.mubr.f32.gmra.mrb[0].mxu0 %v1908
  %v1978 = vpop.f32.mrb[0].mxu0
  %v1979 = vadd.f32 0.0, %v1978
  %v1980 = vpop.f32.mrb[0].mxu0
  %1981 = vdwg.mxu0
  %1982 = vrot.lane.b32.xlu0 %v332, 120
  %v1983 = vpop.permute.xlu0 %1982
  %1984 = vrot.lane.b32.xlu0 %v332, 104
  %v1985 = vpop.permute.xlu0 %1984
  %v1986 = vsel %vm79, %v1983, 0
  %v1988 = vsel %vm79, %v1985, 0
  %1990 = vmatprep.subr.mxu0 0.0
  %1991 = vmatpush1.xpose.msra.mxu0 %v1988
  %1992 = vmatprep.subr.mxu0 0.0
  %1993 = vmatpush1.xpose.msra.mxu0 0.0
  %1994 = vmatprep.subr.mxu0 0.0
  %1995 = vmatpush1.xpose.msra.mxu0 0.0
  %1996 = vmatprep.subr.mxu0 0.0
  %1997 = vmatpush1.xpose.msra.mxu0 0.0
  %1998 = vmatprep.subr.mxu0 0.0
  %1999 = vmatpush1.xpose.msra.mxu0 0.0
  %2000 = vmatprep.subr.mxu0 0.0
  %2001 = vmatpush1.xpose.msra.mxu0 0.0
  %2002 = vmatprep.subr.mxu0 0.0
  %2003 = vmatpush1.xpose.msra.mxu0 0.0
  %2004 = vmatprep.subr.mxu0 0.0
  %2005 = vmatpush1.xpose.msra.mxu0 0.0
  %2006 = vmatprep.subr.mxu0 0.0
  %2007 = vmatpush1.xpose.msra.mxu0 0.0
  %2008 = vmatprep.subr.mxu0 0.0
  %2009 = vmatpush1.xpose.msra.mxu0 0.0
  %2010 = vmatprep.subr.mxu0 0.0
  %2011 = vmatpush1.xpose.msra.mxu0 0.0
  %2012 = vmatprep.subr.mxu0 0.0
  %2013 = vmatpush1.xpose.msra.mxu0 0.0
  %2014 = vmatprep.subr.mxu0 0.0
  %2015 = vmatpush1.xpose.msra.mxu0 0.0
  %2016 = vmatprep.subr.mxu0 0.0
  %2017 = vmatpush1.xpose.msra.mxu0 0.0
  %2018 = vmatprep.subr.mxu0 0.0
  %2019 = vmatpush1.xpose.msra.mxu0 0.0
  %2020 = vmatprep.subr.mxu0 0.0
  %2021 = vmatpush1.xpose.msra.mxu0 0.0
  %2022 = vmatprep.subr.mxu0 0.0
  %2023 = vmatpush1.xpose.msra.mxu0 0.0
  %2024 = vmatprep.subr.mxu0 0.0
  %2025 = vmatpush1.xpose.msra.mxu0 0.0
  %2026 = vmatprep.subr.mxu0 0.0
  %2027 = vmatpush1.xpose.msra.mxu0 0.0
  %2028 = vmatprep.subr.mxu0 0.0
  %2029 = vmatpush1.xpose.msra.mxu0 0.0
  %2030 = vmatprep.subr.mxu0 0.0
  %2031 = vmatpush1.xpose.msra.mxu0 0.0
  %2032 = vmatprep.subr.mxu0 0.0
  %2033 = vmatpush1.xpose.msra.mxu0 0.0
  %2034 = vmatprep.subr.mxu0 0.0
  %2035 = vmatpush1.xpose.msra.mxu0 0.0
  %2036 = vmatprep.subr.mxu0 0.0
  %2037 = vmatpush1.xpose.msra.mxu0 0.0
  %2038 = vmatprep.subr.mxu0 0.0
  %2039 = vmatpush1.xpose.msra.mxu0 0.0
  %2040 = vmatprep.subr.mxu0 0.0
  %2041 = vmatpush1.xpose.msra.mxu0 0.0
  %2042 = vmatprep.subr.mxu0 0.0
  %2043 = vmatpush1.xpose.msra.mxu0 0.0
  %2044 = vmatprep.subr.mxu0 0.0
  %2045 = vmatpush1.xpose.msra.mxu0 0.0
  %2046 = vmatprep.subr.mxu0 0.0
  %2047 = vmatpush1.xpose.msra.mxu0 0.0
  %2048 = vmatprep.subr.mxu0 0.0
  %2049 = vmatpush1.xpose.msra.mxu0 0.0
  %2050 = vmatprep.subr.mxu0 0.0
  %2051 = vmatpush1.xpose.msra.mxu0 0.0
  %2052 = vmatprep.subr.mxu0 0.0
  %2053 = vmatpush1.xpose.msra.mxu0 0.0
  %2054 = vmatprep.mubr.f32.mxu0 0.0
  %2055 = vmatmul.mubr.f32.gmra.mrb[0].mxu0 %v1986
  %v2056 = vpop.f32.mrb[0].mxu0
  %v2057 = vadd.f32 0.0, %v2056
  %v2058 = vpop.f32.mrb[0].mxu0
  %2059 = vdwg.mxu0
  %2060 = vrot.lane.b32.xlu0 %v337, 120
  %v2061 = vpop.permute.xlu0 %2060
  %2062 = vrot.lane.b32.xlu0 %v337, 104
  %v2063 = vpop.permute.xlu0 %2062
  %v2064 = vsel %vm79, %v2061, 0
  %v2066 = vsel %vm79, %v2063, 0
  %2068 = vmatprep.subr.mxu0 0.0
  %2069 = vmatpush1.xpose.msra.mxu0 %v2066
  %2070 = vmatprep.subr.mxu0 0.0
  %2071 = vmatpush1.xpose.msra.mxu0 0.0
  %2072 = vmatprep.subr.mxu0 0.0
  %2073 = vmatpush1.xpose.msra.mxu0 0.0
  %2074 = vmatprep.subr.mxu0 0.0
  %2075 = vmatpush1.xpose.msra.mxu0 0.0
  %2076 = vmatprep.subr.mxu0 0.0
  %2077 = vmatpush1.xpose.msra.mxu0 0.0
  %2078 = vmatprep.subr.mxu0 0.0
  %2079 = vmatpush1.xpose.msra.mxu0 0.0
  %2080 = vmatprep.subr.mxu0 0.0
  %2081 = vmatpush1.xpose.msra.mxu0 0.0
  %2082 = vmatprep.subr.mxu0 0.0
  %2083 = vmatpush1.xpose.msra.mxu0 0.0
  %2084 = vmatprep.subr.mxu0 0.0
  %2085 = vmatpush1.xpose.msra.mxu0 0.0
  %2086 = vmatprep.subr.mxu0 0.0
  %2087 = vmatpush1.xpose.msra.mxu0 0.0
  %2088 = vmatprep.subr.mxu0 0.0
  %2089 = vmatpush1.xpose.msra.mxu0 0.0
  %2090 = vmatprep.subr.mxu0 0.0
  %2091 = vmatpush1.xpose.msra.mxu0 0.0
  %2092 = vmatprep.subr.mxu0 0.0
  %2093 = vmatpush1.xpose.msra.mxu0 0.0
  %2094 = vmatprep.subr.mxu0 0.0
  %2095 = vmatpush1.xpose.msra.mxu0 0.0
  %2096 = vmatprep.subr.mxu0 0.0
  %2097 = vmatpush1.xpose.msra.mxu0 0.0
  %2098 = vmatprep.subr.mxu0 0.0
  %2099 = vmatpush1.xpose.msra.mxu0 0.0
  %2100 = vmatprep.subr.mxu0 0.0
  %2101 = vmatpush1.xpose.msra.mxu0 0.0
  %2102 = vmatprep.subr.mxu0 0.0
  %2103 = vmatpush1.xpose.msra.mxu0 0.0
  %2104 = vmatprep.subr.mxu0 0.0
  %2105 = vmatpush1.xpose.msra.mxu0 0.0
  %2106 = vmatprep.subr.mxu0 0.0
  %2107 = vmatpush1.xpose.msra.mxu0 0.0
  %2108 = vmatprep.subr.mxu0 0.0
  %2109 = vmatpush1.xpose.msra.mxu0 0.0
  %2110 = vmatprep.subr.mxu0 0.0
  %2111 = vmatpush1.xpose.msra.mxu0 0.0
  %2112 = vmatprep.subr.mxu0 0.0
  %2113 = vmatpush1.xpose.msra.mxu0 0.0
  %2114 = vmatprep.subr.mxu0 0.0
  %2115 = vmatpush1.xpose.msra.mxu0 0.0
  %2116 = vmatprep.subr.mxu0 0.0
  %2117 = vmatpush1.xpose.msra.mxu0 0.0
  %2118 = vmatprep.subr.mxu0 0.0
  %2119 = vmatpush1.xpose.msra.mxu0 0.0
  %2120 = vmatprep.subr.mxu0 0.0
  %2121 = vmatpush1.xpose.msra.mxu0 0.0
  %2122 = vmatprep.subr.mxu0 0.0
  %2123 = vmatpush1.xpose.msra.mxu0 0.0
  %2124 = vmatprep.subr.mxu0 0.0
  %2125 = vmatpush1.xpose.msra.mxu0 0.0
  %2126 = vmatprep.subr.mxu0 0.0
  %2127 = vmatpush1.xpose.msra.mxu0 0.0
  %2128 = vmatprep.subr.mxu0 0.0
  %2129 = vmatpush1.xpose.msra.mxu0 0.0
  %2130 = vmatprep.subr.mxu0 0.0
  %2131 = vmatpush1.xpose.msra.mxu0 0.0
  %2132 = vmatprep.mubr.f32.mxu0 0.0
  %2133 = vmatmul.mubr.f32.gmra.mrb[0].mxu0 %v2064
  %v2134 = vpop.f32.mrb[0].mxu0
  %v2135 = vadd.f32 0.0, %v2134
  %v2136 = vpop.f32.mrb[0].mxu0
  %2137 = vdwg.mxu0
  %2138 = vrot.lane.b32.xlu0 %v342, 120
  %v2139 = vpop.permute.xlu0 %2138
  %2140 = vrot.lane.b32.xlu0 %v342, 104
  %v2141 = vpop.permute.xlu0 %2140
  %v2142 = vsel %vm79, %v2139, 0
  %v2144 = vsel %vm79, %v2141, 0
  %2146 = vmatprep.subr.mxu0 0.0
  %2147 = vmatpush1.xpose.msra.mxu0 %v2144
  %2148 = vmatprep.subr.mxu0 0.0
  %2149 = vmatpush1.xpose.msra.mxu0 0.0
  %2150 = vmatprep.subr.mxu0 0.0
  %2151 = vmatpush1.xpose.msra.mxu0 0.0
  %2152 = vmatprep.subr.mxu0 0.0
  %2153 = vmatpush1.xpose.msra.mxu0 0.0
  %2154 = vmatprep.subr.mxu0 0.0
  %2155 = vmatpush1.xpose.msra.mxu0 0.0
  %2156 = vmatprep.subr.mxu0 0.0
  %2157 = vmatpush1.xpose.msra.mxu0 0.0
  %2158 = vmatprep.subr.mxu0 0.0
  %2159 = vmatpush1.xpose.msra.mxu0 0.0
  %2160 = vmatprep.subr.mxu0 0.0
  %2161 = vmatpush1.xpose.msra.mxu0 0.0
  %2162 = vmatprep.subr.mxu0 0.0
  %2163 = vmatpush1.xpose.msra.mxu0 0.0
  %2164 = vmatprep.subr.mxu0 0.0
  %2165 = vmatpush1.xpose.msra.mxu0 0.0
  %2166 = vmatprep.subr.mxu0 0.0
  %2167 = vmatpush1.xpose.msra.mxu0 0.0
  %2168 = vmatprep.subr.mxu0 0.0
  %2169 = vmatpush1.xpose.msra.mxu0 0.0
  %2170 = vmatprep.subr.mxu0 0.0
  %2171 = vmatpush1.xpose.msra.mxu0 0.0
  %2172 = vmatprep.subr.mxu0 0.0
  %2173 = vmatpush1.xpose.msra.mxu0 0.0
  %2174 = vmatprep.subr.mxu0 0.0
  %2175 = vmatpush1.xpose.msra.mxu0 0.0
  %2176 = vmatprep.subr.mxu0 0.0
  %2177 = vmatpush1.xpose.msra.mxu0 0.0
  %2178 = vmatprep.subr.mxu0 0.0
  %2179 = vmatpush1.xpose.msra.mxu0 0.0
  %2180 = vmatprep.subr.mxu0 0.0
  %2181 = vmatpush1.xpose.msra.mxu0 0.0
  %2182 = vmatprep.subr.mxu0 0.0
  %2183 = vmatpush1.xpose.msra.mxu0 0.0
  %2184 = vmatprep.subr.mxu0 0.0
  %2185 = vmatpush1.xpose.msra.mxu0 0.0
  %2186 = vmatprep.subr.mxu0 0.0
  %2187 = vmatpush1.xpose.msra.mxu0 0.0
  %2188 = vmatprep.subr.mxu0 0.0
  %2189 = vmatpush1.xpose.msra.mxu0 0.0
  %2190 = vmatprep.subr.mxu0 0.0
  %2191 = vmatpush1.xpose.msra.mxu0 0.0
  %2192 = vmatprep.subr.mxu0 0.0
  %2193 = vmatpush1.xpose.msra.mxu0 0.0
  %2194 = vmatprep.subr.mxu0 0.0
  %2195 = vmatpush1.xpose.msra.mxu0 0.0
  %2196 = vmatprep.subr.mxu0 0.0
  %2197 = vmatpush1.xpose.msra.mxu0 0.0
  %2198 = vmatprep.subr.mxu0 0.0
  %2199 = vmatpush1.xpose.msra.mxu0 0.0
  %2200 = vmatprep.subr.mxu0 0.0
  %2201 = vmatpush1.xpose.msra.mxu0 0.0
  %2202 = vmatprep.subr.mxu0 0.0
  %2203 = vmatpush1.xpose.msra.mxu0 0.0
  %2204 = vmatprep.subr.mxu0 0.0
  %2205 = vmatpush1.xpose.msra.mxu0 0.0
  %2206 = vmatprep.subr.mxu0 0.0
  %2207 = vmatpush1.xpose.msra.mxu0 0.0
  %2208 = vmatprep.subr.mxu0 0.0
  %2209 = vmatpush1.xpose.msra.mxu0 0.0
  %2210 = vmatprep.mubr.f32.mxu0 0.0
  %2211 = vmatmul.mubr.f32.gmra.mrb[0].mxu0 %v2142
  %v2212 = vpop.f32.mrb[0].mxu0
  %v2213 = vadd.f32 0.0, %v2212
  %v2214 = vpop.f32.mrb[0].mxu0
  %2215 = vdwg.mxu0
  %2216 = vrot.lane.b32.xlu0 %v347, 120
  %v2217 = vpop.permute.xlu0 %2216
  %2218 = vrot.lane.b32.xlu0 %v347, 104
  %v2219 = vpop.permute.xlu0 %2218
  %v2220 = vsel %vm79, %v2217, 0
  %v2222 = vsel %vm79, %v2219, 0
  %2224 = vmatprep.subr.mxu0 0.0
  %2225 = vmatpush1.xpose.msra.mxu0 %v2222
  %2226 = vmatprep.subr.mxu0 0.0
  %2227 = vmatpush1.xpose.msra.mxu0 0.0
  %2228 = vmatprep.subr.mxu0 0.0
  %2229 = vmatpush1.xpose.msra.mxu0 0.0
  %2230 = vmatprep.subr.mxu0 0.0
  %2231 = vmatpush1.xpose.msra.mxu0 0.0
  %2232 = vmatprep.subr.mxu0 0.0
  %2233 = vmatpush1.xpose.msra.mxu0 0.0
  %2234 = vmatprep.subr.mxu0 0.0
  %2235 = vmatpush1.xpose.msra.mxu0 0.0
  %2236 = vmatprep.subr.mxu0 0.0
  %2237 = vmatpush1.xpose.msra.mxu0 0.0
  %2238 = vmatprep.subr.mxu0 0.0
  %2239 = vmatpush1.xpose.msra.mxu0 0.0
  %2240 = vmatprep.subr.mxu0 0.0
  %2241 = vmatpush1.xpose.msra.mxu0 0.0
  %2242 = vmatprep.subr.mxu0 0.0
  %2243 = vmatpush1.xpose.msra.mxu0 0.0
  %2244 = vmatprep.subr.mxu0 0.0
  %2245 = vmatpush1.xpose.msra.mxu0 0.0
  %2246 = vmatprep.subr.mxu0 0.0
  %2247 = vmatpush1.xpose.msra.mxu0 0.0
  %2248 = vmatprep.subr.mxu0 0.0
  %2249 = vmatpush1.xpose.msra.mxu0 0.0
  %2250 = vmatprep.subr.mxu0 0.0
  %2251 = vmatpush1.xpose.msra.mxu0 0.0
  %2252 = vmatprep.subr.mxu0 0.0
  %2253 = vmatpush1.xpose.msra.mxu0 0.0
  %2254 = vmatprep.subr.mxu0 0.0
  %2255 = vmatpush1.xpose.msra.mxu0 0.0
  %2256 = vmatprep.subr.mxu0 0.0
  %2257 = vmatpush1.xpose.msra.mxu0 0.0
  %2258 = vmatprep.subr.mxu0 0.0
  %2259 = vmatpush1.xpose.msra.mxu0 0.0
  %2260 = vmatprep.subr.mxu0 0.0
  %2261 = vmatpush1.xpose.msra.mxu0 0.0
  %2262 = vmatprep.subr.mxu0 0.0
  %2263 = vmatpush1.xpose.msra.mxu0 0.0
  %2264 = vmatprep.subr.mxu0 0.0
  %2265 = vmatpush1.xpose.msra.mxu0 0.0
  %2266 = vmatprep.subr.mxu0 0.0
  %2267 = vmatpush1.xpose.msra.mxu0 0.0
  %2268 = vmatprep.subr.mxu0 0.0
  %2269 = vmatpush1.xpose.msra.mxu0 0.0
  %2270 = vmatprep.subr.mxu0 0.0
  %2271 = vmatpush1.xpose.msra.mxu0 0.0
  %2272 = vmatprep.subr.mxu0 0.0
  %2273 = vmatpush1.xpose.msra.mxu0 0.0
  %2274 = vmatprep.subr.mxu0 0.0
  %2275 = vmatpush1.xpose.msra.mxu0 0.0
  %2276 = vmatprep.subr.mxu0 0.0
  %2277 = vmatpush1.xpose.msra.mxu0 0.0
  %2278 = vmatprep.subr.mxu0 0.0
  %2279 = vmatpush1.xpose.msra.mxu0 0.0
  %2280 = vmatprep.subr.mxu0 0.0
  %2281 = vmatpush1.xpose.msra.mxu0 0.0
  %2282 = vmatprep.subr.mxu0 0.0
  %2283 = vmatpush1.xpose.msra.mxu0 0.0
  %2284 = vmatprep.subr.mxu0 0.0
  %2285 = vmatpush1.xpose.msra.mxu0 0.0
  %2286 = vmatprep.subr.mxu0 0.0
  %2287 = vmatpush1.xpose.msra.mxu0 0.0
  %2288 = vmatprep.mubr.f32.mxu0 0.0
  %2289 = vmatmul.mubr.f32.gmra.mrb[0].mxu0 %v2220
  %v2290 = vpop.f32.mrb[0].mxu0
  %v2291 = vadd.f32 0.0, %v2290
  %v2292 = vpop.f32.mrb[0].mxu0
  %2293 = vdwg.mxu0
  %v2294 = vmul.f32 %v1745, 0.35355338
  %v2295 = vmul.f32 %v1823, 0.35355338
  %v2296 = vmul.f32 %v1901, 0.35355338
  %v2297 = vmul.f32 %v1979, 0.35355338
  %v2298 = vmul.f32 %v2057, 0.35355338
  %v2299 = vmul.f32 %v2135, 0.35355338
  %v2300 = vmul.f32 %v2213, 0.35355338
  %v2301 = vmul.f32 %v2291, 0.35355338
  %v2302 = vsel %vm79, %v2294, -inf
  %2303 = vmax.xlane.f32.xlu0 %v2302
  %v2304 = vpop.xlane.xlu0 %2303
  %v2305 = vsel %vm79, %v2295, -inf
  %2306 = vmax.xlane.f32.xlu0 %v2305
  %v2307 = vpop.xlane.xlu0 %2306
  %v2308 = vsel %vm79, %v2296, -inf
  %2309 = vmax.xlane.f32.xlu0 %v2308
  %v2310 = vpop.xlane.xlu0 %2309
  %v2311 = vsel %vm79, %v2297, -inf
  %2312 = vmax.xlane.f32.xlu0 %v2311
  %v2313 = vpop.xlane.xlu0 %2312
  %v2314 = vsel %vm79, %v2298, -inf
  %2315 = vmax.xlane.f32.xlu0 %v2314
  %v2316 = vpop.xlane.xlu0 %2315
  %v2317 = vsel %vm79, %v2299, -inf
  %2318 = vmax.xlane.f32.xlu0 %v2317
  %v2319 = vpop.xlane.xlu0 %2318
  %v2320 = vsel %vm79, %v2300, -inf
  %2321 = vmax.xlane.f32.xlu0 %v2320
  %v2322 = vpop.xlane.xlu0 %2321
  %v2323 = vsel %vm79, %v2301, -inf
  %2324 = vmax.xlane.f32.xlu0 %v2323
  %v2325 = vpop.xlane.xlu0 %2324
  %v2326 = vsub.f32 %v2294, %v2304
  %v2327 = vsub.f32 %v2295, %v2307
  %v2328 = vsub.f32 %v2296, %v2310
  %v2329 = vsub.f32 %v2297, %v2313
  %v2330 = vsub.f32 %v2298, %v2316
  %v2331 = vsub.f32 %v2299, %v2319
  %v2332 = vsub.f32 %v2300, %v2322
  %v2333 = vsub.f32 %v2301, %v2325
  %v2334 = vmul.f32 %v2326, 1.442695
  %v2335 = vpow.pop %v2334
  %v2336 = vmul.f32 %v2327, 1.442695
  %v2337 = vpow.pop %v2336
  %v2338 = vmul.f32 %v2328, 1.442695
  %v2339 = vpow.pop %v2338
  %v2340 = vmul.f32 %v2329, 1.442695
  %v2341 = vpow.pop %v2340
  %v2342 = vmul.f32 %v2330, 1.442695
  %v2343 = vpow.pop %v2342
  %v2344 = vmul.f32 %v2331, 1.442695
  %v2345 = vpow.pop %v2344
  %v2346 = vmul.f32 %v2332, 1.442695
  %v2347 = vpow.pop %v2346
  %v2348 = vmul.f32 %v2333, 1.442695
  %v2349 = vpow.pop %v2348
  %v2350 = vsel %vm79, %v2335, 0.0
  %2351 = vadd.xlane.f32.xlu0 %v2350
  %v2352 = vpop.xlane.xlu0 %2351
  %v2353 = vsel %vm79, %v2337, 0.0
  %2354 = vadd.xlane.f32.xlu0 %v2353
  %v2355 = vpop.xlane.xlu0 %2354
  %v2356 = vsel %vm79, %v2339, 0.0
  %2357 = vadd.xlane.f32.xlu0 %v2356
  %v2358 = vpop.xlane.xlu0 %2357
  %v2359 = vsel %vm79, %v2341, 0.0
  %2360 = vadd.xlane.f32.xlu0 %v2359
  %v2361 = vpop.xlane.xlu0 %2360
  %v2362 = vsel %vm79, %v2343, 0.0
  %2363 = vadd.xlane.f32.xlu0 %v2362
  %v2364 = vpop.xlane.xlu0 %2363
  %v2365 = vsel %vm79, %v2345, 0.0
  %2366 = vadd.xlane.f32.xlu0 %v2365
  %v2367 = vpop.xlane.xlu0 %2366
  %v2368 = vsel %vm79, %v2347, 0.0
  %2369 = vadd.xlane.f32.xlu0 %v2368
  %v2370 = vpop.xlane.xlu0 %2369
  %v2371 = vsel %vm79, %v2349, 0.0
  %2372 = vadd.xlane.f32.xlu0 %v2371
  %v2373 = vpop.xlane.xlu0 %2372
  %v2374 = vrcp.pop %v2352
  %v2375 = vmul.f32 %v2335, %v2374
  %v2376 = vrcp.pop %v2355
  %v2377 = vmul.f32 %v2337, %v2376
  %v2378 = vrcp.pop %v2358
  %v2379 = vmul.f32 %v2339, %v2378
  %v2380 = vrcp.pop %v2361
  %v2381 = vmul.f32 %v2341, %v2380
  %v2382 = vrcp.pop %v2364
  %v2383 = vmul.f32 %v2343, %v2382
  %v2384 = vrcp.pop %v2367
  %v2385 = vmul.f32 %v2345, %v2384
  %v2386 = vrcp.pop %v2370
  %v2387 = vmul.f32 %v2347, %v2386
  %v2388 = vrcp.pop %v2373
  %v2389 = vmul.f32 %v2349, %v2388
  %2390 = vrot.lane.b32.xlu0 %v312, 88
  %v2391 = vpop.permute.xlu0 %2390
  %v2394 = vsel %vm79, %v2375, 0
  %2396 = vmatprep.subr.mxu0 0.0
  %2397 = vmatpush1.msra.mxu0 %v2391
  %2398 = vmatprep.subr.mxu0 0.0
  %2399 = vmatpush1.msra.mxu0 0.0
  %2400 = vmatprep.subr.mxu0 0.0
  %2401 = vmatpush1.msra.mxu0 0.0
  %2402 = vmatprep.subr.mxu0 0.0
  %2403 = vmatpush1.msra.mxu0 0.0
  %2404 = vmatprep.subr.mxu0 0.0
  %2405 = vmatpush1.msra.mxu0 0.0
  %2406 = vmatprep.subr.mxu0 0.0
  %2407 = vmatpush1.msra.mxu0 0.0
  %2408 = vmatprep.subr.mxu0 0.0
  %2409 = vmatpush1.msra.mxu0 0.0
  %2410 = vmatprep.subr.mxu0 0.0
  %2411 = vmatpush1.msra.mxu0 0.0
  %2412 = vmatprep.subr.mxu0 0.0
  %2413 = vmatpush1.msra.mxu0 0.0
  %2414 = vmatprep.subr.mxu0 0.0
  %2415 = vmatpush1.msra.mxu0 0.0
  %2416 = vmatprep.subr.mxu0 0.0
  %2417 = vmatpush1.msra.mxu0 0.0
  %2418 = vmatprep.subr.mxu0 0.0
  %2419 = vmatpush1.msra.mxu0 0.0
  %2420 = vmatprep.subr.mxu0 0.0
  %2421 = vmatpush1.msra.mxu0 0.0
  %2422 = vmatprep.subr.mxu0 0.0
  %2423 = vmatpush1.msra.mxu0 0.0
  %2424 = vmatprep.subr.mxu0 0.0
  %2425 = vmatpush1.msra.mxu0 0.0
  %2426 = vmatprep.subr.mxu0 0.0
  %2427 = vmatpush1.msra.mxu0 0.0
  %2428 = vmatprep.subr.mxu0 0.0
  %2429 = vmatpush1.msra.mxu0 0.0
  %2430 = vmatprep.subr.mxu0 0.0
  %2431 = vmatpush1.msra.mxu0 0.0
  %2432 = vmatprep.subr.mxu0 0.0
  %2433 = vmatpush1.msra.mxu0 0.0
  %2434 = vmatprep.subr.mxu0 0.0
  %2435 = vmatpush1.msra.mxu0 0.0
  %2436 = vmatprep.subr.mxu0 0.0
  %2437 = vmatpush1.msra.mxu0 0.0
  %2438 = vmatprep.subr.mxu0 0.0
  %2439 = vmatpush1.msra.mxu0 0.0
  %2440 = vmatprep.subr.mxu0 0.0
  %2441 = vmatpush1.msra.mxu0 0.0
  %2442 = vmatprep.subr.mxu0 0.0
  %2443 = vmatpush1.msra.mxu0 0.0
  %2444 = vmatprep.subr.mxu0 0.0
  %2445 = vmatpush1.msra.mxu0 0.0
  %2446 = vmatprep.subr.mxu0 0.0
  %2447 = vmatpush1.msra.mxu0 0.0
  %2448 = vmatprep.subr.mxu0 0.0
  %2449 = vmatpush1.msra.mxu0 0.0
  %2450 = vmatprep.subr.mxu0 0.0
  %2451 = vmatpush1.msra.mxu0 0.0
  %2452 = vmatprep.subr.mxu0 0.0
  %2453 = vmatpush1.msra.mxu0 0.0
  %2454 = vmatprep.subr.mxu0 0.0
  %2455 = vmatpush1.msra.mxu0 0.0
  %2456 = vmatprep.subr.mxu0 0.0
  %2457 = vmatpush1.msra.mxu0 0.0
  %2458 = vmatprep.subr.mxu0 0.0
  %2459 = vmatpush1.msra.mxu0 0.0
  %2460 = vmatprep.mubr.f32.mxu0 0.0
  %2461 = vmatmul.mubr.f32.gmra.mrb[0].mxu0 %v2394
  %v2462 = vpop.f32.mrb[0].mxu0
  %v2463 = vadd.f32 0.0, %v2462
  %v2464 = vpop.f32.mrb[0].mxu0
  %2465 = vdwg.mxu0
  %2466 = vrot.lane.b32.xlu0 %v317, 88
  %v2467 = vpop.permute.xlu0 %2466
  %v2470 = vsel %vm79, %v2377, 0
  %2472 = vmatprep.subr.mxu0 0.0
  %2473 = vmatpush1.msra.mxu0 %v2467
  %2474 = vmatprep.subr.mxu0 0.0
  %2475 = vmatpush1.msra.mxu0 0.0
  %2476 = vmatprep.subr.mxu0 0.0
  %2477 = vmatpush1.msra.mxu0 0.0
  %2478 = vmatprep.subr.mxu0 0.0
  %2479 = vmatpush1.msra.mxu0 0.0
  %2480 = vmatprep.subr.mxu0 0.0
  %2481 = vmatpush1.msra.mxu0 0.0
  %2482 = vmatprep.subr.mxu0 0.0
  %2483 = vmatpush1.msra.mxu0 0.0
  %2484 = vmatprep.subr.mxu0 0.0
  %2485 = vmatpush1.msra.mxu0 0.0
  %2486 = vmatprep.subr.mxu0 0.0
  %2487 = vmatpush1.msra.mxu0 0.0
  %2488 = vmatprep.subr.mxu0 0.0
  %2489 = vmatpush1.msra.mxu0 0.0
  %2490 = vmatprep.subr.mxu0 0.0
  %2491 = vmatpush1.msra.mxu0 0.0
  %2492 = vmatprep.subr.mxu0 0.0
  %2493 = vmatpush1.msra.mxu0 0.0
  %2494 = vmatprep.subr.mxu0 0.0
  %2495 = vmatpush1.msra.mxu0 0.0
  %2496 = vmatprep.subr.mxu0 0.0
  %2497 = vmatpush1.msra.mxu0 0.0
  %2498 = vmatprep.subr.mxu0 0.0
  %2499 = vmatpush1.msra.mxu0 0.0
  %2500 = vmatprep.subr.mxu0 0.0
  %2501 = vmatpush1.msra.mxu0 0.0
  %2502 = vmatprep.subr.mxu0 0.0
  %2503 = vmatpush1.msra.mxu0 0.0
  %2504 = vmatprep.subr.mxu0 0.0
  %2505 = vmatpush1.msra.mxu0 0.0
  %2506 = vmatprep.subr.mxu0 0.0
  %2507 = vmatpush1.msra.mxu0 0.0
  %2508 = vmatprep.subr.mxu0 0.0
  %2509 = vmatpush1.msra.mxu0 0.0
  %2510 = vmatprep.subr.mxu0 0.0
  %2511 = vmatpush1.msra.mxu0 0.0
  %2512 = vmatprep.subr.mxu0 0.0
  %2513 = vmatpush1.msra.mxu0 0.0
  %2514 = vmatprep.subr.mxu0 0.0
  %2515 = vmatpush1.msra.mxu0 0.0
  %2516 = vmatprep.subr.mxu0 0.0
  %2517 = vmatpush1.msra.mxu0 0.0
  %2518 = vmatprep.subr.mxu0 0.0
  %2519 = vmatpush1.msra.mxu0 0.0
  %2520 = vmatprep.subr.mxu0 0.0
  %2521 = vmatpush1.msra.mxu0 0.0
  %2522 = vmatprep.subr.mxu0 0.0
  %2523 = vmatpush1.msra.mxu0 0.0
  %2524 = vmatprep.subr.mxu0 0.0
  %2525 = vmatpush1.msra.mxu0 0.0
  %2526 = vmatprep.subr.mxu0 0.0
  %2527 = vmatpush1.msra.mxu0 0.0
  %2528 = vmatprep.subr.mxu0 0.0
  %2529 = vmatpush1.msra.mxu0 0.0
  %2530 = vmatprep.subr.mxu0 0.0
  %2531 = vmatpush1.msra.mxu0 0.0
  %2532 = vmatprep.subr.mxu0 0.0
  %2533 = vmatpush1.msra.mxu0 0.0
  %2534 = vmatprep.subr.mxu0 0.0
  %2535 = vmatpush1.msra.mxu0 0.0
  %2536 = vmatprep.mubr.f32.mxu0 0.0
  %2537 = vmatmul.mubr.f32.gmra.mrb[0].mxu0 %v2470
  %v2538 = vpop.f32.mrb[0].mxu0
  %v2539 = vadd.f32 0.0, %v2538
  %v2540 = vpop.f32.mrb[0].mxu0
  %2541 = vdwg.mxu0
  %2542 = vrot.lane.b32.xlu0 %v322, 88
  %v2543 = vpop.permute.xlu0 %2542
  %v2546 = vsel %vm79, %v2379, 0
  %2548 = vmatprep.subr.mxu0 0.0
  %2549 = vmatpush1.msra.mxu0 %v2543
  %2550 = vmatprep.subr.mxu0 0.0
  %2551 = vmatpush1.msra.mxu0 0.0
  %2552 = vmatprep.subr.mxu0 0.0
  %2553 = vmatpush1.msra.mxu0 0.0
  %2554 = vmatprep.subr.mxu0 0.0
  %2555 = vmatpush1.msra.mxu0 0.0
  %2556 = vmatprep.subr.mxu0 0.0
  %2557 = vmatpush1.msra.mxu0 0.0
  %2558 = vmatprep.subr.mxu0 0.0
  %2559 = vmatpush1.msra.mxu0 0.0
  %2560 = vmatprep.subr.mxu0 0.0
  %2561 = vmatpush1.msra.mxu0 0.0
  %2562 = vmatprep.subr.mxu0 0.0
  %2563 = vmatpush1.msra.mxu0 0.0
  %2564 = vmatprep.subr.mxu0 0.0
  %2565 = vmatpush1.msra.mxu0 0.0
  %2566 = vmatprep.subr.mxu0 0.0
  %2567 = vmatpush1.msra.mxu0 0.0
  %2568 = vmatprep.subr.mxu0 0.0
  %2569 = vmatpush1.msra.mxu0 0.0
  %2570 = vmatprep.subr.mxu0 0.0
  %2571 = vmatpush1.msra.mxu0 0.0
  %2572 = vmatprep.subr.mxu0 0.0
  %2573 = vmatpush1.msra.mxu0 0.0
  %2574 = vmatprep.subr.mxu0 0.0
  %2575 = vmatpush1.msra.mxu0 0.0
  %2576 = vmatprep.subr.mxu0 0.0
  %2577 = vmatpush1.msra.mxu0 0.0
  %2578 = vmatprep.subr.mxu0 0.0
  %2579 = vmatpush1.msra.mxu0 0.0
  %2580 = vmatprep.subr.mxu0 0.0
  %2581 = vmatpush1.msra.mxu0 0.0
  %2582 = vmatprep.subr.mxu0 0.0
  %2583 = vmatpush1.msra.mxu0 0.0
  %2584 = vmatprep.subr.mxu0 0.0
  %2585 = vmatpush1.msra.mxu0 0.0
  %2586 = vmatprep.subr.mxu0 0.0
  %2587 = vmatpush1.msra.mxu0 0.0
  %2588 = vmatprep.subr.mxu0 0.0
  %2589 = vmatpush1.msra.mxu0 0.0
  %2590 = vmatprep.subr.mxu0 0.0
  %2591 = vmatpush1.msra.mxu0 0.0
  %2592 = vmatprep.subr.mxu0 0.0
  %2593 = vmatpush1.msra.mxu0 0.0
  %2594 = vmatprep.subr.mxu0 0.0
  %2595 = vmatpush1.msra.mxu0 0.0
  %2596 = vmatprep.subr.mxu0 0.0
  %2597 = vmatpush1.msra.mxu0 0.0
  %2598 = vmatprep.subr.mxu0 0.0
  %2599 = vmatpush1.msra.mxu0 0.0
  %2600 = vmatprep.subr.mxu0 0.0
  %2601 = vmatpush1.msra.mxu0 0.0
  %2602 = vmatprep.subr.mxu0 0.0
  %2603 = vmatpush1.msra.mxu0 0.0
  %2604 = vmatprep.subr.mxu0 0.0
  %2605 = vmatpush1.msra.mxu0 0.0
  %2606 = vmatprep.subr.mxu0 0.0
  %2607 = vmatpush1.msra.mxu0 0.0
  %2608 = vmatprep.subr.mxu0 0.0
  %2609 = vmatpush1.msra.mxu0 0.0
  %2610 = vmatprep.subr.mxu0 0.0
  %2611 = vmatpush1.msra.mxu0 0.0
  %2612 = vmatprep.mubr.f32.mxu0 0.0
  %2613 = vmatmul.mubr.f32.gmra.mrb[0].mxu0 %v2546
  %v2614 = vpop.f32.mrb[0].mxu0
  %v2615 = vadd.f32 0.0, %v2614
  %v2616 = vpop.f32.mrb[0].mxu0
  %2617 = vdwg.mxu0
  %2618 = vrot.lane.b32.xlu0 %v327, 88
  %v2619 = vpop.permute.xlu0 %2618
  %v2622 = vsel %vm79, %v2381, 0
  %2624 = vmatprep.subr.mxu0 0.0
  %2625 = vmatpush1.msra.mxu0 %v2619
  %2626 = vmatprep.subr.mxu0 0.0
  %2627 = vmatpush1.msra.mxu0 0.0
  %2628 = vmatprep.subr.mxu0 0.0
  %2629 = vmatpush1.msra.mxu0 0.0
  %2630 = vmatprep.subr.mxu0 0.0
  %2631 = vmatpush1.msra.mxu0 0.0
  %2632 = vmatprep.subr.mxu0 0.0
  %2633 = vmatpush1.msra.mxu0 0.0
  %2634 = vmatprep.subr.mxu0 0.0
  %2635 = vmatpush1.msra.mxu0 0.0
  %2636 = vmatprep.subr.mxu0 0.0
  %2637 = vmatpush1.msra.mxu0 0.0
  %2638 = vmatprep.subr.mxu0 0.0
  %2639 = vmatpush1.msra.mxu0 0.0
  %2640 = vmatprep.subr.mxu0 0.0
  %2641 = vmatpush1.msra.mxu0 0.0
  %2642 = vmatprep.subr.mxu0 0.0
  %2643 = vmatpush1.msra.mxu0 0.0
  %2644 = vmatprep.subr.mxu0 0.0
  %2645 = vmatpush1.msra.mxu0 0.0
  %2646 = vmatprep.subr.mxu0 0.0
  %2647 = vmatpush1.msra.mxu0 0.0
  %2648 = vmatprep.subr.mxu0 0.0
  %2649 = vmatpush1.msra.mxu0 0.0
  %2650 = vmatprep.subr.mxu0 0.0
  %2651 = vmatpush1.msra.mxu0 0.0
  %2652 = vmatprep.subr.mxu0 0.0
  %2653 = vmatpush1.msra.mxu0 0.0
  %2654 = vmatprep.subr.mxu0 0.0
  %2655 = vmatpush1.msra.mxu0 0.0
  %2656 = vmatprep.subr.mxu0 0.0
  %2657 = vmatpush1.msra.mxu0 0.0
  %2658 = vmatprep.subr.mxu0 0.0
  %2659 = vmatpush1.msra.mxu0 0.0
  %2660 = vmatprep.subr.mxu0 0.0
  %2661 = vmatpush1.msra.mxu0 0.0
  %2662 = vmatprep.subr.mxu0 0.0
  %2663 = vmatpush1.msra.mxu0 0.0
  %2664 = vmatprep.subr.mxu0 0.0
  %2665 = vmatpush1.msra.mxu0 0.0
  %2666 = vmatprep.subr.mxu0 0.0
  %2667 = vmatpush1.msra.mxu0 0.0
  %2668 = vmatprep.subr.mxu0 0.0
  %2669 = vmatpush1.msra.mxu0 0.0
  %2670 = vmatprep.subr.mxu0 0.0
  %2671 = vmatpush1.msra.mxu0 0.0
  %2672 = vmatprep.subr.mxu0 0.0
  %2673 = vmatpush1.msra.mxu0 0.0
  %2674 = vmatprep.subr.mxu0 0.0
  %2675 = vmatpush1.msra.mxu0 0.0
  %2676 = vmatprep.subr.mxu0 0.0
  %2677 = vmatpush1.msra.mxu0 0.0
  %2678 = vmatprep.subr.mxu0 0.0
  %2679 = vmatpush1.msra.mxu0 0.0
  %2680 = vmatprep.subr.mxu0 0.0
  %2681 = vmatpush1.msra.mxu0 0.0
  %2682 = vmatprep.subr.mxu0 0.0
  %2683 = vmatpush1.msra.mxu0 0.0
  %2684 = vmatprep.subr.mxu0 0.0
  %2685 = vmatpush1.msra.mxu0 0.0
  %2686 = vmatprep.subr.mxu0 0.0
  %2687 = vmatpush1.msra.mxu0 0.0
  %2688 = vmatprep.mubr.f32.mxu0 0.0
  %2689 = vmatmul.mubr.f32.gmra.mrb[0].mxu0 %v2622
  %v2690 = vpop.f32.mrb[0].mxu0
  %v2691 = vadd.f32 0.0, %v2690
  %v2692 = vpop.f32.mrb[0].mxu0
  %2693 = vdwg.mxu0
  %2694 = vrot.lane.b32.xlu0 %v332, 88
  %v2695 = vpop.permute.xlu0 %2694
  %v2698 = vsel %vm79, %v2383, 0
  %2700 = vmatprep.subr.mxu0 0.0
  %2701 = vmatpush1.msra.mxu0 %v2695
  %2702 = vmatprep.subr.mxu0 0.0
  %2703 = vmatpush1.msra.mxu0 0.0
  %2704 = vmatprep.subr.mxu0 0.0
  %2705 = vmatpush1.msra.mxu0 0.0
  %2706 = vmatprep.subr.mxu0 0.0
  %2707 = vmatpush1.msra.mxu0 0.0
  %2708 = vmatprep.subr.mxu0 0.0
  %2709 = vmatpush1.msra.mxu0 0.0
  %2710 = vmatprep.subr.mxu0 0.0
  %2711 = vmatpush1.msra.mxu0 0.0
  %2712 = vmatprep.subr.mxu0 0.0
  %2713 = vmatpush1.msra.mxu0 0.0
  %2714 = vmatprep.subr.mxu0 0.0
  %2715 = vmatpush1.msra.mxu0 0.0
  %2716 = vmatprep.subr.mxu0 0.0
  %2717 = vmatpush1.msra.mxu0 0.0
  %2718 = vmatprep.subr.mxu0 0.0
  %2719 = vmatpush1.msra.mxu0 0.0
  %2720 = vmatprep.subr.mxu0 0.0
  %2721 = vmatpush1.msra.mxu0 0.0
  %2722 = vmatprep.subr.mxu0 0.0
  %2723 = vmatpush1.msra.mxu0 0.0
  %2724 = vmatprep.subr.mxu0 0.0
  %2725 = vmatpush1.msra.mxu0 0.0
  %2726 = vmatprep.subr.mxu0 0.0
  %2727 = vmatpush1.msra.mxu0 0.0
  %2728 = vmatprep.subr.mxu0 0.0
  %2729 = vmatpush1.msra.mxu0 0.0
  %2730 = vmatprep.subr.mxu0 0.0
  %2731 = vmatpush1.msra.mxu0 0.0
  %2732 = vmatprep.subr.mxu0 0.0
  %2733 = vmatpush1.msra.mxu0 0.0
  %2734 = vmatprep.subr.mxu0 0.0
  %2735 = vmatpush1.msra.mxu0 0.0
  %2736 = vmatprep.subr.mxu0 0.0
  %2737 = vmatpush1.msra.mxu0 0.0
  %2738 = vmatprep.subr.mxu0 0.0
  %2739 = vmatpush1.msra.mxu0 0.0
  %2740 = vmatprep.subr.mxu0 0.0
  %2741 = vmatpush1.msra.mxu0 0.0
  %2742 = vmatprep.subr.mxu0 0.0
  %2743 = vmatpush1.msra.mxu0 0.0
  %2744 = vmatprep.subr.mxu0 0.0
  %2745 = vmatpush1.msra.mxu0 0.0
  %2746 = vmatprep.subr.mxu0 0.0
  %2747 = vmatpush1.msra.mxu0 0.0
  %2748 = vmatprep.subr.mxu0 0.0
  %2749 = vmatpush1.msra.mxu0 0.0
  %2750 = vmatprep.subr.mxu0 0.0
  %2751 = vmatpush1.msra.mxu0 0.0
  %2752 = vmatprep.subr.mxu0 0.0
  %2753 = vmatpush1.msra.mxu0 0.0
  %2754 = vmatprep.subr.mxu0 0.0
  %2755 = vmatpush1.msra.mxu0 0.0
  %2756 = vmatprep.subr.mxu0 0.0
  %2757 = vmatpush1.msra.mxu0 0.0
  %2758 = vmatprep.subr.mxu0 0.0
  %2759 = vmatpush1.msra.mxu0 0.0
  %2760 = vmatprep.subr.mxu0 0.0
  %2761 = vmatpush1.msra.mxu0 0.0
  %2762 = vmatprep.subr.mxu0 0.0
  %2763 = vmatpush1.msra.mxu0 0.0
  %2764 = vmatprep.mubr.f32.mxu0 0.0
  %2765 = vmatmul.mubr.f32.gmra.mrb[0].mxu0 %v2698
  %v2766 = vpop.f32.mrb[0].mxu0
  %v2767 = vadd.f32 0.0, %v2766
  %v2768 = vpop.f32.mrb[0].mxu0
  %2769 = vdwg.mxu0
  %2770 = vrot.lane.b32.xlu0 %v337, 88
  %v2771 = vpop.permute.xlu0 %2770
  %v2774 = vsel %vm79, %v2385, 0
  %2776 = vmatprep.subr.mxu0 0.0
  %2777 = vmatpush1.msra.mxu0 %v2771
  %2778 = vmatprep.subr.mxu0 0.0
  %2779 = vmatpush1.msra.mxu0 0.0
  %2780 = vmatprep.subr.mxu0 0.0
  %2781 = vmatpush1.msra.mxu0 0.0
  %2782 = vmatprep.subr.mxu0 0.0
  %2783 = vmatpush1.msra.mxu0 0.0
  %2784 = vmatprep.subr.mxu0 0.0
  %2785 = vmatpush1.msra.mxu0 0.0
  %2786 = vmatprep.subr.mxu0 0.0
  %2787 = vmatpush1.msra.mxu0 0.0
  %2788 = vmatprep.subr.mxu0 0.0
  %2789 = vmatpush1.msra.mxu0 0.0
  %2790 = vmatprep.subr.mxu0 0.0
  %2791 = vmatpush1.msra.mxu0 0.0
  %2792 = vmatprep.subr.mxu0 0.0
  %2793 = vmatpush1.msra.mxu0 0.0
  %2794 = vmatprep.subr.mxu0 0.0
  %2795 = vmatpush1.msra.mxu0 0.0
  %2796 = vmatprep.subr.mxu0 0.0
  %2797 = vmatpush1.msra.mxu0 0.0
  %2798 = vmatprep.subr.mxu0 0.0
  %2799 = vmatpush1.msra.mxu0 0.0
  %2800 = vmatprep.subr.mxu0 0.0
  %2801 = vmatpush1.msra.mxu0 0.0
  %2802 = vmatprep.subr.mxu0 0.0
  %2803 = vmatpush1.msra.mxu0 0.0
  %2804 = vmatprep.subr.mxu0 0.0
  %2805 = vmatpush1.msra.mxu0 0.0
  %2806 = vmatprep.subr.mxu0 0.0
  %2807 = vmatpush1.msra.mxu0 0.0
  %2808 = vmatprep.subr.mxu0 0.0
  %2809 = vmatpush1.msra.mxu0 0.0
  %2810 = vmatprep.subr.mxu0 0.0
  %2811 = vmatpush1.msra.mxu0 0.0
  %2812 = vmatprep.subr.mxu0 0.0
  %2813 = vmatpush1.msra.mxu0 0.0
  %2814 = vmatprep.subr.mxu0 0.0
  %2815 = vmatpush1.msra.mxu0 0.0
  %2816 = vmatprep.subr.mxu0 0.0
  %2817 = vmatpush1.msra.mxu0 0.0
  %2818 = vmatprep.subr.mxu0 0.0
  %2819 = vmatpush1.msra.mxu0 0.0
  %2820 = vmatprep.subr.mxu0 0.0
  %2821 = vmatpush1.msra.mxu0 0.0
  %2822 = vmatprep.subr.mxu0 0.0
  %2823 = vmatpush1.msra.mxu0 0.0
  %2824 = vmatprep.subr.mxu0 0.0
  %2825 = vmatpush1.msra.mxu0 0.0
  %2826 = vmatprep.subr.mxu0 0.0
  %2827 = vmatpush1.msra.mxu0 0.0
  %2828 = vmatprep.subr.mxu0 0.0
  %2829 = vmatpush1.msra.mxu0 0.0
  %2830 = vmatprep.subr.mxu0 0.0
  %2831 = vmatpush1.msra.mxu0 0.0
  %2832 = vmatprep.subr.mxu0 0.0
  %2833 = vmatpush1.msra.mxu0 0.0
  %2834 = vmatprep.subr.mxu0 0.0
  %2835 = vmatpush1.msra.mxu0 0.0
  %2836 = vmatprep.subr.mxu0 0.0
  %2837 = vmatpush1.msra.mxu0 0.0
  %2838 = vmatprep.subr.mxu0 0.0
  %2839 = vmatpush1.msra.mxu0 0.0
  %2840 = vmatprep.mubr.f32.mxu0 0.0
  %2841 = vmatmul.mubr.f32.gmra.mrb[0].mxu0 %v2774
  %v2842 = vpop.f32.mrb[0].mxu0
  %v2843 = vadd.f32 0.0, %v2842
  %v2844 = vpop.f32.mrb[0].mxu0
  %2845 = vdwg.mxu0
  %2846 = vrot.lane.b32.xlu0 %v342, 88
  %v2847 = vpop.permute.xlu0 %2846
  %v2850 = vsel %vm79, %v2387, 0
  %2852 = vmatprep.subr.mxu0 0.0
  %2853 = vmatpush1.msra.mxu0 %v2847
  %2854 = vmatprep.subr.mxu0 0.0
  %2855 = vmatpush1.msra.mxu0 0.0
  %2856 = vmatprep.subr.mxu0 0.0
  %2857 = vmatpush1.msra.mxu0 0.0
  %2858 = vmatprep.subr.mxu0 0.0
  %2859 = vmatpush1.msra.mxu0 0.0
  %2860 = vmatprep.subr.mxu0 0.0
  %2861 = vmatpush1.msra.mxu0 0.0
  %2862 = vmatprep.subr.mxu0 0.0
  %2863 = vmatpush1.msra.mxu0 0.0
  %2864 = vmatprep.subr.mxu0 0.0
  %2865 = vmatpush1.msra.mxu0 0.0
  %2866 = vmatprep.subr.mxu0 0.0
  %2867 = vmatpush1.msra.mxu0 0.0
  %2868 = vmatprep.subr.mxu0 0.0
  %2869 = vmatpush1.msra.mxu0 0.0
  %2870 = vmatprep.subr.mxu0 0.0
  %2871 = vmatpush1.msra.mxu0 0.0
  %2872 = vmatprep.subr.mxu0 0.0
  %2873 = vmatpush1.msra.mxu0 0.0
  %2874 = vmatprep.subr.mxu0 0.0
  %2875 = vmatpush1.msra.mxu0 0.0
  %2876 = vmatprep.subr.mxu0 0.0
  %2877 = vmatpush1.msra.mxu0 0.0
  %2878 = vmatprep.subr.mxu0 0.0
  %2879 = vmatpush1.msra.mxu0 0.0
  %2880 = vmatprep.subr.mxu0 0.0
  %2881 = vmatpush1.msra.mxu0 0.0
  %2882 = vmatprep.subr.mxu0 0.0
  %2883 = vmatpush1.msra.mxu0 0.0
  %2884 = vmatprep.subr.mxu0 0.0
  %2885 = vmatpush1.msra.mxu0 0.0
  %2886 = vmatprep.subr.mxu0 0.0
  %2887 = vmatpush1.msra.mxu0 0.0
  %2888 = vmatprep.subr.mxu0 0.0
  %2889 = vmatpush1.msra.mxu0 0.0
  %2890 = vmatprep.subr.mxu0 0.0
  %2891 = vmatpush1.msra.mxu0 0.0
  %2892 = vmatprep.subr.mxu0 0.0
  %2893 = vmatpush1.msra.mxu0 0.0
  %2894 = vmatprep.subr.mxu0 0.0
  %2895 = vmatpush1.msra.mxu0 0.0
  %2896 = vmatprep.subr.mxu0 0.0
  %2897 = vmatpush1.msra.mxu0 0.0
  %2898 = vmatprep.subr.mxu0 0.0
  %2899 = vmatpush1.msra.mxu0 0.0
  %2900 = vmatprep.subr.mxu0 0.0
  %2901 = vmatpush1.msra.mxu0 0.0
  %2902 = vmatprep.subr.mxu0 0.0
  %2903 = vmatpush1.msra.mxu0 0.0
  %2904 = vmatprep.subr.mxu0 0.0
  %2905 = vmatpush1.msra.mxu0 0.0
  %2906 = vmatprep.subr.mxu0 0.0
  %2907 = vmatpush1.msra.mxu0 0.0
  %2908 = vmatprep.subr.mxu0 0.0
  %2909 = vmatpush1.msra.mxu0 0.0
  %2910 = vmatprep.subr.mxu0 0.0
  %2911 = vmatpush1.msra.mxu0 0.0
  %2912 = vmatprep.subr.mxu0 0.0
  %2913 = vmatpush1.msra.mxu0 0.0
  %2914 = vmatprep.subr.mxu0 0.0
  %2915 = vmatpush1.msra.mxu0 0.0
  %2916 = vmatprep.mubr.f32.mxu0 0.0
  %2917 = vmatmul.mubr.f32.gmra.mrb[0].mxu0 %v2850
  %v2918 = vpop.f32.mrb[0].mxu0
  %v2919 = vadd.f32 0.0, %v2918
  %v2920 = vpop.f32.mrb[0].mxu0
  %2921 = vdwg.mxu0
  %2922 = vrot.lane.b32.xlu0 %v347, 88
  %v2923 = vpop.permute.xlu0 %2922
  %v2926 = vsel %vm79, %v2389, 0
  %2928 = vmatprep.subr.mxu0 0.0
  %2929 = vmatpush1.msra.mxu0 %v2923
  %2930 = vmatprep.subr.mxu0 0.0
  %2931 = vmatpush1.msra.mxu0 0.0
  %2932 = vmatprep.subr.mxu0 0.0
  %2933 = vmatpush1.msra.mxu0 0.0
  %2934 = vmatprep.subr.mxu0 0.0
  %2935 = vmatpush1.msra.mxu0 0.0
  %2936 = vmatprep.subr.mxu0 0.0
  %2937 = vmatpush1.msra.mxu0 0.0
  %2938 = vmatprep.subr.mxu0 0.0
  %2939 = vmatpush1.msra.mxu0 0.0
  %2940 = vmatprep.subr.mxu0 0.0
  %2941 = vmatpush1.msra.mxu0 0.0
  %2942 = vmatprep.subr.mxu0 0.0
  %2943 = vmatpush1.msra.mxu0 0.0
  %2944 = vmatprep.subr.mxu0 0.0
  %2945 = vmatpush1.msra.mxu0 0.0
  %2946 = vmatprep.subr.mxu0 0.0
  %2947 = vmatpush1.msra.mxu0 0.0
  %2948 = vmatprep.subr.mxu0 0.0
  %2949 = vmatpush1.msra.mxu0 0.0
  %2950 = vmatprep.subr.mxu0 0.0
  %2951 = vmatpush1.msra.mxu0 0.0
  %2952 = vmatprep.subr.mxu0 0.0
  %2953 = vmatpush1.msra.mxu0 0.0
  %2954 = vmatprep.subr.mxu0 0.0
  %2955 = vmatpush1.msra.mxu0 0.0
  %2956 = vmatprep.subr.mxu0 0.0
  %2957 = vmatpush1.msra.mxu0 0.0
  %2958 = vmatprep.subr.mxu0 0.0
  %2959 = vmatpush1.msra.mxu0 0.0
  %2960 = vmatprep.subr.mxu0 0.0
  %2961 = vmatpush1.msra.mxu0 0.0
  %2962 = vmatprep.subr.mxu0 0.0
  %2963 = vmatpush1.msra.mxu0 0.0
  %2964 = vmatprep.subr.mxu0 0.0
  %2965 = vmatpush1.msra.mxu0 0.0
  %2966 = vmatprep.subr.mxu0 0.0
  %2967 = vmatpush1.msra.mxu0 0.0
  %2968 = vmatprep.subr.mxu0 0.0
  %2969 = vmatpush1.msra.mxu0 0.0
  %2970 = vmatprep.subr.mxu0 0.0
  %2971 = vmatpush1.msra.mxu0 0.0
  %2972 = vmatprep.subr.mxu0 0.0
  %2973 = vmatpush1.msra.mxu0 0.0
  %2974 = vmatprep.subr.mxu0 0.0
  %2975 = vmatpush1.msra.mxu0 0.0
  %2976 = vmatprep.subr.mxu0 0.0
  %2977 = vmatpush1.msra.mxu0 0.0
  %2978 = vmatprep.subr.mxu0 0.0
  %2979 = vmatpush1.msra.mxu0 0.0
  %2980 = vmatprep.subr.mxu0 0.0
  %2981 = vmatpush1.msra.mxu0 0.0
  %2982 = vmatprep.subr.mxu0 0.0
  %2983 = vmatpush1.msra.mxu0 0.0
  %2984 = vmatprep.subr.mxu0 0.0
  %2985 = vmatpush1.msra.mxu0 0.0
  %2986 = vmatprep.subr.mxu0 0.0
  %2987 = vmatpush1.msra.mxu0 0.0
  %2988 = vmatprep.subr.mxu0 0.0
  %2989 = vmatpush1.msra.mxu0 0.0
  %2990 = vmatprep.subr.mxu0 0.0
  %2991 = vmatpush1.msra.mxu0 0.0
  %2992 = vmatprep.mubr.f32.mxu0 0.0
  %2993 = vmatmul.mubr.f32.gmra.mrb[0].mxu0 %v2926
  %v2994 = vpop.f32.mrb[0].mxu0
  %v2995 = vadd.f32 0.0, %v2994
  %v2996 = vpop.f32.mrb[0].mxu0
  %2997 = vdwg.mxu0
  %v2999 = vsel %vm79, %v2463, 0
  %v3002 = vsel %vm79, %v2539, 0
  %v3005 = vsel %vm79, %v2615, 0
  %v3008 = vsel %vm79, %v2691, 0
  %v3011 = vsel %vm79, %v2767, 0
  %v3014 = vsel %vm79, %v2843, 0
  %v3017 = vsel %vm79, %v2919, 0
  %v3020 = vsel %vm79, %v2995, 0
  %3022 = vmatprep.subr.mxu0 0.0
  %3023 = vmatpush1.msra.mxu0 %v212
  %3024 = vmatprep.subr.mxu0 0.0
  %3025 = vmatpush1.msra.mxu0 0.0
  %3026 = vmatprep.subr.mxu0 0.0
  %3027 = vmatpush1.msra.mxu0 0.0
  %3028 = vmatprep.subr.mxu0 0.0
  %3029 = vmatpush1.msra.mxu0 0.0
  %3030 = vmatprep.subr.mxu0 0.0
  %3031 = vmatpush1.msra.mxu0 0.0
  %3032 = vmatprep.subr.mxu0 0.0
  %3033 = vmatpush1.msra.mxu0 0.0
  %3034 = vmatprep.subr.mxu0 0.0
  %3035 = vmatpush1.msra.mxu0 0.0
  %3036 = vmatprep.subr.mxu0 0.0
  %3037 = vmatpush1.msra.mxu0 0.0
  %3038 = vmatprep.subr.mxu0 0.0
  %3039 = vmatpush1.msra.mxu0 0.0
  %3040 = vmatprep.subr.mxu0 0.0
  %3041 = vmatpush1.msra.mxu0 0.0
  %3042 = vmatprep.subr.mxu0 0.0
  %3043 = vmatpush1.msra.mxu0 0.0
  %3044 = vmatprep.subr.mxu0 0.0
  %3045 = vmatpush1.msra.mxu0 0.0
  %3046 = vmatprep.subr.mxu0 0.0
  %3047 = vmatpush1.msra.mxu0 0.0
  %3048 = vmatprep.subr.mxu0 0.0
  %3049 = vmatpush1.msra.mxu0 0.0
  %3050 = vmatprep.subr.mxu0 0.0
  %3051 = vmatpush1.msra.mxu0 0.0
  %3052 = vmatprep.subr.mxu0 0.0
  %3053 = vmatpush1.msra.mxu0 0.0
  %3054 = vmatprep.subr.mxu0 0.0
  %3055 = vmatpush1.msra.mxu0 0.0
  %3056 = vmatprep.subr.mxu0 0.0
  %3057 = vmatpush1.msra.mxu0 0.0
  %3058 = vmatprep.subr.mxu0 0.0
  %3059 = vmatpush1.msra.mxu0 0.0
  %3060 = vmatprep.subr.mxu0 0.0
  %3061 = vmatpush1.msra.mxu0 0.0
  %3062 = vmatprep.subr.mxu0 0.0
  %3063 = vmatpush1.msra.mxu0 0.0
  %3064 = vmatprep.subr.mxu0 0.0
  %3065 = vmatpush1.msra.mxu0 0.0
  %3066 = vmatprep.subr.mxu0 0.0
  %3067 = vmatpush1.msra.mxu0 0.0
  %3068 = vmatprep.subr.mxu0 0.0
  %3069 = vmatpush1.msra.mxu0 0.0
  %3070 = vmatprep.subr.mxu0 0.0
  %3071 = vmatpush1.msra.mxu0 0.0
  %3072 = vmatprep.subr.mxu0 0.0
  %3073 = vmatpush1.msra.mxu0 0.0
  %3074 = vmatprep.subr.mxu0 0.0
  %3075 = vmatpush1.msra.mxu0 0.0
  %3076 = vmatprep.subr.mxu0 0.0
  %3077 = vmatpush1.msra.mxu0 0.0
  %3078 = vmatprep.subr.mxu0 0.0
  %3079 = vmatpush1.msra.mxu0 0.0
  %3080 = vmatprep.subr.mxu0 0.0
  %3081 = vmatpush1.msra.mxu0 0.0
  %3082 = vmatprep.subr.mxu0 0.0
  %3083 = vmatpush1.msra.mxu0 0.0
  %3084 = vmatprep.subr.mxu0 0.0
  %3085 = vmatpush1.msra.mxu0 0.0
  %3086 = vmatprep.mubr.f32.mxu0 0.0
  %3087 = vmatmul.mubr.f32.gmra.mrb[0].mxu0 %v2999
  %v3088 = vpop.f32.mrb[0].mxu0
  %v3089 = vadd.f32 0.0, %v3088
  %v3090 = vpop.f32.mrb[0].mxu0
  %3091 = vmatprep.mubr.f32.mxu0 0.0
  %3092 = vmatmul.mubr.f32.gmra.mrb[0].mxu0 %v3002
  %v3093 = vpop.f32.mrb[0].mxu0
  %v3094 = vadd.f32 0.0, %v3093
  %v3095 = vpop.f32.mrb[0].mxu0
  %3096 = vmatprep.mubr.f32.mxu0 0.0
  %3097 = vmatmul.mubr.f32.gmra.mrb[0].mxu0 %v3005
  %v3098 = vpop.f32.mrb[0].mxu0
  %v3099 = vadd.f32 0.0, %v3098
  %v3100 = vpop.f32.mrb[0].mxu0
  %3101 = vmatprep.mubr.f32.mxu0 0.0
  %3102 = vmatmul.mubr.f32.gmra.mrb[0].mxu0 %v3008
  %v3103 = vpop.f32.mrb[0].mxu0
  %v3104 = vadd.f32 0.0, %v3103
  %v3105 = vpop.f32.mrb[0].mxu0
  %3106 = vmatprep.mubr.f32.mxu0 0.0
  %3107 = vmatmul.mubr.f32.gmra.mrb[0].mxu0 %v3011
  %v3108 = vpop.f32.mrb[0].mxu0
  %v3109 = vadd.f32 0.0, %v3108
  %v3110 = vpop.f32.mrb[0].mxu0
  %3111 = vmatprep.mubr.f32.mxu0 0.0
  %3112 = vmatmul.mubr.f32.gmra.mrb[0].mxu0 %v3014
  %v3113 = vpop.f32.mrb[0].mxu0
  %v3114 = vadd.f32 0.0, %v3113
  %v3115 = vpop.f32.mrb[0].mxu0
  %3116 = vmatprep.mubr.f32.mxu0 0.0
  %3117 = vmatmul.mubr.f32.gmra.mrb[0].mxu0 %v3017
  %v3118 = vpop.f32.mrb[0].mxu0
  %v3119 = vadd.f32 0.0, %v3118
  %v3120 = vpop.f32.mrb[0].mxu0
  %3121 = vmatprep.mubr.f32.mxu0 0.0
  %3122 = vmatmul.mubr.f32.gmra.mrb[0].mxu0 %v3020
  %v3123 = vpop.f32.mrb[0].mxu0
  %v3124 = vadd.f32 0.0, %v3123
  %v3125 = vpop.f32.mrb[0].mxu0
  %3126 = vdwg.mxu0
  %v3128 = vsel %vm79, %v1135, 0
  %v3131 = vsel %vm79, %v1211, 0
  %v3134 = vsel %vm79, %v1287, 0
  %v3137 = vsel %vm79, %v1363, 0
  %v3140 = vsel %vm79, %v1439, 0
  %v3143 = vsel %vm79, %v1515, 0
  %v3146 = vsel %vm79, %v1591, 0
  %v3149 = vsel %vm79, %v1667, 0
  %3151 = vmatprep.subr.mxu0 0.0
  %3152 = vmatpush1.msra.mxu0 %v211
  %3153 = vmatprep.subr.mxu0 0.0
  %3154 = vmatpush1.msra.mxu0 0.0
  %3155 = vmatprep.subr.mxu0 0.0
  %3156 = vmatpush1.msra.mxu0 0.0
  %3157 = vmatprep.subr.mxu0 0.0
  %3158 = vmatpush1.msra.mxu0 0.0
  %3159 = vmatprep.subr.mxu0 0.0
  %3160 = vmatpush1.msra.mxu0 0.0
  %3161 = vmatprep.subr.mxu0 0.0
  %3162 = vmatpush1.msra.mxu0 0.0
  %3163 = vmatprep.subr.mxu0 0.0
  %3164 = vmatpush1.msra.mxu0 0.0
  %3165 = vmatprep.subr.mxu0 0.0
  %3166 = vmatpush1.msra.mxu0 0.0
  %3167 = vmatprep.subr.mxu0 0.0
  %3168 = vmatpush1.msra.mxu0 0.0
  %3169 = vmatprep.subr.mxu0 0.0
  %3170 = vmatpush1.msra.mxu0 0.0
  %3171 = vmatprep.subr.mxu0 0.0
  %3172 = vmatpush1.msra.mxu0 0.0
  %3173 = vmatprep.subr.mxu0 0.0
  %3174 = vmatpush1.msra.mxu0 0.0
  %3175 = vmatprep.subr.mxu0 0.0
  %3176 = vmatpush1.msra.mxu0 0.0
  %3177 = vmatprep.subr.mxu0 0.0
  %3178 = vmatpush1.msra.mxu0 0.0
  %3179 = vmatprep.subr.mxu0 0.0
  %3180 = vmatpush1.msra.mxu0 0.0
  %3181 = vmatprep.subr.mxu0 0.0
  %3182 = vmatpush1.msra.mxu0 0.0
  %3183 = vmatprep.subr.mxu0 0.0
  %3184 = vmatpush1.msra.mxu0 0.0
  %3185 = vmatprep.subr.mxu0 0.0
  %3186 = vmatpush1.msra.mxu0 0.0
  %3187 = vmatprep.subr.mxu0 0.0
  %3188 = vmatpush1.msra.mxu0 0.0
  %3189 = vmatprep.subr.mxu0 0.0
  %3190 = vmatpush1.msra.mxu0 0.0
  %3191 = vmatprep.subr.mxu0 0.0
  %3192 = vmatpush1.msra.mxu0 0.0
  %3193 = vmatprep.subr.mxu0 0.0
  %3194 = vmatpush1.msra.mxu0 0.0
  %3195 = vmatprep.subr.mxu0 0.0
  %3196 = vmatpush1.msra.mxu0 0.0
  %3197 = vmatprep.subr.mxu0 0.0
  %3198 = vmatpush1.msra.mxu0 0.0
  %3199 = vmatprep.subr.mxu0 0.0
  %3200 = vmatpush1.msra.mxu0 0.0
  %3201 = vmatprep.subr.mxu0 0.0
  %3202 = vmatpush1.msra.mxu0 0.0
  %3203 = vmatprep.subr.mxu0 0.0
  %3204 = vmatpush1.msra.mxu0 0.0
  %3205 = vmatprep.subr.mxu0 0.0
  %3206 = vmatpush1.msra.mxu0 0.0
  %3207 = vmatprep.subr.mxu0 0.0
  %3208 = vmatpush1.msra.mxu0 0.0
  %3209 = vmatprep.subr.mxu0 0.0
  %3210 = vmatpush1.msra.mxu0 0.0
  %3211 = vmatprep.subr.mxu0 0.0
  %3212 = vmatpush1.msra.mxu0 0.0
  %3213 = vmatprep.subr.mxu0 0.0
  %3214 = vmatpush1.msra.mxu0 0.0
  %3215 = vmatprep.mubr.f32.mxu0 0.0
  %3216 = vmatmul.mubr.f32.gmra.mrb[0].mxu0 %v3128
  %v3217 = vpop.f32.mrb[0].mxu0
  %v3218 = vadd.f32 %v3089, %v3217
  %v3219 = vpop.f32.mrb[0].mxu0
  %3220 = vmatprep.mubr.f32.mxu0 0.0
  %3221 = vmatmul.mubr.f32.gmra.mrb[0].mxu0 %v3131
  %v3222 = vpop.f32.mrb[0].mxu0
  %v3223 = vadd.f32 %v3094, %v3222
  %v3224 = vpop.f32.mrb[0].mxu0
  %3225 = vmatprep.mubr.f32.mxu0 0.0
  %3226 = vmatmul.mubr.f32.gmra.mrb[0].mxu0 %v3134
  %v3227 = vpop.f32.mrb[0].mxu0
  %v3228 = vadd.f32 %v3099, %v3227
  %v3229 = vpop.f32.mrb[0].mxu0
  %3230 = vmatprep.mubr.f32.mxu0 0.0
  %3231 = vmatmul.mubr.f32.gmra.mrb[0].mxu0 %v3137
  %v3232 = vpop.f32.mrb[0].mxu0
  %v3233 = vadd.f32 %v3104, %v3232
  %v3234 = vpop.f32.mrb[0].mxu0
  %3235 = vmatprep.mubr.f32.mxu0 0.0
  %3236 = vmatmul.mubr.f32.gmra.mrb[0].mxu0 %v3140
  %v3237 = vpop.f32.mrb[0].mxu0
  %v3238 = vadd.f32 %v3109, %v3237
  %v3239 = vpop.f32.mrb[0].mxu0
  %3240 = vmatprep.mubr.f32.mxu0 0.0
  %3241 = vmatmul.mubr.f32.gmra.mrb[0].mxu0 %v3143
  %v3242 = vpop.f32.mrb[0].mxu0
  %v3243 = vadd.f32 %v3114, %v3242
  %v3244 = vpop.f32.mrb[0].mxu0
  %3245 = vmatprep.mubr.f32.mxu0 0.0
  %3246 = vmatmul.mubr.f32.gmra.mrb[0].mxu0 %v3146
  %v3247 = vpop.f32.mrb[0].mxu0
  %v3248 = vadd.f32 %v3119, %v3247
  %v3249 = vpop.f32.mrb[0].mxu0
  %3250 = vmatprep.mubr.f32.mxu0 0.0
  %3251 = vmatmul.mubr.f32.gmra.mrb[0].mxu0 %v3149
  %v3252 = vpop.f32.mrb[0].mxu0
  %v3253 = vadd.f32 %v3124, %v3252
  %v3254 = vpop.f32.mrb[0].mxu0
  %3255 = vdwg.mxu0
  %v3256 = vld [vmem:[%s6] sm:$0x1]
  %v3258 = vlaneseq
  %v3259 = vshrl.u32 %v3258, 7
  %v3260 = vsub.s32 0, %v3259
  %v3261 = vrot.slane %v3256, %v3260
  %v3263 = vadd.f32 %v3218, %v3261
  %v3264 = vadd.f32 %v3223, %v3261
  %v3265 = vadd.f32 %v3228, %v3261
  %v3266 = vadd.f32 %v3233, %v3261
  %v3267 = vadd.f32 %v3238, %v3261
  %v3268 = vadd.f32 %v3243, %v3261
  %v3269 = vadd.f32 %v3248, %v3261
  %v3270 = vadd.f32 %v3253, %v3261
  %v3271 = vadd.f32 %v171, %v3263
  %v3272 = vadd.f32 %v176, %v3264
  %v3273 = vadd.f32 %v181, %v3265
  %v3274 = vadd.f32 %v186, %v3266
  %v3275 = vadd.f32 %v191, %v3267
  %v3276 = vadd.f32 %v196, %v3268
  %v3277 = vadd.f32 %v201, %v3269
  %v3278 = vadd.f32 %v206, %v3270
  %v3279 = vld [vmem:[%s7] sm:$0x1]
  %v3280 = vld [vmem:[%s8] sm:$0x1]
  %v3281 = vsel %vm220, %v3271, 0.0
  %3282 = vadd.xlane.f32.xlu0 %v3281
  %v3283 = vpop.xlane.xlu0 %3282
  %v3284 = vsel %vm220, %v3272, 0.0
  %3285 = vadd.xlane.f32.xlu0 %v3284
  %v3286 = vpop.xlane.xlu0 %3285
  %v3287 = vsel %vm220, %v3273, 0.0
  %3288 = vadd.xlane.f32.xlu0 %v3287
  %v3289 = vpop.xlane.xlu0 %3288
  %v3290 = vsel %vm220, %v3274, 0.0
  %3291 = vadd.xlane.f32.xlu0 %v3290
  %v3292 = vpop.xlane.xlu0 %3291
  %v3293 = vsel %vm220, %v3275, 0.0
  %3294 = vadd.xlane.f32.xlu0 %v3293
  %v3295 = vpop.xlane.xlu0 %3294
  %v3296 = vsel %vm220, %v3276, 0.0
  %3297 = vadd.xlane.f32.xlu0 %v3296
  %v3298 = vpop.xlane.xlu0 %3297
  %v3299 = vsel %vm220, %v3277, 0.0
  %3300 = vadd.xlane.f32.xlu0 %v3299
  %v3301 = vpop.xlane.xlu0 %3300
  %v3302 = vsel %vm220, %v3278, 0.0
  %3303 = vadd.xlane.f32.xlu0 %v3302
  %v3304 = vpop.xlane.xlu0 %3303
  %v3305 = vrcp.pop 16.0
  %v3306 = vmul.f32 %v3283, %v3305
  %v3307 = vmul.f32 %v3286, %v3305
  %v3308 = vmul.f32 %v3289, %v3305
  %v3309 = vmul.f32 %v3292, %v3305
  %v3310 = vmul.f32 %v3295, %v3305
  %v3311 = vmul.f32 %v3298, %v3305
  %v3312 = vmul.f32 %v3301, %v3305
  %v3313 = vmul.f32 %v3304, %v3305
  %v3314 = vsub.f32 %v3271, %v3306
  %v3315 = vsub.f32 %v3272, %v3307
  %v3316 = vsub.f32 %v3273, %v3308
  %v3317 = vsub.f32 %v3274, %v3309
  %v3318 = vsub.f32 %v3275, %v3310
  %v3319 = vsub.f32 %v3276, %v3311
  %v3320 = vsub.f32 %v3277, %v3312
  %v3321 = vsub.f32 %v3278, %v3313
  %v3322 = vmul.f32 %v3314, %v3314
  %v3323 = vmul.f32 %v3315, %v3315
  %v3324 = vmul.f32 %v3316, %v3316
  %v3325 = vmul.f32 %v3317, %v3317
  %v3326 = vmul.f32 %v3318, %v3318
  %v3327 = vmul.f32 %v3319, %v3319
  %v3328 = vmul.f32 %v3320, %v3320
  %v3329 = vmul.f32 %v3321, %v3321
  %v3330 = vsel %vm220, %v3322, 0.0
  %3331 = vadd.xlane.f32.xlu0 %v3330
  %v3332 = vpop.xlane.xlu0 %3331
  %v3333 = vsel %vm220, %v3323, 0.0
  %3334 = vadd.xlane.f32.xlu0 %v3333
  %v3335 = vpop.xlane.xlu0 %3334
  %v3336 = vsel %vm220, %v3324, 0.0
  %3337 = vadd.xlane.f32.xlu0 %v3336
  %v3338 = vpop.xlane.xlu0 %3337
  %v3339 = vsel %vm220, %v3325, 0.0
  %3340 = vadd.xlane.f32.xlu0 %v3339
  %v3341 = vpop.xlane.xlu0 %3340
  %v3342 = vsel %vm220, %v3326, 0.0
  %3343 = vadd.xlane.f32.xlu0 %v3342
  %v3344 = vpop.xlane.xlu0 %3343
  %v3345 = vsel %vm220, %v3327, 0.0
  %3346 = vadd.xlane.f32.xlu0 %v3345
  %v3347 = vpop.xlane.xlu0 %3346
  %v3348 = vsel %vm220, %v3328, 0.0
  %3349 = vadd.xlane.f32.xlu0 %v3348
  %v3350 = vpop.xlane.xlu0 %3349
  %v3351 = vsel %vm220, %v3329, 0.0
  %3352 = vadd.xlane.f32.xlu0 %v3351
  %v3353 = vpop.xlane.xlu0 %3352
  %v3354 = vmul.f32 %v3332, %v3305
  %v3355 = vmul.f32 %v3335, %v3305
  %v3356 = vmul.f32 %v3338, %v3305
  %v3357 = vmul.f32 %v3341, %v3305
  %v3358 = vmul.f32 %v3344, %v3305
  %v3359 = vmul.f32 %v3347, %v3305
  %v3360 = vmul.f32 %v3350, %v3305
  %v3361 = vmul.f32 %v3353, %v3305
  %v3362 = vadd.f32 %v3354, 1e-05
  %v3363 = vadd.f32 %v3355, 1e-05
  %v3364 = vadd.f32 %v3356, 1e-05
  %v3365 = vadd.f32 %v3357, 1e-05
  %v3366 = vadd.f32 %v3358, 1e-05
  %v3367 = vadd.f32 %v3359, 1e-05
  %v3368 = vadd.f32 %v3360, 1e-05
  %v3369 = vadd.f32 %v3361, 1e-05
  %v3370 = vrsqrt.pop %v3362
  %v3371 = vrsqrt.pop %v3363
  %v3372 = vrsqrt.pop %v3364
  %v3373 = vrsqrt.pop %v3365
  %v3374 = vrsqrt.pop %v3366
  %v3375 = vrsqrt.pop %v3367
  %v3376 = vrsqrt.pop %v3368
  %v3377 = vrsqrt.pop %v3369
  %v3378 = vmul.f32 %v3314, %v3370
  %v3379 = vmul.f32 %v3315, %v3371
  %v3380 = vmul.f32 %v3316, %v3372
  %v3381 = vmul.f32 %v3317, %v3373
  %v3382 = vmul.f32 %v3318, %v3374
  %v3383 = vmul.f32 %v3319, %v3375
  %v3384 = vmul.f32 %v3320, %v3376
  %v3385 = vmul.f32 %v3321, %v3377
  %v3387 = vlaneseq
  %v3388 = vshrl.u32 %v3387, 7
  %v3389 = vsub.s32 0, %v3388
  %v3390 = vrot.slane %v3279, %v3389
  %v3392 = vmul.f32 %v3378, %v3390
  %v3393 = vmul.f32 %v3379, %v3390
  %v3394 = vmul.f32 %v3380, %v3390
  %v3395 = vmul.f32 %v3381, %v3390
  %v3396 = vmul.f32 %v3382, %v3390
  %v3397 = vmul.f32 %v3383, %v3390
  %v3398 = vmul.f32 %v3384, %v3390
  %v3399 = vmul.f32 %v3385, %v3390
  %v3401 = vlaneseq
  %v3402 = vshrl.u32 %v3401, 7
  %v3403 = vsub.s32 0, %v3402
  %v3404 = vrot.slane %v3280, %v3403
  %v3406 = vadd.f32 %v3392, %v3404
  %v3407 = vadd.f32 %v3393, %v3404
  %v3408 = vadd.f32 %v3394, %v3404
  %v3409 = vadd.f32 %v3395, %v3404
  %v3410 = vadd.f32 %v3396, %v3404
  %v3411 = vadd.f32 %v3397, %v3404
  %v3412 = vadd.f32 %v3398, %v3404
  %v3413 = vadd.f32 %v3399, %v3404
  %v3414 = vld [vmem:[%s9] sm:$0xff]
  %v3415 = vld [vmem:[%s9 + $0x8] sm:$0xff]
  %v3416 = vld [vmem:[%s10] sm:$0x1]
  %v3418 = vlaneseq
  %v3419 = vshrl.u32 %v3418, 7
  %v3420 = vsub.s32 0, %v3419
  %v3421 = vrot.slane %v3416, %v3420
  %v3424 = vsel %vm220, %v3406, 0
  %v3427 = vsel %vm220, %v3407, 0
  %v3430 = vsel %vm220, %v3408, 0
  %v3433 = vsel %vm220, %v3409, 0
  %v3436 = vsel %vm220, %v3410, 0
  %v3439 = vsel %vm220, %v3411, 0
  %v3442 = vsel %vm220, %v3412, 0
  %v3445 = vsel %vm220, %v3413, 0
  %3447 = vmatprep.subr.mxu0 0.0
  %3448 = vmatpush1.msra.mxu0 %v3414
  %3449 = vmatprep.subr.mxu0 0.0
  %3450 = vmatpush1.msra.mxu0 %v3415
  %3451 = vmatprep.subr.mxu0 0.0
  %3452 = vmatpush1.msra.mxu0 0.0
  %3453 = vmatprep.subr.mxu0 0.0
  %3454 = vmatpush1.msra.mxu0 0.0
  %3455 = vmatprep.subr.mxu0 0.0
  %3456 = vmatpush1.msra.mxu0 0.0
  %3457 = vmatprep.subr.mxu0 0.0
  %3458 = vmatpush1.msra.mxu0 0.0
  %3459 = vmatprep.subr.mxu0 0.0
  %3460 = vmatpush1.msra.mxu0 0.0
  %3461 = vmatprep.subr.mxu0 0.0
  %3462 = vmatpush1.msra.mxu0 0.0
  %3463 = vmatprep.subr.mxu0 0.0
  %3464 = vmatpush1.msra.mxu0 0.0
  %3465 = vmatprep.subr.mxu0 0.0
  %3466 = vmatpush1.msra.mxu0 0.0
  %3467 = vmatprep.subr.mxu0 0.0
  %3468 = vmatpush1.msra.mxu0 0.0
  %3469 = vmatprep.subr.mxu0 0.0
  %3470 = vmatpush1.msra.mxu0 0.0
  %3471 = vmatprep.subr.mxu0 0.0
  %3472 = vmatpush1.msra.mxu0 0.0
  %3473 = vmatprep.subr.mxu0 0.0
  %3474 = vmatpush1.msra.mxu0 0.0
  %3475 = vmatprep.subr.mxu0 0.0
  %3476 = vmatpush1.msra.mxu0 0.0
  %3477 = vmatprep.subr.mxu0 0.0
  %3478 = vmatpush1.msra.mxu0 0.0
  %3479 = vmatprep.subr.mxu0 0.0
  %3480 = vmatpush1.msra.mxu0 0.0
  %3481 = vmatprep.subr.mxu0 0.0
  %3482 = vmatpush1.msra.mxu0 0.0
  %3483 = vmatprep.subr.mxu0 0.0
  %3484 = vmatpush1.msra.mxu0 0.0
  %3485 = vmatprep.subr.mxu0 0.0
  %3486 = vmatpush1.msra.mxu0 0.0
  %3487 = vmatprep.subr.mxu0 0.0
  %3488 = vmatpush1.msra.mxu0 0.0
  %3489 = vmatprep.subr.mxu0 0.0
  %3490 = vmatpush1.msra.mxu0 0.0
  %3491 = vmatprep.subr.mxu0 0.0
  %3492 = vmatpush1.msra.mxu0 0.0
  %3493 = vmatprep.subr.mxu0 0.0
  %3494 = vmatpush1.msra.mxu0 0.0
  %3495 = vmatprep.subr.mxu0 0.0
  %3496 = vmatpush1.msra.mxu0 0.0
  %3497 = vmatprep.subr.mxu0 0.0
  %3498 = vmatpush1.msra.mxu0 0.0
  %3499 = vmatprep.subr.mxu0 0.0
  %3500 = vmatpush1.msra.mxu0 0.0
  %3501 = vmatprep.subr.mxu0 0.0
  %3502 = vmatpush1.msra.mxu0 0.0
  %3503 = vmatprep.subr.mxu0 0.0
  %3504 = vmatpush1.msra.mxu0 0.0
  %3505 = vmatprep.subr.mxu0 0.0
  %3506 = vmatpush1.msra.mxu0 0.0
  %3507 = vmatprep.subr.mxu0 0.0
  %3508 = vmatpush1.msra.mxu0 0.0
  %3509 = vmatprep.subr.mxu0 0.0
  %3510 = vmatpush1.msra.mxu0 0.0
  %3511 = vmatprep.mubr.f32.mxu0 0.0
  %3512 = vmatmul.mubr.f32.gmra.mrb[0].mxu0 %v3424
  %v3513 = vpop.f32.mrb[0].mxu0
  %v3514 = vadd.f32 %v3421, %v3513
  %v3515 = vpop.f32.mrb[0].mxu0
  %3516 = vmatprep.mubr.f32.mxu0 0.0
  %3517 = vmatmul.mubr.f32.gmra.mrb[0].mxu0 %v3427
  %v3518 = vpop.f32.mrb[0].mxu0
  %v3519 = vadd.f32 %v3421, %v3518
  %v3520 = vpop.f32.mrb[0].mxu0
  %3521 = vmatprep.mubr.f32.mxu0 0.0
  %3522 = vmatmul.mubr.f32.gmra.mrb[0].mxu0 %v3430
  %v3523 = vpop.f32.mrb[0].mxu0
  %v3524 = vadd.f32 %v3421, %v3523
  %v3525 = vpop.f32.mrb[0].mxu0
  %3526 = vmatprep.mubr.f32.mxu0 0.0
  %3527 = vmatmul.mubr.f32.gmra.mrb[0].mxu0 %v3433
  %v3528 = vpop.f32.mrb[0].mxu0
  %v3529 = vadd.f32 %v3421, %v3528
  %v3530 = vpop.f32.mrb[0].mxu0
  %3531 = vmatprep.mubr.f32.mxu0 0.0
  %3532 = vmatmul.mubr.f32.gmra.mrb[0].mxu0 %v3436
  %v3533 = vpop.f32.mrb[0].mxu0
  %v3534 = vadd.f32 %v3421, %v3533
  %v3535 = vpop.f32.mrb[0].mxu0
  %3536 = vmatprep.mubr.f32.mxu0 0.0
  %3537 = vmatmul.mubr.f32.gmra.mrb[0].mxu0 %v3439
  %v3538 = vpop.f32.mrb[0].mxu0
  %v3539 = vadd.f32 %v3421, %v3538
  %v3540 = vpop.f32.mrb[0].mxu0
  %3541 = vmatprep.mubr.f32.mxu0 0.0
  %3542 = vmatmul.mubr.f32.gmra.mrb[0].mxu0 %v3442
  %v3543 = vpop.f32.mrb[0].mxu0
  %v3544 = vadd.f32 %v3421, %v3543
  %v3545 = vpop.f32.mrb[0].mxu0
  %3546 = vmatprep.mubr.f32.mxu0 0.0
  %3547 = vmatmul.mubr.f32.gmra.mrb[0].mxu0 %v3445
  %v3548 = vpop.f32.mrb[0].mxu0
  %v3549 = vadd.f32 %v3421, %v3548
  %v3550 = vpop.f32.mrb[0].mxu0
  %3551 = vdwg.mxu0
  %v3552 = vmax.f32 %v3514, 0.0
  %v3553 = vmax.f32 %v3519, 0.0
  %v3554 = vmax.f32 %v3524, 0.0
  %v3555 = vmax.f32 %v3529, 0.0
  %v3556 = vmax.f32 %v3534, 0.0
  %v3557 = vmax.f32 %v3539, 0.0
  %v3558 = vmax.f32 %v3544, 0.0
  %v3559 = vmax.f32 %v3549, 0.0
  %v3560 = vld [vmem:[%s11] sm:$0xff]
  %v3561 = vld [vmem:[%s11 + $0x8] sm:$0xff]
  %v3562 = vld [vmem:[%s11 + $0x10] sm:$0xff]
  %v3563 = vld [vmem:[%s11 + $0x18] sm:$0xff]
  %v3564 = vld [vmem:[%s12] sm:$0x1]
  %v3566 = vlaneseq
  %v3567 = vshrl.u32 %v3566, 7
  %v3568 = vsub.s32 0, %v3567
  %v3569 = vrot.slane %v3564, %v3568
  %vm3571 = vcmask 261120
  %v3573 = vsel %vm3571, %v3552, 0
  %v3576 = vsel %vm3571, %v3553, 0
  %v3579 = vsel %vm3571, %v3554, 0
  %v3582 = vsel %vm3571, %v3555, 0
  %v3585 = vsel %vm3571, %v3556, 0
  %v3588 = vsel %vm3571, %v3557, 0
  %v3591 = vsel %vm3571, %v3558, 0
  %v3594 = vsel %vm3571, %v3559, 0
  %3596 = vmatprep.subr.mxu0 0.0
  %3597 = vmatpush1.msra.mxu0 %v3560
  %3598 = vmatprep.subr.mxu0 0.0
  %3599 = vmatpush1.msra.mxu0 %v3561
  %3600 = vmatprep.subr.mxu0 0.0
  %3601 = vmatpush1.msra.mxu0 %v3562
  %3602 = vmatprep.subr.mxu0 0.0
  %3603 = vmatpush1.msra.mxu0 %v3563
  %3604 = vmatprep.subr.mxu0 0.0
  %3605 = vmatpush1.msra.mxu0 0.0
  %3606 = vmatprep.subr.mxu0 0.0
  %3607 = vmatpush1.msra.mxu0 0.0
  %3608 = vmatprep.subr.mxu0 0.0
  %3609 = vmatpush1.msra.mxu0 0.0
  %3610 = vmatprep.subr.mxu0 0.0
  %3611 = vmatpush1.msra.mxu0 0.0
  %3612 = vmatprep.subr.mxu0 0.0
  %3613 = vmatpush1.msra.mxu0 0.0
  %3614 = vmatprep.subr.mxu0 0.0
  %3615 = vmatpush1.msra.mxu0 0.0
  %3616 = vmatprep.subr.mxu0 0.0
  %3617 = vmatpush1.msra.mxu0 0.0
  %3618 = vmatprep.subr.mxu0 0.0
  %3619 = vmatpush1.msra.mxu0 0.0
  %3620 = vmatprep.subr.mxu0 0.0
  %3621 = vmatpush1.msra.mxu0 0.0
  %3622 = vmatprep.subr.mxu0 0.0
  %3623 = vmatpush1.msra.mxu0 0.0
  %3624 = vmatprep.subr.mxu0 0.0
  %3625 = vmatpush1.msra.mxu0 0.0
  %3626 = vmatprep.subr.mxu0 0.0
  %3627 = vmatpush1.msra.mxu0 0.0
  %3628 = vmatprep.subr.mxu0 0.0
  %3629 = vmatpush1.msra.mxu0 0.0
  %3630 = vmatprep.subr.mxu0 0.0
  %3631 = vmatpush1.msra.mxu0 0.0
  %3632 = vmatprep.subr.mxu0 0.0
  %3633 = vmatpush1.msra.mxu0 0.0
  %3634 = vmatprep.subr.mxu0 0.0
  %3635 = vmatpush1.msra.mxu0 0.0
  %3636 = vmatprep.subr.mxu0 0.0
  %3637 = vmatpush1.msra.mxu0 0.0
  %3638 = vmatprep.subr.mxu0 0.0
  %3639 = vmatpush1.msra.mxu0 0.0
  %3640 = vmatprep.subr.mxu0 0.0
  %3641 = vmatpush1.msra.mxu0 0.0
  %3642 = vmatprep.subr.mxu0 0.0
  %3643 = vmatpush1.msra.mxu0 0.0
  %3644 = vmatprep.subr.mxu0 0.0
  %3645 = vmatpush1.msra.mxu0 0.0
  %3646 = vmatprep.subr.mxu0 0.0
  %3647 = vmatpush1.msra.mxu0 0.0
  %3648 = vmatprep.subr.mxu0 0.0
  %3649 = vmatpush1.msra.mxu0 0.0
  %3650 = vmatprep.subr.mxu0 0.0
  %3651 = vmatpush1.msra.mxu0 0.0
  %3652 = vmatprep.subr.mxu0 0.0
  %3653 = vmatpush1.msra.mxu0 0.0
  %3654 = vmatprep.subr.mxu0 0.0
  %3655 = vmatpush1.msra.mxu0 0.0
  %3656 = vmatprep.subr.mxu0 0.0
  %3657 = vmatpush1.msra.mxu0 0.0
  %3658 = vmatprep.subr.mxu0 0.0
  %3659 = vmatpush1.msra.mxu0 0.0
  %3660 = vmatprep.mubr.f32.mxu0 0.0
  %3661 = vmatmul.mubr.f32.gmra.mrb[0].mxu0 %v3573
  %v3662 = vpop.f32.mrb[0].mxu0
  %v3663 = vadd.f32 %v3569, %v3662
  %v3664 = vpop.f32.mrb[0].mxu0
  %3665 = vmatprep.mubr.f32.mxu0 0.0
  %3666 = vmatmul.mubr.f32.gmra.mrb[0].mxu0 %v3576
  %v3667 = vpop.f32.mrb[0].mxu0
  %v3668 = vadd.f32 %v3569, %v3667
  %v3669 = vpop.f32.mrb[0].mxu0
  %3670 = vmatprep.mubr.f32.mxu0 0.0
  %3671 = vmatmul.mubr.f32.gmra.mrb[0].mxu0 %v3579
  %v3672 = vpop.f32.mrb[0].mxu0
  %v3673 = vadd.f32 %v3569, %v3672
  %v3674 = vpop.f32.mrb[0].mxu0
  %3675 = vmatprep.mubr.f32.mxu0 0.0
  %3676 = vmatmul.mubr.f32.gmra.mrb[0].mxu0 %v3582
  %v3677 = vpop.f32.mrb[0].mxu0
  %v3678 = vadd.f32 %v3569, %v3677
  %v3679 = vpop.f32.mrb[0].mxu0
  %3680 = vmatprep.mubr.f32.mxu0 0.0
  %3681 = vmatmul.mubr.f32.gmra.mrb[0].mxu0 %v3585
  %v3682 = vpop.f32.mrb[0].mxu0
  %v3683 = vadd.f32 %v3569, %v3682
  %v3684 = vpop.f32.mrb[0].mxu0
  %3685 = vmatprep.mubr.f32.mxu0 0.0
  %3686 = vmatmul.mubr.f32.gmra.mrb[0].mxu0 %v3588
  %v3687 = vpop.f32.mrb[0].mxu0
  %v3688 = vadd.f32 %v3569, %v3687
  %v3689 = vpop.f32.mrb[0].mxu0
  %3690 = vmatprep.mubr.f32.mxu0 0.0
  %3691 = vmatmul.mubr.f32.gmra.mrb[0].mxu0 %v3591
  %v3692 = vpop.f32.mrb[0].mxu0
  %v3693 = vadd.f32 %v3569, %v3692
  %v3694 = vpop.f32.mrb[0].mxu0
  %3695 = vmatprep.mubr.f32.mxu0 0.0
  %3696 = vmatmul.mubr.f32.gmra.mrb[0].mxu0 %v3594
  %v3697 = vpop.f32.mrb[0].mxu0
  %v3698 = vadd.f32 %v3569, %v3697
  %v3699 = vpop.f32.mrb[0].mxu0
  %3700 = vdwg.mxu0
  %v3701 = vadd.f32 %v3406, %v3663
  %v3702 = vadd.f32 %v3407, %v3668
  %v3703 = vadd.f32 %v3408, %v3673
  %v3704 = vadd.f32 %v3409, %v3678
  %v3705 = vadd.f32 %v3410, %v3683
  %v3706 = vadd.f32 %v3411, %v3688
  %v3707 = vadd.f32 %v3412, %v3693
  %v3708 = vadd.f32 %v3413, %v3698
  %v3709 = vld [vmem:[%s13] sm:$0x1]
  %v3710 = vld [vmem:[%s14] sm:$0x1]
  %v3711 = vsel %vm220, %v3701, 0.0
  %3712 = vadd.xlane.f32.xlu0 %v3711
  %v3713 = vpop.xlane.xlu0 %3712
  %v3714 = vsel %vm220, %v3702, 0.0
  %3715 = vadd.xlane.f32.xlu0 %v3714
  %v3716 = vpop.xlane.xlu0 %3715
  %v3717 = vsel %vm220, %v3703, 0.0
  %3718 = vadd.xlane.f32.xlu0 %v3717
  %v3719 = vpop.xlane.xlu0 %3718
  %v3720 = vsel %vm220, %v3704, 0.0
  %3721 = vadd.xlane.f32.xlu0 %v3720
  %v3722 = vpop.xlane.xlu0 %3721
  %v3723 = vsel %vm220, %v3705, 0.0
  %3724 = vadd.xlane.f32.xlu0 %v3723
  %v3725 = vpop.xlane.xlu0 %3724
  %v3726 = vsel %vm220, %v3706, 0.0
  %3727 = vadd.xlane.f32.xlu0 %v3726
  %v3728 = vpop.xlane.xlu0 %3727
  %v3729 = vsel %vm220, %v3707, 0.0
  %3730 = vadd.xlane.f32.xlu0 %v3729
  %v3731 = vpop.xlane.xlu0 %3730
  %v3732 = vsel %vm220, %v3708, 0.0
  %3733 = vadd.xlane.f32.xlu0 %v3732
  %v3734 = vpop.xlane.xlu0 %3733
  %v3735 = vmul.f32 %v3713, %v3305
  %v3736 = vmul.f32 %v3716, %v3305
  %v3737 = vmul.f32 %v3719, %v3305
  %v3738 = vmul.f32 %v3722, %v3305
  %v3739 = vmul.f32 %v3725, %v3305
  %v3740 = vmul.f32 %v3728, %v3305
  %v3741 = vmul.f32 %v3731, %v3305
  %v3742 = vmul.f32 %v3734, %v3305
  %v3743 = vsub.f32 %v3701, %v3735
  %v3744 = vsub.f32 %v3702, %v3736
  %v3745 = vsub.f32 %v3703, %v3737
  %v3746 = vsub.f32 %v3704, %v3738
  %v3747 = vsub.f32 %v3705, %v3739
  %v3748 = vsub.f32 %v3706, %v3740
  %v3749 = vsub.f32 %v3707, %v3741
  %v3750 = vsub.f32 %v3708, %v3742
  %v3751 = vmul.f32 %v3743, %v3743
  %v3752 = vmul.f32 %v3744, %v3744
  %v3753 = vmul.f32 %v3745, %v3745
  %v3754 = vmul.f32 %v3746, %v3746
  %v3755 = vmul.f32 %v3747, %v3747
  %v3756 = vmul.f32 %v3748, %v3748
  %v3757 = vmul.f32 %v3749, %v3749
  %v3758 = vmul.f32 %v3750, %v3750
  %v3759 = vsel %vm220, %v3751, 0.0
  %3760 = vadd.xlane.f32.xlu0 %v3759
  %v3761 = vpop.xlane.xlu0 %3760
  %v3762 = vsel %vm220, %v3752, 0.0
  %3763 = vadd.xlane.f32.xlu0 %v3762
  %v3764 = vpop.xlane.xlu0 %3763
  %v3765 = vsel %vm220, %v3753, 0.0
  %3766 = vadd.xlane.f32.xlu0 %v3765
  %v3767 = vpop.xlane.xlu0 %3766
  %v3768 = vsel %vm220, %v3754, 0.0
  %3769 = vadd.xlane.f32.xlu0 %v3768
  %v3770 = vpop.xlane.xlu0 %3769
  %v3771 = vsel %vm220, %v3755, 0.0
  %3772 = vadd.xlane.f32.xlu0 %v3771
  %v3773 = vpop.xlane.xlu0 %3772
  %v3774 = vsel %vm220, %v3756, 0.0
  %3775 = vadd.xlane.f32.xlu0 %v3774
  %v3776 = vpop.xlane.xlu0 %3775
  %v3777 = vsel %vm220, %v3757, 0.0
  %3778 = vadd.xlane.f32.xlu0 %v3777
  %v3779 = vpop.xlane.xlu0 %3778
  %v3780 = vsel %vm220, %v3758, 0.0
  %3781 = vadd.xlane.f32.xlu0 %v3780
  %v3782 = vpop.xlane.xlu0 %3781
  %v3783 = vmul.f32 %v3761, %v3305
  %v3784 = vmul.f32 %v3764, %v3305
  %v3785 = vmul.f32 %v3767, %v3305
  %v3786 = vmul.f32 %v3770, %v3305
  %v3787 = vmul.f32 %v3773, %v3305
  %v3788 = vmul.f32 %v3776, %v3305
  %v3789 = vmul.f32 %v3779, %v3305
  %v3790 = vmul.f32 %v3782, %v3305
  %v3791 = vadd.f32 %v3783, 1e-05
  %v3792 = vadd.f32 %v3784, 1e-05
  %v3793 = vadd.f32 %v3785, 1e-05
  %v3794 = vadd.f32 %v3786, 1e-05
  %v3795 = vadd.f32 %v3787, 1e-05
  %v3796 = vadd.f32 %v3788, 1e-05
  %v3797 = vadd.f32 %v3789, 1e-05
  %v3798 = vadd.f32 %v3790, 1e-05
  %v3799 = vrsqrt.pop %v3791
  %v3800 = vrsqrt.pop %v3792
  %v3801 = vrsqrt.pop %v3793
  %v3802 = vrsqrt.pop %v3794
  %v3803 = vrsqrt.pop %v3795
  %v3804 = vrsqrt.pop %v3796
  %v3805 = vrsqrt.pop %v3797
  %v3806 = vrsqrt.pop %v3798
  %v3807 = vmul.f32 %v3743, %v3799
  %v3808 = vmul.f32 %v3744, %v3800
  %v3809 = vmul.f32 %v3745, %v3801
  %v3810 = vmul.f32 %v3746, %v3802
  %v3811 = vmul.f32 %v3747, %v3803
  %v3812 = vmul.f32 %v3748, %v3804
  %v3813 = vmul.f32 %v3749, %v3805
  %v3814 = vmul.f32 %v3750, %v3806
  %v3816 = vlaneseq
  %v3817 = vshrl.u32 %v3816, 7
  %v3818 = vsub.s32 0, %v3817
  %v3819 = vrot.slane %v3709, %v3818
  %v3821 = vmul.f32 %v3807, %v3819
  %v3822 = vmul.f32 %v3808, %v3819
  %v3823 = vmul.f32 %v3809, %v3819
  %v3824 = vmul.f32 %v3810, %v3819
  %v3825 = vmul.f32 %v3811, %v3819
  %v3826 = vmul.f32 %v3812, %v3819
  %v3827 = vmul.f32 %v3813, %v3819
  %v3828 = vmul.f32 %v3814, %v3819
  %v3830 = vlaneseq
  %v3831 = vshrl.u32 %v3830, 7
  %v3832 = vsub.s32 0, %v3831
  %v3833 = vrot.slane %v3710, %v3832
  %v3835 = vadd.f32 %v3821, %v3833
  %v3836 = vadd.f32 %v3822, %v3833
  %v3837 = vadd.f32 %v3823, %v3833
  %v3838 = vadd.f32 %v3824, %v3833
  %v3839 = vadd.f32 %v3825, %v3833
  %v3840 = vadd.f32 %v3826, %v3833
  %v3841 = vadd.f32 %v3827, %v3833
  %v3842 = vadd.f32 %v3828, %v3833
  %s3843 = scalar_lea.vmem %s3, 16
  %v3844 = vld [vmem:[%s3843] sm:$0xff]
  %v3845 = vld [vmem:[%s3843 + $0x8] sm:$0xff]
  %s3846 = scalar_lea.vmem %s5, 16
  %v3847 = vld [vmem:[%s3846] sm:$0xff]
  %v3848 = vld [vmem:[%s3846 + $0x8] sm:$0xff]
  %s3849 = scalar_lea.vmem %s4, 1
  %v3850 = vld [vmem:[%s3849] sm:$0x1]
  %v3852 = vlaneseq
  %v3853 = vshrl.u32 %v3852, 7
  %v3854 = vsub.s32 0, %v3853
  %v3855 = vrot.slane %v3850, %v3854
  %v3858 = vsel %vm220, %v3835, 0
  %v3861 = vsel %vm220, %v3836, 0
  %v3864 = vsel %vm220, %v3837, 0
  %v3867 = vsel %vm220, %v3838, 0
  %v3870 = vsel %vm220, %v3839, 0
  %v3873 = vsel %vm220, %v3840, 0
  %v3876 = vsel %vm220, %v3841, 0
  %v3879 = vsel %vm220, %v3842, 0
  %3881 = vmatprep.subr.mxu0 0.0
  %3882 = vmatpush1.msra.mxu0 %v3844
  %3883 = vmatprep.subr.mxu0 0.0
  %3884 = vmatpush1.msra.mxu0 %v3845
  %3885 = vmatprep.subr.mxu0 0.0
  %3886 = vmatpush1.msra.mxu0 0.0
  %3887 = vmatprep.subr.mxu0 0.0
  %3888 = vmatpush1.msra.mxu0 0.0
  %3889 = vmatprep.subr.mxu0 0.0
  %3890 = vmatpush1.msra.mxu0 0.0
  %3891 = vmatprep.subr.mxu0 0.0
  %3892 = vmatpush1.msra.mxu0 0.0
  %3893 = vmatprep.subr.mxu0 0.0
  %3894 = vmatpush1.msra.mxu0 0.0
  %3895 = vmatprep.subr.mxu0 0.0
  %3896 = vmatpush1.msra.mxu0 0.0
  %3897 = vmatprep.subr.mxu0 0.0
  %3898 = vmatpush1.msra.mxu0 0.0
  %3899 = vmatprep.subr.mxu0 0.0
  %3900 = vmatpush1.msra.mxu0 0.0
  %3901 = vmatprep.subr.mxu0 0.0
  %3902 = vmatpush1.msra.mxu0 0.0
  %3903 = vmatprep.subr.mxu0 0.0
  %3904 = vmatpush1.msra.mxu0 0.0
  %3905 = vmatprep.subr.mxu0 0.0
  %3906 = vmatpush1.msra.mxu0 0.0
  %3907 = vmatprep.subr.mxu0 0.0
  %3908 = vmatpush1.msra.mxu0 0.0
  %3909 = vmatprep.subr.mxu0 0.0
  %3910 = vmatpush1.msra.mxu0 0.0
  %3911 = vmatprep.subr.mxu0 0.0
  %3912 = vmatpush1.msra.mxu0 0.0
  %3913 = vmatprep.subr.mxu0 0.0
  %3914 = vmatpush1.msra.mxu0 0.0
  %3915 = vmatprep.subr.mxu0 0.0
  %3916 = vmatpush1.msra.mxu0 0.0
  %3917 = vmatprep.subr.mxu0 0.0
  %3918 = vmatpush1.msra.mxu0 0.0
  %3919 = vmatprep.subr.mxu0 0.0
  %3920 = vmatpush1.msra.mxu0 0.0
  %3921 = vmatprep.subr.mxu0 0.0
  %3922 = vmatpush1.msra.mxu0 0.0
  %3923 = vmatprep.subr.mxu0 0.0
  %3924 = vmatpush1.msra.mxu0 0.0
  %3925 = vmatprep.subr.mxu0 0.0
  %3926 = vmatpush1.msra.mxu0 0.0
  %3927 = vmatprep.subr.mxu0 0.0
  %3928 = vmatpush1.msra.mxu0 0.0
  %3929 = vmatprep.subr.mxu0 0.0
  %3930 = vmatpush1.msra.mxu0 0.0
  %3931 = vmatprep.subr.mxu0 0.0
  %3932 = vmatpush1.msra.mxu0 0.0
  %3933 = vmatprep.subr.mxu0 0.0
  %3934 = vmatpush1.msra.mxu0 0.0
  %3935 = vmatprep.subr.mxu0 0.0
  %3936 = vmatpush1.msra.mxu0 0.0
  %3937 = vmatprep.subr.mxu0 0.0
  %3938 = vmatpush1.msra.mxu0 0.0
  %3939 = vmatprep.subr.mxu0 0.0
  %3940 = vmatpush1.msra.mxu0 0.0
  %3941 = vmatprep.subr.mxu0 0.0
  %3942 = vmatpush1.msra.mxu0 0.0
  %3943 = vmatprep.subr.mxu0 0.0
  %3944 = vmatpush1.msra.mxu0 0.0
  %3945 = vmatprep.mubr.f32.mxu0 0.0
  %3946 = vmatmul.mubr.f32.gmra.mrb[0].mxu0 %v3858
  %v3947 = vpop.f32.mrb[0].mxu0
  %v3948 = vadd.f32 %v3855, %v3947
  %v3949 = vpop.f32.mrb[0].mxu0
  %3950 = vmatprep.mubr.f32.mxu0 0.0
  %3951 = vmatmul.mubr.f32.gmra.mrb[0].mxu0 %v3861
  %v3952 = vpop.f32.mrb[0].mxu0
  %v3953 = vadd.f32 %v3855, %v3952
  %v3954 = vpop.f32.mrb[0].mxu0
  %3955 = vmatprep.mubr.f32.mxu0 0.0
  %3956 = vmatmul.mubr.f32.gmra.mrb[0].mxu0 %v3864
  %v3957 = vpop.f32.mrb[0].mxu0
  %v3958 = vadd.f32 %v3855, %v3957
  %v3959 = vpop.f32.mrb[0].mxu0
  %3960 = vmatprep.mubr.f32.mxu0 0.0
  %3961 = vmatmul.mubr.f32.gmra.mrb[0].mxu0 %v3867
  %v3962 = vpop.f32.mrb[0].mxu0
  %v3963 = vadd.f32 %v3855, %v3962
  %v3964 = vpop.f32.mrb[0].mxu0
  %3965 = vmatprep.mubr.f32.mxu0 0.0
  %3966 = vmatmul.mubr.f32.gmra.mrb[0].mxu0 %v3870
  %v3967 = vpop.f32.mrb[0].mxu0
  %v3968 = vadd.f32 %v3855, %v3967
  %v3969 = vpop.f32.mrb[0].mxu0
  %3970 = vmatprep.mubr.f32.mxu0 0.0
  %3971 = vmatmul.mubr.f32.gmra.mrb[0].mxu0 %v3873
  %v3972 = vpop.f32.mrb[0].mxu0
  %v3973 = vadd.f32 %v3855, %v3972
  %v3974 = vpop.f32.mrb[0].mxu0
  %3975 = vmatprep.mubr.f32.mxu0 0.0
  %3976 = vmatmul.mubr.f32.gmra.mrb[0].mxu0 %v3876
  %v3977 = vpop.f32.mrb[0].mxu0
  %v3978 = vadd.f32 %v3855, %v3977
  %v3979 = vpop.f32.mrb[0].mxu0
  %3980 = vmatprep.mubr.f32.mxu0 0.0
  %3981 = vmatmul.mubr.f32.gmra.mrb[0].mxu0 %v3879
  %v3982 = vpop.f32.mrb[0].mxu0
  %v3983 = vadd.f32 %v3855, %v3982
  %v3984 = vpop.f32.mrb[0].mxu0
  %3985 = vdwg.mxu0
  %3987 = vrot.lane.b32.xlu0 %v3948, 112
  %v3988 = vpop.permute.xlu0 %3987
  %v3989 = vsel %vm79, %v3948, 0
  %v3991 = vsel %vm79, %v3988, 0
  %3993 = vmatprep.subr.mxu0 0.0
  %3994 = vmatpush1.xpose.msra.mxu0 %v3991
  %3995 = vmatprep.subr.mxu0 0.0
  %3996 = vmatpush1.xpose.msra.mxu0 0.0
  %3997 = vmatprep.subr.mxu0 0.0
  %3998 = vmatpush1.xpose.msra.mxu0 0.0
  %3999 = vmatprep.subr.mxu0 0.0
  %4000 = vmatpush1.xpose.msra.mxu0 0.0
  %4001 = vmatprep.subr.mxu0 0.0
  %4002 = vmatpush1.xpose.msra.mxu0 0.0
  %4003 = vmatprep.subr.mxu0 0.0
  %4004 = vmatpush1.xpose.msra.mxu0 0.0
  %4005 = vmatprep.subr.mxu0 0.0
  %4006 = vmatpush1.xpose.msra.mxu0 0.0
  %4007 = vmatprep.subr.mxu0 0.0
  %4008 = vmatpush1.xpose.msra.mxu0 0.0
  %4009 = vmatprep.subr.mxu0 0.0
  %4010 = vmatpush1.xpose.msra.mxu0 0.0
  %4011 = vmatprep.subr.mxu0 0.0
  %4012 = vmatpush1.xpose.msra.mxu0 0.0
  %4013 = vmatprep.subr.mxu0 0.0
  %4014 = vmatpush1.xpose.msra.mxu0 0.0
  %4015 = vmatprep.subr.mxu0 0.0
  %4016 = vmatpush1.xpose.msra.mxu0 0.0
  %4017 = vmatprep.subr.mxu0 0.0
  %4018 = vmatpush1.xpose.msra.mxu0 0.0
  %4019 = vmatprep.subr.mxu0 0.0
  %4020 = vmatpush1.xpose.msra.mxu0 0.0
  %4021 = vmatprep.subr.mxu0 0.0
  %4022 = vmatpush1.xpose.msra.mxu0 0.0
  %4023 = vmatprep.subr.mxu0 0.0
  %4024 = vmatpush1.xpose.msra.mxu0 0.0
  %4025 = vmatprep.subr.mxu0 0.0
  %4026 = vmatpush1.xpose.msra.mxu0 0.0
  %4027 = vmatprep.subr.mxu0 0.0
  %4028 = vmatpush1.xpose.msra.mxu0 0.0
  %4029 = vmatprep.subr.mxu0 0.0
  %4030 = vmatpush1.xpose.msra.mxu0 0.0
  %4031 = vmatprep.subr.mxu0 0.0
  %4032 = vmatpush1.xpose.msra.mxu0 0.0
  %4033 = vmatprep.subr.mxu0 0.0
  %4034 = vmatpush1.xpose.msra.mxu0 0.0
  %4035 = vmatprep.subr.mxu0 0.0
  %4036 = vmatpush1.xpose.msra.mxu0 0.0
  %4037 = vmatprep.subr.mxu0 0.0
  %4038 = vmatpush1.xpose.msra.mxu0 0.0
  %4039 = vmatprep.subr.mxu0 0.0
  %4040 = vmatpush1.xpose.msra.mxu0 0.0
  %4041 = vmatprep.subr.mxu0 0.0
  %4042 = vmatpush1.xpose.msra.mxu0 0.0
  %4043 = vmatprep.subr.mxu0 0.0
  %4044 = vmatpush1.xpose.msra.mxu0 0.0
  %4045 = vmatprep.subr.mxu0 0.0
  %4046 = vmatpush1.xpose.msra.mxu0 0.0
  %4047 = vmatprep.subr.mxu0 0.0
  %4048 = vmatpush1.xpose.msra.mxu0 0.0
  %4049 = vmatprep.subr.mxu0 0.0
  %4050 = vmatpush1.xpose.msra.mxu0 0.0
  %4051 = vmatprep.subr.mxu0 0.0
  %4052 = vmatpush1.xpose.msra.mxu0 0.0
  %4053 = vmatprep.subr.mxu0 0.0
  %4054 = vmatpush1.xpose.msra.mxu0 0.0
  %4055 = vmatprep.subr.mxu0 0.0
  %4056 = vmatpush1.xpose.msra.mxu0 0.0
  %4057 = vmatprep.mubr.f32.mxu0 0.0
  %4058 = vmatmul.mubr.f32.gmra.mrb[0].mxu0 %v3989
  %v4059 = vpop.f32.mrb[0].mxu0
  %v4060 = vadd.f32 0.0, %v4059
  %v4061 = vpop.f32.mrb[0].mxu0
  %4062 = vdwg.mxu0
  %4064 = vrot.lane.b32.xlu0 %v3953, 112
  %v4065 = vpop.permute.xlu0 %4064
  %v4066 = vsel %vm79, %v3953, 0
  %v4068 = vsel %vm79, %v4065, 0
  %4070 = vmatprep.subr.mxu0 0.0
  %4071 = vmatpush1.xpose.msra.mxu0 %v4068
  %4072 = vmatprep.subr.mxu0 0.0
  %4073 = vmatpush1.xpose.msra.mxu0 0.0
  %4074 = vmatprep.subr.mxu0 0.0
  %4075 = vmatpush1.xpose.msra.mxu0 0.0
  %4076 = vmatprep.subr.mxu0 0.0
  %4077 = vmatpush1.xpose.msra.mxu0 0.0
  %4078 = vmatprep.subr.mxu0 0.0
  %4079 = vmatpush1.xpose.msra.mxu0 0.0
  %4080 = vmatprep.subr.mxu0 0.0
  %4081 = vmatpush1.xpose.msra.mxu0 0.0
  %4082 = vmatprep.subr.mxu0 0.0
  %4083 = vmatpush1.xpose.msra.mxu0 0.0
  %4084 = vmatprep.subr.mxu0 0.0
  %4085 = vmatpush1.xpose.msra.mxu0 0.0
  %4086 = vmatprep.subr.mxu0 0.0
  %4087 = vmatpush1.xpose.msra.mxu0 0.0
  %4088 = vmatprep.subr.mxu0 0.0
  %4089 = vmatpush1.xpose.msra.mxu0 0.0
  %4090 = vmatprep.subr.mxu0 0.0
  %4091 = vmatpush1.xpose.msra.mxu0 0.0
  %4092 = vmatprep.subr.mxu0 0.0
  %4093 = vmatpush1.xpose.msra.mxu0 0.0
  %4094 = vmatprep.subr.mxu0 0.0
  %4095 = vmatpush1.xpose.msra.mxu0 0.0
  %4096 = vmatprep.subr.mxu0 0.0
  %4097 = vmatpush1.xpose.msra.mxu0 0.0
  %4098 = vmatprep.subr.mxu0 0.0
  %4099 = vmatpush1.xpose.msra.mxu0 0.0
  %4100 = vmatprep.subr.mxu0 0.0
  %4101 = vmatpush1.xpose.msra.mxu0 0.0
  %4102 = vmatprep.subr.mxu0 0.0
  %4103 = vmatpush1.xpose.msra.mxu0 0.0
  %4104 = vmatprep.subr.mxu0 0.0
  %4105 = vmatpush1.xpose.msra.mxu0 0.0
  %4106 = vmatprep.subr.mxu0 0.0
  %4107 = vmatpush1.xpose.msra.mxu0 0.0
  %4108 = vmatprep.subr.mxu0 0.0
  %4109 = vmatpush1.xpose.msra.mxu0 0.0
  %4110 = vmatprep.subr.mxu0 0.0
  %4111 = vmatpush1.xpose.msra.mxu0 0.0
  %4112 = vmatprep.subr.mxu0 0.0
  %4113 = vmatpush1.xpose.msra.mxu0 0.0
  %4114 = vmatprep.subr.mxu0 0.0
  %4115 = vmatpush1.xpose.msra.mxu0 0.0
  %4116 = vmatprep.subr.mxu0 0.0
  %4117 = vmatpush1.xpose.msra.mxu0 0.0
  %4118 = vmatprep.subr.mxu0 0.0
  %4119 = vmatpush1.xpose.msra.mxu0 0.0
  %4120 = vmatprep.subr.mxu0 0.0
  %4121 = vmatpush1.xpose.msra.mxu0 0.0
  %4122 = vmatprep.subr.mxu0 0.0
  %4123 = vmatpush1.xpose.msra.mxu0 0.0
  %4124 = vmatprep.subr.mxu0 0.0
  %4125 = vmatpush1.xpose.msra.mxu0 0.0
  %4126 = vmatprep.subr.mxu0 0.0
  %4127 = vmatpush1.xpose.msra.mxu0 0.0
  %4128 = vmatprep.subr.mxu0 0.0
  %4129 = vmatpush1.xpose.msra.mxu0 0.0
  %4130 = vmatprep.subr.mxu0 0.0
  %4131 = vmatpush1.xpose.msra.mxu0 0.0
  %4132 = vmatprep.subr.mxu0 0.0
  %4133 = vmatpush1.xpose.msra.mxu0 0.0
  %4134 = vmatprep.mubr.f32.mxu0 0.0
  %4135 = vmatmul.mubr.f32.gmra.mrb[0].mxu0 %v4066
  %v4136 = vpop.f32.mrb[0].mxu0
  %v4137 = vadd.f32 0.0, %v4136
  %v4138 = vpop.f32.mrb[0].mxu0
  %4139 = vdwg.mxu0
  %4141 = vrot.lane.b32.xlu0 %v3958, 112
  %v4142 = vpop.permute.xlu0 %4141
  %v4143 = vsel %vm79, %v3958, 0
  %v4145 = vsel %vm79, %v4142, 0
  %4147 = vmatprep.subr.mxu0 0.0
  %4148 = vmatpush1.xpose.msra.mxu0 %v4145
  %4149 = vmatprep.subr.mxu0 0.0
  %4150 = vmatpush1.xpose.msra.mxu0 0.0
  %4151 = vmatprep.subr.mxu0 0.0
  %4152 = vmatpush1.xpose.msra.mxu0 0.0
  %4153 = vmatprep.subr.mxu0 0.0
  %4154 = vmatpush1.xpose.msra.mxu0 0.0
  %4155 = vmatprep.subr.mxu0 0.0
  %4156 = vmatpush1.xpose.msra.mxu0 0.0
  %4157 = vmatprep.subr.mxu0 0.0
  %4158 = vmatpush1.xpose.msra.mxu0 0.0
  %4159 = vmatprep.subr.mxu0 0.0
  %4160 = vmatpush1.xpose.msra.mxu0 0.0
  %4161 = vmatprep.subr.mxu0 0.0
  %4162 = vmatpush1.xpose.msra.mxu0 0.0
  %4163 = vmatprep.subr.mxu0 0.0
  %4164 = vmatpush1.xpose.msra.mxu0 0.0
  %4165 = vmatprep.subr.mxu0 0.0
  %4166 = vmatpush1.xpose.msra.mxu0 0.0
  %4167 = vmatprep.subr.mxu0 0.0
  %4168 = vmatpush1.xpose.msra.mxu0 0.0
  %4169 = vmatprep.subr.mxu0 0.0
  %4170 = vmatpush1.xpose.msra.mxu0 0.0
  %4171 = vmatprep.subr.mxu0 0.0
  %4172 = vmatpush1.xpose.msra.mxu0 0.0
  %4173 = vmatprep.subr.mxu0 0.0
  %4174 = vmatpush1.xpose.msra.mxu0 0.0
  %4175 = vmatprep.subr.mxu0 0.0
  %4176 = vmatpush1.xpose.msra.mxu0 0.0
  %4177 = vmatprep.subr.mxu0 0.0
  %4178 = vmatpush1.xpose.msra.mxu0 0.0
  %4179 = vmatprep.subr.mxu0 0.0
  %4180 = vmatpush1.xpose.msra.mxu0 0.0
  %4181 = vmatprep.subr.mxu0 0.0
  %4182 = vmatpush1.xpose.msra.mxu0 0.0
  %4183 = vmatprep.subr.mxu0 0.0
  %4184 = vmatpush1.xpose.msra.mxu0 0.0
  %4185 = vmatprep.subr.mxu0 0.0
  %4186 = vmatpush1.xpose.msra.mxu0 0.0
  %4187 = vmatprep.subr.mxu0 0.0
  %4188 = vmatpush1.xpose.msra.mxu0 0.0
  %4189 = vmatprep.subr.mxu0 0.0
  %4190 = vmatpush1.xpose.msra.mxu0 0.0
  %4191 = vmatprep.subr.mxu0 0.0
  %4192 = vmatpush1.xpose.msra.mxu0 0.0
  %4193 = vmatprep.subr.mxu0 0.0
  %4194 = vmatpush1.xpose.msra.mxu0 0.0
  %4195 = vmatprep.subr.mxu0 0.0
  %4196 = vmatpush1.xpose.msra.mxu0 0.0
  %4197 = vmatprep.subr.mxu0 0.0
  %4198 = vmatpush1.xpose.msra.mxu0 0.0
  %4199 = vmatprep.subr.mxu0 0.0
  %4200 = vmatpush1.xpose.msra.mxu0 0.0
  %4201 = vmatprep.subr.mxu0 0.0
  %4202 = vmatpush1.xpose.msra.mxu0 0.0
  %4203 = vmatprep.subr.mxu0 0.0
  %4204 = vmatpush1.xpose.msra.mxu0 0.0
  %4205 = vmatprep.subr.mxu0 0.0
  %4206 = vmatpush1.xpose.msra.mxu0 0.0
  %4207 = vmatprep.subr.mxu0 0.0
  %4208 = vmatpush1.xpose.msra.mxu0 0.0
  %4209 = vmatprep.subr.mxu0 0.0
  %4210 = vmatpush1.xpose.msra.mxu0 0.0
  %4211 = vmatprep.mubr.f32.mxu0 0.0
  %4212 = vmatmul.mubr.f32.gmra.mrb[0].mxu0 %v4143
  %v4213 = vpop.f32.mrb[0].mxu0
  %v4214 = vadd.f32 0.0, %v4213
  %v4215 = vpop.f32.mrb[0].mxu0
  %4216 = vdwg.mxu0
  %4218 = vrot.lane.b32.xlu0 %v3963, 112
  %v4219 = vpop.permute.xlu0 %4218
  %v4220 = vsel %vm79, %v3963, 0
  %v4222 = vsel %vm79, %v4219, 0
  %4224 = vmatprep.subr.mxu0 0.0
  %4225 = vmatpush1.xpose.msra.mxu0 %v4222
  %4226 = vmatprep.subr.mxu0 0.0
  %4227 = vmatpush1.xpose.msra.mxu0 0.0
  %4228 = vmatprep.subr.mxu0 0.0
  %4229 = vmatpush1.xpose.msra.mxu0 0.0
  %4230 = vmatprep.subr.mxu0 0.0
  %4231 = vmatpush1.xpose.msra.mxu0 0.0
  %4232 = vmatprep.subr.mxu0 0.0
  %4233 = vmatpush1.xpose.msra.mxu0 0.0
  %4234 = vmatprep.subr.mxu0 0.0
  %4235 = vmatpush1.xpose.msra.mxu0 0.0
  %4236 = vmatprep.subr.mxu0 0.0
  %4237 = vmatpush1.xpose.msra.mxu0 0.0
  %4238 = vmatprep.subr.mxu0 0.0
  %4239 = vmatpush1.xpose.msra.mxu0 0.0
  %4240 = vmatprep.subr.mxu0 0.0
  %4241 = vmatpush1.xpose.msra.mxu0 0.0
  %4242 = vmatprep.subr.mxu0 0.0
  %4243 = vmatpush1.xpose.msra.mxu0 0.0
  %4244 = vmatprep.subr.mxu0 0.0
  %4245 = vmatpush1.xpose.msra.mxu0 0.0
  %4246 = vmatprep.subr.mxu0 0.0
  %4247 = vmatpush1.xpose.msra.mxu0 0.0
  %4248 = vmatprep.subr.mxu0 0.0
  %4249 = vmatpush1.xpose.msra.mxu0 0.0
  %4250 = vmatprep.subr.mxu0 0.0
  %4251 = vmatpush1.xpose.msra.mxu0 0.0
  %4252 = vmatprep.subr.mxu0 0.0
  %4253 = vmatpush1.xpose.msra.mxu0 0.0
  %4254 = vmatprep.subr.mxu0 0.0
  %4255 = vmatpush1.xpose.msra.mxu0 0.0
  %4256 = vmatprep.subr.mxu0 0.0
  %4257 = vmatpush1.xpose.msra.mxu0 0.0
  %4258 = vmatprep.subr.mxu0 0.0
  %4259 = vmatpush1.xpose.msra.mxu0 0.0
  %4260 = vmatprep.subr.mxu0 0.0
  %4261 = vmatpush1.xpose.msra.mxu0 0.0
  %4262 = vmatprep.subr.mxu0 0.0
  %4263 = vmatpush1.xpose.msra.mxu0 0.0
  %4264 = vmatprep.subr.mxu0 0.0
  %4265 = vmatpush1.xpose.msra.mxu0 0.0
  %4266 = vmatprep.subr.mxu0 0.0
  %4267 = vmatpush1.xpose.msra.mxu0 0.0
  %4268 = vmatprep.subr.mxu0 0.0
  %4269 = vmatpush1.xpose.msra.mxu0 0.0
  %4270 = vmatprep.subr.mxu0 0.0
  %4271 = vmatpush1.xpose.msra.mxu0 0.0
  %4272 = vmatprep.subr.mxu0 0.0
  %4273 = vmatpush1.xpose.msra.mxu0 0.0
  %4274 = vmatprep.subr.mxu0 0.0
  %4275 = vmatpush1.xpose.msra.mxu0 0.0
  %4276 = vmatprep.subr.mxu0 0.0
  %4277 = vmatpush1.xpose.msra.mxu0 0.0
  %4278 = vmatprep.subr.mxu0 0.0
  %4279 = vmatpush1.xpose.msra.mxu0 0.0
  %4280 = vmatprep.subr.mxu0 0.0
  %4281 = vmatpush1.xpose.msra.mxu0 0.0
  %4282 = vmatprep.subr.mxu0 0.0
  %4283 = vmatpush1.xpose.msra.mxu0 0.0
  %4284 = vmatprep.subr.mxu0 0.0
  %4285 = vmatpush1.xpose.msra.mxu0 0.0
  %4286 = vmatprep.subr.mxu0 0.0
  %4287 = vmatpush1.xpose.msra.mxu0 0.0
  %4288 = vmatprep.mubr.f32.mxu0 0.0
  %4289 = vmatmul.mubr.f32.gmra.mrb[0].mxu0 %v4220
  %v4290 = vpop.f32.mrb[0].mxu0
  %v4291 = vadd.f32 0.0, %v4290
  %v4292 = vpop.f32.mrb[0].mxu0
  %4293 = vdwg.mxu0
  %4295 = vrot.lane.b32.xlu0 %v3968, 112
  %v4296 = vpop.permute.xlu0 %4295
  %v4297 = vsel %vm79, %v3968, 0
  %v4299 = vsel %vm79, %v4296, 0
  %4301 = vmatprep.subr.mxu0 0.0
  %4302 = vmatpush1.xpose.msra.mxu0 %v4299
  %4303 = vmatprep.subr.mxu0 0.0
  %4304 = vmatpush1.xpose.msra.mxu0 0.0
  %4305 = vmatprep.subr.mxu0 0.0
  %4306 = vmatpush1.xpose.msra.mxu0 0.0
  %4307 = vmatprep.subr.mxu0 0.0
  %4308 = vmatpush1.xpose.msra.mxu0 0.0
  %4309 = vmatprep.subr.mxu0 0.0
  %4310 = vmatpush1.xpose.msra.mxu0 0.0
  %4311 = vmatprep.subr.mxu0 0.0
  %4312 = vmatpush1.xpose.msra.mxu0 0.0
  %4313 = vmatprep.subr.mxu0 0.0
  %4314 = vmatpush1.xpose.msra.mxu0 0.0
  %4315 = vmatprep.subr.mxu0 0.0
  %4316 = vmatpush1.xpose.msra.mxu0 0.0
  %4317 = vmatprep.subr.mxu0 0.0
  %4318 = vmatpush1.xpose.msra.mxu0 0.0
  %4319 = vmatprep.subr.mxu0 0.0
  %4320 = vmatpush1.xpose.msra.mxu0 0.0
  %4321 = vmatprep.subr.mxu0 0.0
  %4322 = vmatpush1.xpose.msra.mxu0 0.0
  %4323 = vmatprep.subr.mxu0 0.0
  %4324 = vmatpush1.xpose.msra.mxu0 0.0
  %4325 = vmatprep.subr.mxu0 0.0
  %4326 = vmatpush1.xpose.msra.mxu0 0.0
  %4327 = vmatprep.subr.mxu0 0.0
  %4328 = vmatpush1.xpose.msra.mxu0 0.0
  %4329 = vmatprep.subr.mxu0 0.0
  %4330 = vmatpush1.xpose.msra.mxu0 0.0
  %4331 = vmatprep.subr.mxu0 0.0
  %4332 = vmatpush1.xpose.msra.mxu0 0.0
  %4333 = vmatprep.subr.mxu0 0.0
  %4334 = vmatpush1.xpose.msra.mxu0 0.0
  %4335 = vmatprep.subr.mxu0 0.0
  %4336 = vmatpush1.xpose.msra.mxu0 0.0
  %4337 = vmatprep.subr.mxu0 0.0
  %4338 = vmatpush1.xpose.msra.mxu0 0.0
  %4339 = vmatprep.subr.mxu0 0.0
  %4340 = vmatpush1.xpose.msra.mxu0 0.0
  %4341 = vmatprep.subr.mxu0 0.0
  %4342 = vmatpush1.xpose.msra.mxu0 0.0
  %4343 = vmatprep.subr.mxu0 0.0
  %4344 = vmatpush1.xpose.msra.mxu0 0.0
  %4345 = vmatprep.subr.mxu0 0.0
  %4346 = vmatpush1.xpose.msra.mxu0 0.0
  %4347 = vmatprep.subr.mxu0 0.0
  %4348 = vmatpush1.xpose.msra.mxu0 0.0
  %4349 = vmatprep.subr.mxu0 0.0
  %4350 = vmatpush1.xpose.msra.mxu0 0.0
  %4351 = vmatprep.subr.mxu0 0.0
  %4352 = vmatpush1.xpose.msra.mxu0 0.0
  %4353 = vmatprep.subr.mxu0 0.0
  %4354 = vmatpush1.xpose.msra.mxu0 0.0
  %4355 = vmatprep.subr.mxu0 0.0
  %4356 = vmatpush1.xpose.msra.mxu0 0.0
  %4357 = vmatprep.subr.mxu0 0.0
  %4358 = vmatpush1.xpose.msra.mxu0 0.0
  %4359 = vmatprep.subr.mxu0 0.0
  %4360 = vmatpush1.xpose.msra.mxu0 0.0
  %4361 = vmatprep.subr.mxu0 0.0
  %4362 = vmatpush1.xpose.msra.mxu0 0.0
  %4363 = vmatprep.subr.mxu0 0.0
  %4364 = vmatpush1.xpose.msra.mxu0 0.0
  %4365 = vmatprep.mubr.f32.mxu0 0.0
  %4366 = vmatmul.mubr.f32.gmra.mrb[0].mxu0 %v4297
  %v4367 = vpop.f32.mrb[0].mxu0
  %v4368 = vadd.f32 0.0, %v4367
  %v4369 = vpop.f32.mrb[0].mxu0
  %4370 = vdwg.mxu0
  %4372 = vrot.lane.b32.xlu0 %v3973, 112
  %v4373 = vpop.permute.xlu0 %4372
  %v4374 = vsel %vm79, %v3973, 0
  %v4376 = vsel %vm79, %v4373, 0
  %4378 = vmatprep.subr.mxu0 0.0
  %4379 = vmatpush1.xpose.msra.mxu0 %v4376
  %4380 = vmatprep.subr.mxu0 0.0
  %4381 = vmatpush1.xpose.msra.mxu0 0.0
  %4382 = vmatprep.subr.mxu0 0.0
  %4383 = vmatpush1.xpose.msra.mxu0 0.0
  %4384 = vmatprep.subr.mxu0 0.0
  %4385 = vmatpush1.xpose.msra.mxu0 0.0
  %4386 = vmatprep.subr.mxu0 0.0
  %4387 = vmatpush1.xpose.msra.mxu0 0.0
  %4388 = vmatprep.subr.mxu0 0.0
  %4389 = vmatpush1.xpose.msra.mxu0 0.0
  %4390 = vmatprep.subr.mxu0 0.0
  %4391 = vmatpush1.xpose.msra.mxu0 0.0
  %4392 = vmatprep.subr.mxu0 0.0
  %4393 = vmatpush1.xpose.msra.mxu0 0.0
  %4394 = vmatprep.subr.mxu0 0.0
  %4395 = vmatpush1.xpose.msra.mxu0 0.0
  %4396 = vmatprep.subr.mxu0 0.0
  %4397 = vmatpush1.xpose.msra.mxu0 0.0
  %4398 = vmatprep.subr.mxu0 0.0
  %4399 = vmatpush1.xpose.msra.mxu0 0.0
  %4400 = vmatprep.subr.mxu0 0.0
  %4401 = vmatpush1.xpose.msra.mxu0 0.0
  %4402 = vmatprep.subr.mxu0 0.0
  %4403 = vmatpush1.xpose.msra.mxu0 0.0
  %4404 = vmatprep.subr.mxu0 0.0
  %4405 = vmatpush1.xpose.msra.mxu0 0.0
  %4406 = vmatprep.subr.mxu0 0.0
  %4407 = vmatpush1.xpose.msra.mxu0 0.0
  %4408 = vmatprep.subr.mxu0 0.0
  %4409 = vmatpush1.xpose.msra.mxu0 0.0
  %4410 = vmatprep.subr.mxu0 0.0
  %4411 = vmatpush1.xpose.msra.mxu0 0.0
  %4412 = vmatprep.subr.mxu0 0.0
  %4413 = vmatpush1.xpose.msra.mxu0 0.0
  %4414 = vmatprep.subr.mxu0 0.0
  %4415 = vmatpush1.xpose.msra.mxu0 0.0
  %4416 = vmatprep.subr.mxu0 0.0
  %4417 = vmatpush1.xpose.msra.mxu0 0.0
  %4418 = vmatprep.subr.mxu0 0.0
  %4419 = vmatpush1.xpose.msra.mxu0 0.0
  %4420 = vmatprep.subr.mxu0 0.0
  %4421 = vmatpush1.xpose.msra.mxu0 0.0
  %4422 = vmatprep.subr.mxu0 0.0
  %4423 = vmatpush1.xpose.msra.mxu0 0.0
  %4424 = vmatprep.subr.mxu0 0.0
  %4425 = vmatpush1.xpose.msra.mxu0 0.0
  %4426 = vmatprep.subr.mxu0 0.0
  %4427 = vmatpush1.xpose.msra.mxu0 0.0
  %4428 = vmatprep.subr.mxu0 0.0
  %4429 = vmatpush1.xpose.msra.mxu0 0.0
  %4430 = vmatprep.subr.mxu0 0.0
  %4431 = vmatpush1.xpose.msra.mxu0 0.0
  %4432 = vmatprep.subr.mxu0 0.0
  %4433 = vmatpush1.xpose.msra.mxu0 0.0
  %4434 = vmatprep.subr.mxu0 0.0
  %4435 = vmatpush1.xpose.msra.mxu0 0.0
  %4436 = vmatprep.subr.mxu0 0.0
  %4437 = vmatpush1.xpose.msra.mxu0 0.0
  %4438 = vmatprep.subr.mxu0 0.0
  %4439 = vmatpush1.xpose.msra.mxu0 0.0
  %4440 = vmatprep.subr.mxu0 0.0
  %4441 = vmatpush1.xpose.msra.mxu0 0.0
  %4442 = vmatprep.mubr.f32.mxu0 0.0
  %4443 = vmatmul.mubr.f32.gmra.mrb[0].mxu0 %v4374
  %v4444 = vpop.f32.mrb[0].mxu0
  %v4445 = vadd.f32 0.0, %v4444
  %v4446 = vpop.f32.mrb[0].mxu0
  %4447 = vdwg.mxu0
  %4449 = vrot.lane.b32.xlu0 %v3978, 112
  %v4450 = vpop.permute.xlu0 %4449
  %v4451 = vsel %vm79, %v3978, 0
  %v4453 = vsel %vm79, %v4450, 0
  %4455 = vmatprep.subr.mxu0 0.0
  %4456 = vmatpush1.xpose.msra.mxu0 %v4453
  %4457 = vmatprep.subr.mxu0 0.0
  %4458 = vmatpush1.xpose.msra.mxu0 0.0
  %4459 = vmatprep.subr.mxu0 0.0
  %4460 = vmatpush1.xpose.msra.mxu0 0.0
  %4461 = vmatprep.subr.mxu0 0.0
  %4462 = vmatpush1.xpose.msra.mxu0 0.0
  %4463 = vmatprep.subr.mxu0 0.0
  %4464 = vmatpush1.xpose.msra.mxu0 0.0
  %4465 = vmatprep.subr.mxu0 0.0
  %4466 = vmatpush1.xpose.msra.mxu0 0.0
  %4467 = vmatprep.subr.mxu0 0.0
  %4468 = vmatpush1.xpose.msra.mxu0 0.0
  %4469 = vmatprep.subr.mxu0 0.0
  %4470 = vmatpush1.xpose.msra.mxu0 0.0
  %4471 = vmatprep.subr.mxu0 0.0
  %4472 = vmatpush1.xpose.msra.mxu0 0.0
  %4473 = vmatprep.subr.mxu0 0.0
  %4474 = vmatpush1.xpose.msra.mxu0 0.0
  %4475 = vmatprep.subr.mxu0 0.0
  %4476 = vmatpush1.xpose.msra.mxu0 0.0
  %4477 = vmatprep.subr.mxu0 0.0
  %4478 = vmatpush1.xpose.msra.mxu0 0.0
  %4479 = vmatprep.subr.mxu0 0.0
  %4480 = vmatpush1.xpose.msra.mxu0 0.0
  %4481 = vmatprep.subr.mxu0 0.0
  %4482 = vmatpush1.xpose.msra.mxu0 0.0
  %4483 = vmatprep.subr.mxu0 0.0
  %4484 = vmatpush1.xpose.msra.mxu0 0.0
  %4485 = vmatprep.subr.mxu0 0.0
  %4486 = vmatpush1.xpose.msra.mxu0 0.0
  %4487 = vmatprep.subr.mxu0 0.0
  %4488 = vmatpush1.xpose.msra.mxu0 0.0
  %4489 = vmatprep.subr.mxu0 0.0
  %4490 = vmatpush1.xpose.msra.mxu0 0.0
  %4491 = vmatprep.subr.mxu0 0.0
  %4492 = vmatpush1.xpose.msra.mxu0 0.0
  %4493 = vmatprep.subr.mxu0 0.0
  %4494 = vmatpush1.xpose.msra.mxu0 0.0
  %4495 = vmatprep.subr.mxu0 0.0
  %4496 = vmatpush1.xpose.msra.mxu0 0.0
  %4497 = vmatprep.subr.mxu0 0.0
  %4498 = vmatpush1.xpose.msra.mxu0 0.0
  %4499 = vmatprep.subr.mxu0 0.0
  %4500 = vmatpush1.xpose.msra.mxu0 0.0
  %4501 = vmatprep.subr.mxu0 0.0
  %4502 = vmatpush1.xpose.msra.mxu0 0.0
  %4503 = vmatprep.subr.mxu0 0.0
  %4504 = vmatpush1.xpose.msra.mxu0 0.0
  %4505 = vmatprep.subr.mxu0 0.0
  %4506 = vmatpush1.xpose.msra.mxu0 0.0
  %4507 = vmatprep.subr.mxu0 0.0
  %4508 = vmatpush1.xpose.msra.mxu0 0.0
  %4509 = vmatprep.subr.mxu0 0.0
  %4510 = vmatpush1.xpose.msra.mxu0 0.0
  %4511 = vmatprep.subr.mxu0 0.0
  %4512 = vmatpush1.xpose.msra.mxu0 0.0
  %4513 = vmatprep.subr.mxu0 0.0
  %4514 = vmatpush1.xpose.msra.mxu0 0.0
  %4515 = vmatprep.subr.mxu0 0.0
  %4516 = vmatpush1.xpose.msra.mxu0 0.0
  %4517 = vmatprep.subr.mxu0 0.0
  %4518 = vmatpush1.xpose.msra.mxu0 0.0
  %4519 = vmatprep.mubr.f32.mxu0 0.0
  %4520 = vmatmul.mubr.f32.gmra.mrb[0].mxu0 %v4451
  %v4521 = vpop.f32.mrb[0].mxu0
  %v4522 = vadd.f32 0.0, %v4521
  %v4523 = vpop.f32.mrb[0].mxu0
  %4524 = vdwg.mxu0
  %4526 = vrot.lane.b32.xlu0 %v3983, 112
  %v4527 = vpop.permute.xlu0 %4526
  %v4528 = vsel %vm79, %v3983, 0
  %v4530 = vsel %vm79, %v4527, 0
  %4532 = vmatprep.subr.mxu0 0.0
  %4533 = vmatpush1.xpose.msra.mxu0 %v4530
  %4534 = vmatprep.subr.mxu0 0.0
  %4535 = vmatpush1.xpose.msra.mxu0 0.0
  %4536 = vmatprep.subr.mxu0 0.0
  %4537 = vmatpush1.xpose.msra.mxu0 0.0
  %4538 = vmatprep.subr.mxu0 0.0
  %4539 = vmatpush1.xpose.msra.mxu0 0.0
  %4540 = vmatprep.subr.mxu0 0.0
  %4541 = vmatpush1.xpose.msra.mxu0 0.0
  %4542 = vmatprep.subr.mxu0 0.0
  %4543 = vmatpush1.xpose.msra.mxu0 0.0
  %4544 = vmatprep.subr.mxu0 0.0
  %4545 = vmatpush1.xpose.msra.mxu0 0.0
  %4546 = vmatprep.subr.mxu0 0.0
  %4547 = vmatpush1.xpose.msra.mxu0 0.0
  %4548 = vmatprep.subr.mxu0 0.0
  %4549 = vmatpush1.xpose.msra.mxu0 0.0
  %4550 = vmatprep.subr.mxu0 0.0
  %4551 = vmatpush1.xpose.msra.mxu0 0.0
  %4552 = vmatprep.subr.mxu0 0.0
  %4553 = vmatpush1.xpose.msra.mxu0 0.0
  %4554 = vmatprep.subr.mxu0 0.0
  %4555 = vmatpush1.xpose.msra.mxu0 0.0
  %4556 = vmatprep.subr.mxu0 0.0
  %4557 = vmatpush1.xpose.msra.mxu0 0.0
  %4558 = vmatprep.subr.mxu0 0.0
  %4559 = vmatpush1.xpose.msra.mxu0 0.0
  %4560 = vmatprep.subr.mxu0 0.0
  %4561 = vmatpush1.xpose.msra.mxu0 0.0
  %4562 = vmatprep.subr.mxu0 0.0
  %4563 = vmatpush1.xpose.msra.mxu0 0.0
  %4564 = vmatprep.subr.mxu0 0.0
  %4565 = vmatpush1.xpose.msra.mxu0 0.0
  %4566 = vmatprep.subr.mxu0 0.0
  %4567 = vmatpush1.xpose.msra.mxu0 0.0
  %4568 = vmatprep.subr.mxu0 0.0
  %4569 = vmatpush1.xpose.msra.mxu0 0.0
  %4570 = vmatprep.subr.mxu0 0.0
  %4571 = vmatpush1.xpose.msra.mxu0 0.0
  %4572 = vmatprep.subr.mxu0 0.0
  %4573 = vmatpush1.xpose.msra.mxu0 0.0
  %4574 = vmatprep.subr.mxu0 0.0
  %4575 = vmatpush1.xpose.msra.mxu0 0.0
  %4576 = vmatprep.subr.mxu0 0.0
  %4577 = vmatpush1.xpose.msra.mxu0 0.0
  %4578 = vmatprep.subr.mxu0 0.0
  %4579 = vmatpush1.xpose.msra.mxu0 0.0
  %4580 = vmatprep.subr.mxu0 0.0
  %4581 = vmatpush1.xpose.msra.mxu0 0.0
  %4582 = vmatprep.subr.mxu0 0.0
  %4583 = vmatpush1.xpose.msra.mxu0 0.0
  %4584 = vmatprep.subr.mxu0 0.0
  %4585 = vmatpush1.xpose.msra.mxu0 0.0
  %4586 = vmatprep.subr.mxu0 0.0
  %4587 = vmatpush1.xpose.msra.mxu0 0.0
  %4588 = vmatprep.subr.mxu0 0.0
  %4589 = vmatpush1.xpose.msra.mxu0 0.0
  %4590 = vmatprep.subr.mxu0 0.0
  %4591 = vmatpush1.xpose.msra.mxu0 0.0
  %4592 = vmatprep.subr.mxu0 0.0
  %4593 = vmatpush1.xpose.msra.mxu0 0.0
  %4594 = vmatprep.subr.mxu0 0.0
  %4595 = vmatpush1.xpose.msra.mxu0 0.0
  %4596 = vmatprep.mubr.f32.mxu0 0.0
  %4597 = vmatmul.mubr.f32.gmra.mrb[0].mxu0 %v4528
  %v4598 = vpop.f32.mrb[0].mxu0
  %v4599 = vadd.f32 0.0, %v4598
  %v4600 = vpop.f32.mrb[0].mxu0
  %4601 = vdwg.mxu0
  %v4602 = vmul.f32 %v4060, 0.35355338
  %v4603 = vmul.f32 %v4137, 0.35355338
  %v4604 = vmul.f32 %v4214, 0.35355338
  %v4605 = vmul.f32 %v4291, 0.35355338
  %v4606 = vmul.f32 %v4368, 0.35355338
  %v4607 = vmul.f32 %v4445, 0.35355338
  %v4608 = vmul.f32 %v4522, 0.35355338
  %v4609 = vmul.f32 %v4599, 0.35355338
  %v4610 = vsel %vm79, %v4602, -inf
  %4611 = vmax.xlane.f32.xlu0 %v4610
  %v4612 = vpop.xlane.xlu0 %4611
  %v4613 = vsel %vm79, %v4603, -inf
  %4614 = vmax.xlane.f32.xlu0 %v4613
  %v4615 = vpop.xlane.xlu0 %4614
  %v4616 = vsel %vm79, %v4604, -inf
  %4617 = vmax.xlane.f32.xlu0 %v4616
  %v4618 = vpop.xlane.xlu0 %4617
  %v4619 = vsel %vm79, %v4605, -inf
  %4620 = vmax.xlane.f32.xlu0 %v4619
  %v4621 = vpop.xlane.xlu0 %4620
  %v4622 = vsel %vm79, %v4606, -inf
  %4623 = vmax.xlane.f32.xlu0 %v4622
  %v4624 = vpop.xlane.xlu0 %4623
  %v4625 = vsel %vm79, %v4607, -inf
  %4626 = vmax.xlane.f32.xlu0 %v4625
  %v4627 = vpop.xlane.xlu0 %4626
  %v4628 = vsel %vm79, %v4608, -inf
  %4629 = vmax.xlane.f32.xlu0 %v4628
  %v4630 = vpop.xlane.xlu0 %4629
  %v4631 = vsel %vm79, %v4609, -inf
  %4632 = vmax.xlane.f32.xlu0 %v4631
  %v4633 = vpop.xlane.xlu0 %4632
  %v4634 = vsub.f32 %v4602, %v4612
  %v4635 = vsub.f32 %v4603, %v4615
  %v4636 = vsub.f32 %v4604, %v4618
  %v4637 = vsub.f32 %v4605, %v4621
  %v4638 = vsub.f32 %v4606, %v4624
  %v4639 = vsub.f32 %v4607, %v4627
  %v4640 = vsub.f32 %v4608, %v4630
  %v4641 = vsub.f32 %v4609, %v4633
  %v4642 = vmul.f32 %v4634, 1.442695
  %v4643 = vpow.pop %v4642
  %v4644 = vmul.f32 %v4635, 1.442695
  %v4645 = vpow.pop %v4644
  %v4646 = vmul.f32 %v4636, 1.442695
  %v4647 = vpow.pop %v4646
  %v4648 = vmul.f32 %v4637, 1.442695
  %v4649 = vpow.pop %v4648
  %v4650 = vmul.f32 %v4638, 1.442695
  %v4651 = vpow.pop %v4650
  %v4652 = vmul.f32 %v4639, 1.442695
  %v4653 = vpow.pop %v4652
  %v4654 = vmul.f32 %v4640, 1.442695
  %v4655 = vpow.pop %v4654
  %v4656 = vmul.f32 %v4641, 1.442695
  %v4657 = vpow.pop %v4656
  %v4658 = vsel %vm79, %v4643, 0.0
  %4659 = vadd.xlane.f32.xlu0 %v4658
  %v4660 = vpop.xlane.xlu0 %4659
  %v4661 = vsel %vm79, %v4645, 0.0
  %4662 = vadd.xlane.f32.xlu0 %v4661
  %v4663 = vpop.xlane.xlu0 %4662
  %v4664 = vsel %vm79, %v4647, 0.0
  %4665 = vadd.xlane.f32.xlu0 %v4664
  %v4666 = vpop.xlane.xlu0 %4665
  %v4667 = vsel %vm79, %v4649, 0.0
  %4668 = vadd.xlane.f32.xlu0 %v4667
  %v4669 = vpop.xlane.xlu0 %4668
  %v4670 = vsel %vm79, %v4651, 0.0
  %4671 = vadd.xlane.f32.xlu0 %v4670
  %v4672 = vpop.xlane.xlu0 %4671
  %v4673 = vsel %vm79, %v4653, 0.0
  %4674 = vadd.xlane.f32.xlu0 %v4673
  %v4675 = vpop.xlane.xlu0 %4674
  %v4676 = vsel %vm79, %v4655, 0.0
  %4677 = vadd.xlane.f32.xlu0 %v4676
  %v4678 = vpop.xlane.xlu0 %4677
  %v4679 = vsel %vm79, %v4657, 0.0
  %4680 = vadd.xlane.f32.xlu0 %v4679
  %v4681 = vpop.xlane.xlu0 %4680
  %v4682 = vrcp.pop %v4660
  %v4683 = vmul.f32 %v4643, %v4682
  %v4684 = vrcp.pop %v4663
  %v4685 = vmul.f32 %v4645, %v4684
  %v4686 = vrcp.pop %v4666
  %v4687 = vmul.f32 %v4647, %v4686
  %v4688 = vrcp.pop %v4669
  %v4689 = vmul.f32 %v4649, %v4688
  %v4690 = vrcp.pop %v4672
  %v4691 = vmul.f32 %v4651, %v4690
  %v4692 = vrcp.pop %v4675
  %v4693 = vmul.f32 %v4653, %v4692
  %v4694 = vrcp.pop %v4678
  %v4695 = vmul.f32 %v4655, %v4694
  %v4696 = vrcp.pop %v4681
  %v4697 = vmul.f32 %v4657, %v4696
  %4698 = vrot.lane.b32.xlu0 %v3948, 96
  %v4699 = vpop.permute.xlu0 %4698
  %v4702 = vsel %vm79, %v4683, 0
  %4704 = vmatprep.subr.mxu0 0.0
  %4705 = vmatpush1.msra.mxu0 %v4699
  %4706 = vmatprep.subr.mxu0 0.0
  %4707 = vmatpush1.msra.mxu0 0.0
  %4708 = vmatprep.subr.mxu0 0.0
  %4709 = vmatpush1.msra.mxu0 0.0
  %4710 = vmatprep.subr.mxu0 0.0
  %4711 = vmatpush1.msra.mxu0 0.0
  %4712 = vmatprep.subr.mxu0 0.0
  %4713 = vmatpush1.msra.mxu0 0.0
  %4714 = vmatprep.subr.mxu0 0.0
  %4715 = vmatpush1.msra.mxu0 0.0
  %4716 = vmatprep.subr.mxu0 0.0
  %4717 = vmatpush1.msra.mxu0 0.0
  %4718 = vmatprep.subr.mxu0 0.0
  %4719 = vmatpush1.msra.mxu0 0.0
  %4720 = vmatprep.subr.mxu0 0.0
  %4721 = vmatpush1.msra.mxu0 0.0
  %4722 = vmatprep.subr.mxu0 0.0
  %4723 = vmatpush1.msra.mxu0 0.0
  %4724 = vmatprep.subr.mxu0 0.0
  %4725 = vmatpush1.msra.mxu0 0.0
  %4726 = vmatprep.subr.mxu0 0.0
  %4727 = vmatpush1.msra.mxu0 0.0
  %4728 = vmatprep.subr.mxu0 0.0
  %4729 = vmatpush1.msra.mxu0 0.0
  %4730 = vmatprep.subr.mxu0 0.0
  %4731 = vmatpush1.msra.mxu0 0.0
  %4732 = vmatprep.subr.mxu0 0.0
  %4733 = vmatpush1.msra.mxu0 0.0
  %4734 = vmatprep.subr.mxu0 0.0
  %4735 = vmatpush1.msra.mxu0 0.0
  %4736 = vmatprep.subr.mxu0 0.0
  %4737 = vmatpush1.msra.mxu0 0.0
  %4738 = vmatprep.subr.mxu0 0.0
  %4739 = vmatpush1.msra.mxu0 0.0
  %4740 = vmatprep.subr.mxu0 0.0
  %4741 = vmatpush1.msra.mxu0 0.0
  %4742 = vmatprep.subr.mxu0 0.0
  %4743 = vmatpush1.msra.mxu0 0.0
  %4744 = vmatprep.subr.mxu0 0.0
  %4745 = vmatpush1.msra.mxu0 0.0
  %4746 = vmatprep.subr.mxu0 0.0
  %4747 = vmatpush1.msra.mxu0 0.0
  %4748 = vmatprep.subr.mxu0 0.0
  %4749 = vmatpush1.msra.mxu0 0.0
  %4750 = vmatprep.subr.mxu0 0.0
  %4751 = vmatpush1.msra.mxu0 0.0
  %4752 = vmatprep.subr.mxu0 0.0
  %4753 = vmatpush1.msra.mxu0 0.0
  %4754 = vmatprep.subr.mxu0 0.0
  %4755 = vmatpush1.msra.mxu0 0.0
  %4756 = vmatprep.subr.mxu0 0.0
  %4757 = vmatpush1.msra.mxu0 0.0
  %4758 = vmatprep.subr.mxu0 0.0
  %4759 = vmatpush1.msra.mxu0 0.0
  %4760 = vmatprep.subr.mxu0 0.0
  %4761 = vmatpush1.msra.mxu0 0.0
  %4762 = vmatprep.subr.mxu0 0.0
  %4763 = vmatpush1.msra.mxu0 0.0
  %4764 = vmatprep.subr.mxu0 0.0
  %4765 = vmatpush1.msra.mxu0 0.0
  %4766 = vmatprep.subr.mxu0 0.0
  %4767 = vmatpush1.msra.mxu0 0.0
  %4768 = vmatprep.mubr.f32.mxu0 0.0
  %4769 = vmatmul.mubr.f32.gmra.mrb[0].mxu0 %v4702
  %v4770 = vpop.f32.mrb[0].mxu0
  %v4771 = vadd.f32 0.0, %v4770
  %v4772 = vpop.f32.mrb[0].mxu0
  %4773 = vdwg.mxu0
  %4774 = vrot.lane.b32.xlu0 %v3953, 96
  %v4775 = vpop.permute.xlu0 %4774
  %v4778 = vsel %vm79, %v4685, 0
  %4780 = vmatprep.subr.mxu0 0.0
  %4781 = vmatpush1.msra.mxu0 %v4775
  %4782 = vmatprep.subr.mxu0 0.0
  %4783 = vmatpush1.msra.mxu0 0.0
  %4784 = vmatprep.subr.mxu0 0.0
  %4785 = vmatpush1.msra.mxu0 0.0
  %4786 = vmatprep.subr.mxu0 0.0
  %4787 = vmatpush1.msra.mxu0 0.0
  %4788 = vmatprep.subr.mxu0 0.0
  %4789 = vmatpush1.msra.mxu0 0.0
  %4790 = vmatprep.subr.mxu0 0.0
  %4791 = vmatpush1.msra.mxu0 0.0
  %4792 = vmatprep.subr.mxu0 0.0
  %4793 = vmatpush1.msra.mxu0 0.0
  %4794 = vmatprep.subr.mxu0 0.0
  %4795 = vmatpush1.msra.mxu0 0.0
  %4796 = vmatprep.subr.mxu0 0.0
  %4797 = vmatpush1.msra.mxu0 0.0
  %4798 = vmatprep.subr.mxu0 0.0
  %4799 = vmatpush1.msra.mxu0 0.0
  %4800 = vmatprep.subr.mxu0 0.0
  %4801 = vmatpush1.msra.mxu0 0.0
  %4802 = vmatprep.subr.mxu0 0.0
  %4803 = vmatpush1.msra.mxu0 0.0
  %4804 = vmatprep.subr.mxu0 0.0
  %4805 = vmatpush1.msra.mxu0 0.0
  %4806 = vmatprep.subr.mxu0 0.0
  %4807 = vmatpush1.msra.mxu0 0.0
  %4808 = vmatprep.subr.mxu0 0.0
  %4809 = vmatpush1.msra.mxu0 0.0
  %4810 = vmatprep.subr.mxu0 0.0
  %4811 = vmatpush1.msra.mxu0 0.0
  %4812 = vmatprep.subr.mxu0 0.0
  %4813 = vmatpush1.msra.mxu0 0.0
  %4814 = vmatprep.subr.mxu0 0.0
  %4815 = vmatpush1.msra.mxu0 0.0
  %4816 = vmatprep.subr.mxu0 0.0
  %4817 = vmatpush1.msra.mxu0 0.0
  %4818 = vmatprep.subr.mxu0 0.0
  %4819 = vmatpush1.msra.mxu0 0.0
  %4820 = vmatprep.subr.mxu0 0.0
  %4821 = vmatpush1.msra.mxu0 0.0
  %4822 = vmatprep.subr.mxu0 0.0
  %4823 = vmatpush1.msra.mxu0 0.0
  %4824 = vmatprep.subr.mxu0 0.0
  %4825 = vmatpush1.msra.mxu0 0.0
  %4826 = vmatprep.subr.mxu0 0.0
  %4827 = vmatpush1.msra.mxu0 0.0
  %4828 = vmatprep.subr.mxu0 0.0
  %4829 = vmatpush1.msra.mxu0 0.0
  %4830 = vmatprep.subr.mxu0 0.0
  %4831 = vmatpush1.msra.mxu0 0.0
  %4832 = vmatprep.subr.mxu0 0.0
  %4833 = vmatpush1.msra.mxu0 0.0
  %4834 = vmatprep.subr.mxu0 0.0
  %4835 = vmatpush1.msra.mxu0 0.0
  %4836 = vmatprep.subr.mxu0 0.0
  %4837 = vmatpush1.msra.mxu0 0.0
  %4838 = vmatprep.subr.mxu0 0.0
  %4839 = vmatpush1.msra.mxu0 0.0
  %4840 = vmatprep.subr.mxu0 0.0
  %4841 = vmatpush1.msra.mxu0 0.0
  %4842 = vmatprep.subr.mxu0 0.0
  %4843 = vmatpush1.msra.mxu0 0.0
  %4844 = vmatprep.mubr.f32.mxu0 0.0
  %4845 = vmatmul.mubr.f32.gmra.mrb[0].mxu0 %v4778
  %v4846 = vpop.f32.mrb[0].mxu0
  %v4847 = vadd.f32 0.0, %v4846
  %v4848 = vpop.f32.mrb[0].mxu0
  %4849 = vdwg.mxu0
  %4850 = vrot.lane.b32.xlu0 %v3958, 96
  %v4851 = vpop.permute.xlu0 %4850
  %v4854 = vsel %vm79, %v4687, 0
  %4856 = vmatprep.subr.mxu0 0.0
  %4857 = vmatpush1.msra.mxu0 %v4851
  %4858 = vmatprep.subr.mxu0 0.0
  %4859 = vmatpush1.msra.mxu0 0.0
  %4860 = vmatprep.subr.mxu0 0.0
  %4861 = vmatpush1.msra.mxu0 0.0
  %4862 = vmatprep.subr.mxu0 0.0
  %4863 = vmatpush1.msra.mxu0 0.0
  %4864 = vmatprep.subr.mxu0 0.0
  %4865 = vmatpush1.msra.mxu0 0.0
  %4866 = vmatprep.subr.mxu0 0.0
  %4867 = vmatpush1.msra.mxu0 0.0
  %4868 = vmatprep.subr.mxu0 0.0
  %4869 = vmatpush1.msra.mxu0 0.0
  %4870 = vmatprep.subr.mxu0 0.0
  %4871 = vmatpush1.msra.mxu0 0.0
  %4872 = vmatprep.subr.mxu0 0.0
  %4873 = vmatpush1.msra.mxu0 0.0
  %4874 = vmatprep.subr.mxu0 0.0
  %4875 = vmatpush1.msra.mxu0 0.0
  %4876 = vmatprep.subr.mxu0 0.0
  %4877 = vmatpush1.msra.mxu0 0.0
  %4878 = vmatprep.subr.mxu0 0.0
  %4879 = vmatpush1.msra.mxu0 0.0
  %4880 = vmatprep.subr.mxu0 0.0
  %4881 = vmatpush1.msra.mxu0 0.0
  %4882 = vmatprep.subr.mxu0 0.0
  %4883 = vmatpush1.msra.mxu0 0.0
  %4884 = vmatprep.subr.mxu0 0.0
  %4885 = vmatpush1.msra.mxu0 0.0
  %4886 = vmatprep.subr.mxu0 0.0
  %4887 = vmatpush1.msra.mxu0 0.0
  %4888 = vmatprep.subr.mxu0 0.0
  %4889 = vmatpush1.msra.mxu0 0.0
  %4890 = vmatprep.subr.mxu0 0.0
  %4891 = vmatpush1.msra.mxu0 0.0
  %4892 = vmatprep.subr.mxu0 0.0
  %4893 = vmatpush1.msra.mxu0 0.0
  %4894 = vmatprep.subr.mxu0 0.0
  %4895 = vmatpush1.msra.mxu0 0.0
  %4896 = vmatprep.subr.mxu0 0.0
  %4897 = vmatpush1.msra.mxu0 0.0
  %4898 = vmatprep.subr.mxu0 0.0
  %4899 = vmatpush1.msra.mxu0 0.0
  %4900 = vmatprep.subr.mxu0 0.0
  %4901 = vmatpush1.msra.mxu0 0.0
  %4902 = vmatprep.subr.mxu0 0.0
  %4903 = vmatpush1.msra.mxu0 0.0
  %4904 = vmatprep.subr.mxu0 0.0
  %4905 = vmatpush1.msra.mxu0 0.0
  %4906 = vmatprep.subr.mxu0 0.0
  %4907 = vmatpush1.msra.mxu0 0.0
  %4908 = vmatprep.subr.mxu0 0.0
  %4909 = vmatpush1.msra.mxu0 0.0
  %4910 = vmatprep.subr.mxu0 0.0
  %4911 = vmatpush1.msra.mxu0 0.0
  %4912 = vmatprep.subr.mxu0 0.0
  %4913 = vmatpush1.msra.mxu0 0.0
  %4914 = vmatprep.subr.mxu0 0.0
  %4915 = vmatpush1.msra.mxu0 0.0
  %4916 = vmatprep.subr.mxu0 0.0
  %4917 = vmatpush1.msra.mxu0 0.0
  %4918 = vmatprep.subr.mxu0 0.0
  %4919 = vmatpush1.msra.mxu0 0.0
  %4920 = vmatprep.mubr.f32.mxu0 0.0
  %4921 = vmatmul.mubr.f32.gmra.mrb[0].mxu0 %v4854
  %v4922 = vpop.f32.mrb[0].mxu0
  %v4923 = vadd.f32 0.0, %v4922
  %v4924 = vpop.f32.mrb[0].mxu0
  %4925 = vdwg.mxu0
  %4926 = vrot.lane.b32.xlu0 %v3963, 96
  %v4927 = vpop.permute.xlu0 %4926
  %v4930 = vsel %vm79, %v4689, 0
  %4932 = vmatprep.subr.mxu0 0.0
  %4933 = vmatpush1.msra.mxu0 %v4927
  %4934 = vmatprep.subr.mxu0 0.0
  %4935 = vmatpush1.msra.mxu0 0.0
  %4936 = vmatprep.subr.mxu0 0.0
  %4937 = vmatpush1.msra.mxu0 0.0
  %4938 = vmatprep.subr.mxu0 0.0
  %4939 = vmatpush1.msra.mxu0 0.0
  %4940 = vmatprep.subr.mxu0 0.0
  %4941 = vmatpush1.msra.mxu0 0.0
  %4942 = vmatprep.subr.mxu0 0.0
  %4943 = vmatpush1.msra.mxu0 0.0
  %4944 = vmatprep.subr.mxu0 0.0
  %4945 = vmatpush1.msra.mxu0 0.0
  %4946 = vmatprep.subr.mxu0 0.0
  %4947 = vmatpush1.msra.mxu0 0.0
  %4948 = vmatprep.subr.mxu0 0.0
  %4949 = vmatpush1.msra.mxu0 0.0
  %4950 = vmatprep.subr.mxu0 0.0
  %4951 = vmatpush1.msra.mxu0 0.0
  %4952 = vmatprep.subr.mxu0 0.0
  %4953 = vmatpush1.msra.mxu0 0.0
  %4954 = vmatprep.subr.mxu0 0.0
  %4955 = vmatpush1.msra.mxu0 0.0
  %4956 = vmatprep.subr.mxu0 0.0
  %4957 = vmatpush1.msra.mxu0 0.0
  %4958 = vmatprep.subr.mxu0 0.0
  %4959 = vmatpush1.msra.mxu0 0.0
  %4960 = vmatprep.subr.mxu0 0.0
  %4961 = vmatpush1.msra.mxu0 0.0
  %4962 = vmatprep.subr.mxu0 0.0
  %4963 = vmatpush1.msra.mxu0 0.0
  %4964 = vmatprep.subr.mxu0 0.0
  %4965 = vmatpush1.msra.mxu0 0.0
  %4966 = vmatprep.subr.mxu0 0.0
  %4967 = vmatpush1.msra.mxu0 0.0
  %4968 = vmatprep.subr.mxu0 0.0
  %4969 = vmatpush1.msra.mxu0 0.0
  %4970 = vmatprep.subr.mxu0 0.0
  %4971 = vmatpush1.msra.mxu0 0.0
  %4972 = vmatprep.subr.mxu0 0.0
  %4973 = vmatpush1.msra.mxu0 0.0
  %4974 = vmatprep.subr.mxu0 0.0
  %4975 = vmatpush1.msra.mxu0 0.0
  %4976 = vmatprep.subr.mxu0 0.0
  %4977 = vmatpush1.msra.mxu0 0.0
  %4978 = vmatprep.subr.mxu0 0.0
  %4979 = vmatpush1.msra.mxu0 0.0
  %4980 = vmatprep.subr.mxu0 0.0
  %4981 = vmatpush1.msra.mxu0 0.0
  %4982 = vmatprep.subr.mxu0 0.0
  %4983 = vmatpush1.msra.mxu0 0.0
  %4984 = vmatprep.subr.mxu0 0.0
  %4985 = vmatpush1.msra.mxu0 0.0
  %4986 = vmatprep.subr.mxu0 0.0
  %4987 = vmatpush1.msra.mxu0 0.0
  %4988 = vmatprep.subr.mxu0 0.0
  %4989 = vmatpush1.msra.mxu0 0.0
  %4990 = vmatprep.subr.mxu0 0.0
  %4991 = vmatpush1.msra.mxu0 0.0
  %4992 = vmatprep.subr.mxu0 0.0
  %4993 = vmatpush1.msra.mxu0 0.0
  %4994 = vmatprep.subr.mxu0 0.0
  %4995 = vmatpush1.msra.mxu0 0.0
  %4996 = vmatprep.mubr.f32.mxu0 0.0
  %4997 = vmatmul.mubr.f32.gmra.mrb[0].mxu0 %v4930
  %v4998 = vpop.f32.mrb[0].mxu0
  %v4999 = vadd.f32 0.0, %v4998
  %v5000 = vpop.f32.mrb[0].mxu0
  %5001 = vdwg.mxu0
  %5002 = vrot.lane.b32.xlu0 %v3968, 96
  %v5003 = vpop.permute.xlu0 %5002
  %v5006 = vsel %vm79, %v4691, 0
  %5008 = vmatprep.subr.mxu0 0.0
  %5009 = vmatpush1.msra.mxu0 %v5003
  %5010 = vmatprep.subr.mxu0 0.0
  %5011 = vmatpush1.msra.mxu0 0.0
  %5012 = vmatprep.subr.mxu0 0.0
  %5013 = vmatpush1.msra.mxu0 0.0
  %5014 = vmatprep.subr.mxu0 0.0
  %5015 = vmatpush1.msra.mxu0 0.0
  %5016 = vmatprep.subr.mxu0 0.0
  %5017 = vmatpush1.msra.mxu0 0.0
  %5018 = vmatprep.subr.mxu0 0.0
  %5019 = vmatpush1.msra.mxu0 0.0
  %5020 = vmatprep.subr.mxu0 0.0
  %5021 = vmatpush1.msra.mxu0 0.0
  %5022 = vmatprep.subr.mxu0 0.0
  %5023 = vmatpush1.msra.mxu0 0.0
  %5024 = vmatprep.subr.mxu0 0.0
  %5025 = vmatpush1.msra.mxu0 0.0
  %5026 = vmatprep.subr.mxu0 0.0
  %5027 = vmatpush1.msra.mxu0 0.0
  %5028 = vmatprep.subr.mxu0 0.0
  %5029 = vmatpush1.msra.mxu0 0.0
  %5030 = vmatprep.subr.mxu0 0.0
  %5031 = vmatpush1.msra.mxu0 0.0
  %5032 = vmatprep.subr.mxu0 0.0
  %5033 = vmatpush1.msra.mxu0 0.0
  %5034 = vmatprep.subr.mxu0 0.0
  %5035 = vmatpush1.msra.mxu0 0.0
  %5036 = vmatprep.subr.mxu0 0.0
  %5037 = vmatpush1.msra.mxu0 0.0
  %5038 = vmatprep.subr.mxu0 0.0
  %5039 = vmatpush1.msra.mxu0 0.0
  %5040 = vmatprep.subr.mxu0 0.0
  %5041 = vmatpush1.msra.mxu0 0.0
  %5042 = vmatprep.subr.mxu0 0.0
  %5043 = vmatpush1.msra.mxu0 0.0
  %5044 = vmatprep.subr.mxu0 0.0
  %5045 = vmatpush1.msra.mxu0 0.0
  %5046 = vmatprep.subr.mxu0 0.0
  %5047 = vmatpush1.msra.mxu0 0.0
  %5048 = vmatprep.subr.mxu0 0.0
  %5049 = vmatpush1.msra.mxu0 0.0
  %5050 = vmatprep.subr.mxu0 0.0
  %5051 = vmatpush1.msra.mxu0 0.0
  %5052 = vmatprep.subr.mxu0 0.0
  %5053 = vmatpush1.msra.mxu0 0.0
  %5054 = vmatprep.subr.mxu0 0.0
  %5055 = vmatpush1.msra.mxu0 0.0
  %5056 = vmatprep.subr.mxu0 0.0
  %5057 = vmatpush1.msra.mxu0 0.0
  %5058 = vmatprep.subr.mxu0 0.0
  %5059 = vmatpush1.msra.mxu0 0.0
  %5060 = vmatprep.subr.mxu0 0.0
  %5061 = vmatpush1.msra.mxu0 0.0
  %5062 = vmatprep.subr.mxu0 0.0
  %5063 = vmatpush1.msra.mxu0 0.0
  %5064 = vmatprep.subr.mxu0 0.0
  %5065 = vmatpush1.msra.mxu0 0.0
  %5066 = vmatprep.subr.mxu0 0.0
  %5067 = vmatpush1.msra.mxu0 0.0
  %5068 = vmatprep.subr.mxu0 0.0
  %5069 = vmatpush1.msra.mxu0 0.0
  %5070 = vmatprep.subr.mxu0 0.0
  %5071 = vmatpush1.msra.mxu0 0.0
  %5072 = vmatprep.mubr.f32.mxu0 0.0
  %5073 = vmatmul.mubr.f32.gmra.mrb[0].mxu0 %v5006
  %v5074 = vpop.f32.mrb[0].mxu0
  %v5075 = vadd.f32 0.0, %v5074
  %v5076 = vpop.f32.mrb[0].mxu0
  %5077 = vdwg.mxu0
  %5078 = vrot.lane.b32.xlu0 %v3973, 96
  %v5079 = vpop.permute.xlu0 %5078
  %v5082 = vsel %vm79, %v4693, 0
  %5084 = vmatprep.subr.mxu0 0.0
  %5085 = vmatpush1.msra.mxu0 %v5079
  %5086 = vmatprep.subr.mxu0 0.0
  %5087 = vmatpush1.msra.mxu0 0.0
  %5088 = vmatprep.subr.mxu0 0.0
  %5089 = vmatpush1.msra.mxu0 0.0
  %5090 = vmatprep.subr.mxu0 0.0
  %5091 = vmatpush1.msra.mxu0 0.0
  %5092 = vmatprep.subr.mxu0 0.0
  %5093 = vmatpush1.msra.mxu0 0.0
  %5094 = vmatprep.subr.mxu0 0.0
  %5095 = vmatpush1.msra.mxu0 0.0
  %5096 = vmatprep.subr.mxu0 0.0
  %5097 = vmatpush1.msra.mxu0 0.0
  %5098 = vmatprep.subr.mxu0 0.0
  %5099 = vmatpush1.msra.mxu0 0.0
  %5100 = vmatprep.subr.mxu0 0.0
  %5101 = vmatpush1.msra.mxu0 0.0
  %5102 = vmatprep.subr.mxu0 0.0
  %5103 = vmatpush1.msra.mxu0 0.0
  %5104 = vmatprep.subr.mxu0 0.0
  %5105 = vmatpush1.msra.mxu0 0.0
  %5106 = vmatprep.subr.mxu0 0.0
  %5107 = vmatpush1.msra.mxu0 0.0
  %5108 = vmatprep.subr.mxu0 0.0
  %5109 = vmatpush1.msra.mxu0 0.0
  %5110 = vmatprep.subr.mxu0 0.0
  %5111 = vmatpush1.msra.mxu0 0.0
  %5112 = vmatprep.subr.mxu0 0.0
  %5113 = vmatpush1.msra.mxu0 0.0
  %5114 = vmatprep.subr.mxu0 0.0
  %5115 = vmatpush1.msra.mxu0 0.0
  %5116 = vmatprep.subr.mxu0 0.0
  %5117 = vmatpush1.msra.mxu0 0.0
  %5118 = vmatprep.subr.mxu0 0.0
  %5119 = vmatpush1.msra.mxu0 0.0
  %5120 = vmatprep.subr.mxu0 0.0
  %5121 = vmatpush1.msra.mxu0 0.0
  %5122 = vmatprep.subr.mxu0 0.0
  %5123 = vmatpush1.msra.mxu0 0.0
  %5124 = vmatprep.subr.mxu0 0.0
  %5125 = vmatpush1.msra.mxu0 0.0
  %5126 = vmatprep.subr.mxu0 0.0
  %5127 = vmatpush1.msra.mxu0 0.0
  %5128 = vmatprep.subr.mxu0 0.0
  %5129 = vmatpush1.msra.mxu0 0.0
  %5130 = vmatprep.subr.mxu0 0.0
  %5131 = vmatpush1.msra.mxu0 0.0
  %5132 = vmatprep.subr.mxu0 0.0
  %5133 = vmatpush1.msra.mxu0 0.0
  %5134 = vmatprep.subr.mxu0 0.0
  %5135 = vmatpush1.msra.mxu0 0.0
  %5136 = vmatprep.subr.mxu0 0.0
  %5137 = vmatpush1.msra.mxu0 0.0
  %5138 = vmatprep.subr.mxu0 0.0
  %5139 = vmatpush1.msra.mxu0 0.0
  %5140 = vmatprep.subr.mxu0 0.0
  %5141 = vmatpush1.msra.mxu0 0.0
  %5142 = vmatprep.subr.mxu0 0.0
  %5143 = vmatpush1.msra.mxu0 0.0
  %5144 = vmatprep.subr.mxu0 0.0
  %5145 = vmatpush1.msra.mxu0 0.0
  %5146 = vmatprep.subr.mxu0 0.0
  %5147 = vmatpush1.msra.mxu0 0.0
  %5148 = vmatprep.mubr.f32.mxu0 0.0
  %5149 = vmatmul.mubr.f32.gmra.mrb[0].mxu0 %v5082
  %v5150 = vpop.f32.mrb[0].mxu0
  %v5151 = vadd.f32 0.0, %v5150
  %v5152 = vpop.f32.mrb[0].mxu0
  %5153 = vdwg.mxu0
  %5154 = vrot.lane.b32.xlu0 %v3978, 96
  %v5155 = vpop.permute.xlu0 %5154
  %v5158 = vsel %vm79, %v4695, 0
  %5160 = vmatprep.subr.mxu0 0.0
  %5161 = vmatpush1.msra.mxu0 %v5155
  %5162 = vmatprep.subr.mxu0 0.0
  %5163 = vmatpush1.msra.mxu0 0.0
  %5164 = vmatprep.subr.mxu0 0.0
  %5165 = vmatpush1.msra.mxu0 0.0
  %5166 = vmatprep.subr.mxu0 0.0
  %5167 = vmatpush1.msra.mxu0 0.0
  %5168 = vmatprep.subr.mxu0 0.0
  %5169 = vmatpush1.msra.mxu0 0.0
  %5170 = vmatprep.subr.mxu0 0.0
  %5171 = vmatpush1.msra.mxu0 0.0
  %5172 = vmatprep.subr.mxu0 0.0
  %5173 = vmatpush1.msra.mxu0 0.0
  %5174 = vmatprep.subr.mxu0 0.0
  %5175 = vmatpush1.msra.mxu0 0.0
  %5176 = vmatprep.subr.mxu0 0.0
  %5177 = vmatpush1.msra.mxu0 0.0
  %5178 = vmatprep.subr.mxu0 0.0
  %5179 = vmatpush1.msra.mxu0 0.0
  %5180 = vmatprep.subr.mxu0 0.0
  %5181 = vmatpush1.msra.mxu0 0.0
  %5182 = vmatprep.subr.mxu0 0.0
  %5183 = vmatpush1.msra.mxu0 0.0
  %5184 = vmatprep.subr.mxu0 0.0
  %5185 = vmatpush1.msra.mxu0 0.0
  %5186 = vmatprep.subr.mxu0 0.0
  %5187 = vmatpush1.msra.mxu0 0.0
  %5188 = vmatprep.subr.mxu0 0.0
  %5189 = vmatpush1.msra.mxu0 0.0
  %5190 = vmatprep.subr.mxu0 0.0
  %5191 = vmatpush1.msra.mxu0 0.0
  %5192 = vmatprep.subr.mxu0 0.0
  %5193 = vmatpush1.msra.mxu0 0.0
  %5194 = vmatprep.subr.mxu0 0.0
  %5195 = vmatpush1.msra.mxu0 0.0
  %5196 = vmatprep.subr.mxu0 0.0
  %5197 = vmatpush1.msra.mxu0 0.0
  %5198 = vmatprep.subr.mxu0 0.0
  %5199 = vmatpush1.msra.mxu0 0.0
  %5200 = vmatprep.subr.mxu0 0.0
  %5201 = vmatpush1.msra.mxu0 0.0
  %5202 = vmatprep.subr.mxu0 0.0
  %5203 = vmatpush1.msra.mxu0 0.0
  %5204 = vmatprep.subr.mxu0 0.0
  %5205 = vmatpush1.msra.mxu0 0.0
  %5206 = vmatprep.subr.mxu0 0.0
  %5207 = vmatpush1.msra.mxu0 0.0
  %5208 = vmatprep.subr.mxu0 0.0
  %5209 = vmatpush1.msra.mxu0 0.0
  %5210 = vmatprep.subr.mxu0 0.0
  %5211 = vmatpush1.msra.mxu0 0.0
  %5212 = vmatprep.subr.mxu0 0.0
  %5213 = vmatpush1.msra.mxu0 0.0
  %5214 = vmatprep.subr.mxu0 0.0
  %5215 = vmatpush1.msra.mxu0 0.0
  %5216 = vmatprep.subr.mxu0 0.0
  %5217 = vmatpush1.msra.mxu0 0.0
  %5218 = vmatprep.subr.mxu0 0.0
  %5219 = vmatpush1.msra.mxu0 0.0
  %5220 = vmatprep.subr.mxu0 0.0
  %5221 = vmatpush1.msra.mxu0 0.0
  %5222 = vmatprep.subr.mxu0 0.0
  %5223 = vmatpush1.msra.mxu0 0.0
  %5224 = vmatprep.mubr.f32.mxu0 0.0
  %5225 = vmatmul.mubr.f32.gmra.mrb[0].mxu0 %v5158
  %v5226 = vpop.f32.mrb[0].mxu0
  %v5227 = vadd.f32 0.0, %v5226
  %v5228 = vpop.f32.mrb[0].mxu0
  %5229 = vdwg.mxu0
  %5230 = vrot.lane.b32.xlu0 %v3983, 96
  %v5231 = vpop.permute.xlu0 %5230
  %v5234 = vsel %vm79, %v4697, 0
  %5236 = vmatprep.subr.mxu0 0.0
  %5237 = vmatpush1.msra.mxu0 %v5231
  %5238 = vmatprep.subr.mxu0 0.0
  %5239 = vmatpush1.msra.mxu0 0.0
  %5240 = vmatprep.subr.mxu0 0.0
  %5241 = vmatpush1.msra.mxu0 0.0
  %5242 = vmatprep.subr.mxu0 0.0
  %5243 = vmatpush1.msra.mxu0 0.0
  %5244 = vmatprep.subr.mxu0 0.0
  %5245 = vmatpush1.msra.mxu0 0.0
  %5246 = vmatprep.subr.mxu0 0.0
  %5247 = vmatpush1.msra.mxu0 0.0
  %5248 = vmatprep.subr.mxu0 0.0
  %5249 = vmatpush1.msra.mxu0 0.0
  %5250 = vmatprep.subr.mxu0 0.0
  %5251 = vmatpush1.msra.mxu0 0.0
  %5252 = vmatprep.subr.mxu0 0.0
  %5253 = vmatpush1.msra.mxu0 0.0
  %5254 = vmatprep.subr.mxu0 0.0
  %5255 = vmatpush1.msra.mxu0 0.0
  %5256 = vmatprep.subr.mxu0 0.0
  %5257 = vmatpush1.msra.mxu0 0.0
  %5258 = vmatprep.subr.mxu0 0.0
  %5259 = vmatpush1.msra.mxu0 0.0
  %5260 = vmatprep.subr.mxu0 0.0
  %5261 = vmatpush1.msra.mxu0 0.0
  %5262 = vmatprep.subr.mxu0 0.0
  %5263 = vmatpush1.msra.mxu0 0.0
  %5264 = vmatprep.subr.mxu0 0.0
  %5265 = vmatpush1.msra.mxu0 0.0
  %5266 = vmatprep.subr.mxu0 0.0
  %5267 = vmatpush1.msra.mxu0 0.0
  %5268 = vmatprep.subr.mxu0 0.0
  %5269 = vmatpush1.msra.mxu0 0.0
  %5270 = vmatprep.subr.mxu0 0.0
  %5271 = vmatpush1.msra.mxu0 0.0
  %5272 = vmatprep.subr.mxu0 0.0
  %5273 = vmatpush1.msra.mxu0 0.0
  %5274 = vmatprep.subr.mxu0 0.0
  %5275 = vmatpush1.msra.mxu0 0.0
  %5276 = vmatprep.subr.mxu0 0.0
  %5277 = vmatpush1.msra.mxu0 0.0
  %5278 = vmatprep.subr.mxu0 0.0
  %5279 = vmatpush1.msra.mxu0 0.0
  %5280 = vmatprep.subr.mxu0 0.0
  %5281 = vmatpush1.msra.mxu0 0.0
  %5282 = vmatprep.subr.mxu0 0.0
  %5283 = vmatpush1.msra.mxu0 0.0
  %5284 = vmatprep.subr.mxu0 0.0
  %5285 = vmatpush1.msra.mxu0 0.0
  %5286 = vmatprep.subr.mxu0 0.0
  %5287 = vmatpush1.msra.mxu0 0.0
  %5288 = vmatprep.subr.mxu0 0.0
  %5289 = vmatpush1.msra.mxu0 0.0
  %5290 = vmatprep.subr.mxu0 0.0
  %5291 = vmatpush1.msra.mxu0 0.0
  %5292 = vmatprep.subr.mxu0 0.0
  %5293 = vmatpush1.msra.mxu0 0.0
  %5294 = vmatprep.subr.mxu0 0.0
  %5295 = vmatpush1.msra.mxu0 0.0
  %5296 = vmatprep.subr.mxu0 0.0
  %5297 = vmatpush1.msra.mxu0 0.0
  %5298 = vmatprep.subr.mxu0 0.0
  %5299 = vmatpush1.msra.mxu0 0.0
  %5300 = vmatprep.mubr.f32.mxu0 0.0
  %5301 = vmatmul.mubr.f32.gmra.mrb[0].mxu0 %v5234
  %v5302 = vpop.f32.mrb[0].mxu0
  %v5303 = vadd.f32 0.0, %v5302
  %v5304 = vpop.f32.mrb[0].mxu0
  %5305 = vdwg.mxu0
  %5306 = vrot.lane.b32.xlu0 %v3948, 120
  %v5307 = vpop.permute.xlu0 %5306
  %5308 = vrot.lane.b32.xlu0 %v3948, 104
  %v5309 = vpop.permute.xlu0 %5308
  %v5310 = vsel %vm79, %v5307, 0
  %v5312 = vsel %vm79, %v5309, 0
  %5314 = vmatprep.subr.mxu0 0.0
  %5315 = vmatpush1.xpose.msra.mxu0 %v5312
  %5316 = vmatprep.subr.mxu0 0.0
  %5317 = vmatpush1.xpose.msra.mxu0 0.0
  %5318 = vmatprep.subr.mxu0 0.0
  %5319 = vmatpush1.xpose.msra.mxu0 0.0
  %5320 = vmatprep.subr.mxu0 0.0
  %5321 = vmatpush1.xpose.msra.mxu0 0.0
  %5322 = vmatprep.subr.mxu0 0.0
  %5323 = vmatpush1.xpose.msra.mxu0 0.0
  %5324 = vmatprep.subr.mxu0 0.0
  %5325 = vmatpush1.xpose.msra.mxu0 0.0
  %5326 = vmatprep.subr.mxu0 0.0
  %5327 = vmatpush1.xpose.msra.mxu0 0.0
  %5328 = vmatprep.subr.mxu0 0.0
  %5329 = vmatpush1.xpose.msra.mxu0 0.0
  %5330 = vmatprep.subr.mxu0 0.0
  %5331 = vmatpush1.xpose.msra.mxu0 0.0
  %5332 = vmatprep.subr.mxu0 0.0
  %5333 = vmatpush1.xpose.msra.mxu0 0.0
  %5334 = vmatprep.subr.mxu0 0.0
  %5335 = vmatpush1.xpose.msra.mxu0 0.0
  %5336 = vmatprep.subr.mxu0 0.0
  %5337 = vmatpush1.xpose.msra.mxu0 0.0
  %5338 = vmatprep.subr.mxu0 0.0
  %5339 = vmatpush1.xpose.msra.mxu0 0.0
  %5340 = vmatprep.subr.mxu0 0.0
  %5341 = vmatpush1.xpose.msra.mxu0 0.0
  %5342 = vmatprep.subr.mxu0 0.0
  %5343 = vmatpush1.xpose.msra.mxu0 0.0
  %5344 = vmatprep.subr.mxu0 0.0
  %5345 = vmatpush1.xpose.msra.mxu0 0.0
  %5346 = vmatprep.subr.mxu0 0.0
  %5347 = vmatpush1.xpose.msra.mxu0 0.0
  %5348 = vmatprep.subr.mxu0 0.0
  %5349 = vmatpush1.xpose.msra.mxu0 0.0
  %5350 = vmatprep.subr.mxu0 0.0
  %5351 = vmatpush1.xpose.msra.mxu0 0.0
  %5352 = vmatprep.subr.mxu0 0.0
  %5353 = vmatpush1.xpose.msra.mxu0 0.0
  %5354 = vmatprep.subr.mxu0 0.0
  %5355 = vmatpush1.xpose.msra.mxu0 0.0
  %5356 = vmatprep.subr.mxu0 0.0
  %5357 = vmatpush1.xpose.msra.mxu0 0.0
  %5358 = vmatprep.subr.mxu0 0.0
  %5359 = vmatpush1.xpose.msra.mxu0 0.0
  %5360 = vmatprep.subr.mxu0 0.0
  %5361 = vmatpush1.xpose.msra.mxu0 0.0
  %5362 = vmatprep.subr.mxu0 0.0
  %5363 = vmatpush1.xpose.msra.mxu0 0.0
  %5364 = vmatprep.subr.mxu0 0.0
  %5365 = vmatpush1.xpose.msra.mxu0 0.0
  %5366 = vmatprep.subr.mxu0 0.0
  %5367 = vmatpush1.xpose.msra.mxu0 0.0
  %5368 = vmatprep.subr.mxu0 0.0
  %5369 = vmatpush1.xpose.msra.mxu0 0.0
  %5370 = vmatprep.subr.mxu0 0.0
  %5371 = vmatpush1.xpose.msra.mxu0 0.0
  %5372 = vmatprep.subr.mxu0 0.0
  %5373 = vmatpush1.xpose.msra.mxu0 0.0
  %5374 = vmatprep.subr.mxu0 0.0
  %5375 = vmatpush1.xpose.msra.mxu0 0.0
  %5376 = vmatprep.subr.mxu0 0.0
  %5377 = vmatpush1.xpose.msra.mxu0 0.0
  %5378 = vmatprep.mubr.f32.mxu0 0.0
  %5379 = vmatmul.mubr.f32.gmra.mrb[0].mxu0 %v5310
  %v5380 = vpop.f32.mrb[0].mxu0
  %v5381 = vadd.f32 0.0, %v5380
  %v5382 = vpop.f32.mrb[0].mxu0
  %5383 = vdwg.mxu0
  %5384 = vrot.lane.b32.xlu0 %v3953, 120
  %v5385 = vpop.permute.xlu0 %5384
  %5386 = vrot.lane.b32.xlu0 %v3953, 104
  %v5387 = vpop.permute.xlu0 %5386
  %v5388 = vsel %vm79, %v5385, 0
  %v5390 = vsel %vm79, %v5387, 0
  %5392 = vmatprep.subr.mxu0 0.0
  %5393 = vmatpush1.xpose.msra.mxu0 %v5390
  %5394 = vmatprep.subr.mxu0 0.0
  %5395 = vmatpush1.xpose.msra.mxu0 0.0
  %5396 = vmatprep.subr.mxu0 0.0
  %5397 = vmatpush1.xpose.msra.mxu0 0.0
  %5398 = vmatprep.subr.mxu0 0.0
  %5399 = vmatpush1.xpose.msra.mxu0 0.0
  %5400 = vmatprep.subr.mxu0 0.0
  %5401 = vmatpush1.xpose.msra.mxu0 0.0
  %5402 = vmatprep.subr.mxu0 0.0
  %5403 = vmatpush1.xpose.msra.mxu0 0.0
  %5404 = vmatprep.subr.mxu0 0.0
  %5405 = vmatpush1.xpose.msra.mxu0 0.0
  %5406 = vmatprep.subr.mxu0 0.0
  %5407 = vmatpush1.xpose.msra.mxu0 0.0
  %5408 = vmatprep.subr.mxu0 0.0
  %5409 = vmatpush1.xpose.msra.mxu0 0.0
  %5410 = vmatprep.subr.mxu0 0.0
  %5411 = vmatpush1.xpose.msra.mxu0 0.0
  %5412 = vmatprep.subr.mxu0 0.0
  %5413 = vmatpush1.xpose.msra.mxu0 0.0
  %5414 = vmatprep.subr.mxu0 0.0
  %5415 = vmatpush1.xpose.msra.mxu0 0.0
  %5416 = vmatprep.subr.mxu0 0.0
  %5417 = vmatpush1.xpose.msra.mxu0 0.0
  %5418 = vmatprep.subr.mxu0 0.0
  %5419 = vmatpush1.xpose.msra.mxu0 0.0
  %5420 = vmatprep.subr.mxu0 0.0
  %5421 = vmatpush1.xpose.msra.mxu0 0.0
  %5422 = vmatprep.subr.mxu0 0.0
  %5423 = vmatpush1.xpose.msra.mxu0 0.0
  %5424 = vmatprep.subr.mxu0 0.0
  %5425 = vmatpush1.xpose.msra.mxu0 0.0
  %5426 = vmatprep.subr.mxu0 0.0
  %5427 = vmatpush1.xpose.msra.mxu0 0.0
  %5428 = vmatprep.subr.mxu0 0.0
  %5429 = vmatpush1.xpose.msra.mxu0 0.0
  %5430 = vmatprep.subr.mxu0 0.0
  %5431 = vmatpush1.xpose.msra.mxu0 0.0
  %5432 = vmatprep.subr.mxu0 0.0
  %5433 = vmatpush1.xpose.msra.mxu0 0.0
  %5434 = vmatprep.subr.mxu0 0.0
  %5435 = vmatpush1.xpose.msra.mxu0 0.0
  %5436 = vmatprep.subr.mxu0 0.0
  %5437 = vmatpush1.xpose.msra.mxu0 0.0
  %5438 = vmatprep.subr.mxu0 0.0
  %5439 = vmatpush1.xpose.msra.mxu0 0.0
  %5440 = vmatprep.subr.mxu0 0.0
  %5441 = vmatpush1.xpose.msra.mxu0 0.0
  %5442 = vmatprep.subr.mxu0 0.0
  %5443 = vmatpush1.xpose.msra.mxu0 0.0
  %5444 = vmatprep.subr.mxu0 0.0
  %5445 = vmatpush1.xpose.msra.mxu0 0.0
  %5446 = vmatprep.subr.mxu0 0.0
  %5447 = vmatpush1.xpose.msra.mxu0 0.0
  %5448 = vmatprep.subr.mxu0 0.0
  %5449 = vmatpush1.xpose.msra.mxu0 0.0
  %5450 = vmatprep.subr.mxu0 0.0
  %5451 = vmatpush1.xpose.msra.mxu0 0.0
  %5452 = vmatprep.subr.mxu0 0.0
  %5453 = vmatpush1.xpose.msra.mxu0 0.0
  %5454 = vmatprep.subr.mxu0 0.0
  %5455 = vmatpush1.xpose.msra.mxu0 0.0
  %5456 = vmatprep.mubr.f32.mxu0 0.0
  %5457 = vmatmul.mubr.f32.gmra.mrb[0].mxu0 %v5388
  %v5458 = vpop.f32.mrb[0].mxu0
  %v5459 = vadd.f32 0.0, %v5458
  %v5460 = vpop.f32.mrb[0].mxu0
  %5461 = vdwg.mxu0
  %5462 = vrot.lane.b32.xlu0 %v3958, 120
  %v5463 = vpop.permute.xlu0 %5462
  %5464 = vrot.lane.b32.xlu0 %v3958, 104
  %v5465 = vpop.permute.xlu0 %5464
  %v5466 = vsel %vm79, %v5463, 0
  %v5468 = vsel %vm79, %v5465, 0
  %5470 = vmatprep.subr.mxu0 0.0
  %5471 = vmatpush1.xpose.msra.mxu0 %v5468
  %5472 = vmatprep.subr.mxu0 0.0
  %5473 = vmatpush1.xpose.msra.mxu0 0.0
  %5474 = vmatprep.subr.mxu0 0.0
  %5475 = vmatpush1.xpose.msra.mxu0 0.0
  %5476 = vmatprep.subr.mxu0 0.0
  %5477 = vmatpush1.xpose.msra.mxu0 0.0
  %5478 = vmatprep.subr.mxu0 0.0
  %5479 = vmatpush1.xpose.msra.mxu0 0.0
  %5480 = vmatprep.subr.mxu0 0.0
  %5481 = vmatpush1.xpose.msra.mxu0 0.0
  %5482 = vmatprep.subr.mxu0 0.0
  %5483 = vmatpush1.xpose.msra.mxu0 0.0
  %5484 = vmatprep.subr.mxu0 0.0
  %5485 = vmatpush1.xpose.msra.mxu0 0.0
  %5486 = vmatprep.subr.mxu0 0.0
  %5487 = vmatpush1.xpose.msra.mxu0 0.0
  %5488 = vmatprep.subr.mxu0 0.0
  %5489 = vmatpush1.xpose.msra.mxu0 0.0
  %5490 = vmatprep.subr.mxu0 0.0
  %5491 = vmatpush1.xpose.msra.mxu0 0.0
  %5492 = vmatprep.subr.mxu0 0.0
  %5493 = vmatpush1.xpose.msra.mxu0 0.0
  %5494 = vmatprep.subr.mxu0 0.0
  %5495 = vmatpush1.xpose.msra.mxu0 0.0
  %5496 = vmatprep.subr.mxu0 0.0
  %5497 = vmatpush1.xpose.msra.mxu0 0.0
  %5498 = vmatprep.subr.mxu0 0.0
  %5499 = vmatpush1.xpose.msra.mxu0 0.0
  %5500 = vmatprep.subr.mxu0 0.0
  %5501 = vmatpush1.xpose.msra.mxu0 0.0
  %5502 = vmatprep.subr.mxu0 0.0
  %5503 = vmatpush1.xpose.msra.mxu0 0.0
  %5504 = vmatprep.subr.mxu0 0.0
  %5505 = vmatpush1.xpose.msra.mxu0 0.0
  %5506 = vmatprep.subr.mxu0 0.0
  %5507 = vmatpush1.xpose.msra.mxu0 0.0
  %5508 = vmatprep.subr.mxu0 0.0
  %5509 = vmatpush1.xpose.msra.mxu0 0.0
  %5510 = vmatprep.subr.mxu0 0.0
  %5511 = vmatpush1.xpose.msra.mxu0 0.0
  %5512 = vmatprep.subr.mxu0 0.0
  %5513 = vmatpush1.xpose.msra.mxu0 0.0
  %5514 = vmatprep.subr.mxu0 0.0
  %5515 = vmatpush1.xpose.msra.mxu0 0.0
  %5516 = vmatprep.subr.mxu0 0.0
  %5517 = vmatpush1.xpose.msra.mxu0 0.0
  %5518 = vmatprep.subr.mxu0 0.0
  %5519 = vmatpush1.xpose.msra.mxu0 0.0
  %5520 = vmatprep.subr.mxu0 0.0
  %5521 = vmatpush1.xpose.msra.mxu0 0.0
  %5522 = vmatprep.subr.mxu0 0.0
  %5523 = vmatpush1.xpose.msra.mxu0 0.0
  %5524 = vmatprep.subr.mxu0 0.0
  %5525 = vmatpush1.xpose.msra.mxu0 0.0
  %5526 = vmatprep.subr.mxu0 0.0
  %5527 = vmatpush1.xpose.msra.mxu0 0.0
  %5528 = vmatprep.subr.mxu0 0.0
  %5529 = vmatpush1.xpose.msra.mxu0 0.0
  %5530 = vmatprep.subr.mxu0 0.0
  %5531 = vmatpush1.xpose.msra.mxu0 0.0
  %5532 = vmatprep.subr.mxu0 0.0
  %5533 = vmatpush1.xpose.msra.mxu0 0.0
  %5534 = vmatprep.mubr.f32.mxu0 0.0
  %5535 = vmatmul.mubr.f32.gmra.mrb[0].mxu0 %v5466
  %v5536 = vpop.f32.mrb[0].mxu0
  %v5537 = vadd.f32 0.0, %v5536
  %v5538 = vpop.f32.mrb[0].mxu0
  %5539 = vdwg.mxu0
  %5540 = vrot.lane.b32.xlu0 %v3963, 120
  %v5541 = vpop.permute.xlu0 %5540
  %5542 = vrot.lane.b32.xlu0 %v3963, 104
  %v5543 = vpop.permute.xlu0 %5542
  %v5544 = vsel %vm79, %v5541, 0
  %v5546 = vsel %vm79, %v5543, 0
  %5548 = vmatprep.subr.mxu0 0.0
  %5549 = vmatpush1.xpose.msra.mxu0 %v5546
  %5550 = vmatprep.subr.mxu0 0.0
  %5551 = vmatpush1.xpose.msra.mxu0 0.0
  %5552 = vmatprep.subr.mxu0 0.0
  %5553 = vmatpush1.xpose.msra.mxu0 0.0
  %5554 = vmatprep.subr.mxu0 0.0
  %5555 = vmatpush1.xpose.msra.mxu0 0.0
  %5556 = vmatprep.subr.mxu0 0.0
  %5557 = vmatpush1.xpose.msra.mxu0 0.0
  %5558 = vmatprep.subr.mxu0 0.0
  %5559 = vmatpush1.xpose.msra.mxu0 0.0
  %5560 = vmatprep.subr.mxu0 0.0
  %5561 = vmatpush1.xpose.msra.mxu0 0.0
  %5562 = vmatprep.subr.mxu0 0.0
  %5563 = vmatpush1.xpose.msra.mxu0 0.0
  %5564 = vmatprep.subr.mxu0 0.0
  %5565 = vmatpush1.xpose.msra.mxu0 0.0
  %5566 = vmatprep.subr.mxu0 0.0
  %5567 = vmatpush1.xpose.msra.mxu0 0.0
  %5568 = vmatprep.subr.mxu0 0.0
  %5569 = vmatpush1.xpose.msra.mxu0 0.0
  %5570 = vmatprep.subr.mxu0 0.0
  %5571 = vmatpush1.xpose.msra.mxu0 0.0
  %5572 = vmatprep.subr.mxu0 0.0
  %5573 = vmatpush1.xpose.msra.mxu0 0.0
  %5574 = vmatprep.subr.mxu0 0.0
  %5575 = vmatpush1.xpose.msra.mxu0 0.0
  %5576 = vmatprep.subr.mxu0 0.0
  %5577 = vmatpush1.xpose.msra.mxu0 0.0
  %5578 = vmatprep.subr.mxu0 0.0
  %5579 = vmatpush1.xpose.msra.mxu0 0.0
  %5580 = vmatprep.subr.mxu0 0.0
  %5581 = vmatpush1.xpose.msra.mxu0 0.0
  %5582 = vmatprep.subr.mxu0 0.0
  %5583 = vmatpush1.xpose.msra.mxu0 0.0
  %5584 = vmatprep.subr.mxu0 0.0
  %5585 = vmatpush1.xpose.msra.mxu0 0.0
  %5586 = vmatprep.subr.mxu0 0.0
  %5587 = vmatpush1.xpose.msra.mxu0 0.0
  %5588 = vmatprep.subr.mxu0 0.0
  %5589 = vmatpush1.xpose.msra.mxu0 0.0
  %5590 = vmatprep.subr.mxu0 0.0
  %5591 = vmatpush1.xpose.msra.mxu0 0.0
  %5592 = vmatprep.subr.mxu0 0.0
  %5593 = vmatpush1.xpose.msra.mxu0 0.0
  %5594 = vmatprep.subr.mxu0 0.0
  %5595 = vmatpush1.xpose.msra.mxu0 0.0
  %5596 = vmatprep.subr.mxu0 0.0
  %5597 = vmatpush1.xpose.msra.mxu0 0.0
  %5598 = vmatprep.subr.mxu0 0.0
  %5599 = vmatpush1.xpose.msra.mxu0 0.0
  %5600 = vmatprep.subr.mxu0 0.0
  %5601 = vmatpush1.xpose.msra.mxu0 0.0
  %5602 = vmatprep.subr.mxu0 0.0
  %5603 = vmatpush1.xpose.msra.mxu0 0.0
  %5604 = vmatprep.subr.mxu0 0.0
  %5605 = vmatpush1.xpose.msra.mxu0 0.0
  %5606 = vmatprep.subr.mxu0 0.0
  %5607 = vmatpush1.xpose.msra.mxu0 0.0
  %5608 = vmatprep.subr.mxu0 0.0
  %5609 = vmatpush1.xpose.msra.mxu0 0.0
  %5610 = vmatprep.subr.mxu0 0.0
  %5611 = vmatpush1.xpose.msra.mxu0 0.0
  %5612 = vmatprep.mubr.f32.mxu0 0.0
  %5613 = vmatmul.mubr.f32.gmra.mrb[0].mxu0 %v5544
  %v5614 = vpop.f32.mrb[0].mxu0
  %v5615 = vadd.f32 0.0, %v5614
  %v5616 = vpop.f32.mrb[0].mxu0
  %5617 = vdwg.mxu0
  %5618 = vrot.lane.b32.xlu0 %v3968, 120
  %v5619 = vpop.permute.xlu0 %5618
  %5620 = vrot.lane.b32.xlu0 %v3968, 104
  %v5621 = vpop.permute.xlu0 %5620
  %v5622 = vsel %vm79, %v5619, 0
  %v5624 = vsel %vm79, %v5621, 0
  %5626 = vmatprep.subr.mxu0 0.0
  %5627 = vmatpush1.xpose.msra.mxu0 %v5624
  %5628 = vmatprep.subr.mxu0 0.0
  %5629 = vmatpush1.xpose.msra.mxu0 0.0
  %5630 = vmatprep.subr.mxu0 0.0
  %5631 = vmatpush1.xpose.msra.mxu0 0.0
  %5632 = vmatprep.subr.mxu0 0.0
  %5633 = vmatpush1.xpose.msra.mxu0 0.0
  %5634 = vmatprep.subr.mxu0 0.0
  %5635 = vmatpush1.xpose.msra.mxu0 0.0
  %5636 = vmatprep.subr.mxu0 0.0
  %5637 = vmatpush1.xpose.msra.mxu0 0.0
  %5638 = vmatprep.subr.mxu0 0.0
  %5639 = vmatpush1.xpose.msra.mxu0 0.0
  %5640 = vmatprep.subr.mxu0 0.0
  %5641 = vmatpush1.xpose.msra.mxu0 0.0
  %5642 = vmatprep.subr.mxu0 0.0
  %5643 = vmatpush1.xpose.msra.mxu0 0.0
  %5644 = vmatprep.subr.mxu0 0.0
  %5645 = vmatpush1.xpose.msra.mxu0 0.0
  %5646 = vmatprep.subr.mxu0 0.0
  %5647 = vmatpush1.xpose.msra.mxu0 0.0
  %5648 = vmatprep.subr.mxu0 0.0
  %5649 = vmatpush1.xpose.msra.mxu0 0.0
  %5650 = vmatprep.subr.mxu0 0.0
  %5651 = vmatpush1.xpose.msra.mxu0 0.0
  %5652 = vmatprep.subr.mxu0 0.0
  %5653 = vmatpush1.xpose.msra.mxu0 0.0
  %5654 = vmatprep.subr.mxu0 0.0
  %5655 = vmatpush1.xpose.msra.mxu0 0.0
  %5656 = vmatprep.subr.mxu0 0.0
  %5657 = vmatpush1.xpose.msra.mxu0 0.0
  %5658 = vmatprep.subr.mxu0 0.0
  %5659 = vmatpush1.xpose.msra.mxu0 0.0
  %5660 = vmatprep.subr.mxu0 0.0
  %5661 = vmatpush1.xpose.msra.mxu0 0.0
  %5662 = vmatprep.subr.mxu0 0.0
  %5663 = vmatpush1.xpose.msra.mxu0 0.0
  %5664 = vmatprep.subr.mxu0 0.0
  %5665 = vmatpush1.xpose.msra.mxu0 0.0
  %5666 = vmatprep.subr.mxu0 0.0
  %5667 = vmatpush1.xpose.msra.mxu0 0.0
  %5668 = vmatprep.subr.mxu0 0.0
  %5669 = vmatpush1.xpose.msra.mxu0 0.0
  %5670 = vmatprep.subr.mxu0 0.0
  %5671 = vmatpush1.xpose.msra.mxu0 0.0
  %5672 = vmatprep.subr.mxu0 0.0
  %5673 = vmatpush1.xpose.msra.mxu0 0.0
  %5674 = vmatprep.subr.mxu0 0.0
  %5675 = vmatpush1.xpose.msra.mxu0 0.0
  %5676 = vmatprep.subr.mxu0 0.0
  %5677 = vmatpush1.xpose.msra.mxu0 0.0
  %5678 = vmatprep.subr.mxu0 0.0
  %5679 = vmatpush1.xpose.msra.mxu0 0.0
  %5680 = vmatprep.subr.mxu0 0.0
  %5681 = vmatpush1.xpose.msra.mxu0 0.0
  %5682 = vmatprep.subr.mxu0 0.0
  %5683 = vmatpush1.xpose.msra.mxu0 0.0
  %5684 = vmatprep.subr.mxu0 0.0
  %5685 = vmatpush1.xpose.msra.mxu0 0.0
  %5686 = vmatprep.subr.mxu0 0.0
  %5687 = vmatpush1.xpose.msra.mxu0 0.0
  %5688 = vmatprep.subr.mxu0 0.0
  %5689 = vmatpush1.xpose.msra.mxu0 0.0
  %5690 = vmatprep.mubr.f32.mxu0 0.0
  %5691 = vmatmul.mubr.f32.gmra.mrb[0].mxu0 %v5622
  %v5692 = vpop.f32.mrb[0].mxu0
  %v5693 = vadd.f32 0.0, %v5692
  %v5694 = vpop.f32.mrb[0].mxu0
  %5695 = vdwg.mxu0
  %5696 = vrot.lane.b32.xlu0 %v3973, 120
  %v5697 = vpop.permute.xlu0 %5696
  %5698 = vrot.lane.b32.xlu0 %v3973, 104
  %v5699 = vpop.permute.xlu0 %5698
  %v5700 = vsel %vm79, %v5697, 0
  %v5702 = vsel %vm79, %v5699, 0
  %5704 = vmatprep.subr.mxu0 0.0
  %5705 = vmatpush1.xpose.msra.mxu0 %v5702
  %5706 = vmatprep.subr.mxu0 0.0
  %5707 = vmatpush1.xpose.msra.mxu0 0.0
  %5708 = vmatprep.subr.mxu0 0.0
  %5709 = vmatpush1.xpose.msra.mxu0 0.0
  %5710 = vmatprep.subr.mxu0 0.0
  %5711 = vmatpush1.xpose.msra.mxu0 0.0
  %5712 = vmatprep.subr.mxu0 0.0
  %5713 = vmatpush1.xpose.msra.mxu0 0.0
  %5714 = vmatprep.subr.mxu0 0.0
  %5715 = vmatpush1.xpose.msra.mxu0 0.0
  %5716 = vmatprep.subr.mxu0 0.0
  %5717 = vmatpush1.xpose.msra.mxu0 0.0
  %5718 = vmatprep.subr.mxu0 0.0
  %5719 = vmatpush1.xpose.msra.mxu0 0.0
  %5720 = vmatprep.subr.mxu0 0.0
  %5721 = vmatpush1.xpose.msra.mxu0 0.0
  %5722 = vmatprep.subr.mxu0 0.0
  %5723 = vmatpush1.xpose.msra.mxu0 0.0
  %5724 = vmatprep.subr.mxu0 0.0
  %5725 = vmatpush1.xpose.msra.mxu0 0.0
  %5726 = vmatprep.subr.mxu0 0.0
  %5727 = vmatpush1.xpose.msra.mxu0 0.0
  %5728 = vmatprep.subr.mxu0 0.0
  %5729 = vmatpush1.xpose.msra.mxu0 0.0
  %5730 = vmatprep.subr.mxu0 0.0
  %5731 = vmatpush1.xpose.msra.mxu0 0.0
  %5732 = vmatprep.subr.mxu0 0.0
  %5733 = vmatpush1.xpose.msra.mxu0 0.0
  %5734 = vmatprep.subr.mxu0 0.0
  %5735 = vmatpush1.xpose.msra.mxu0 0.0
  %5736 = vmatprep.subr.mxu0 0.0
  %5737 = vmatpush1.xpose.msra.mxu0 0.0
  %5738 = vmatprep.subr.mxu0 0.0
  %5739 = vmatpush1.xpose.msra.mxu0 0.0
  %5740 = vmatprep.subr.mxu0 0.0
  %5741 = vmatpush1.xpose.msra.mxu0 0.0
  %5742 = vmatprep.subr.mxu0 0.0
  %5743 = vmatpush1.xpose.msra.mxu0 0.0
  %5744 = vmatprep.subr.mxu0 0.0
  %5745 = vmatpush1.xpose.msra.mxu0 0.0
  %5746 = vmatprep.subr.mxu0 0.0
  %5747 = vmatpush1.xpose.msra.mxu0 0.0
  %5748 = vmatprep.subr.mxu0 0.0
  %5749 = vmatpush1.xpose.msra.mxu0 0.0
  %5750 = vmatprep.subr.mxu0 0.0
  %5751 = vmatpush1.xpose.msra.mxu0 0.0
  %5752 = vmatprep.subr.mxu0 0.0
  %5753 = vmatpush1.xpose.msra.mxu0 0.0
  %5754 = vmatprep.subr.mxu0 0.0
  %5755 = vmatpush1.xpose.msra.mxu0 0.0
  %5756 = vmatprep.subr.mxu0 0.0
  %5757 = vmatpush1.xpose.msra.mxu0 0.0
  %5758 = vmatprep.subr.mxu0 0.0
  %5759 = vmatpush1.xpose.msra.mxu0 0.0
  %5760 = vmatprep.subr.mxu0 0.0
  %5761 = vmatpush1.xpose.msra.mxu0 0.0
  %5762 = vmatprep.subr.mxu0 0.0
  %5763 = vmatpush1.xpose.msra.mxu0 0.0
  %5764 = vmatprep.subr.mxu0 0.0
  %5765 = vmatpush1.xpose.msra.mxu0 0.0
  %5766 = vmatprep.subr.mxu0 0.0
  %5767 = vmatpush1.xpose.msra.mxu0 0.0
  %5768 = vmatprep.mubr.f32.mxu0 0.0
  %5769 = vmatmul.mubr.f32.gmra.mrb[0].mxu0 %v5700
  %v5770 = vpop.f32.mrb[0].mxu0
  %v5771 = vadd.f32 0.0, %v5770
  %v5772 = vpop.f32.mrb[0].mxu0
  %5773 = vdwg.mxu0
  %5774 = vrot.lane.b32.xlu0 %v3978, 120
  %v5775 = vpop.permute.xlu0 %5774
  %5776 = vrot.lane.b32.xlu0 %v3978, 104
  %v5777 = vpop.permute.xlu0 %5776
  %v5778 = vsel %vm79, %v5775, 0
  %v5780 = vsel %vm79, %v5777, 0
  %5782 = vmatprep.subr.mxu0 0.0
  %5783 = vmatpush1.xpose.msra.mxu0 %v5780
  %5784 = vmatprep.subr.mxu0 0.0
  %5785 = vmatpush1.xpose.msra.mxu0 0.0
  %5786 = vmatprep.subr.mxu0 0.0
  %5787 = vmatpush1.xpose.msra.mxu0 0.0
  %5788 = vmatprep.subr.mxu0 0.0
  %5789 = vmatpush1.xpose.msra.mxu0 0.0
  %5790 = vmatprep.subr.mxu0 0.0
  %5791 = vmatpush1.xpose.msra.mxu0 0.0
  %5792 = vmatprep.subr.mxu0 0.0
  %5793 = vmatpush1.xpose.msra.mxu0 0.0
  %5794 = vmatprep.subr.mxu0 0.0
  %5795 = vmatpush1.xpose.msra.mxu0 0.0
  %5796 = vmatprep.subr.mxu0 0.0
  %5797 = vmatpush1.xpose.msra.mxu0 0.0
  %5798 = vmatprep.subr.mxu0 0.0
  %5799 = vmatpush1.xpose.msra.mxu0 0.0
  %5800 = vmatprep.subr.mxu0 0.0
  %5801 = vmatpush1.xpose.msra.mxu0 0.0
  %5802 = vmatprep.subr.mxu0 0.0
  %5803 = vmatpush1.xpose.msra.mxu0 0.0
  %5804 = vmatprep.subr.mxu0 0.0
  %5805 = vmatpush1.xpose.msra.mxu0 0.0
  %5806 = vmatprep.subr.mxu0 0.0
  %5807 = vmatpush1.xpose.msra.mxu0 0.0
  %5808 = vmatprep.subr.mxu0 0.0
  %5809 = vmatpush1.xpose.msra.mxu0 0.0
  %5810 = vmatprep.subr.mxu0 0.0
  %5811 = vmatpush1.xpose.msra.mxu0 0.0
  %5812 = vmatprep.subr.mxu0 0.0
  %5813 = vmatpush1.xpose.msra.mxu0 0.0
  %5814 = vmatprep.subr.mxu0 0.0
  %5815 = vmatpush1.xpose.msra.mxu0 0.0
  %5816 = vmatprep.subr.mxu0 0.0
  %5817 = vmatpush1.xpose.msra.mxu0 0.0
  %5818 = vmatprep.subr.mxu0 0.0
  %5819 = vmatpush1.xpose.msra.mxu0 0.0
  %5820 = vmatprep.subr.mxu0 0.0
  %5821 = vmatpush1.xpose.msra.mxu0 0.0
  %5822 = vmatprep.subr.mxu0 0.0
  %5823 = vmatpush1.xpose.msra.mxu0 0.0
  %5824 = vmatprep.subr.mxu0 0.0
  %5825 = vmatpush1.xpose.msra.mxu0 0.0
  %5826 = vmatprep.subr.mxu0 0.0
  %5827 = vmatpush1.xpose.msra.mxu0 0.0
  %5828 = vmatprep.subr.mxu0 0.0
  %5829 = vmatpush1.xpose.msra.mxu0 0.0
  %5830 = vmatprep.subr.mxu0 0.0
  %5831 = vmatpush1.xpose.msra.mxu0 0.0
  %5832 = vmatprep.subr.mxu0 0.0
  %5833 = vmatpush1.xpose.msra.mxu0 0.0
  %5834 = vmatprep.subr.mxu0 0.0
  %5835 = vmatpush1.xpose.msra.mxu0 0.0
  %5836 = vmatprep.subr.mxu0 0.0
  %5837 = vmatpush1.xpose.msra.mxu0 0.0
  %5838 = vmatprep.subr.mxu0 0.0
  %5839 = vmatpush1.xpose.msra.mxu0 0.0
  %5840 = vmatprep.subr.mxu0 0.0
  %5841 = vmatpush1.xpose.msra.mxu0 0.0
  %5842 = vmatprep.subr.mxu0 0.0
  %5843 = vmatpush1.xpose.msra.mxu0 0.0
  %5844 = vmatprep.subr.mxu0 0.0
  %5845 = vmatpush1.xpose.msra.mxu0 0.0
  %5846 = vmatprep.mubr.f32.mxu0 0.0
  %5847 = vmatmul.mubr.f32.gmra.mrb[0].mxu0 %v5778
  %v5848 = vpop.f32.mrb[0].mxu0
  %v5849 = vadd.f32 0.0, %v5848
  %v5850 = vpop.f32.mrb[0].mxu0
  %5851 = vdwg.mxu0
  %5852 = vrot.lane.b32.xlu0 %v3983, 120
  %v5853 = vpop.permute.xlu0 %5852
  %5854 = vrot.lane.b32.xlu0 %v3983, 104
  %v5855 = vpop.permute.xlu0 %5854
  %v5856 = vsel %vm79, %v5853, 0
  %v5858 = vsel %vm79, %v5855, 0
  %5860 = vmatprep.subr.mxu0 0.0
  %5861 = vmatpush1.xpose.msra.mxu0 %v5858
  %5862 = vmatprep.subr.mxu0 0.0
  %5863 = vmatpush1.xpose.msra.mxu0 0.0
  %5864 = vmatprep.subr.mxu0 0.0
  %5865 = vmatpush1.xpose.msra.mxu0 0.0
  %5866 = vmatprep.subr.mxu0 0.0
  %5867 = vmatpush1.xpose.msra.mxu0 0.0
  %5868 = vmatprep.subr.mxu0 0.0
  %5869 = vmatpush1.xpose.msra.mxu0 0.0
  %5870 = vmatprep.subr.mxu0 0.0
  %5871 = vmatpush1.xpose.msra.mxu0 0.0
  %5872 = vmatprep.subr.mxu0 0.0
  %5873 = vmatpush1.xpose.msra.mxu0 0.0
  %5874 = vmatprep.subr.mxu0 0.0
  %5875 = vmatpush1.xpose.msra.mxu0 0.0
  %5876 = vmatprep.subr.mxu0 0.0
  %5877 = vmatpush1.xpose.msra.mxu0 0.0
  %5878 = vmatprep.subr.mxu0 0.0
  %5879 = vmatpush1.xpose.msra.mxu0 0.0
  %5880 = vmatprep.subr.mxu0 0.0
  %5881 = vmatpush1.xpose.msra.mxu0 0.0
  %5882 = vmatprep.subr.mxu0 0.0
  %5883 = vmatpush1.xpose.msra.mxu0 0.0
  %5884 = vmatprep.subr.mxu0 0.0
  %5885 = vmatpush1.xpose.msra.mxu0 0.0
  %5886 = vmatprep.subr.mxu0 0.0
  %5887 = vmatpush1.xpose.msra.mxu0 0.0
  %5888 = vmatprep.subr.mxu0 0.0
  %5889 = vmatpush1.xpose.msra.mxu0 0.0
  %5890 = vmatprep.subr.mxu0 0.0
  %5891 = vmatpush1.xpose.msra.mxu0 0.0
  %5892 = vmatprep.subr.mxu0 0.0
  %5893 = vmatpush1.xpose.msra.mxu0 0.0
  %5894 = vmatprep.subr.mxu0 0.0
  %5895 = vmatpush1.xpose.msra.mxu0 0.0
  %5896 = vmatprep.subr.mxu0 0.0
  %5897 = vmatpush1.xpose.msra.mxu0 0.0
  %5898 = vmatprep.subr.mxu0 0.0
  %5899 = vmatpush1.xpose.msra.mxu0 0.0
  %5900 = vmatprep.subr.mxu0 0.0
  %5901 = vmatpush1.xpose.msra.mxu0 0.0
  %5902 = vmatprep.subr.mxu0 0.0
  %5903 = vmatpush1.xpose.msra.mxu0 0.0
  %5904 = vmatprep.subr.mxu0 0.0
  %5905 = vmatpush1.xpose.msra.mxu0 0.0
  %5906 = vmatprep.subr.mxu0 0.0
  %5907 = vmatpush1.xpose.msra.mxu0 0.0
  %5908 = vmatprep.subr.mxu0 0.0
  %5909 = vmatpush1.xpose.msra.mxu0 0.0
  %5910 = vmatprep.subr.mxu0 0.0
  %5911 = vmatpush1.xpose.msra.mxu0 0.0
  %5912 = vmatprep.subr.mxu0 0.0
  %5913 = vmatpush1.xpose.msra.mxu0 0.0
  %5914 = vmatprep.subr.mxu0 0.0
  %5915 = vmatpush1.xpose.msra.mxu0 0.0
  %5916 = vmatprep.subr.mxu0 0.0
  %5917 = vmatpush1.xpose.msra.mxu0 0.0
  %5918 = vmatprep.subr.mxu0 0.0
  %5919 = vmatpush1.xpose.msra.mxu0 0.0
  %5920 = vmatprep.subr.mxu0 0.0
  %5921 = vmatpush1.xpose.msra.mxu0 0.0
  %5922 = vmatprep.subr.mxu0 0.0
  %5923 = vmatpush1.xpose.msra.mxu0 0.0
  %5924 = vmatprep.mubr.f32.mxu0 0.0
  %5925 = vmatmul.mubr.f32.gmra.mrb[0].mxu0 %v5856
  %v5926 = vpop.f32.mrb[0].mxu0
  %v5927 = vadd.f32 0.0, %v5926
  %v5928 = vpop.f32.mrb[0].mxu0
  %5929 = vdwg.mxu0
  %v5930 = vmul.f32 %v5381, 0.35355338
  %v5931 = vmul.f32 %v5459, 0.35355338
  %v5932 = vmul.f32 %v5537, 0.35355338
  %v5933 = vmul.f32 %v5615, 0.35355338
  %v5934 = vmul.f32 %v5693, 0.35355338
  %v5935 = vmul.f32 %v5771, 0.35355338
  %v5936 = vmul.f32 %v5849, 0.35355338
  %v5937 = vmul.f32 %v5927, 0.35355338
  %v5938 = vsel %vm79, %v5930, -inf
  %5939 = vmax.xlane.f32.xlu0 %v5938
  %v5940 = vpop.xlane.xlu0 %5939
  %v5941 = vsel %vm79, %v5931, -inf
  %5942 = vmax.xlane.f32.xlu0 %v5941
  %v5943 = vpop.xlane.xlu0 %5942
  %v5944 = vsel %vm79, %v5932, -inf
  %5945 = vmax.xlane.f32.xlu0 %v5944
  %v5946 = vpop.xlane.xlu0 %5945
  %v5947 = vsel %vm79, %v5933, -inf
  %5948 = vmax.xlane.f32.xlu0 %v5947
  %v5949 = vpop.xlane.xlu0 %5948
  %v5950 = vsel %vm79, %v5934, -inf
  %5951 = vmax.xlane.f32.xlu0 %v5950
  %v5952 = vpop.xlane.xlu0 %5951
  %v5953 = vsel %vm79, %v5935, -inf
  %5954 = vmax.xlane.f32.xlu0 %v5953
  %v5955 = vpop.xlane.xlu0 %5954
  %v5956 = vsel %vm79, %v5936, -inf
  %5957 = vmax.xlane.f32.xlu0 %v5956
  %v5958 = vpop.xlane.xlu0 %5957
  %v5959 = vsel %vm79, %v5937, -inf
  %5960 = vmax.xlane.f32.xlu0 %v5959
  %v5961 = vpop.xlane.xlu0 %5960
  %v5962 = vsub.f32 %v5930, %v5940
  %v5963 = vsub.f32 %v5931, %v5943
  %v5964 = vsub.f32 %v5932, %v5946
  %v5965 = vsub.f32 %v5933, %v5949
  %v5966 = vsub.f32 %v5934, %v5952
  %v5967 = vsub.f32 %v5935, %v5955
  %v5968 = vsub.f32 %v5936, %v5958
  %v5969 = vsub.f32 %v5937, %v5961
  %v5970 = vmul.f32 %v5962, 1.442695
  %v5971 = vpow.pop %v5970
  %v5972 = vmul.f32 %v5963, 1.442695
  %v5973 = vpow.pop %v5972
  %v5974 = vmul.f32 %v5964, 1.442695
  %v5975 = vpow.pop %v5974
  %v5976 = vmul.f32 %v5965, 1.442695
  %v5977 = vpow.pop %v5976
  %v5978 = vmul.f32 %v5966, 1.442695
  %v5979 = vpow.pop %v5978
  %v5980 = vmul.f32 %v5967, 1.442695
  %v5981 = vpow.pop %v5980
  %v5982 = vmul.f32 %v5968, 1.442695
  %v5983 = vpow.pop %v5982
  %v5984 = vmul.f32 %v5969, 1.442695
  %v5985 = vpow.pop %v5984
  %v5986 = vsel %vm79, %v5971, 0.0
  %5987 = vadd.xlane.f32.xlu0 %v5986
  %v5988 = vpop.xlane.xlu0 %5987
  %v5989 = vsel %vm79, %v5973, 0.0
  %5990 = vadd.xlane.f32.xlu0 %v5989
  %v5991 = vpop.xlane.xlu0 %5990
  %v5992 = vsel %vm79, %v5975, 0.0
  %5993 = vadd.xlane.f32.xlu0 %v5992
  %v5994 = vpop.xlane.xlu0 %5993
  %v5995 = vsel %vm79, %v5977, 0.0
  %5996 = vadd.xlane.f32.xlu0 %v5995
  %v5997 = vpop.xlane.xlu0 %5996
  %v5998 = vsel %vm79, %v5979, 0.0
  %5999 = vadd.xlane.f32.xlu0 %v5998
  %v6000 = vpop.xlane.xlu0 %5999
  %v6001 = vsel %vm79, %v5981, 0.0
  %6002 = vadd.xlane.f32.xlu0 %v6001
  %v6003 = vpop.xlane.xlu0 %6002
  %v6004 = vsel %vm79, %v5983, 0.0
  %6005 = vadd.xlane.f32.xlu0 %v6004
  %v6006 = vpop.xlane.xlu0 %6005
  %v6007 = vsel %vm79, %v5985, 0.0
  %6008 = vadd.xlane.f32.xlu0 %v6007
  %v6009 = vpop.xlane.xlu0 %6008
  %v6010 = vrcp.pop %v5988
  %v6011 = vmul.f32 %v5971, %v6010
  %v6012 = vrcp.pop %v5991
  %v6013 = vmul.f32 %v5973, %v6012
  %v6014 = vrcp.pop %v5994
  %v6015 = vmul.f32 %v5975, %v6014
  %v6016 = vrcp.pop %v5997
  %v6017 = vmul.f32 %v5977, %v6016
  %v6018 = vrcp.pop %v6000
  %v6019 = vmul.f32 %v5979, %v6018
  %v6020 = vrcp.pop %v6003
  %v6021 = vmul.f32 %v5981, %v6020
  %v6022 = vrcp.pop %v6006
  %v6023 = vmul.f32 %v5983, %v6022
  %v6024 = vrcp.pop %v6009
  %v6025 = vmul.f32 %v5985, %v6024
  %6026 = vrot.lane.b32.xlu0 %v3948, 88
  %v6027 = vpop.permute.xlu0 %6026
  %v6030 = vsel %vm79, %v6011, 0
  %6032 = vmatprep.subr.mxu0 0.0
  %6033 = vmatpush1.msra.mxu0 %v6027
  %6034 = vmatprep.subr.mxu0 0.0
  %6035 = vmatpush1.msra.mxu0 0.0
  %6036 = vmatprep.subr.mxu0 0.0
  %6037 = vmatpush1.msra.mxu0 0.0
  %6038 = vmatprep.subr.mxu0 0.0
  %6039 = vmatpush1.msra.mxu0 0.0
  %6040 = vmatprep.subr.mxu0 0.0
  %6041 = vmatpush1.msra.mxu0 0.0
  %6042 = vmatprep.subr.mxu0 0.0
  %6043 = vmatpush1.msra.mxu0 0.0
  %6044 = vmatprep.subr.mxu0 0.0
  %6045 = vmatpush1.msra.mxu0 0.0
  %6046 = vmatprep.subr.mxu0 0.0
  %6047 = vmatpush1.msra.mxu0 0.0
  %6048 = vmatprep.subr.mxu0 0.0
  %6049 = vmatpush1.msra.mxu0 0.0
  %6050 = vmatprep.subr.mxu0 0.0
  %6051 = vmatpush1.msra.mxu0 0.0
  %6052 = vmatprep.subr.mxu0 0.0
  %6053 = vmatpush1.msra.mxu0 0.0
  %6054 = vmatprep.subr.mxu0 0.0
  %6055 = vmatpush1.msra.mxu0 0.0
  %6056 = vmatprep.subr.mxu0 0.0
  %6057 = vmatpush1.msra.mxu0 0.0
  %6058 = vmatprep.subr.mxu0 0.0
  %6059 = vmatpush1.msra.mxu0 0.0
  %6060 = vmatprep.subr.mxu0 0.0
  %6061 = vmatpush1.msra.mxu0 0.0
  %6062 = vmatprep.subr.mxu0 0.0
  %6063 = vmatpush1.msra.mxu0 0.0
  %6064 = vmatprep.subr.mxu0 0.0
  %6065 = vmatpush1.msra.mxu0 0.0
  %6066 = vmatprep.subr.mxu0 0.0
  %6067 = vmatpush1.msra.mxu0 0.0
  %6068 = vmatprep.subr.mxu0 0.0
  %6069 = vmatpush1.msra.mxu0 0.0
  %6070 = vmatprep.subr.mxu0 0.0
  %6071 = vmatpush1.msra.mxu0 0.0
  %6072 = vmatprep.subr.mxu0 0.0
  %6073 = vmatpush1.msra.mxu0 0.0
  %6074 = vmatprep.subr.mxu0 0.0
  %6075 = vmatpush1.msra.mxu0 0.0
  %6076 = vmatprep.subr.mxu0 0.0
  %6077 = vmatpush1.msra.mxu0 0.0
  %6078 = vmatprep.subr.mxu0 0.0
  %6079 = vmatpush1.msra.mxu0 0.0
  %6080 = vmatprep.subr.mxu0 0.0
  %6081 = vmatpush1.msra.mxu0 0.0
  %6082 = vmatprep.subr.mxu0 0.0
  %6083 = vmatpush1.msra.mxu0 0.0
  %6084 = vmatprep.subr.mxu0 0.0
  %6085 = vmatpush1.msra.mxu0 0.0
  %6086 = vmatprep.subr.mxu0 0.0
  %6087 = vmatpush1.msra.mxu0 0.0
  %6088 = vmatprep.subr.mxu0 0.0
  %6089 = vmatpush1.msra.mxu0 0.0
  %6090 = vmatprep.subr.mxu0 0.0
  %6091 = vmatpush1.msra.mxu0 0.0
  %6092 = vmatprep.subr.mxu0 0.0
  %6093 = vmatpush1.msra.mxu0 0.0
  %6094 = vmatprep.subr.mxu0 0.0
  %6095 = vmatpush1.msra.mxu0 0.0
  %6096 = vmatprep.mubr.f32.mxu0 0.0
  %6097 = vmatmul.mubr.f32.gmra.mrb[0].mxu0 %v6030
  %v6098 = vpop.f32.mrb[0].mxu0
  %v6099 = vadd.f32 0.0, %v6098
  %v6100 = vpop.f32.mrb[0].mxu0
  %6101 = vdwg.mxu0
  %6102 = vrot.lane.b32.xlu0 %v3953, 88
  %v6103 = vpop.permute.xlu0 %6102
  %v6106 = vsel %vm79, %v6013, 0
  %6108 = vmatprep.subr.mxu0 0.0
  %6109 = vmatpush1.msra.mxu0 %v6103
  %6110 = vmatprep.subr.mxu0 0.0
  %6111 = vmatpush1.msra.mxu0 0.0
  %6112 = vmatprep.subr.mxu0 0.0
  %6113 = vmatpush1.msra.mxu0 0.0
  %6114 = vmatprep.subr.mxu0 0.0
  %6115 = vmatpush1.msra.mxu0 0.0
  %6116 = vmatprep.subr.mxu0 0.0
  %6117 = vmatpush1.msra.mxu0 0.0
  %6118 = vmatprep.subr.mxu0 0.0
  %6119 = vmatpush1.msra.mxu0 0.0
  %6120 = vmatprep.subr.mxu0 0.0
  %6121 = vmatpush1.msra.mxu0 0.0
  %6122 = vmatprep.subr.mxu0 0.0
  %6123 = vmatpush1.msra.mxu0 0.0
  %6124 = vmatprep.subr.mxu0 0.0
  %6125 = vmatpush1.msra.mxu0 0.0
  %6126 = vmatprep.subr.mxu0 0.0
  %6127 = vmatpush1.msra.mxu0 0.0
  %6128 = vmatprep.subr.mxu0 0.0
  %6129 = vmatpush1.msra.mxu0 0.0
  %6130 = vmatprep.subr.mxu0 0.0
  %6131 = vmatpush1.msra.mxu0 0.0
  %6132 = vmatprep.subr.mxu0 0.0
  %6133 = vmatpush1.msra.mxu0 0.0
  %6134 = vmatprep.subr.mxu0 0.0
  %6135 = vmatpush1.msra.mxu0 0.0
  %6136 = vmatprep.subr.mxu0 0.0
  %6137 = vmatpush1.msra.mxu0 0.0
  %6138 = vmatprep.subr.mxu0 0.0
  %6139 = vmatpush1.msra.mxu0 0.0
  %6140 = vmatprep.subr.mxu0 0.0
  %6141 = vmatpush1.msra.mxu0 0.0
  %6142 = vmatprep.subr.mxu0 0.0
  %6143 = vmatpush1.msra.mxu0 0.0
  %6144 = vmatprep.subr.mxu0 0.0
  %6145 = vmatpush1.msra.mxu0 0.0
  %6146 = vmatprep.subr.mxu0 0.0
  %6147 = vmatpush1.msra.mxu0 0.0
  %6148 = vmatprep.subr.mxu0 0.0
  %6149 = vmatpush1.msra.mxu0 0.0
  %6150 = vmatprep.subr.mxu0 0.0
  %6151 = vmatpush1.msra.mxu0 0.0
  %6152 = vmatprep.subr.mxu0 0.0
  %6153 = vmatpush1.msra.mxu0 0.0
  %6154 = vmatprep.subr.mxu0 0.0
  %6155 = vmatpush1.msra.mxu0 0.0
  %6156 = vmatprep.subr.mxu0 0.0
  %6157 = vmatpush1.msra.mxu0 0.0
  %6158 = vmatprep.subr.mxu0 0.0
  %6159 = vmatpush1.msra.mxu0 0.0
  %6160 = vmatprep.subr.mxu0 0.0
  %6161 = vmatpush1.msra.mxu0 0.0
  %6162 = vmatprep.subr.mxu0 0.0
  %6163 = vmatpush1.msra.mxu0 0.0
  %6164 = vmatprep.subr.mxu0 0.0
  %6165 = vmatpush1.msra.mxu0 0.0
  %6166 = vmatprep.subr.mxu0 0.0
  %6167 = vmatpush1.msra.mxu0 0.0
  %6168 = vmatprep.subr.mxu0 0.0
  %6169 = vmatpush1.msra.mxu0 0.0
  %6170 = vmatprep.subr.mxu0 0.0
  %6171 = vmatpush1.msra.mxu0 0.0
  %6172 = vmatprep.mubr.f32.mxu0 0.0
  %6173 = vmatmul.mubr.f32.gmra.mrb[0].mxu0 %v6106
  %v6174 = vpop.f32.mrb[0].mxu0
  %v6175 = vadd.f32 0.0, %v6174
  %v6176 = vpop.f32.mrb[0].mxu0
  %6177 = vdwg.mxu0
  %6178 = vrot.lane.b32.xlu0 %v3958, 88
  %v6179 = vpop.permute.xlu0 %6178
  %v6182 = vsel %vm79, %v6015, 0
  %6184 = vmatprep.subr.mxu0 0.0
  %6185 = vmatpush1.msra.mxu0 %v6179
  %6186 = vmatprep.subr.mxu0 0.0
  %6187 = vmatpush1.msra.mxu0 0.0
  %6188 = vmatprep.subr.mxu0 0.0
  %6189 = vmatpush1.msra.mxu0 0.0
  %6190 = vmatprep.subr.mxu0 0.0
  %6191 = vmatpush1.msra.mxu0 0.0
  %6192 = vmatprep.subr.mxu0 0.0
  %6193 = vmatpush1.msra.mxu0 0.0
  %6194 = vmatprep.subr.mxu0 0.0
  %6195 = vmatpush1.msra.mxu0 0.0
  %6196 = vmatprep.subr.mxu0 0.0
  %6197 = vmatpush1.msra.mxu0 0.0
  %6198 = vmatprep.subr.mxu0 0.0
  %6199 = vmatpush1.msra.mxu0 0.0
  %6200 = vmatprep.subr.mxu0 0.0
  %6201 = vmatpush1.msra.mxu0 0.0
  %6202 = vmatprep.subr.mxu0 0.0
  %6203 = vmatpush1.msra.mxu0 0.0
  %6204 = vmatprep.subr.mxu0 0.0
  %6205 = vmatpush1.msra.mxu0 0.0
  %6206 = vmatprep.subr.mxu0 0.0
  %6207 = vmatpush1.msra.mxu0 0.0
  %6208 = vmatprep.subr.mxu0 0.0
  %6209 = vmatpush1.msra.mxu0 0.0
  %6210 = vmatprep.subr.mxu0 0.0
  %6211 = vmatpush1.msra.mxu0 0.0
  %6212 = vmatprep.subr.mxu0 0.0
  %6213 = vmatpush1.msra.mxu0 0.0
  %6214 = vmatprep.subr.mxu0 0.0
  %6215 = vmatpush1.msra.mxu0 0.0
  %6216 = vmatprep.subr.mxu0 0.0
  %6217 = vmatpush1.msra.mxu0 0.0
  %6218 = vmatprep.subr.mxu0 0.0
  %6219 = vmatpush1.msra.mxu0 0.0
  %6220 = vmatprep.subr.mxu0 0.0
  %6221 = vmatpush1.msra.mxu0 0.0
  %6222 = vmatprep.subr.mxu0 0.0
  %6223 = vmatpush1.msra.mxu0 0.0
  %6224 = vmatprep.subr.mxu0 0.0
  %6225 = vmatpush1.msra.mxu0 0.0
  %6226 = vmatprep.subr.mxu0 0.0
  %6227 = vmatpush1.msra.mxu0 0.0
  %6228 = vmatprep.subr.mxu0 0.0
  %6229 = vmatpush1.msra.mxu0 0.0
  %6230 = vmatprep.subr.mxu0 0.0
  %6231 = vmatpush1.msra.mxu0 0.0
  %6232 = vmatprep.subr.mxu0 0.0
  %6233 = vmatpush1.msra.mxu0 0.0
  %6234 = vmatprep.subr.mxu0 0.0
  %6235 = vmatpush1.msra.mxu0 0.0
  %6236 = vmatprep.subr.mxu0 0.0
  %6237 = vmatpush1.msra.mxu0 0.0
  %6238 = vmatprep.subr.mxu0 0.0
  %6239 = vmatpush1.msra.mxu0 0.0
  %6240 = vmatprep.subr.mxu0 0.0
  %6241 = vmatpush1.msra.mxu0 0.0
  %6242 = vmatprep.subr.mxu0 0.0
  %6243 = vmatpush1.msra.mxu0 0.0
  %6244 = vmatprep.subr.mxu0 0.0
  %6245 = vmatpush1.msra.mxu0 0.0
  %6246 = vmatprep.subr.mxu0 0.0
  %6247 = vmatpush1.msra.mxu0 0.0
  %6248 = vmatprep.mubr.f32.mxu0 0.0
  %6249 = vmatmul.mubr.f32.gmra.mrb[0].mxu0 %v6182
  %v6250 = vpop.f32.mrb[0].mxu0
  %v6251 = vadd.f32 0.0, %v6250
  %v6252 = vpop.f32.mrb[0].mxu0
  %6253 = vdwg.mxu0
  %6254 = vrot.lane.b32.xlu0 %v3963, 88
  %v6255 = vpop.permute.xlu0 %6254
  %v6258 = vsel %vm79, %v6017, 0
  %6260 = vmatprep.subr.mxu0 0.0
  %6261 = vmatpush1.msra.mxu0 %v6255
  %6262 = vmatprep.subr.mxu0 0.0
  %6263 = vmatpush1.msra.mxu0 0.0
  %6264 = vmatprep.subr.mxu0 0.0
  %6265 = vmatpush1.msra.mxu0 0.0
  %6266 = vmatprep.subr.mxu0 0.0
  %6267 = vmatpush1.msra.mxu0 0.0
  %6268 = vmatprep.subr.mxu0 0.0
  %6269 = vmatpush1.msra.mxu0 0.0
  %6270 = vmatprep.subr.mxu0 0.0
  %6271 = vmatpush1.msra.mxu0 0.0
  %6272 = vmatprep.subr.mxu0 0.0
  %6273 = vmatpush1.msra.mxu0 0.0
  %6274 = vmatprep.subr.mxu0 0.0
  %6275 = vmatpush1.msra.mxu0 0.0
  %6276 = vmatprep.subr.mxu0 0.0
  %6277 = vmatpush1.msra.mxu0 0.0
  %6278 = vmatprep.subr.mxu0 0.0
  %6279 = vmatpush1.msra.mxu0 0.0
  %6280 = vmatprep.subr.mxu0 0.0
  %6281 = vmatpush1.msra.mxu0 0.0
  %6282 = vmatprep.subr.mxu0 0.0
  %6283 = vmatpush1.msra.mxu0 0.0
  %6284 = vmatprep.subr.mxu0 0.0
  %6285 = vmatpush1.msra.mxu0 0.0
  %6286 = vmatprep.subr.mxu0 0.0
  %6287 = vmatpush1.msra.mxu0 0.0
  %6288 = vmatprep.subr.mxu0 0.0
  %6289 = vmatpush1.msra.mxu0 0.0
  %6290 = vmatprep.subr.mxu0 0.0
  %6291 = vmatpush1.msra.mxu0 0.0
  %6292 = vmatprep.subr.mxu0 0.0
  %6293 = vmatpush1.msra.mxu0 0.0
  %6294 = vmatprep.subr.mxu0 0.0
  %6295 = vmatpush1.msra.mxu0 0.0
  %6296 = vmatprep.subr.mxu0 0.0
  %6297 = vmatpush1.msra.mxu0 0.0
  %6298 = vmatprep.subr.mxu0 0.0
  %6299 = vmatpush1.msra.mxu0 0.0
  %6300 = vmatprep.subr.mxu0 0.0
  %6301 = vmatpush1.msra.mxu0 0.0
  %6302 = vmatprep.subr.mxu0 0.0
  %6303 = vmatpush1.msra.mxu0 0.0
  %6304 = vmatprep.subr.mxu0 0.0
  %6305 = vmatpush1.msra.mxu0 0.0
  %6306 = vmatprep.subr.mxu0 0.0
  %6307 = vmatpush1.msra.mxu0 0.0
  %6308 = vmatprep.subr.mxu0 0.0
  %6309 = vmatpush1.msra.mxu0 0.0
  %6310 = vmatprep.subr.mxu0 0.0
  %6311 = vmatpush1.msra.mxu0 0.0
  %6312 = vmatprep.subr.mxu0 0.0
  %6313 = vmatpush1.msra.mxu0 0.0
  %6314 = vmatprep.subr.mxu0 0.0
  %6315 = vmatpush1.msra.mxu0 0.0
  %6316 = vmatprep.subr.mxu0 0.0
  %6317 = vmatpush1.msra.mxu0 0.0
  %6318 = vmatprep.subr.mxu0 0.0
  %6319 = vmatpush1.msra.mxu0 0.0
  %6320 = vmatprep.subr.mxu0 0.0
  %6321 = vmatpush1.msra.mxu0 0.0
  %6322 = vmatprep.subr.mxu0 0.0
  %6323 = vmatpush1.msra.mxu0 0.0
  %6324 = vmatprep.mubr.f32.mxu0 0.0
  %6325 = vmatmul.mubr.f32.gmra.mrb[0].mxu0 %v6258
  %v6326 = vpop.f32.mrb[0].mxu0
  %v6327 = vadd.f32 0.0, %v6326
  %v6328 = vpop.f32.mrb[0].mxu0
  %6329 = vdwg.mxu0
  %6330 = vrot.lane.b32.xlu0 %v3968, 88
  %v6331 = vpop.permute.xlu0 %6330
  %v6334 = vsel %vm79, %v6019, 0
  %6336 = vmatprep.subr.mxu0 0.0
  %6337 = vmatpush1.msra.mxu0 %v6331
  %6338 = vmatprep.subr.mxu0 0.0
  %6339 = vmatpush1.msra.mxu0 0.0
  %6340 = vmatprep.subr.mxu0 0.0
  %6341 = vmatpush1.msra.mxu0 0.0
  %6342 = vmatprep.subr.mxu0 0.0
  %6343 = vmatpush1.msra.mxu0 0.0
  %6344 = vmatprep.subr.mxu0 0.0
  %6345 = vmatpush1.msra.mxu0 0.0
  %6346 = vmatprep.subr.mxu0 0.0
  %6347 = vmatpush1.msra.mxu0 0.0
  %6348 = vmatprep.subr.mxu0 0.0
  %6349 = vmatpush1.msra.mxu0 0.0
  %6350 = vmatprep.subr.mxu0 0.0
  %6351 = vmatpush1.msra.mxu0 0.0
  %6352 = vmatprep.subr.mxu0 0.0
  %6353 = vmatpush1.msra.mxu0 0.0
  %6354 = vmatprep.subr.mxu0 0.0
  %6355 = vmatpush1.msra.mxu0 0.0
  %6356 = vmatprep.subr.mxu0 0.0
  %6357 = vmatpush1.msra.mxu0 0.0
  %6358 = vmatprep.subr.mxu0 0.0
  %6359 = vmatpush1.msra.mxu0 0.0
  %6360 = vmatprep.subr.mxu0 0.0
  %6361 = vmatpush1.msra.mxu0 0.0
  %6362 = vmatprep.subr.mxu0 0.0
  %6363 = vmatpush1.msra.mxu0 0.0
  %6364 = vmatprep.subr.mxu0 0.0
  %6365 = vmatpush1.msra.mxu0 0.0
  %6366 = vmatprep.subr.mxu0 0.0
  %6367 = vmatpush1.msra.mxu0 0.0
  %6368 = vmatprep.subr.mxu0 0.0
  %6369 = vmatpush1.msra.mxu0 0.0
  %6370 = vmatprep.subr.mxu0 0.0
  %6371 = vmatpush1.msra.mxu0 0.0
  %6372 = vmatprep.subr.mxu0 0.0
  %6373 = vmatpush1.msra.mxu0 0.0
  %6374 = vmatprep.subr.mxu0 0.0
  %6375 = vmatpush1.msra.mxu0 0.0
  %6376 = vmatprep.subr.mxu0 0.0
  %6377 = vmatpush1.msra.mxu0 0.0
  %6378 = vmatprep.subr.mxu0 0.0
  %6379 = vmatpush1.msra.mxu0 0.0
  %6380 = vmatprep.subr.mxu0 0.0
  %6381 = vmatpush1.msra.mxu0 0.0
  %6382 = vmatprep.subr.mxu0 0.0
  %6383 = vmatpush1.msra.mxu0 0.0
  %6384 = vmatprep.subr.mxu0 0.0
  %6385 = vmatpush1.msra.mxu0 0.0
  %6386 = vmatprep.subr.mxu0 0.0
  %6387 = vmatpush1.msra.mxu0 0.0
  %6388 = vmatprep.subr.mxu0 0.0
  %6389 = vmatpush1.msra.mxu0 0.0
  %6390 = vmatprep.subr.mxu0 0.0
  %6391 = vmatpush1.msra.mxu0 0.0
  %6392 = vmatprep.subr.mxu0 0.0
  %6393 = vmatpush1.msra.mxu0 0.0
  %6394 = vmatprep.subr.mxu0 0.0
  %6395 = vmatpush1.msra.mxu0 0.0
  %6396 = vmatprep.subr.mxu0 0.0
  %6397 = vmatpush1.msra.mxu0 0.0
  %6398 = vmatprep.subr.mxu0 0.0
  %6399 = vmatpush1.msra.mxu0 0.0
  %6400 = vmatprep.mubr.f32.mxu0 0.0
  %6401 = vmatmul.mubr.f32.gmra.mrb[0].mxu0 %v6334
  %v6402 = vpop.f32.mrb[0].mxu0
  %v6403 = vadd.f32 0.0, %v6402
  %v6404 = vpop.f32.mrb[0].mxu0
  %6405 = vdwg.mxu0
  %6406 = vrot.lane.b32.xlu0 %v3973, 88
  %v6407 = vpop.permute.xlu0 %6406
  %v6410 = vsel %vm79, %v6021, 0
  %6412 = vmatprep.subr.mxu0 0.0
  %6413 = vmatpush1.msra.mxu0 %v6407
  %6414 = vmatprep.subr.mxu0 0.0
  %6415 = vmatpush1.msra.mxu0 0.0
  %6416 = vmatprep.subr.mxu0 0.0
  %6417 = vmatpush1.msra.mxu0 0.0
  %6418 = vmatprep.subr.mxu0 0.0
  %6419 = vmatpush1.msra.mxu0 0.0
  %6420 = vmatprep.subr.mxu0 0.0
  %6421 = vmatpush1.msra.mxu0 0.0
  %6422 = vmatprep.subr.mxu0 0.0
  %6423 = vmatpush1.msra.mxu0 0.0
  %6424 = vmatprep.subr.mxu0 0.0
  %6425 = vmatpush1.msra.mxu0 0.0
  %6426 = vmatprep.subr.mxu0 0.0
  %6427 = vmatpush1.msra.mxu0 0.0
  %6428 = vmatprep.subr.mxu0 0.0
  %6429 = vmatpush1.msra.mxu0 0.0
  %6430 = vmatprep.subr.mxu0 0.0
  %6431 = vmatpush1.msra.mxu0 0.0
  %6432 = vmatprep.subr.mxu0 0.0
  %6433 = vmatpush1.msra.mxu0 0.0
  %6434 = vmatprep.subr.mxu0 0.0
  %6435 = vmatpush1.msra.mxu0 0.0
  %6436 = vmatprep.subr.mxu0 0.0
  %6437 = vmatpush1.msra.mxu0 0.0
  %6438 = vmatprep.subr.mxu0 0.0
  %6439 = vmatpush1.msra.mxu0 0.0
  %6440 = vmatprep.subr.mxu0 0.0
  %6441 = vmatpush1.msra.mxu0 0.0
  %6442 = vmatprep.subr.mxu0 0.0
  %6443 = vmatpush1.msra.mxu0 0.0
  %6444 = vmatprep.subr.mxu0 0.0
  %6445 = vmatpush1.msra.mxu0 0.0
  %6446 = vmatprep.subr.mxu0 0.0
  %6447 = vmatpush1.msra.mxu0 0.0
  %6448 = vmatprep.subr.mxu0 0.0
  %6449 = vmatpush1.msra.mxu0 0.0
  %6450 = vmatprep.subr.mxu0 0.0
  %6451 = vmatpush1.msra.mxu0 0.0
  %6452 = vmatprep.subr.mxu0 0.0
  %6453 = vmatpush1.msra.mxu0 0.0
  %6454 = vmatprep.subr.mxu0 0.0
  %6455 = vmatpush1.msra.mxu0 0.0
  %6456 = vmatprep.subr.mxu0 0.0
  %6457 = vmatpush1.msra.mxu0 0.0
  %6458 = vmatprep.subr.mxu0 0.0
  %6459 = vmatpush1.msra.mxu0 0.0
  %6460 = vmatprep.subr.mxu0 0.0
  %6461 = vmatpush1.msra.mxu0 0.0
  %6462 = vmatprep.subr.mxu0 0.0
  %6463 = vmatpush1.msra.mxu0 0.0
  %6464 = vmatprep.subr.mxu0 0.0
  %6465 = vmatpush1.msra.mxu0 0.0
  %6466 = vmatprep.subr.mxu0 0.0
  %6467 = vmatpush1.msra.mxu0 0.0
  %6468 = vmatprep.subr.mxu0 0.0
  %6469 = vmatpush1.msra.mxu0 0.0
  %6470 = vmatprep.subr.mxu0 0.0
  %6471 = vmatpush1.msra.mxu0 0.0
  %6472 = vmatprep.subr.mxu0 0.0
  %6473 = vmatpush1.msra.mxu0 0.0
  %6474 = vmatprep.subr.mxu0 0.0
  %6475 = vmatpush1.msra.mxu0 0.0
  %6476 = vmatprep.mubr.f32.mxu0 0.0
  %6477 = vmatmul.mubr.f32.gmra.mrb[0].mxu0 %v6410
  %v6478 = vpop.f32.mrb[0].mxu0
  %v6479 = vadd.f32 0.0, %v6478
  %v6480 = vpop.f32.mrb[0].mxu0
  %6481 = vdwg.mxu0
  %6482 = vrot.lane.b32.xlu0 %v3978, 88
  %v6483 = vpop.permute.xlu0 %6482
  %v6486 = vsel %vm79, %v6023, 0
  %6488 = vmatprep.subr.mxu0 0.0
  %6489 = vmatpush1.msra.mxu0 %v6483
  %6490 = vmatprep.subr.mxu0 0.0
  %6491 = vmatpush1.msra.mxu0 0.0
  %6492 = vmatprep.subr.mxu0 0.0
  %6493 = vmatpush1.msra.mxu0 0.0
  %6494 = vmatprep.subr.mxu0 0.0
  %6495 = vmatpush1.msra.mxu0 0.0
  %6496 = vmatprep.subr.mxu0 0.0
  %6497 = vmatpush1.msra.mxu0 0.0
  %6498 = vmatprep.subr.mxu0 0.0
  %6499 = vmatpush1.msra.mxu0 0.0
  %6500 = vmatprep.subr.mxu0 0.0
  %6501 = vmatpush1.msra.mxu0 0.0
  %6502 = vmatprep.subr.mxu0 0.0
  %6503 = vmatpush1.msra.mxu0 0.0
  %6504 = vmatprep.subr.mxu0 0.0
  %6505 = vmatpush1.msra.mxu0 0.0
  %6506 = vmatprep.subr.mxu0 0.0
  %6507 = vmatpush1.msra.mxu0 0.0
  %6508 = vmatprep.subr.mxu0 0.0
  %6509 = vmatpush1.msra.mxu0 0.0
  %6510 = vmatprep.subr.mxu0 0.0
  %6511 = vmatpush1.msra.mxu0 0.0
  %6512 = vmatprep.subr.mxu0 0.0
  %6513 = vmatpush1.msra.mxu0 0.0
  %6514 = vmatprep.subr.mxu0 0.0
  %6515 = vmatpush1.msra.mxu0 0.0
  %6516 = vmatprep.subr.mxu0 0.0
  %6517 = vmatpush1.msra.mxu0 0.0
  %6518 = vmatprep.subr.mxu0 0.0
  %6519 = vmatpush1.msra.mxu0 0.0
  %6520 = vmatprep.subr.mxu0 0.0
  %6521 = vmatpush1.msra.mxu0 0.0
  %6522 = vmatprep.subr.mxu0 0.0
  %6523 = vmatpush1.msra.mxu0 0.0
  %6524 = vmatprep.subr.mxu0 0.0
  %6525 = vmatpush1.msra.mxu0 0.0
  %6526 = vmatprep.subr.mxu0 0.0
  %6527 = vmatpush1.msra.mxu0 0.0
  %6528 = vmatprep.subr.mxu0 0.0
  %6529 = vmatpush1.msra.mxu0 0.0
  %6530 = vmatprep.subr.mxu0 0.0
  %6531 = vmatpush1.msra.mxu0 0.0
  %6532 = vmatprep.subr.mxu0 0.0
  %6533 = vmatpush1.msra.mxu0 0.0
  %6534 = vmatprep.subr.mxu0 0.0
  %6535 = vmatpush1.msra.mxu0 0.0
  %6536 = vmatprep.subr.mxu0 0.0
  %6537 = vmatpush1.msra.mxu0 0.0
  %6538 = vmatprep.subr.mxu0 0.0
  %6539 = vmatpush1.msra.mxu0 0.0
  %6540 = vmatprep.subr.mxu0 0.0
  %6541 = vmatpush1.msra.mxu0 0.0
  %6542 = vmatprep.subr.mxu0 0.0
  %6543 = vmatpush1.msra.mxu0 0.0
  %6544 = vmatprep.subr.mxu0 0.0
  %6545 = vmatpush1.msra.mxu0 0.0
  %6546 = vmatprep.subr.mxu0 0.0
  %6547 = vmatpush1.msra.mxu0 0.0
  %6548 = vmatprep.subr.mxu0 0.0
  %6549 = vmatpush1.msra.mxu0 0.0
  %6550 = vmatprep.subr.mxu0 0.0
  %6551 = vmatpush1.msra.mxu0 0.0
  %6552 = vmatprep.mubr.f32.mxu0 0.0
  %6553 = vmatmul.mubr.f32.gmra.mrb[0].mxu0 %v6486
  %v6554 = vpop.f32.mrb[0].mxu0
  %v6555 = vadd.f32 0.0, %v6554
  %v6556 = vpop.f32.mrb[0].mxu0
  %6557 = vdwg.mxu0
  %6558 = vrot.lane.b32.xlu0 %v3983, 88
  %v6559 = vpop.permute.xlu0 %6558
  %v6562 = vsel %vm79, %v6025, 0
  %6564 = vmatprep.subr.mxu0 0.0
  %6565 = vmatpush1.msra.mxu0 %v6559
  %6566 = vmatprep.subr.mxu0 0.0
  %6567 = vmatpush1.msra.mxu0 0.0
  %6568 = vmatprep.subr.mxu0 0.0
  %6569 = vmatpush1.msra.mxu0 0.0
  %6570 = vmatprep.subr.mxu0 0.0
  %6571 = vmatpush1.msra.mxu0 0.0
  %6572 = vmatprep.subr.mxu0 0.0
  %6573 = vmatpush1.msra.mxu0 0.0
  %6574 = vmatprep.subr.mxu0 0.0
  %6575 = vmatpush1.msra.mxu0 0.0
  %6576 = vmatprep.subr.mxu0 0.0
  %6577 = vmatpush1.msra.mxu0 0.0
  %6578 = vmatprep.subr.mxu0 0.0
  %6579 = vmatpush1.msra.mxu0 0.0
  %6580 = vmatprep.subr.mxu0 0.0
  %6581 = vmatpush1.msra.mxu0 0.0
  %6582 = vmatprep.subr.mxu0 0.0
  %6583 = vmatpush1.msra.mxu0 0.0
  %6584 = vmatprep.subr.mxu0 0.0
  %6585 = vmatpush1.msra.mxu0 0.0
  %6586 = vmatprep.subr.mxu0 0.0
  %6587 = vmatpush1.msra.mxu0 0.0
  %6588 = vmatprep.subr.mxu0 0.0
  %6589 = vmatpush1.msra.mxu0 0.0
  %6590 = vmatprep.subr.mxu0 0.0
  %6591 = vmatpush1.msra.mxu0 0.0
  %6592 = vmatprep.subr.mxu0 0.0
  %6593 = vmatpush1.msra.mxu0 0.0
  %6594 = vmatprep.subr.mxu0 0.0
  %6595 = vmatpush1.msra.mxu0 0.0
  %6596 = vmatprep.subr.mxu0 0.0
  %6597 = vmatpush1.msra.mxu0 0.0
  %6598 = vmatprep.subr.mxu0 0.0
  %6599 = vmatpush1.msra.mxu0 0.0
  %6600 = vmatprep.subr.mxu0 0.0
  %6601 = vmatpush1.msra.mxu0 0.0
  %6602 = vmatprep.subr.mxu0 0.0
  %6603 = vmatpush1.msra.mxu0 0.0
  %6604 = vmatprep.subr.mxu0 0.0
  %6605 = vmatpush1.msra.mxu0 0.0
  %6606 = vmatprep.subr.mxu0 0.0
  %6607 = vmatpush1.msra.mxu0 0.0
  %6608 = vmatprep.subr.mxu0 0.0
  %6609 = vmatpush1.msra.mxu0 0.0
  %6610 = vmatprep.subr.mxu0 0.0
  %6611 = vmatpush1.msra.mxu0 0.0
  %6612 = vmatprep.subr.mxu0 0.0
  %6613 = vmatpush1.msra.mxu0 0.0
  %6614 = vmatprep.subr.mxu0 0.0
  %6615 = vmatpush1.msra.mxu0 0.0
  %6616 = vmatprep.subr.mxu0 0.0
  %6617 = vmatpush1.msra.mxu0 0.0
  %6618 = vmatprep.subr.mxu0 0.0
  %6619 = vmatpush1.msra.mxu0 0.0
  %6620 = vmatprep.subr.mxu0 0.0
  %6621 = vmatpush1.msra.mxu0 0.0
  %6622 = vmatprep.subr.mxu0 0.0
  %6623 = vmatpush1.msra.mxu0 0.0
  %6624 = vmatprep.subr.mxu0 0.0
  %6625 = vmatpush1.msra.mxu0 0.0
  %6626 = vmatprep.subr.mxu0 0.0
  %6627 = vmatpush1.msra.mxu0 0.0
  %6628 = vmatprep.mubr.f32.mxu0 0.0
  %6629 = vmatmul.mubr.f32.gmra.mrb[0].mxu0 %v6562
  %v6630 = vpop.f32.mrb[0].mxu0
  %v6631 = vadd.f32 0.0, %v6630
  %v6632 = vpop.f32.mrb[0].mxu0
  %6633 = vdwg.mxu0
  %v6635 = vsel %vm79, %v6099, 0
  %v6638 = vsel %vm79, %v6175, 0
  %v6641 = vsel %vm79, %v6251, 0
  %v6644 = vsel %vm79, %v6327, 0
  %v6647 = vsel %vm79, %v6403, 0
  %v6650 = vsel %vm79, %v6479, 0
  %v6653 = vsel %vm79, %v6555, 0
  %v6656 = vsel %vm79, %v6631, 0
  %6658 = vmatprep.subr.mxu0 0.0
  %6659 = vmatpush1.msra.mxu0 %v3848
  %6660 = vmatprep.subr.mxu0 0.0
  %6661 = vmatpush1.msra.mxu0 0.0
  %6662 = vmatprep.subr.mxu0 0.0
  %6663 = vmatpush1.msra.mxu0 0.0
  %6664 = vmatprep.subr.mxu0 0.0
  %6665 = vmatpush1.msra.mxu0 0.0
  %6666 = vmatprep.subr.mxu0 0.0
  %6667 = vmatpush1.msra.mxu0 0.0
  %6668 = vmatprep.subr.mxu0 0.0
  %6669 = vmatpush1.msra.mxu0 0.0
  %6670 = vmatprep.subr.mxu0 0.0
  %6671 = vmatpush1.msra.mxu0 0.0
  %6672 = vmatprep.subr.mxu0 0.0
  %6673 = vmatpush1.msra.mxu0 0.0
  %6674 = vmatprep.subr.mxu0 0.0
  %6675 = vmatpush1.msra.mxu0 0.0
  %6676 = vmatprep.subr.mxu0 0.0
  %6677 = vmatpush1.msra.mxu0 0.0
  %6678 = vmatprep.subr.mxu0 0.0
  %6679 = vmatpush1.msra.mxu0 0.0
  %6680 = vmatprep.subr.mxu0 0.0
  %6681 = vmatpush1.msra.mxu0 0.0
  %6682 = vmatprep.subr.mxu0 0.0
  %6683 = vmatpush1.msra.mxu0 0.0
  %6684 = vmatprep.subr.mxu0 0.0
  %6685 = vmatpush1.msra.mxu0 0.0
  %6686 = vmatprep.subr.mxu0 0.0
  %6687 = vmatpush1.msra.mxu0 0.0
  %6688 = vmatprep.subr.mxu0 0.0
  %6689 = vmatpush1.msra.mxu0 0.0
  %6690 = vmatprep.subr.mxu0 0.0
  %6691 = vmatpush1.msra.mxu0 0.0
  %6692 = vmatprep.subr.mxu0 0.0
  %6693 = vmatpush1.msra.mxu0 0.0
  %6694 = vmatprep.subr.mxu0 0.0
  %6695 = vmatpush1.msra.mxu0 0.0
  %6696 = vmatprep.subr.mxu0 0.0
  %6697 = vmatpush1.msra.mxu0 0.0
  %6698 = vmatprep.subr.mxu0 0.0
  %6699 = vmatpush1.msra.mxu0 0.0
  %6700 = vmatprep.subr.mxu0 0.0
  %6701 = vmatpush1.msra.mxu0 0.0
  %6702 = vmatprep.subr.mxu0 0.0
  %6703 = vmatpush1.msra.mxu0 0.0
  %6704 = vmatprep.subr.mxu0 0.0
  %6705 = vmatpush1.msra.mxu0 0.0
  %6706 = vmatprep.subr.mxu0 0.0
  %6707 = vmatpush1.msra.mxu0 0.0
  %6708 = vmatprep.subr.mxu0 0.0
  %6709 = vmatpush1.msra.mxu0 0.0
  %6710 = vmatprep.subr.mxu0 0.0
  %6711 = vmatpush1.msra.mxu0 0.0
  %6712 = vmatprep.subr.mxu0 0.0
  %6713 = vmatpush1.msra.mxu0 0.0
  %6714 = vmatprep.subr.mxu0 0.0
  %6715 = vmatpush1.msra.mxu0 0.0
  %6716 = vmatprep.subr.mxu0 0.0
  %6717 = vmatpush1.msra.mxu0 0.0
  %6718 = vmatprep.subr.mxu0 0.0
  %6719 = vmatpush1.msra.mxu0 0.0
  %6720 = vmatprep.subr.mxu0 0.0
  %6721 = vmatpush1.msra.mxu0 0.0
  %6722 = vmatprep.mubr.f32.mxu0 0.0
  %6723 = vmatmul.mubr.f32.gmra.mrb[0].mxu0 %v6635
  %v6724 = vpop.f32.mrb[0].mxu0
  %v6725 = vadd.f32 0.0, %v6724
  %v6726 = vpop.f32.mrb[0].mxu0
  %6727 = vmatprep.mubr.f32.mxu0 0.0
  %6728 = vmatmul.mubr.f32.gmra.mrb[0].mxu0 %v6638
  %v6729 = vpop.f32.mrb[0].mxu0
  %v6730 = vadd.f32 0.0, %v6729
  %v6731 = vpop.f32.mrb[0].mxu0
  %6732 = vmatprep.mubr.f32.mxu0 0.0
  %6733 = vmatmul.mubr.f32.gmra.mrb[0].mxu0 %v6641
  %v6734 = vpop.f32.mrb[0].mxu0
  %v6735 = vadd.f32 0.0, %v6734
  %v6736 = vpop.f32.mrb[0].mxu0
  %6737 = vmatprep.mubr.f32.mxu0 0.0
  %6738 = vmatmul.mubr.f32.gmra.mrb[0].mxu0 %v6644
  %v6739 = vpop.f32.mrb[0].mxu0
  %v6740 = vadd.f32 0.0, %v6739
  %v6741 = vpop.f32.mrb[0].mxu0
  %6742 = vmatprep.mubr.f32.mxu0 0.0
  %6743 = vmatmul.mubr.f32.gmra.mrb[0].mxu0 %v6647
  %v6744 = vpop.f32.mrb[0].mxu0
  %v6745 = vadd.f32 0.0, %v6744
  %v6746 = vpop.f32.mrb[0].mxu0
  %6747 = vmatprep.mubr.f32.mxu0 0.0
  %6748 = vmatmul.mubr.f32.gmra.mrb[0].mxu0 %v6650
  %v6749 = vpop.f32.mrb[0].mxu0
  %v6750 = vadd.f32 0.0, %v6749
  %v6751 = vpop.f32.mrb[0].mxu0
  %6752 = vmatprep.mubr.f32.mxu0 0.0
  %6753 = vmatmul.mubr.f32.gmra.mrb[0].mxu0 %v6653
  %v6754 = vpop.f32.mrb[0].mxu0
  %v6755 = vadd.f32 0.0, %v6754
  %v6756 = vpop.f32.mrb[0].mxu0
  %6757 = vmatprep.mubr.f32.mxu0 0.0
  %6758 = vmatmul.mubr.f32.gmra.mrb[0].mxu0 %v6656
  %v6759 = vpop.f32.mrb[0].mxu0
  %v6760 = vadd.f32 0.0, %v6759
  %v6761 = vpop.f32.mrb[0].mxu0
  %6762 = vdwg.mxu0
  %v6764 = vsel %vm79, %v4771, 0
  %v6767 = vsel %vm79, %v4847, 0
  %v6770 = vsel %vm79, %v4923, 0
  %v6773 = vsel %vm79, %v4999, 0
  %v6776 = vsel %vm79, %v5075, 0
  %v6779 = vsel %vm79, %v5151, 0
  %v6782 = vsel %vm79, %v5227, 0
  %v6785 = vsel %vm79, %v5303, 0
  %6787 = vmatprep.subr.mxu0 0.0
  %6788 = vmatpush1.msra.mxu0 %v3847
  %6789 = vmatprep.subr.mxu0 0.0
  %6790 = vmatpush1.msra.mxu0 0.0
  %6791 = vmatprep.subr.mxu0 0.0
  %6792 = vmatpush1.msra.mxu0 0.0
  %6793 = vmatprep.subr.mxu0 0.0
  %6794 = vmatpush1.msra.mxu0 0.0
  %6795 = vmatprep.subr.mxu0 0.0
  %6796 = vmatpush1.msra.mxu0 0.0
  %6797 = vmatprep.subr.mxu0 0.0
  %6798 = vmatpush1.msra.mxu0 0.0
  %6799 = vmatprep.subr.mxu0 0.0
  %6800 = vmatpush1.msra.mxu0 0.0
  %6801 = vmatprep.subr.mxu0 0.0
  %6802 = vmatpush1.msra.mxu0 0.0
  %6803 = vmatprep.subr.mxu0 0.0
  %6804 = vmatpush1.msra.mxu0 0.0
  %6805 = vmatprep.subr.mxu0 0.0
  %6806 = vmatpush1.msra.mxu0 0.0
  %6807 = vmatprep.subr.mxu0 0.0
  %6808 = vmatpush1.msra.mxu0 0.0
  %6809 = vmatprep.subr.mxu0 0.0
  %6810 = vmatpush1.msra.mxu0 0.0
  %6811 = vmatprep.subr.mxu0 0.0
  %6812 = vmatpush1.msra.mxu0 0.0
  %6813 = vmatprep.subr.mxu0 0.0
  %6814 = vmatpush1.msra.mxu0 0.0
  %6815 = vmatprep.subr.mxu0 0.0
  %6816 = vmatpush1.msra.mxu0 0.0
  %6817 = vmatprep.subr.mxu0 0.0
  %6818 = vmatpush1.msra.mxu0 0.0
  %6819 = vmatprep.subr.mxu0 0.0
  %6820 = vmatpush1.msra.mxu0 0.0
  %6821 = vmatprep.subr.mxu0 0.0
  %6822 = vmatpush1.msra.mxu0 0.0
  %6823 = vmatprep.subr.mxu0 0.0
  %6824 = vmatpush1.msra.mxu0 0.0
  %6825 = vmatprep.subr.mxu0 0.0
  %6826 = vmatpush1.msra.mxu0 0.0
  %6827 = vmatprep.subr.mxu0 0.0
  %6828 = vmatpush1.msra.mxu0 0.0
  %6829 = vmatprep.subr.mxu0 0.0
  %6830 = vmatpush1.msra.mxu0 0.0
  %6831 = vmatprep.subr.mxu0 0.0
  %6832 = vmatpush1.msra.mxu0 0.0
  %6833 = vmatprep.subr.mxu0 0.0
  %6834 = vmatpush1.msra.mxu0 0.0
  %6835 = vmatprep.subr.mxu0 0.0
  %6836 = vmatpush1.msra.mxu0 0.0
  %6837 = vmatprep.subr.mxu0 0.0
  %6838 = vmatpush1.msra.mxu0 0.0
  %6839 = vmatprep.subr.mxu0 0.0
  %6840 = vmatpush1.msra.mxu0 0.0
  %6841 = vmatprep.subr.mxu0 0.0
  %6842 = vmatpush1.msra.mxu0 0.0
  %6843 = vmatprep.subr.mxu0 0.0
  %6844 = vmatpush1.msra.mxu0 0.0
  %6845 = vmatprep.subr.mxu0 0.0
  %6846 = vmatpush1.msra.mxu0 0.0
  %6847 = vmatprep.subr.mxu0 0.0
  %6848 = vmatpush1.msra.mxu0 0.0
  %6849 = vmatprep.subr.mxu0 0.0
  %6850 = vmatpush1.msra.mxu0 0.0
  %6851 = vmatprep.mubr.f32.mxu0 0.0
  %6852 = vmatmul.mubr.f32.gmra.mrb[0].mxu0 %v6764
  %v6853 = vpop.f32.mrb[0].mxu0
  %v6854 = vadd.f32 %v6725, %v6853
  %v6855 = vpop.f32.mrb[0].mxu0
  %6856 = vmatprep.mubr.f32.mxu0 0.0
  %6857 = vmatmul.mubr.f32.gmra.mrb[0].mxu0 %v6767
  %v6858 = vpop.f32.mrb[0].mxu0
  %v6859 = vadd.f32 %v6730, %v6858
  %v6860 = vpop.f32.mrb[0].mxu0
  %6861 = vmatprep.mubr.f32.mxu0 0.0
  %6862 = vmatmul.mubr.f32.gmra.mrb[0].mxu0 %v6770
  %v6863 = vpop.f32.mrb[0].mxu0
  %v6864 = vadd.f32 %v6735, %v6863
  %v6865 = vpop.f32.mrb[0].mxu0
  %6866 = vmatprep.mubr.f32.mxu0 0.0
  %6867 = vmatmul.mubr.f32.gmra.mrb[0].mxu0 %v6773
  %v6868 = vpop.f32.mrb[0].mxu0
  %v6869 = vadd.f32 %v6740, %v6868
  %v6870 = vpop.f32.mrb[0].mxu0
  %6871 = vmatprep.mubr.f32.mxu0 0.0
  %6872 = vmatmul.mubr.f32.gmra.mrb[0].mxu0 %v6776
  %v6873 = vpop.f32.mrb[0].mxu0
  %v6874 = vadd.f32 %v6745, %v6873
  %v6875 = vpop.f32.mrb[0].mxu0
  %6876 = vmatprep.mubr.f32.mxu0 0.0
  %6877 = vmatmul.mubr.f32.gmra.mrb[0].mxu0 %v6779
  %v6878 = vpop.f32.mrb[0].mxu0
  %v6879 = vadd.f32 %v6750, %v6878
  %v6880 = vpop.f32.mrb[0].mxu0
  %6881 = vmatprep.mubr.f32.mxu0 0.0
  %6882 = vmatmul.mubr.f32.gmra.mrb[0].mxu0 %v6782
  %v6883 = vpop.f32.mrb[0].mxu0
  %v6884 = vadd.f32 %v6755, %v6883
  %v6885 = vpop.f32.mrb[0].mxu0
  %6886 = vmatprep.mubr.f32.mxu0 0.0
  %6887 = vmatmul.mubr.f32.gmra.mrb[0].mxu0 %v6785
  %v6888 = vpop.f32.mrb[0].mxu0
  %v6889 = vadd.f32 %v6760, %v6888
  %v6890 = vpop.f32.mrb[0].mxu0
  %6891 = vdwg.mxu0
  %s6892 = scalar_lea.vmem %s6, 1
  %v6893 = vld [vmem:[%s6892] sm:$0x1]
  %v6895 = vlaneseq
  %v6896 = vshrl.u32 %v6895, 7
  %v6897 = vsub.s32 0, %v6896
  %v6898 = vrot.slane %v6893, %v6897
  %v6900 = vadd.f32 %v6854, %v6898
  %v6901 = vadd.f32 %v6859, %v6898
  %v6902 = vadd.f32 %v6864, %v6898
  %v6903 = vadd.f32 %v6869, %v6898
  %v6904 = vadd.f32 %v6874, %v6898
  %v6905 = vadd.f32 %v6879, %v6898
  %v6906 = vadd.f32 %v6884, %v6898
  %v6907 = vadd.f32 %v6889, %v6898
  %v6908 = vadd.f32 %v3835, %v6900
  %v6909 = vadd.f32 %v3836, %v6901
  %v6910 = vadd.f32 %v3837, %v6902
  %v6911 = vadd.f32 %v3838, %v6903
  %v6912 = vadd.f32 %v3839, %v6904
  %v6913 = vadd.f32 %v3840, %v6905
  %v6914 = vadd.f32 %v3841, %v6906
  %v6915 = vadd.f32 %v3842, %v6907
  %s6916 = scalar_lea.vmem %s7, 1
  %v6917 = vld [vmem:[%s6916] sm:$0x1]
  %s6918 = scalar_lea.vmem %s8, 1
  %v6919 = vld [vmem:[%s6918] sm:$0x1]
  %v6920 = vsel %vm220, %v6908, 0.0
  %6921 = vadd.xlane.f32.xlu0 %v6920
  %v6922 = vpop.xlane.xlu0 %6921
  %v6923 = vsel %vm220, %v6909, 0.0
  %6924 = vadd.xlane.f32.xlu0 %v6923
  %v6925 = vpop.xlane.xlu0 %6924
  %v6926 = vsel %vm220, %v6910, 0.0
  %6927 = vadd.xlane.f32.xlu0 %v6926
  %v6928 = vpop.xlane.xlu0 %6927
  %v6929 = vsel %vm220, %v6911, 0.0
  %6930 = vadd.xlane.f32.xlu0 %v6929
  %v6931 = vpop.xlane.xlu0 %6930
  %v6932 = vsel %vm220, %v6912, 0.0
  %6933 = vadd.xlane.f32.xlu0 %v6932
  %v6934 = vpop.xlane.xlu0 %6933
  %v6935 = vsel %vm220, %v6913, 0.0
  %6936 = vadd.xlane.f32.xlu0 %v6935
  %v6937 = vpop.xlane.xlu0 %6936
  %v6938 = vsel %vm220, %v6914, 0.0
  %6939 = vadd.xlane.f32.xlu0 %v6938
  %v6940 = vpop.xlane.xlu0 %6939
  %v6941 = vsel %vm220, %v6915, 0.0
  %6942 = vadd.xlane.f32.xlu0 %v6941
  %v6943 = vpop.xlane.xlu0 %6942
  %v6944 = vmul.f32 %v6922, %v3305
  %v6945 = vmul.f32 %v6925, %v3305
  %v6946 = vmul.f32 %v6928, %v3305
  %v6947 = vmul.f32 %v6931, %v3305
  %v6948 = vmul.f32 %v6934, %v3305
  %v6949 = vmul.f32 %v6937, %v3305
  %v6950 = vmul.f32 %v6940, %v3305
  %v6951 = vmul.f32 %v6943, %v3305
  %v6952 = vsub.f32 %v6908, %v6944
  %v6953 = vsub.f32 %v6909, %v6945
  %v6954 = vsub.f32 %v6910, %v6946
  %v6955 = vsub.f32 %v6911, %v6947
  %v6956 = vsub.f32 %v6912, %v6948
  %v6957 = vsub.f32 %v6913, %v6949
  %v6958 = vsub.f32 %v6914, %v6950
  %v6959 = vsub.f32 %v6915, %v6951
  %v6960 = vmul.f32 %v6952, %v6952
  %v6961 = vmul.f32 %v6953, %v6953
  %v6962 = vmul.f32 %v6954, %v6954
  %v6963 = vmul.f32 %v6955, %v6955
  %v6964 = vmul.f32 %v6956, %v6956
  %v6965 = vmul.f32 %v6957, %v6957
  %v6966 = vmul.f32 %v6958, %v6958
  %v6967 = vmul.f32 %v6959, %v6959
  %v6968 = vsel %vm220, %v6960, 0.0
  %6969 = vadd.xlane.f32.xlu0 %v6968
  %v6970 = vpop.xlane.xlu0 %6969
  %v6971 = vsel %vm220, %v6961, 0.0
  %6972 = vadd.xlane.f32.xlu0 %v6971
  %v6973 = vpop.xlane.xlu0 %6972
  %v6974 = vsel %vm220, %v6962, 0.0
  %6975 = vadd.xlane.f32.xlu0 %v6974
  %v6976 = vpop.xlane.xlu0 %6975
  %v6977 = vsel %vm220, %v6963, 0.0
  %6978 = vadd.xlane.f32.xlu0 %v6977
  %v6979 = vpop.xlane.xlu0 %6978
  %v6980 = vsel %vm220, %v6964, 0.0
  %6981 = vadd.xlane.f32.xlu0 %v6980
  %v6982 = vpop.xlane.xlu0 %6981
  %v6983 = vsel %vm220, %v6965, 0.0
  %6984 = vadd.xlane.f32.xlu0 %v6983
  %v6985 = vpop.xlane.xlu0 %6984
  %v6986 = vsel %vm220, %v6966, 0.0
  %6987 = vadd.xlane.f32.xlu0 %v6986
  %v6988 = vpop.xlane.xlu0 %6987
  %v6989 = vsel %vm220, %v6967, 0.0
  %6990 = vadd.xlane.f32.xlu0 %v6989
  %v6991 = vpop.xlane.xlu0 %6990
  %v6992 = vmul.f32 %v6970, %v3305
  %v6993 = vmul.f32 %v6973, %v3305
  %v6994 = vmul.f32 %v6976, %v3305
  %v6995 = vmul.f32 %v6979, %v3305
  %v6996 = vmul.f32 %v6982, %v3305
  %v6997 = vmul.f32 %v6985, %v3305
  %v6998 = vmul.f32 %v6988, %v3305
  %v6999 = vmul.f32 %v6991, %v3305
  %v7000 = vadd.f32 %v6992, 1e-05
  %v7001 = vadd.f32 %v6993, 1e-05
  %v7002 = vadd.f32 %v6994, 1e-05
  %v7003 = vadd.f32 %v6995, 1e-05
  %v7004 = vadd.f32 %v6996, 1e-05
  %v7005 = vadd.f32 %v6997, 1e-05
  %v7006 = vadd.f32 %v6998, 1e-05
  %v7007 = vadd.f32 %v6999, 1e-05
  %v7008 = vrsqrt.pop %v7000
  %v7009 = vrsqrt.pop %v7001
  %v7010 = vrsqrt.pop %v7002
  %v7011 = vrsqrt.pop %v7003
  %v7012 = vrsqrt.pop %v7004
  %v7013 = vrsqrt.pop %v7005
  %v7014 = vrsqrt.pop %v7006
  %v7015 = vrsqrt.pop %v7007
  %v7016 = vmul.f32 %v6952, %v7008
  %v7017 = vmul.f32 %v6953, %v7009
  %v7018 = vmul.f32 %v6954, %v7010
  %v7019 = vmul.f32 %v6955, %v7011
  %v7020 = vmul.f32 %v6956, %v7012
  %v7021 = vmul.f32 %v6957, %v7013
  %v7022 = vmul.f32 %v6958, %v7014
  %v7023 = vmul.f32 %v6959, %v7015
  %v7025 = vlaneseq
  %v7026 = vshrl.u32 %v7025, 7
  %v7027 = vsub.s32 0, %v7026
  %v7028 = vrot.slane %v6917, %v7027
  %v7030 = vmul.f32 %v7016, %v7028
  %v7031 = vmul.f32 %v7017, %v7028
  %v7032 = vmul.f32 %v7018, %v7028
  %v7033 = vmul.f32 %v7019, %v7028
  %v7034 = vmul.f32 %v7020, %v7028
  %v7035 = vmul.f32 %v7021, %v7028
  %v7036 = vmul.f32 %v7022, %v7028
  %v7037 = vmul.f32 %v7023, %v7028
  %v7039 = vlaneseq
  %v7040 = vshrl.u32 %v7039, 7
  %v7041 = vsub.s32 0, %v7040
  %v7042 = vrot.slane %v6919, %v7041
  %v7044 = vadd.f32 %v7030, %v7042
  %v7045 = vadd.f32 %v7031, %v7042
  %v7046 = vadd.f32 %v7032, %v7042
  %v7047 = vadd.f32 %v7033, %v7042
  %v7048 = vadd.f32 %v7034, %v7042
  %v7049 = vadd.f32 %v7035, %v7042
  %v7050 = vadd.f32 %v7036, %v7042
  %v7051 = vadd.f32 %v7037, %v7042
  %s7052 = scalar_lea.vmem %s9, 16
  %v7053 = vld [vmem:[%s7052] sm:$0xff]
  %v7054 = vld [vmem:[%s7052 + $0x8] sm:$0xff]
  %s7055 = scalar_lea.vmem %s10, 1
  %v7056 = vld [vmem:[%s7055] sm:$0x1]
  %v7058 = vlaneseq
  %v7059 = vshrl.u32 %v7058, 7
  %v7060 = vsub.s32 0, %v7059
  %v7061 = vrot.slane %v7056, %v7060
  %v7064 = vsel %vm220, %v7044, 0
  %v7067 = vsel %vm220, %v7045, 0
  %v7070 = vsel %vm220, %v7046, 0
  %v7073 = vsel %vm220, %v7047, 0
  %v7076 = vsel %vm220, %v7048, 0
  %v7079 = vsel %vm220, %v7049, 0
  %v7082 = vsel %vm220, %v7050, 0
  %v7085 = vsel %vm220, %v7051, 0
  %7087 = vmatprep.subr.mxu0 0.0
  %7088 = vmatpush1.msra.mxu0 %v7053
  %7089 = vmatprep.subr.mxu0 0.0
  %7090 = vmatpush1.msra.mxu0 %v7054
  %7091 = vmatprep.subr.mxu0 0.0
  %7092 = vmatpush1.msra.mxu0 0.0
  %7093 = vmatprep.subr.mxu0 0.0
  %7094 = vmatpush1.msra.mxu0 0.0
  %7095 = vmatprep.subr.mxu0 0.0
  %7096 = vmatpush1.msra.mxu0 0.0
  %7097 = vmatprep.subr.mxu0 0.0
  %7098 = vmatpush1.msra.mxu0 0.0
  %7099 = vmatprep.subr.mxu0 0.0
  %7100 = vmatpush1.msra.mxu0 0.0
  %7101 = vmatprep.subr.mxu0 0.0
  %7102 = vmatpush1.msra.mxu0 0.0
  %7103 = vmatprep.subr.mxu0 0.0
  %7104 = vmatpush1.msra.mxu0 0.0
  %7105 = vmatprep.subr.mxu0 0.0
  %7106 = vmatpush1.msra.mxu0 0.0
  %7107 = vmatprep.subr.mxu0 0.0
  %7108 = vmatpush1.msra.mxu0 0.0
  %7109 = vmatprep.subr.mxu0 0.0
  %7110 = vmatpush1.msra.mxu0 0.0
  %7111 = vmatprep.subr.mxu0 0.0
  %7112 = vmatpush1.msra.mxu0 0.0
  %7113 = vmatprep.subr.mxu0 0.0
  %7114 = vmatpush1.msra.mxu0 0.0
  %7115 = vmatprep.subr.mxu0 0.0
  %7116 = vmatpush1.msra.mxu0 0.0
  %7117 = vmatprep.subr.mxu0 0.0
  %7118 = vmatpush1.msra.mxu0 0.0
  %7119 = vmatprep.subr.mxu0 0.0
  %7120 = vmatpush1.msra.mxu0 0.0
  %7121 = vmatprep.subr.mxu0 0.0
  %7122 = vmatpush1.msra.mxu0 0.0
  %7123 = vmatprep.subr.mxu0 0.0
  %7124 = vmatpush1.msra.mxu0 0.0
  %7125 = vmatprep.subr.mxu0 0.0
  %7126 = vmatpush1.msra.mxu0 0.0
  %7127 = vmatprep.subr.mxu0 0.0
  %7128 = vmatpush1.msra.mxu0 0.0
  %7129 = vmatprep.subr.mxu0 0.0
  %7130 = vmatpush1.msra.mxu0 0.0
  %7131 = vmatprep.subr.mxu0 0.0
  %7132 = vmatpush1.msra.mxu0 0.0
  %7133 = vmatprep.subr.mxu0 0.0
  %7134 = vmatpush1.msra.mxu0 0.0
  %7135 = vmatprep.subr.mxu0 0.0
  %7136 = vmatpush1.msra.mxu0 0.0
  %7137 = vmatprep.subr.mxu0 0.0
  %7138 = vmatpush1.msra.mxu0 0.0
  %7139 = vmatprep.subr.mxu0 0.0
  %7140 = vmatpush1.msra.mxu0 0.0
  %7141 = vmatprep.subr.mxu0 0.0
  %7142 = vmatpush1.msra.mxu0 0.0
  %7143 = vmatprep.subr.mxu0 0.0
  %7144 = vmatpush1.msra.mxu0 0.0
  %7145 = vmatprep.subr.mxu0 0.0
  %7146 = vmatpush1.msra.mxu0 0.0
  %7147 = vmatprep.subr.mxu0 0.0
  %7148 = vmatpush1.msra.mxu0 0.0
  %7149 = vmatprep.subr.mxu0 0.0
  %7150 = vmatpush1.msra.mxu0 0.0
  %7151 = vmatprep.mubr.f32.mxu0 0.0
  %7152 = vmatmul.mubr.f32.gmra.mrb[0].mxu0 %v7064
  %v7153 = vpop.f32.mrb[0].mxu0
  %v7154 = vadd.f32 %v7061, %v7153
  %v7155 = vpop.f32.mrb[0].mxu0
  %7156 = vmatprep.mubr.f32.mxu0 0.0
  %7157 = vmatmul.mubr.f32.gmra.mrb[0].mxu0 %v7067
  %v7158 = vpop.f32.mrb[0].mxu0
  %v7159 = vadd.f32 %v7061, %v7158
  %v7160 = vpop.f32.mrb[0].mxu0
  %7161 = vmatprep.mubr.f32.mxu0 0.0
  %7162 = vmatmul.mubr.f32.gmra.mrb[0].mxu0 %v7070
  %v7163 = vpop.f32.mrb[0].mxu0
  %v7164 = vadd.f32 %v7061, %v7163
  %v7165 = vpop.f32.mrb[0].mxu0
  %7166 = vmatprep.mubr.f32.mxu0 0.0
  %7167 = vmatmul.mubr.f32.gmra.mrb[0].mxu0 %v7073
  %v7168 = vpop.f32.mrb[0].mxu0
  %v7169 = vadd.f32 %v7061, %v7168
  %v7170 = vpop.f32.mrb[0].mxu0
  %7171 = vmatprep.mubr.f32.mxu0 0.0
  %7172 = vmatmul.mubr.f32.gmra.mrb[0].mxu0 %v7076
  %v7173 = vpop.f32.mrb[0].mxu0
  %v7174 = vadd.f32 %v7061, %v7173
  %v7175 = vpop.f32.mrb[0].mxu0
  %7176 = vmatprep.mubr.f32.mxu0 0.0
  %7177 = vmatmul.mubr.f32.gmra.mrb[0].mxu0 %v7079
  %v7178 = vpop.f32.mrb[0].mxu0
  %v7179 = vadd.f32 %v7061, %v7178
  %v7180 = vpop.f32.mrb[0].mxu0
  %7181 = vmatprep.mubr.f32.mxu0 0.0
  %7182 = vmatmul.mubr.f32.gmra.mrb[0].mxu0 %v7082
  %v7183 = vpop.f32.mrb[0].mxu0
  %v7184 = vadd.f32 %v7061, %v7183
  %v7185 = vpop.f32.mrb[0].mxu0
  %7186 = vmatprep.mubr.f32.mxu0 0.0
  %7187 = vmatmul.mubr.f32.gmra.mrb[0].mxu0 %v7085
  %v7188 = vpop.f32.mrb[0].mxu0
  %v7189 = vadd.f32 %v7061, %v7188
  %v7190 = vpop.f32.mrb[0].mxu0
  %7191 = vdwg.mxu0
  %v7192 = vmax.f32 %v7154, 0.0
  %v7193 = vmax.f32 %v7159, 0.0
  %v7194 = vmax.f32 %v7164, 0.0
  %v7195 = vmax.f32 %v7169, 0.0
  %v7196 = vmax.f32 %v7174, 0.0
  %v7197 = vmax.f32 %v7179, 0.0
  %v7198 = vmax.f32 %v7184, 0.0
  %v7199 = vmax.f32 %v7189, 0.0
  %s7200 = scalar_lea.vmem %s11, 32
  %v7201 = vld [vmem:[%s7200] sm:$0xff]
  %v7202 = vld [vmem:[%s7200 + $0x8] sm:$0xff]
  %v7203 = vld [vmem:[%s7200 + $0x10] sm:$0xff]
  %v7204 = vld [vmem:[%s7200 + $0x18] sm:$0xff]
  %s7205 = scalar_lea.vmem %s12, 1
  %v7206 = vld [vmem:[%s7205] sm:$0x1]
  %v7208 = vlaneseq
  %v7209 = vshrl.u32 %v7208, 7
  %v7210 = vsub.s32 0, %v7209
  %v7211 = vrot.slane %v7206, %v7210
  %v7214 = vsel %vm3571, %v7192, 0
  %v7217 = vsel %vm3571, %v7193, 0
  %v7220 = vsel %vm3571, %v7194, 0
  %v7223 = vsel %vm3571, %v7195, 0
  %v7226 = vsel %vm3571, %v7196, 0
  %v7229 = vsel %vm3571, %v7197, 0
  %v7232 = vsel %vm3571, %v7198, 0
  %v7235 = vsel %vm3571, %v7199, 0
  %7237 = vmatprep.subr.mxu0 0.0
  %7238 = vmatpush1.msra.mxu0 %v7201
  %7239 = vmatprep.subr.mxu0 0.0
  %7240 = vmatpush1.msra.mxu0 %v7202
  %7241 = vmatprep.subr.mxu0 0.0
  %7242 = vmatpush1.msra.mxu0 %v7203
  %7243 = vmatprep.subr.mxu0 0.0
  %7244 = vmatpush1.msra.mxu0 %v7204
  %7245 = vmatprep.subr.mxu0 0.0
  %7246 = vmatpush1.msra.mxu0 0.0
  %7247 = vmatprep.subr.mxu0 0.0
  %7248 = vmatpush1.msra.mxu0 0.0
  %7249 = vmatprep.subr.mxu0 0.0
  %7250 = vmatpush1.msra.mxu0 0.0
  %7251 = vmatprep.subr.mxu0 0.0
  %7252 = vmatpush1.msra.mxu0 0.0
  %7253 = vmatprep.subr.mxu0 0.0
  %7254 = vmatpush1.msra.mxu0 0.0
  %7255 = vmatprep.subr.mxu0 0.0
  %7256 = vmatpush1.msra.mxu0 0.0
  %7257 = vmatprep.subr.mxu0 0.0
  %7258 = vmatpush1.msra.mxu0 0.0
  %7259 = vmatprep.subr.mxu0 0.0
  %7260 = vmatpush1.msra.mxu0 0.0
  %7261 = vmatprep.subr.mxu0 0.0
  %7262 = vmatpush1.msra.mxu0 0.0
  %7263 = vmatprep.subr.mxu0 0.0
  %7264 = vmatpush1.msra.mxu0 0.0
  %7265 = vmatprep.subr.mxu0 0.0
  %7266 = vmatpush1.msra.mxu0 0.0
  %7267 = vmatprep.subr.mxu0 0.0
  %7268 = vmatpush1.msra.mxu0 0.0
  %7269 = vmatprep.subr.mxu0 0.0
  %7270 = vmatpush1.msra.mxu0 0.0
  %7271 = vmatprep.subr.mxu0 0.0
  %7272 = vmatpush1.msra.mxu0 0.0
  %7273 = vmatprep.subr.mxu0 0.0
  %7274 = vmatpush1.msra.mxu0 0.0
  %7275 = vmatprep.subr.mxu0 0.0
  %7276 = vmatpush1.msra.mxu0 0.0
  %7277 = vmatprep.subr.mxu0 0.0
  %7278 = vmatpush1.msra.mxu0 0.0
  %7279 = vmatprep.subr.mxu0 0.0
  %7280 = vmatpush1.msra.mxu0 0.0
  %7281 = vmatprep.subr.mxu0 0.0
  %7282 = vmatpush1.msra.mxu0 0.0
  %7283 = vmatprep.subr.mxu0 0.0
  %7284 = vmatpush1.msra.mxu0 0.0
  %7285 = vmatprep.subr.mxu0 0.0
  %7286 = vmatpush1.msra.mxu0 0.0
  %7287 = vmatprep.subr.mxu0 0.0
  %7288 = vmatpush1.msra.mxu0 0.0
  %7289 = vmatprep.subr.mxu0 0.0
  %7290 = vmatpush1.msra.mxu0 0.0
  %7291 = vmatprep.subr.mxu0 0.0
  %7292 = vmatpush1.msra.mxu0 0.0
  %7293 = vmatprep.subr.mxu0 0.0
  %7294 = vmatpush1.msra.mxu0 0.0
  %7295 = vmatprep.subr.mxu0 0.0
  %7296 = vmatpush1.msra.mxu0 0.0
  %7297 = vmatprep.subr.mxu0 0.0
  %7298 = vmatpush1.msra.mxu0 0.0
  %7299 = vmatprep.subr.mxu0 0.0
  %7300 = vmatpush1.msra.mxu0 0.0
  %7301 = vmatprep.mubr.f32.mxu0 0.0
  %7302 = vmatmul.mubr.f32.gmra.mrb[0].mxu0 %v7214
  %v7303 = vpop.f32.mrb[0].mxu0
  %v7304 = vadd.f32 %v7211, %v7303
  %v7305 = vpop.f32.mrb[0].mxu0
  %7306 = vmatprep.mubr.f32.mxu0 0.0
  %7307 = vmatmul.mubr.f32.gmra.mrb[0].mxu0 %v7217
  %v7308 = vpop.f32.mrb[0].mxu0
  %v7309 = vadd.f32 %v7211, %v7308
  %v7310 = vpop.f32.mrb[0].mxu0
  %7311 = vmatprep.mubr.f32.mxu0 0.0
  %7312 = vmatmul.mubr.f32.gmra.mrb[0].mxu0 %v7220
  %v7313 = vpop.f32.mrb[0].mxu0
  %v7314 = vadd.f32 %v7211, %v7313
  %v7315 = vpop.f32.mrb[0].mxu0
  %7316 = vmatprep.mubr.f32.mxu0 0.0
  %7317 = vmatmul.mubr.f32.gmra.mrb[0].mxu0 %v7223
  %v7318 = vpop.f32.mrb[0].mxu0
  %v7319 = vadd.f32 %v7211, %v7318
  %v7320 = vpop.f32.mrb[0].mxu0
  %7321 = vmatprep.mubr.f32.mxu0 0.0
  %7322 = vmatmul.mubr.f32.gmra.mrb[0].mxu0 %v7226
  %v7323 = vpop.f32.mrb[0].mxu0
  %v7324 = vadd.f32 %v7211, %v7323
  %v7325 = vpop.f32.mrb[0].mxu0
  %7326 = vmatprep.mubr.f32.mxu0 0.0
  %7327 = vmatmul.mubr.f32.gmra.mrb[0].mxu0 %v7229
  %v7328 = vpop.f32.mrb[0].mxu0
  %v7329 = vadd.f32 %v7211, %v7328
  %v7330 = vpop.f32.mrb[0].mxu0
  %7331 = vmatprep.mubr.f32.mxu0 0.0
  %7332 = vmatmul.mubr.f32.gmra.mrb[0].mxu0 %v7232
  %v7333 = vpop.f32.mrb[0].mxu0
  %v7334 = vadd.f32 %v7211, %v7333
  %v7335 = vpop.f32.mrb[0].mxu0
  %7336 = vmatprep.mubr.f32.mxu0 0.0
  %7337 = vmatmul.mubr.f32.gmra.mrb[0].mxu0 %v7235
  %v7338 = vpop.f32.mrb[0].mxu0
  %v7339 = vadd.f32 %v7211, %v7338
  %v7340 = vpop.f32.mrb[0].mxu0
  %7341 = vdwg.mxu0
  %v7342 = vadd.f32 %v7044, %v7304
  %v7343 = vadd.f32 %v7045, %v7309
  %v7344 = vadd.f32 %v7046, %v7314
  %v7345 = vadd.f32 %v7047, %v7319
  %v7346 = vadd.f32 %v7048, %v7324
  %v7347 = vadd.f32 %v7049, %v7329
  %v7348 = vadd.f32 %v7050, %v7334
  %v7349 = vadd.f32 %v7051, %v7339
  %s7350 = scalar_lea.vmem %s13, 1
  %v7351 = vld [vmem:[%s7350] sm:$0x1]
  %s7352 = scalar_lea.vmem %s14, 1
  %v7353 = vld [vmem:[%s7352] sm:$0x1]
  %v7354 = vsel %vm220, %v7342, 0.0
  %7355 = vadd.xlane.f32.xlu0 %v7354
  %v7356 = vpop.xlane.xlu0 %7355
  %v7357 = vsel %vm220, %v7343, 0.0
  %7358 = vadd.xlane.f32.xlu0 %v7357
  %v7359 = vpop.xlane.xlu0 %7358
  %v7360 = vsel %vm220, %v7344, 0.0
  %7361 = vadd.xlane.f32.xlu0 %v7360
  %v7362 = vpop.xlane.xlu0 %7361
  %v7363 = vsel %vm220, %v7345, 0.0
  %7364 = vadd.xlane.f32.xlu0 %v7363
  %v7365 = vpop.xlane.xlu0 %7364
  %v7366 = vsel %vm220, %v7346, 0.0
  %7367 = vadd.xlane.f32.xlu0 %v7366
  %v7368 = vpop.xlane.xlu0 %7367
  %v7369 = vsel %vm220, %v7347, 0.0
  %7370 = vadd.xlane.f32.xlu0 %v7369
  %v7371 = vpop.xlane.xlu0 %7370
  %v7372 = vsel %vm220, %v7348, 0.0
  %7373 = vadd.xlane.f32.xlu0 %v7372
  %v7374 = vpop.xlane.xlu0 %7373
  %v7375 = vsel %vm220, %v7349, 0.0
  %7376 = vadd.xlane.f32.xlu0 %v7375
  %v7377 = vpop.xlane.xlu0 %7376
  %v7378 = vmul.f32 %v7356, %v3305
  %v7379 = vmul.f32 %v7359, %v3305
  %v7380 = vmul.f32 %v7362, %v3305
  %v7381 = vmul.f32 %v7365, %v3305
  %v7382 = vmul.f32 %v7368, %v3305
  %v7383 = vmul.f32 %v7371, %v3305
  %v7384 = vmul.f32 %v7374, %v3305
  %v7385 = vmul.f32 %v7377, %v3305
  %v7386 = vsub.f32 %v7342, %v7378
  %v7387 = vsub.f32 %v7343, %v7379
  %v7388 = vsub.f32 %v7344, %v7380
  %v7389 = vsub.f32 %v7345, %v7381
  %v7390 = vsub.f32 %v7346, %v7382
  %v7391 = vsub.f32 %v7347, %v7383
  %v7392 = vsub.f32 %v7348, %v7384
  %v7393 = vsub.f32 %v7349, %v7385
  %v7394 = vmul.f32 %v7386, %v7386
  %v7395 = vmul.f32 %v7387, %v7387
  %v7396 = vmul.f32 %v7388, %v7388
  %v7397 = vmul.f32 %v7389, %v7389
  %v7398 = vmul.f32 %v7390, %v7390
  %v7399 = vmul.f32 %v7391, %v7391
  %v7400 = vmul.f32 %v7392, %v7392
  %v7401 = vmul.f32 %v7393, %v7393
  %v7402 = vsel %vm220, %v7394, 0.0
  %7403 = vadd.xlane.f32.xlu0 %v7402
  %v7404 = vpop.xlane.xlu0 %7403
  %v7405 = vsel %vm220, %v7395, 0.0
  %7406 = vadd.xlane.f32.xlu0 %v7405
  %v7407 = vpop.xlane.xlu0 %7406
  %v7408 = vsel %vm220, %v7396, 0.0
  %7409 = vadd.xlane.f32.xlu0 %v7408
  %v7410 = vpop.xlane.xlu0 %7409
  %v7411 = vsel %vm220, %v7397, 0.0
  %7412 = vadd.xlane.f32.xlu0 %v7411
  %v7413 = vpop.xlane.xlu0 %7412
  %v7414 = vsel %vm220, %v7398, 0.0
  %7415 = vadd.xlane.f32.xlu0 %v7414
  %v7416 = vpop.xlane.xlu0 %7415
  %v7417 = vsel %vm220, %v7399, 0.0
  %7418 = vadd.xlane.f32.xlu0 %v7417
  %v7419 = vpop.xlane.xlu0 %7418
  %v7420 = vsel %vm220, %v7400, 0.0
  %7421 = vadd.xlane.f32.xlu0 %v7420
  %v7422 = vpop.xlane.xlu0 %7421
  %v7423 = vsel %vm220, %v7401, 0.0
  %7424 = vadd.xlane.f32.xlu0 %v7423
  %v7425 = vpop.xlane.xlu0 %7424
  %v7426 = vmul.f32 %v7404, %v3305
  %v7427 = vmul.f32 %v7407, %v3305
  %v7428 = vmul.f32 %v7410, %v3305
  %v7429 = vmul.f32 %v7413, %v3305
  %v7430 = vmul.f32 %v7416, %v3305
  %v7431 = vmul.f32 %v7419, %v3305
  %v7432 = vmul.f32 %v7422, %v3305
  %v7433 = vmul.f32 %v7425, %v3305
  %v7434 = vadd.f32 %v7426, 1e-05
  %v7435 = vadd.f32 %v7427, 1e-05
  %v7436 = vadd.f32 %v7428, 1e-05
  %v7437 = vadd.f32 %v7429, 1e-05
  %v7438 = vadd.f32 %v7430, 1e-05
  %v7439 = vadd.f32 %v7431, 1e-05
  %v7440 = vadd.f32 %v7432, 1e-05
  %v7441 = vadd.f32 %v7433, 1e-05
  %v7442 = vrsqrt.pop %v7434
  %v7443 = vrsqrt.pop %v7435
  %v7444 = vrsqrt.pop %v7436
  %v7445 = vrsqrt.pop %v7437
  %v7446 = vrsqrt.pop %v7438
  %v7447 = vrsqrt.pop %v7439
  %v7448 = vrsqrt.pop %v7440
  %v7449 = vrsqrt.pop %v7441
  %v7450 = vmul.f32 %v7386, %v7442
  %v7451 = vmul.f32 %v7387, %v7443
  %v7452 = vmul.f32 %v7388, %v7444
  %v7453 = vmul.f32 %v7389, %v7445
  %v7454 = vmul.f32 %v7390, %v7446
  %v7455 = vmul.f32 %v7391, %v7447
  %v7456 = vmul.f32 %v7392, %v7448
  %v7457 = vmul.f32 %v7393, %v7449
  %v7459 = vlaneseq
  %v7460 = vshrl.u32 %v7459, 7
  %v7461 = vsub.s32 0, %v7460
  %v7462 = vrot.slane %v7351, %v7461
  %v7464 = vmul.f32 %v7450, %v7462
  %v7465 = vmul.f32 %v7451, %v7462
  %v7466 = vmul.f32 %v7452, %v7462
  %v7467 = vmul.f32 %v7453, %v7462
  %v7468 = vmul.f32 %v7454, %v7462
  %v7469 = vmul.f32 %v7455, %v7462
  %v7470 = vmul.f32 %v7456, %v7462
  %v7471 = vmul.f32 %v7457, %v7462
  %v7473 = vlaneseq
  %v7474 = vshrl.u32 %v7473, 7
  %v7475 = vsub.s32 0, %v7474
  %v7476 = vrot.slane %v7353, %v7475
  %v7478 = vadd.f32 %v7464, %v7476
  %v7479 = vadd.f32 %v7465, %v7476
  %v7480 = vadd.f32 %v7466, %v7476
  %v7481 = vadd.f32 %v7467, %v7476
  %v7482 = vadd.f32 %v7468, %v7476
  %v7483 = vadd.f32 %v7469, %v7476
  %v7484 = vadd.f32 %v7470, %v7476
  %v7485 = vadd.f32 %v7471, %v7476
  %v7486 = vld [vmem:[%s15] sm:$0x1]
  %v7487 = vld [vmem:[%s16] sm:$0x1]
  %v7488 = vsel %vm220, %v7478, 0.0
  %7489 = vadd.xlane.f32.xlu0 %v7488
  %v7490 = vpop.xlane.xlu0 %7489
  %v7491 = vsel %vm220, %v7479, 0.0
  %7492 = vadd.xlane.f32.xlu0 %v7491
  %v7493 = vpop.xlane.xlu0 %7492
  %v7494 = vsel %vm220, %v7480, 0.0
  %7495 = vadd.xlane.f32.xlu0 %v7494
  %v7496 = vpop.xlane.xlu0 %7495
  %v7497 = vsel %vm220, %v7481, 0.0
  %7498 = vadd.xlane.f32.xlu0 %v7497
  %v7499 = vpop.xlane.xlu0 %7498
  %v7500 = vsel %vm220, %v7482, 0.0
  %7501 = vadd.xlane.f32.xlu0 %v7500
  %v7502 = vpop.xlane.xlu0 %7501
  %v7503 = vsel %vm220, %v7483, 0.0
  %7504 = vadd.xlane.f32.xlu0 %v7503
  %v7505 = vpop.xlane.xlu0 %7504
  %v7506 = vsel %vm220, %v7484, 0.0
  %7507 = vadd.xlane.f32.xlu0 %v7506
  %v7508 = vpop.xlane.xlu0 %7507
  %v7509 = vsel %vm220, %v7485, 0.0
  %7510 = vadd.xlane.f32.xlu0 %v7509
  %v7511 = vpop.xlane.xlu0 %7510
  %v7512 = vmul.f32 %v7490, %v3305
  %v7513 = vmul.f32 %v7493, %v3305
  %v7514 = vmul.f32 %v7496, %v3305
  %v7515 = vmul.f32 %v7499, %v3305
  %v7516 = vmul.f32 %v7502, %v3305
  %v7517 = vmul.f32 %v7505, %v3305
  %v7518 = vmul.f32 %v7508, %v3305
  %v7519 = vmul.f32 %v7511, %v3305
  %v7520 = vsub.f32 %v7478, %v7512
  %v7521 = vsub.f32 %v7479, %v7513
  %v7522 = vsub.f32 %v7480, %v7514
  %v7523 = vsub.f32 %v7481, %v7515
  %v7524 = vsub.f32 %v7482, %v7516
  %v7525 = vsub.f32 %v7483, %v7517
  %v7526 = vsub.f32 %v7484, %v7518
  %v7527 = vsub.f32 %v7485, %v7519
  %v7528 = vmul.f32 %v7520, %v7520
  %v7529 = vmul.f32 %v7521, %v7521
  %v7530 = vmul.f32 %v7522, %v7522
  %v7531 = vmul.f32 %v7523, %v7523
  %v7532 = vmul.f32 %v7524, %v7524
  %v7533 = vmul.f32 %v7525, %v7525
  %v7534 = vmul.f32 %v7526, %v7526
  %v7535 = vmul.f32 %v7527, %v7527
  %v7536 = vsel %vm220, %v7528, 0.0
  %7537 = vadd.xlane.f32.xlu0 %v7536
  %v7538 = vpop.xlane.xlu0 %7537
  %v7539 = vsel %vm220, %v7529, 0.0
  %7540 = vadd.xlane.f32.xlu0 %v7539
  %v7541 = vpop.xlane.xlu0 %7540
  %v7542 = vsel %vm220, %v7530, 0.0
  %7543 = vadd.xlane.f32.xlu0 %v7542
  %v7544 = vpop.xlane.xlu0 %7543
  %v7545 = vsel %vm220, %v7531, 0.0
  %7546 = vadd.xlane.f32.xlu0 %v7545
  %v7547 = vpop.xlane.xlu0 %7546
  %v7548 = vsel %vm220, %v7532, 0.0
  %7549 = vadd.xlane.f32.xlu0 %v7548
  %v7550 = vpop.xlane.xlu0 %7549
  %v7551 = vsel %vm220, %v7533, 0.0
  %7552 = vadd.xlane.f32.xlu0 %v7551
  %v7553 = vpop.xlane.xlu0 %7552
  %v7554 = vsel %vm220, %v7534, 0.0
  %7555 = vadd.xlane.f32.xlu0 %v7554
  %v7556 = vpop.xlane.xlu0 %7555
  %v7557 = vsel %vm220, %v7535, 0.0
  %7558 = vadd.xlane.f32.xlu0 %v7557
  %v7559 = vpop.xlane.xlu0 %7558
  %v7560 = vmul.f32 %v7538, %v3305
  %v7561 = vmul.f32 %v7541, %v3305
  %v7562 = vmul.f32 %v7544, %v3305
  %v7563 = vmul.f32 %v7547, %v3305
  %v7564 = vmul.f32 %v7550, %v3305
  %v7565 = vmul.f32 %v7553, %v3305
  %v7566 = vmul.f32 %v7556, %v3305
  %v7567 = vmul.f32 %v7559, %v3305
  %v7568 = vadd.f32 %v7560, 1e-05
  %v7569 = vadd.f32 %v7561, 1e-05
  %v7570 = vadd.f32 %v7562, 1e-05
  %v7571 = vadd.f32 %v7563, 1e-05
  %v7572 = vadd.f32 %v7564, 1e-05
  %v7573 = vadd.f32 %v7565, 1e-05
  %v7574 = vadd.f32 %v7566, 1e-05
  %v7575 = vadd.f32 %v7567, 1e-05
  %v7576 = vrsqrt.pop %v7568
  %v7577 = vrsqrt.pop %v7569
  %v7578 = vrsqrt.pop %v7570
  %v7579 = vrsqrt.pop %v7571
  %v7580 = vrsqrt.pop %v7572
  %v7581 = vrsqrt.pop %v7573
  %v7582 = vrsqrt.pop %v7574
  %v7583 = vrsqrt.pop %v7575
  %v7584 = vmul.f32 %v7520, %v7576
  %v7585 = vmul.f32 %v7521, %v7577
  %v7586 = vmul.f32 %v7522, %v7578
  %v7587 = vmul.f32 %v7523, %v7579
  %v7588 = vmul.f32 %v7524, %v7580
  %v7589 = vmul.f32 %v7525, %v7581
  %v7590 = vmul.f32 %v7526, %v7582
  %v7591 = vmul.f32 %v7527, %v7583
  %v7593 = vlaneseq
  %v7594 = vshrl.u32 %v7593, 7
  %v7595 = vsub.s32 0, %v7594
  %v7596 = vrot.slane %v7486, %v7595
  %v7598 = vmul.f32 %v7584, %v7596
  %v7599 = vmul.f32 %v7585, %v7596
  %v7600 = vmul.f32 %v7586, %v7596
  %v7601 = vmul.f32 %v7587, %v7596
  %v7602 = vmul.f32 %v7588, %v7596
  %v7603 = vmul.f32 %v7589, %v7596
  %v7604 = vmul.f32 %v7590, %v7596
  %v7605 = vmul.f32 %v7591, %v7596
  %v7607 = vlaneseq
  %v7608 = vshrl.u32 %v7607, 7
  %v7609 = vsub.s32 0, %v7608
  %v7610 = vrot.slane %v7487, %v7609
  %v7612 = vadd.f32 %v7598, %v7610
  %v7613 = vadd.f32 %v7599, %v7610
  %v7614 = vadd.f32 %v7600, %v7610
  %v7615 = vadd.f32 %v7601, %v7610
  %v7616 = vadd.f32 %v7602, %v7610
  %v7617 = vadd.f32 %v7603, %v7610
  %v7618 = vadd.f32 %v7604, %v7610
  %v7619 = vadd.f32 %v7605, %v7610
  %v7628 = vrot.slane %v7613, 7
  %vm7629 = vcmask 1041409
  %v7630 = vsel %vm7629, %v7628, %v7612
  %v7631 = vrot.slane %v7614, 6
  %vm7632 = vcmask 1042434
  %v7633 = vsel %vm7632, %v7631, %v7630
  %v7634 = vrot.slane %v7615, 5
  %vm7635 = vcmask 1043459
  %v7636 = vsel %vm7635, %v7634, %v7633
  %v7637 = vrot.slane %v7616, 4
  %vm7638 = vcmask 1044484
  %v7639 = vsel %vm7638, %v7637, %v7636
  %v7640 = vrot.slane %v7617, 3
  %vm7641 = vcmask 1045509
  %v7642 = vsel %vm7641, %v7640, %v7639
  %v7643 = vrot.slane %v7618, 2
  %vm7644 = vcmask 1046534
  %v7645 = vsel %vm7644, %v7643, %v7642
  %v7646 = vrot.slane %v7619, 1
  %vm7647 = vcmask 1047559
  %v7648 = vsel %vm7647, %v7646, %v7645
  %v7650 = vrot.slane %v7612, 1
  %v7651 = vsel %vm7629, %v7613, %v7650
  %v7652 = vrot.slane %v7614, 7
  %v7653 = vsel %vm7632, %v7652, %v7651
  %v7654 = vrot.slane %v7615, 6
  %v7655 = vsel %vm7635, %v7654, %v7653
  %v7656 = vrot.slane %v7616, 5
  %v7657 = vsel %vm7638, %v7656, %v7655
  %v7658 = vrot.slane %v7617, 4
  %v7659 = vsel %vm7641, %v7658, %v7657
  %v7660 = vrot.slane %v7618, 3
  %v7661 = vsel %vm7644, %v7660, %v7659
  %v7662 = vrot.slane %v7619, 2
  %v7663 = vsel %vm7647, %v7662, %v7661
  %7664 = vrot.lane.b32.xlu0 %v7663, 16
  %v7665 = vpop.permute.xlu0 %7664
  %v7667 = vrot.slane %v7612, 2
  %v7668 = vrot.slane %v7613, 1
  %v7669 = vsel %vm7629, %v7668, %v7667
  %v7670 = vsel %vm7632, %v7614, %v7669
  %v7671 = vrot.slane %v7615, 7
  %v7672 = vsel %vm7635, %v7671, %v7670
  %v7673 = vrot.slane %v7616, 6
  %v7674 = vsel %vm7638, %v7673, %v7672
  %v7675 = vrot.slane %v7617, 5
  %v7676 = vsel %vm7641, %v7675, %v7674
  %v7677 = vrot.slane %v7618, 4
  %v7678 = vsel %vm7644, %v7677, %v7676
  %v7679 = vrot.slane %v7619, 3
  %v7680 = vsel %vm7647, %v7679, %v7678
  %7681 = vrot.lane.b32.xlu0 %v7680, 32
  %v7682 = vpop.permute.xlu0 %7681
  %v7684 = vrot.slane %v7612, 3
  %v7685 = vrot.slane %v7613, 2
  %v7686 = vsel %vm7629, %v7685, %v7684
  %v7687 = vrot.slane %v7614, 1
  %v7688 = vsel %vm7632, %v7687, %v7686
  %v7689 = vsel %vm7635, %v7615, %v7688
  %v7690 = vrot.slane %v7616, 7
  %v7691 = vsel %vm7638, %v7690, %v7689
  %v7692 = vrot.slane %v7617, 6
  %v7693 = vsel %vm7641, %v7692, %v7691
  %v7694 = vrot.slane %v7618, 5
  %v7695 = vsel %vm7644, %v7694, %v7693
  %v7696 = vrot.slane %v7619, 4
  %v7697 = vsel %vm7647, %v7696, %v7695
  %7698 = vrot.lane.b32.xlu0 %v7697, 48
  %v7699 = vpop.permute.xlu0 %7698
  %v7701 = vrot.slane %v7612, 4
  %v7702 = vrot.slane %v7613, 3
  %v7703 = vsel %vm7629, %v7702, %v7701
  %v7704 = vrot.slane %v7614, 2
  %v7705 = vsel %vm7632, %v7704, %v7703
  %v7706 = vrot.slane %v7615, 1
  %v7707 = vsel %vm7635, %v7706, %v7705
  %v7708 = vsel %vm7638, %v7616, %v7707
  %v7709 = vrot.slane %v7617, 7
  %v7710 = vsel %vm7641, %v7709, %v7708
  %v7711 = vrot.slane %v7618, 6
  %v7712 = vsel %vm7644, %v7711, %v7710
  %v7713 = vrot.slane %v7619, 5
  %v7714 = vsel %vm7647, %v7713, %v7712
  %7715 = vrot.lane.b32.xlu0 %v7714, 64
  %v7716 = vpop.permute.xlu0 %7715
  %v7718 = vrot.slane %v7612, 5
  %v7719 = vrot.slane %v7613, 4
  %v7720 = vsel %vm7629, %v7719, %v7718
  %v7721 = vrot.slane %v7614, 3
  %v7722 = vsel %vm7632, %v7721, %v7720
  %v7723 = vrot.slane %v7615, 2
  %v7724 = vsel %vm7635, %v7723, %v7722
  %v7725 = vrot.slane %v7616, 1
  %v7726 = vsel %vm7638, %v7725, %v7724
  %v7727 = vsel %vm7641, %v7617, %v7726
  %v7728 = vrot.slane %v7618, 7
  %v7729 = vsel %vm7644, %v7728, %v7727
  %v7730 = vrot.slane %v7619, 6
  %v7731 = vsel %vm7647, %v7730, %v7729
  %7732 = vrot.lane.b32.xlu0 %v7731, 80
  %v7733 = vpop.permute.xlu0 %7732
  %v7735 = vrot.slane %v7612, 6
  %v7736 = vrot.slane %v7613, 5
  %v7737 = vsel %vm7629, %v7736, %v7735
  %v7738 = vrot.slane %v7614, 4
  %v7739 = vsel %vm7632, %v7738, %v7737
  %v7740 = vrot.slane %v7615, 3
  %v7741 = vsel %vm7635, %v7740, %v7739
  %v7742 = vrot.slane %v7616, 2
  %v7743 = vsel %vm7638, %v7742, %v7741
  %v7744 = vrot.slane %v7617, 1
  %v7745 = vsel %vm7641, %v7744, %v7743
  %v7746 = vsel %vm7644, %v7618, %v7745
  %v7747 = vrot.slane %v7619, 7
  %v7748 = vsel %vm7647, %v7747, %v7746
  %7749 = vrot.lane.b32.xlu0 %v7748, 96
  %v7750 = vpop.permute.xlu0 %7749
  %v7752 = vrot.slane %v7612, 7
  %v7753 = vrot.slane %v7613, 6
  %v7754 = vsel %vm7629, %v7753, %v7752
  %v7755 = vrot.slane %v7614, 5
  %v7756 = vsel %vm7632, %v7755, %v7754
  %v7757 = vrot.slane %v7615, 4
  %v7758 = vsel %vm7635, %v7757, %v7756
  %v7759 = vrot.slane %v7616, 3
  %v7760 = vsel %vm7638, %v7759, %v7758
  %v7761 = vrot.slane %v7617, 2
  %v7762 = vsel %vm7641, %v7761, %v7760
  %v7763 = vrot.slane %v7618, 1
  %v7764 = vsel %vm7644, %v7763, %v7762
  %v7765 = vsel %vm7647, %v7619, %v7764
  %7766 = vrot.lane.b32.xlu0 %v7765, 112
  %v7767 = vpop.permute.xlu0 %7766
  %v7769 = vsel %vm220, %v7648, %v7665
  %v7770 = vsel %vm3571, %v7769, %v7682
  %vm7771 = vcmask 392192
  %v7772 = vsel %vm7771, %v7770, %v7699
  %vm7773 = vcmask 523264
  %v7774 = vsel %vm7773, %v7772, %v7716
  %vm7775 = vcmask 654336
  %v7776 = vsel %vm7775, %v7774, %v7733
  %vm7777 = vcmask 785408
  %v7778 = vsel %vm7777, %v7776, %v7750
  %vm7779 = vcmask 916480
  %v7780 = vsel %vm7779, %v7778, %v7767
  %v7781 = vld [vmem:[%s17] sm:$0xff]
  %v7782 = vld [vmem:[%s17 + $0x8] sm:$0xff]
  %v7783 = vld [vmem:[%s17 + $0x10] sm:$0xff]
  %v7784 = vld [vmem:[%s17 + $0x18] sm:$0xff]
  %v7785 = vld [vmem:[%s17 + $0x20] sm:$0xff]
  %v7786 = vld [vmem:[%s17 + $0x28] sm:$0xff]
  %v7787 = vld [vmem:[%s17 + $0x30] sm:$0xff]
  %v7788 = vld [vmem:[%s17 + $0x38] sm:$0xff]
  %v7789 = vld [vmem:[%s17 + $0x40] sm:$0xff]
  %v7790 = vld [vmem:[%s17 + $0x48] sm:$0xff]
  %v7791 = vld [vmem:[%s17 + $0x50] sm:$0xff]
  %v7792 = vld [vmem:[%s17 + $0x58] sm:$0xff]
  %v7793 = vld [vmem:[%s17 + $0x60] sm:$0xff]
  %v7794 = vld [vmem:[%s17 + $0x68] sm:$0xff]
  %v7795 = vld [vmem:[%s17 + $0x70] sm:$0xff]
  %v7796 = vld [vmem:[%s17 + $0x78] sm:$0xff]
  %v7797 = vld [vmem:[%s18] sm:$0x1]
  %v7799 = vlaneseq
  %v7800 = vshrl.u32 %v7799, 7
  %v7801 = vsub.s32 0, %v7800
  %v7802 = vrot.slane %v7797, %v7801
  %7804 = vmatprep.subr.mxu0 0.0
  %7805 = vmatpush1.msra.mxu0 %v7781
  %7806 = vmatprep.subr.mxu0 0.0
  %7807 = vmatpush1.msra.mxu0 %v7782
  %7808 = vmatprep.subr.mxu0 0.0
  %7809 = vmatpush1.msra.mxu0 %v7783
  %7810 = vmatprep.subr.mxu0 0.0
  %7811 = vmatpush1.msra.mxu0 %v7784
  %7812 = vmatprep.subr.mxu0 0.0
  %7813 = vmatpush1.msra.mxu0 %v7785
  %7814 = vmatprep.subr.mxu0 0.0
  %7815 = vmatpush1.msra.mxu0 %v7786
  %7816 = vmatprep.subr.mxu0 0.0
  %7817 = vmatpush1.msra.mxu0 %v7787
  %7818 = vmatprep.subr.mxu0 0.0
  %7819 = vmatpush1.msra.mxu0 %v7788
  %7820 = vmatprep.subr.mxu0 0.0
  %7821 = vmatpush1.msra.mxu0 %v7789
  %7822 = vmatprep.subr.mxu0 0.0
  %7823 = vmatpush1.msra.mxu0 %v7790
  %7824 = vmatprep.subr.mxu0 0.0
  %7825 = vmatpush1.msra.mxu0 %v7791
  %7826 = vmatprep.subr.mxu0 0.0
  %7827 = vmatpush1.msra.mxu0 %v7792
  %7828 = vmatprep.subr.mxu0 0.0
  %7829 = vmatpush1.msra.mxu0 %v7793
  %7830 = vmatprep.subr.mxu0 0.0
  %7831 = vmatpush1.msra.mxu0 %v7794
  %7832 = vmatprep.subr.mxu0 0.0
  %7833 = vmatpush1.msra.mxu0 %v7795
  %7834 = vmatprep.subr.mxu0 0.0
  %7835 = vmatpush1.msra.mxu0 %v7796
  %7836 = vmatprep.subr.mxu0 0.0
  %7837 = vmatpush1.msra.mxu0 0.0
  %7838 = vmatprep.subr.mxu0 0.0
  %7839 = vmatpush1.msra.mxu0 0.0
  %7840 = vmatprep.subr.mxu0 0.0
  %7841 = vmatpush1.msra.mxu0 0.0
  %7842 = vmatprep.subr.mxu0 0.0
  %7843 = vmatpush1.msra.mxu0 0.0
  %7844 = vmatprep.subr.mxu0 0.0
  %7845 = vmatpush1.msra.mxu0 0.0
  %7846 = vmatprep.subr.mxu0 0.0
  %7847 = vmatpush1.msra.mxu0 0.0
  %7848 = vmatprep.subr.mxu0 0.0
  %7849 = vmatpush1.msra.mxu0 0.0
  %7850 = vmatprep.subr.mxu0 0.0
  %7851 = vmatpush1.msra.mxu0 0.0
  %7852 = vmatprep.subr.mxu0 0.0
  %7853 = vmatpush1.msra.mxu0 0.0
  %7854 = vmatprep.subr.mxu0 0.0
  %7855 = vmatpush1.msra.mxu0 0.0
  %7856 = vmatprep.subr.mxu0 0.0
  %7857 = vmatpush1.msra.mxu0 0.0
  %7858 = vmatprep.subr.mxu0 0.0
  %7859 = vmatpush1.msra.mxu0 0.0
  %7860 = vmatprep.subr.mxu0 0.0
  %7861 = vmatpush1.msra.mxu0 0.0
  %7862 = vmatprep.subr.mxu0 0.0
  %7863 = vmatpush1.msra.mxu0 0.0
  %7864 = vmatprep.subr.mxu0 0.0
  %7865 = vmatpush1.msra.mxu0 0.0
  %7866 = vmatprep.subr.mxu0 0.0
  %7867 = vmatpush1.msra.mxu0 0.0
  %7868 = vmatprep.mubr.f32.mxu0 0.0
  %7869 = vmatmul.mubr.f32.gmra.mrb[0].mxu0 %v7780
  %v7870 = vpop.f32.mrb[0].mxu0
  %v7871 = vadd.f32 %v7802, %v7870
  %v7872 = vpop.f32.mrb[0].mxu0
  %7873 = vdwg.mxu0
  %7874 = vst.msk [vmem:[%s19] sm:$0xff] %vm79, %v7871
  // Predicated region
  $region78: #{_lambda_.1} parent=0 // pred_check
    _
  $region79: #{_lambda_.1} parent=0 // pred_check_branch
    %7876 = sbr.rel (0) target = $region81
  $region80: #{_lambda_.1} parent=0 // pred_region
    _
  $region81: #{_lambda_.1} parent=0 // pred_fallthru
    _
  // Predicated region
  $region82: #{_lambda_.1} parent=0 // pred_check
    _
  $region83: #{_lambda_.1} parent=0 // pred_check_branch
    %7878 = sbr.rel (0) target = $region85
  $region84: #{_lambda_.1} parent=0 // pred_region
    _
  $region85: #{_lambda_.1} parent=0 // pred_fallthru
    _

</llo_original>
